<compile_context>
chip_gen: v7x
topology: tpu7x:2x2x1
jax: 0.10.0
libtpu: 0.0.40
codegen_flags: <defaults>
</compile_context>

<pallas_src>
import functools

import jax
import jax.numpy as jnp
from jax import lax
from jax.experimental import pallas as pl
from jax.experimental.pallas import tpu as pltpu


def _multiwarp_kernel(lo_ref, hi_ref, img_ref, coord_ref, out_ref, ping_ref, *,
                      height, width, tile_q, n_strips, num_steps,
                      mxu_precision):
    # lo_ref/hi_ref : SMEM (N*T*n_strips,) i32   source-strip window bounds
    # img_ref       : (1, n_strips, C, tile_q)   input image (strip-blocked)
    # coord_ref     : (1, 1, 2*n_strips, tile_q) this step's sample coords
    #                 (rows [0,n_strips) = x, rows [n_strips,2n_strips) = y)
    # out_ref       : (1, n_strips, C, tile_q)   resident carry / output
    # ping_ref      : (n_strips, C, tile_q) VMEM ping-pong buffer
    b = pl.program_id(0)
    t = pl.program_id(1)
    last = num_steps - 1
    C = img_ref.shape[2]

    # Warps are applied in reversed time order.  The coord BlockSpec already
    # folds the reversal into its index_map; the SMEM window tables are in
    # natural time order, so index them with tt = last - t.
    tt = last - t
    win_base = (b * num_steps + tt) * n_strips

    # One-hot row iota, hoisted out of every loop (built once per invocation).
    iota_src = lax.broadcasted_iota(jnp.int32, (tile_q, tile_q), 0)

    def warp_step(read_strip, write_strip):
        def out_strip(s, carry):
            # Sample coordinates for this strip of output pixels (lane-dense).
            src_x = coord_ref[0, 0, pl.ds(s, 1), :]              # (1, tile_q)
            src_y = coord_ref[0, 0, pl.ds(n_strips + s, 1), :]   # (1, tile_q)
            x0f = jnp.floor(src_x)
            y0f = jnp.floor(src_y)
            wx = src_x - x0f
            wy = src_y - y0f
            x0 = x0f.astype(jnp.int32)
            y0 = y0f.astype(jnp.int32)
            x1 = x0 + 1
            y1 = y0 + 1

            # The 4 bilinear taps: (flat source index, weight).  Zero padding
            # is a single fused select folding the in-bounds mask into the
            # weight; flat indices need no clipping (out-of-bounds taps either
            # match no source pixel in the window or match with zero weight).
            taps = []
            for yi, xi, w in ((y0, x0, (1.0 - wy) * (1.0 - wx)),
                              (y0, x1, (1.0 - wy) * wx),
                              (y1, x0, wy * (1.0 - wx)),
                              (y1, x1, wy * wx)):
                valid = (xi >= 0) & (xi < width) & (yi >= 0) & (yi < height)
                taps.append((yi * width + xi, jnp.where(valid, w, 0.0)))

            # Precomputed source-strip window for this (b, step, strip).
            ks_lo = lo_ref[win_base + s]
            ks_hi = hi_ref[win_base + s]

            def src_strip(ks, acc):
                # (tile_q, tile_q) block of the sparse one-hot weight matrix:
                # rows = source pixels of strip ks, cols = output pixels of s.
                base_k = ks * tile_q
                mt = jnp.where((taps[0][0] - base_k) == iota_src,
                               taps[0][1], 0.0)
                for idx_k, w_k in taps[1:]:
                    mt = mt + jnp.where((idx_k - base_k) == iota_src, w_k, 0.0)
                # (C, tile_q) @ (tile_q, tile_q) on the MXU, f32 accumulation.
                return acc + jnp.dot(read_strip(ks), mt,
                                     preferred_element_type=jnp.float32,
                                     precision=mxu_precision)

            warped = lax.fori_loop(ks_lo, ks_hi, src_strip,
                                   jnp.zeros((C, tile_q), jnp.float32))
            write_strip(s, warped)                # lane-dense (C, tile_q) store
            return carry

        lax.fori_loop(0, n_strips, out_strip, 0)

    def write_out(s, v):
        out_ref[0, s] = v

    def write_ping(s, v):
        ping_ref[s] = v

    # Ping-pong: step t writes out_ref iff (last - t) is even, so the final
    # step always lands in out_ref; for t > 0 it reads whichever buffer step
    # t-1 wrote (the other one).  t == 0 always reads the fresh image block.
    first_writes_out = (last % 2) == 0            # static

    @pl.when(t == 0)
    def _():
        warp_step(lambda ks: img_ref[0, ks],
                  write_out if first_writes_out else write_ping)

    if num_steps > 1:
        @pl.when((t != 0) & ((last - t) % 2 == 0))
        def _():
            warp_step(lambda ks: ping_ref[ks], write_out)

    if num_steps > 2:
        @pl.when((t != 0) & ((last - t) % 2 == 1))
        def _():
            warp_step(lambda ks: out_ref[0, ks], write_ping)


def _pick_tile_q(hw):
    # Largest 128-multiple strip (capped at 512) dividing H*W: big enough to
    # amortize per-strip overhead, small enough that the few live
    # (tile_q, tile_q) f32/i32 temporaries stay a few MiB on every TPU
    # generation (v7x: 64 MiB physical / 32 MiB default scoped VMEM).  Bigger
    # strips also coarsen the source-strip window, so tune the two together.
    for cand in (512, 384, 256, 128):
        if hw % cand == 0:
            return cand
    return None


def multi_warp(img, flows, *, tile_q=None,
               mxu_precision=lax.Precision.HIGHEST):
    """Pallas TPU implementation of MultiWarp.forward (use_composite_flow=False)."""
    N, C, H, W = img.shape
    Nf, T, two, Hf, Wf = flows.shape
    assert (Nf, two, Hf, Wf) == (N, 2, H, W)
    HW = H * W
    # TODO(synk): pad H*W up to a multiple of 128 (and mask padded output
    # pixels) for arbitrary sizes; typical flownet2 crops already satisfy it.
    assert HW % 128 == 0, "H*W must be a multiple of 128"
    if tile_q is None:
        tile_q = _pick_tile_q(HW)
    assert tile_q is not None and HW % tile_q == 0 and tile_q % 128 == 0
    n_strips = HW // tile_q

    # ---- lane-dense, strip-blocked layouts (wrapper-side layout plumbing) --
    # images: (N, n_strips, C, tile_q), flat pixel p = s * tile_q + q
    img_strips = (img.astype(jnp.float32)
                  .reshape(N, C, n_strips, tile_q)
                  .transpose(0, 2, 1, 3))
    # absolute sample coords, grid_sample(align_corners=False):
    #   x_src = col + u - 0.5 ;  y_src = row + v - 0.5
    row = jnp.repeat(jnp.arange(H, dtype=jnp.float32), W)     # (HW,)
    col = jnp.tile(jnp.arange(W, dtype=jnp.float32), H)       # (HW,)
    base = jnp.stack([col, row])[None, None]                  # (1, 1, 2, HW)
    coords = flows.astype(jnp.float32).reshape(N, T, 2, HW) + base - 0.5

    # Source-strip windows per (n, t, output-strip): idx00 is the per-lane
    # minimum flat tap index and idx00 + W + 1 (= idx11) the maximum, so
    # [min(idx00), max(idx11)] bounds every tap of every pixel in the strip.
    x0 = jnp.floor(coords[:, :, 0]).astype(jnp.int32)          # (N, T, HW)
    y0 = jnp.floor(coords[:, :, 1]).astype(jnp.int32)
    idx00 = (y0 * W + x0).reshape(N, T, n_strips, tile_q)
    idx11 = idx00 + (W + 1)
    ks_lo = jnp.clip(jnp.min(idx00, axis=-1), 0, HW - 1) // tile_q
    ks_hi = jnp.minimum(
        jnp.clip(jnp.max(idx11, axis=-1), 0, HW - 1) // tile_q + 1, n_strips)
    ks_lo = ks_lo.astype(jnp.int32).reshape(-1)                # (N*T*n_strips,)
    ks_hi = ks_hi.astype(jnp.int32).reshape(-1)

    # Per-t coordinate blocks: (N, T, 2*n_strips, tile_q), x planes then y.
    coords = coords.reshape(N, T, 2 * n_strips, tile_q)

    kernel = functools.partial(_multiwarp_kernel, height=H, width=W,
                               tile_q=tile_q, n_strips=n_strips, num_steps=T,
                               mxu_precision=mxu_precision)

    # ---- explicit VMEM budget (C sublane-padded to 8, inputs/outputs
    # double-buffered by the pipeline, plus in-kernel temporaries). ----------
    c_pad = -(-C // 8) * 8
    coord_rows = -(-(2 * n_strips) // 8) * 8
    img_block_b = n_strips * c_pad * tile_q * 4
    coord_block_b = coord_rows * tile_q * 4
    block_bytes = (2 * img_block_b        # input image buffers
                   + 2 * coord_block_b    # per-t coordinate buffers
                   + 2 * img_block_b      # output carry buffers
                   + img_block_b          # ping-pong scratch
                   + 8 * tile_q * tile_q * 4)  # iota + one-hot temporaries
    vmem_limit = int(min(max(2 * block_bytes, 32 << 20), 100 << 20))

    grid_spec = pltpu.PrefetchScalarGridSpec(
        num_scalar_prefetch=2,            # ks_lo, ks_hi window tables (SMEM)
        grid=(N, T),
        in_specs=[
            # Image fetched once per batch element (block index constant in t).
            pl.BlockSpec((1, n_strips, C, tile_q),
                         lambda b, t, lo, hi: (b, 0, 0, 0)),
            # Coordinates fetched per time step; reversal folded in here.
            pl.BlockSpec((1, 1, 2 * n_strips, tile_q),
                         lambda b, t, lo, hi: (b, T - 1 - t, 0, 0)),
        ],
        # Output block resident in VMEM across t: one half of the warp carry.
        out_specs=pl.BlockSpec((1, n_strips, C, tile_q),
                               lambda b, t, lo, hi: (b, 0, 0, 0)),
        scratch_shapes=[
            pltpu.VMEM((n_strips, C, tile_q), jnp.float32),  # ping-pong buffer
        ],
    )

    out = pl.pallas_call(
        kernel,
        out_shape=jax.ShapeDtypeStruct((N, n_strips, C, tile_q), jnp.float32),
        grid_spec=grid_spec,
        compiler_params=pltpu.CompilerParams(
            dimension_semantics=("parallel", "arbitrary"),
            vmem_limit_bytes=vmem_limit),
    )(ks_lo, ks_hi, img_strips, coords)

    return out.transpose(0, 2, 1, 3).reshape(N, C, H, W).astype(img.dtype)


# ---------------- pure-JAX reference (mirrors torch.nn.functional.grid_sample)
def _ref_backwarp(img, flow):
    N, C, H, W = img.shape
    row = jnp.arange(H, dtype=jnp.float32)[:, None]
    col = jnp.arange(W, dtype=jnp.float32)[None, :]
    u, v = flow[:, 0], flow[:, 1]
    src_x = col[None] + u - 0.5
    src_y = row[None] + v - 0.5
    x0f = jnp.floor(src_x)
    y0f = jnp.floor(src_y)
    wx, wy = src_x - x0f, src_y - y0f
    x0 = x0f.astype(jnp.int32)
    y0 = y0f.astype(jnp.int32)
    x1, y1 = x0 + 1, y0 + 1

    def tap(yi, xi, w):
        valid = ((xi >= 0) & (xi < W) & (yi >= 0) & (yi < H)).astype(jnp.float32)
        yc = jnp.clip(yi, 0, H - 1)
        xc = jnp.clip(xi, 0, W - 1)
        vals = jax.vmap(lambda im, yb, xb: im[:, yb, xb])(img, yc, xc)
        return vals * (w * valid)[:, None, :, :]

    return (tap(y0, x0, (1 - wy) * (1 - wx)) + tap(y0, x1, (1 - wy) * wx)
            + tap(y1, x0, wy * (1 - wx)) + tap(y1, x1, wy * wx))


def _ref_multi_warp(img, flows):
    for i in reversed(range(flows.shape[1])):
        img = _ref_backwarp(img, flows[:, i])
    return img


if __name__ == "__main__":
    N, C, H, W, T = 2, 4, 16, 16, 3
    key = jax.random.PRNGKey(0)
    k_img, k_flow = jax.random.split(key)
    img = jax.random.normal(k_img, (N, C, H, W), dtype=jnp.float32)
    flows = 2.0 * jax.random.normal(k_flow, (N, T, 2, H, W), dtype=jnp.float32)

    ref = _ref_multi_warp(img, flows)

    # Default strip size (HW = 256 -> tile_q = 256, single strip).  T = 3
    # exercises the out->ping->out ping-pong path.
    out = jax.block_until_ready(multi_warp(img, flows))
    assert out.shape == ref.shape == (N, C, H, W)
    assert jnp.allclose(out, ref, atol=1e-3, rtol=1e-3), \
        f"max abs err {jnp.max(jnp.abs(out - ref))}"

    # Smaller strips (tile_q = 128, n_strips = 2) to exercise the windowed
    # two-level strip loops and dynamic leading-dim indexing.
    out2 = jax.block_until_ready(multi_warp(img, flows, tile_q=128))
    assert jnp.allclose(out2, ref, atol=1e-3, rtol=1e-3), \
        f"max abs err {jnp.max(jnp.abs(out2 - ref))}"

    # T = 2 (first step writes the scratch buffer) and T = 1 (single step).
    for tcut in (2, 1):
        ref_t = _ref_multi_warp(img, flows[:, :tcut])
        out_t = jax.block_until_ready(multi_warp(img, flows[:, :tcut]))
        assert jnp.allclose(out_t, ref_t, atol=1e-3, rtol=1e-3), \
            f"T={tcut}: max abs err {jnp.max(jnp.abs(out_t - ref_t))}"

    print("KERNEL_OK")
</pallas_src>

<mosaic_0001>
module attributes {stable_mosaic.version = 11 : i64} {
  func.func @_multiwarp_kernel(%arg0: i32, %arg1: i32, %arg2: memref<6xi32, #tpu.memory_space<smem>>, %arg3: memref<6xi32, #tpu.memory_space<smem>>, %arg4: memref<1x1x4x256xf32, #tpu.memory_space<vmem>>, %arg5: memref<1x1x2x256xf32, #tpu.memory_space<vmem>>, %arg6: memref<1x1x4x256xf32, #tpu.memory_space<vmem>>, %arg7: memref<1x4x256xf32, #tpu.memory_space<vmem>>) attributes {dimension_semantics = [#tpu.dimension_semantics<parallel>, #tpu.dimension_semantics<arbitrary>], iteration_bounds = array<i64: 2, 3>, scalar_prefetch = 2 : i64, scratch_operands = 1 : i64, tpu.core_type = #tpu.core_type<tc>, window_params = [{transform_indices = @transform_0, window_bounds = array<i64: 1, 1, 4, 256>}, {transform_indices = @transform_1, window_bounds = array<i64: 1, 1, 2, 256>}, {transform_indices = @transform_2, window_bounds = array<i64: 1, 1, 4, 256>}]} {
    %c2_i32 = arith.constant 2 : i32
    %0 = arith.subi %c2_i32, %arg1 : i32
    %c3_i32 = arith.constant 3 : i32
    %1 = arith.muli %arg0, %c3_i32 : i32
    %2 = arith.addi %1, %0 : i32
    %c1_i32 = arith.constant 1 : i32
    %3 = arith.muli %2, %c1_i32 : i32
    %4 = tpu.iota {dimensions = array<i32: 0>} : vector<256x256xi32>
    %c0_i32 = arith.constant 0 : i32
    %5 = arith.cmpi eq, %arg1, %c0_i32 : i32
    %6 = arith.extui %5 : i1 to i32
    %c0_i32_0 = arith.constant 0 : i32
    %7 = arith.cmpi ne, %6, %c0_i32_0 : i32
    scf.if %7 {
      %c0_i32_21 = arith.constant 0 : i32
      %c0 = arith.constant 0 : index
      %c0_22 = arith.constant 0 : index
      %40 = arith.index_cast %c0_i32_21 : i32 to index
      %c0_23 = arith.constant 0 : index
      %41 = vector.load %arg5[%c0, %c0_22, %40, %c0_23] : memref<1x1x2x256xf32, #tpu.memory_space<vmem>>, vector<1x1x1x256xf32>
      %42 = vector.shape_cast %41 : vector<1x1x1x256xf32> to vector<1x256xf32>
      %c1_i32_24 = arith.constant 1 : i32
      %43 = arith.addi %c1_i32_24, %c0_i32_21 : i32
      %c0_25 = arith.constant 0 : index
      %c0_26 = arith.constant 0 : index
      %44 = arith.index_cast %43 : i32 to index
      %c0_27 = arith.constant 0 : index
      %45 = vector.load %arg5[%c0_25, %c0_26, %44, %c0_27] : memref<1x1x2x256xf32, #tpu.memory_space<vmem>>, vector<1x1x1x256xf32>
      %46 = vector.shape_cast %45 : vector<1x1x1x256xf32> to vector<1x256xf32>
      %47 = math.floor %42 : vector<1x256xf32>
      %48 = math.floor %46 : vector<1x256xf32>
      %49 = arith.subf %42, %47 : vector<1x256xf32>
      %50 = arith.subf %46, %48 : vector<1x256xf32>
      %51 = arith.fptosi %47 : vector<1x256xf32> to vector<1x256xi32>
      %52 = arith.fptosi %48 : vector<1x256xf32> to vector<1x256xi32>
      %c1_i32_28 = arith.constant 1 : i32
      %53 = vector.broadcast %c1_i32_28 : i32 to vector<1x256xi32>
      %54 = arith.addi %51, %53 : vector<1x256xi32>
      %c1_i32_29 = arith.constant 1 : i32
      %55 = vector.broadcast %c1_i32_29 : i32 to vector<1x256xi32>
      %56 = arith.addi %52, %55 : vector<1x256xi32>
      %cst = arith.constant 1.000000e+00 : f32
      %57 = vector.broadcast %cst : f32 to vector<1x256xf32>
      %58 = arith.subf %57, %50 : vector<1x256xf32>
      %cst_30 = arith.constant 1.000000e+00 : f32
      %59 = vector.broadcast %cst_30 : f32 to vector<1x256xf32>
      %60 = arith.subf %59, %49 : vector<1x256xf32>
      %61 = arith.mulf %58, %60 : vector<1x256xf32>
      %cst_31 = arith.constant 1.000000e+00 : f32
      %62 = vector.broadcast %cst_31 : f32 to vector<1x256xf32>
      %63 = arith.subf %62, %50 : vector<1x256xf32>
      %64 = arith.mulf %63, %49 : vector<1x256xf32>
      %cst_32 = arith.constant 1.000000e+00 : f32
      %65 = vector.broadcast %cst_32 : f32 to vector<1x256xf32>
      %66 = arith.subf %65, %49 : vector<1x256xf32>
      %67 = arith.mulf %50, %66 : vector<1x256xf32>
      %68 = arith.mulf %50, %49 : vector<1x256xf32>
      %c0_i32_33 = arith.constant 0 : i32
      %69 = vector.broadcast %c0_i32_33 : i32 to vector<1x256xi32>
      %70 = arith.cmpi sge, %51, %69 : vector<1x256xi32>
      %c16_i32 = arith.constant 16 : i32
      %71 = vector.broadcast %c16_i32 : i32 to vector<1x256xi32>
      %72 = arith.cmpi slt, %51, %71 : vector<1x256xi32>
      %73 = arith.andi %70, %72 : vector<1x256xi1>
      %c0_i32_34 = arith.constant 0 : i32
      %74 = vector.broadcast %c0_i32_34 : i32 to vector<1x256xi32>
      %75 = arith.cmpi sge, %52, %74 : vector<1x256xi32>
      %76 = arith.andi %73, %75 : vector<1x256xi1>
      %c16_i32_35 = arith.constant 16 : i32
      %77 = vector.broadcast %c16_i32_35 : i32 to vector<1x256xi32>
      %78 = arith.cmpi slt, %52, %77 : vector<1x256xi32>
      %79 = arith.andi %76, %78 : vector<1x256xi1>
      %c16_i32_36 = arith.constant 16 : i32
      %80 = vector.broadcast %c16_i32_36 : i32 to vector<1x256xi32>
      %81 = arith.muli %52, %80 : vector<1x256xi32>
      %82 = arith.addi %81, %51 : vector<1x256xi32>
      %cst_37 = arith.constant 0.000000e+00 : f32
      %83 = vector.broadcast %cst_37 : f32 to vector<1x256xf32>
      %84 = arith.select %79, %61, %83 : vector<1x256xi1>, vector<1x256xf32>
      %c0_i32_38 = arith.constant 0 : i32
      %85 = vector.broadcast %c0_i32_38 : i32 to vector<1x256xi32>
      %86 = arith.cmpi sge, %54, %85 : vector<1x256xi32>
      %c16_i32_39 = arith.constant 16 : i32
      %87 = vector.broadcast %c16_i32_39 : i32 to vector<1x256xi32>
      %88 = arith.cmpi slt, %54, %87 : vector<1x256xi32>
      %89 = arith.andi %86, %88 : vector<1x256xi1>
      %c0_i32_40 = arith.constant 0 : i32
      %90 = vector.broadcast %c0_i32_40 : i32 to vector<1x256xi32>
      %91 = arith.cmpi sge, %52, %90 : vector<1x256xi32>
      %92 = arith.andi %89, %91 : vector<1x256xi1>
      %c16_i32_41 = arith.constant 16 : i32
      %93 = vector.broadcast %c16_i32_41 : i32 to vector<1x256xi32>
      %94 = arith.cmpi slt, %52, %93 : vector<1x256xi32>
      %95 = arith.andi %92, %94 : vector<1x256xi1>
      %c16_i32_42 = arith.constant 16 : i32
      %96 = vector.broadcast %c16_i32_42 : i32 to vector<1x256xi32>
      %97 = arith.muli %52, %96 : vector<1x256xi32>
      %98 = arith.addi %97, %54 : vector<1x256xi32>
      %cst_43 = arith.constant 0.000000e+00 : f32
      %99 = vector.broadcast %cst_43 : f32 to vector<1x256xf32>
      %100 = arith.select %95, %64, %99 : vector<1x256xi1>, vector<1x256xf32>
      %c0_i32_44 = arith.constant 0 : i32
      %101 = vector.broadcast %c0_i32_44 : i32 to vector<1x256xi32>
      %102 = arith.cmpi sge, %51, %101 : vector<1x256xi32>
      %c16_i32_45 = arith.constant 16 : i32
      %103 = vector.broadcast %c16_i32_45 : i32 to vector<1x256xi32>
      %104 = arith.cmpi slt, %51, %103 : vector<1x256xi32>
      %105 = arith.andi %102, %104 : vector<1x256xi1>
      %c0_i32_46 = arith.constant 0 : i32
      %106 = vector.broadcast %c0_i32_46 : i32 to vector<1x256xi32>
      %107 = arith.cmpi sge, %56, %106 : vector<1x256xi32>
      %108 = arith.andi %105, %107 : vector<1x256xi1>
      %c16_i32_47 = arith.constant 16 : i32
      %109 = vector.broadcast %c16_i32_47 : i32 to vector<1x256xi32>
      %110 = arith.cmpi slt, %56, %109 : vector<1x256xi32>
      %111 = arith.andi %108, %110 : vector<1x256xi1>
      %c16_i32_48 = arith.constant 16 : i32
      %112 = vector.broadcast %c16_i32_48 : i32 to vector<1x256xi32>
      %113 = arith.muli %56, %112 : vector<1x256xi32>
      %114 = arith.addi %113, %51 : vector<1x256xi32>
      %cst_49 = arith.constant 0.000000e+00 : f32
      %115 = vector.broadcast %cst_49 : f32 to vector<1x256xf32>
      %116 = arith.select %111, %67, %115 : vector<1x256xi1>, vector<1x256xf32>
      %c0_i32_50 = arith.constant 0 : i32
      %117 = vector.broadcast %c0_i32_50 : i32 to vector<1x256xi32>
      %118 = arith.cmpi sge, %54, %117 : vector<1x256xi32>
      %c16_i32_51 = arith.constant 16 : i32
      %119 = vector.broadcast %c16_i32_51 : i32 to vector<1x256xi32>
      %120 = arith.cmpi slt, %54, %119 : vector<1x256xi32>
      %121 = arith.andi %118, %120 : vector<1x256xi1>
      %c0_i32_52 = arith.constant 0 : i32
      %122 = vector.broadcast %c0_i32_52 : i32 to vector<1x256xi32>
      %123 = arith.cmpi sge, %56, %122 : vector<1x256xi32>
      %124 = arith.andi %121, %123 : vector<1x256xi1>
      %c16_i32_53 = arith.constant 16 : i32
      %125 = vector.broadcast %c16_i32_53 : i32 to vector<1x256xi32>
      %126 = arith.cmpi slt, %56, %125 : vector<1x256xi32>
      %127 = arith.andi %124, %126 : vector<1x256xi1>
      %c16_i32_54 = arith.constant 16 : i32
      %128 = vector.broadcast %c16_i32_54 : i32 to vector<1x256xi32>
      %129 = arith.muli %56, %128 : vector<1x256xi32>
      %130 = arith.addi %129, %54 : vector<1x256xi32>
      %cst_55 = arith.constant 0.000000e+00 : f32
      %131 = vector.broadcast %cst_55 : f32 to vector<1x256xf32>
      %132 = arith.select %127, %68, %131 : vector<1x256xi1>, vector<1x256xf32>
      %133 = arith.addi %3, %c0_i32_21 : i32
      %134 = arith.index_cast %133 : i32 to index
      %135 = memref.load %arg2[%134] : memref<6xi32, #tpu.memory_space<smem>>
      %136 = arith.addi %3, %c0_i32_21 : i32
      %137 = arith.index_cast %136 : i32 to index
      %138 = memref.load %arg3[%137] : memref<6xi32, #tpu.memory_space<smem>>
      %cst_56 = arith.constant 0.000000e+00 : f32
      %139 = vector.broadcast %cst_56 : f32 to vector<4x256xf32>
      %140 = arith.subi %138, %135 : i32
      %141 = arith.addi %135, %140 : i32
      %c1_i32_57 = arith.constant 1 : i32
      %142 = scf.for %arg8 = %135 to %141 step %c1_i32_57 iter_args(%arg9 = %139) -> (vector<4x256xf32>)  : i32 {
        %c256_i32 = arith.constant 256 : i32
        %147 = arith.muli %arg8, %c256_i32 : i32
        %148 = vector.broadcast %147 : i32 to vector<1x256xi32>
        %149 = arith.subi %82, %148 : vector<1x256xi32>
        %150 = vector.broadcast %149 : vector<1x256xi32> to vector<256x256xi32>
        %151 = arith.cmpi eq, %150, %4 : vector<256x256xi32>
        %cst_62 = arith.constant 0.000000e+00 : f32
        %152 = vector.shape_cast %84 : vector<1x256xf32> to vector<1x256xf32>
        %153 = vector.broadcast %152 : vector<1x256xf32> to vector<256x256xf32>
        %154 = vector.broadcast %cst_62 : f32 to vector<256x256xf32>
        %155 = arith.select %151, %153, %154 : vector<256x256xi1>, vector<256x256xf32>
        %156 = vector.broadcast %147 : i32 to vector<1x256xi32>
        %157 = arith.subi %98, %156 : vector<1x256xi32>
        %158 = vector.broadcast %157 : vector<1x256xi32> to vector<256x256xi32>
        %159 = arith.cmpi eq, %158, %4 : vector<256x256xi32>
        %cst_63 = arith.constant 0.000000e+00 : f32
        %160 = vector.shape_cast %100 : vector<1x256xf32> to vector<1x256xf32>
        %161 = vector.broadcast %160 : vector<1x256xf32> to vector<256x256xf32>
        %162 = vector.broadcast %cst_63 : f32 to vector<256x256xf32>
        %163 = arith.select %159, %161, %162 : vector<256x256xi1>, vector<256x256xf32>
        %164 = arith.addf %155, %163 : vector<256x256xf32>
        %165 = vector.broadcast %147 : i32 to vector<1x256xi32>
        %166 = arith.subi %114, %165 : vector<1x256xi32>
        %167 = vector.broadcast %166 : vector<1x256xi32> to vector<256x256xi32>
        %168 = arith.cmpi eq, %167, %4 : vector<256x256xi32>
        %cst_64 = arith.constant 0.000000e+00 : f32
        %169 = vector.shape_cast %116 : vector<1x256xf32> to vector<1x256xf32>
        %170 = vector.broadcast %169 : vector<1x256xf32> to vector<256x256xf32>
        %171 = vector.broadcast %cst_64 : f32 to vector<256x256xf32>
        %172 = arith.select %168, %170, %171 : vector<256x256xi1>, vector<256x256xf32>
        %173 = arith.addf %164, %172 : vector<256x256xf32>
        %174 = vector.broadcast %147 : i32 to vector<1x256xi32>
        %175 = arith.subi %130, %174 : vector<1x256xi32>
        %176 = vector.broadcast %175 : vector<1x256xi32> to vector<256x256xi32>
        %177 = arith.cmpi eq, %176, %4 : vector<256x256xi32>
        %cst_65 = arith.constant 0.000000e+00 : f32
        %178 = vector.shape_cast %132 : vector<1x256xf32> to vector<1x256xf32>
        %179 = vector.broadcast %178 : vector<1x256xf32> to vector<256x256xf32>
        %180 = vector.broadcast %cst_65 : f32 to vector<256x256xf32>
        %181 = arith.select %177, %179, %180 : vector<256x256xi1>, vector<256x256xf32>
        %182 = arith.addf %173, %181 : vector<256x256xf32>
        %c0_66 = arith.constant 0 : index
        %183 = arith.index_cast %arg8 : i32 to index
        %c0_67 = arith.constant 0 : index
        %c0_68 = arith.constant 0 : index
        %184 = vector.load %arg4[%c0_66, %183, %c0_67, %c0_68] : memref<1x1x4x256xf32, #tpu.memory_space<vmem>>, vector<1x1x4x256xf32>
        %185 = vector.shape_cast %184 : vector<1x1x4x256xf32> to vector<4x256xf32>
        %cst_69 = arith.constant dense<0.000000e+00> : vector<4x256xf32>
        %186 = tpu.matmul %185, %182, %cst_69 {dimension_numbers = #tpu.dot_dimension_numbers<[1], [0], [0], [1], [0, 0, 1, 1], [], []>, precision = #tpu.contract_precision<fp32>} : vector<4x256xf32>, vector<256x256xf32>, vector<4x256xf32> -> vector<4x256xf32>
        %187 = arith.addf %arg9, %186 : vector<4x256xf32>
        scf.yield %187 : vector<4x256xf32>
      }
      %c0_58 = arith.constant 0 : index
      %143 = arith.index_cast %c0_i32_21 : i32 to index
      %c0_59 = arith.constant 0 : index
      %c0_60 = arith.constant 0 : index
      %144 = vector.load %arg6[%c0_58, %143, %c0_59, %c0_60] : memref<1x1x4x256xf32, #tpu.memory_space<vmem>>, vector<1x1x4x256xf32>
      %145 = vector.shape_cast %144 : vector<1x1x4x256xf32> to vector<4x256xf32>
      %146 = vector.shape_cast %142 : vector<4x256xf32> to vector<1x1x4x256xf32>
      tpu.vector_store %arg6[%c0_58, %143, %c0_59, %c0_60], %146 {strides = array<i32>} : memref<1x1x4x256xf32, #tpu.memory_space<vmem>>, vector<1x1x4x256xf32>,
      %c1_i32_61 = arith.constant 1 : i32
    } else {
    }
    %c0_i32_1 = arith.constant 0 : i32
    %8 = arith.cmpi ne, %arg1, %c0_i32_1 : i32
    %c2_i32_2 = arith.constant 2 : i32
    %9 = arith.subi %c2_i32_2, %arg1 : i32
    %c2_i32_3 = arith.constant 2 : i32
    %c0_i32_4 = arith.constant 0 : i32
    %10 = arith.cmpi eq, %c2_i32_3, %c0_i32_4 : i32
    %c1_i32_5 = arith.constant 1 : i32
    %11 = arith.select %10, %c1_i32_5, %c2_i32_3 : i32
    %12 = arith.remsi %9, %11 : i32
    %c0_i32_6 = arith.constant 0 : i32
    %13 = arith.cmpi ne, %12, %c0_i32_6 : i32
    %c0_i32_7 = arith.constant 0 : i32
    %14 = arith.cmpi slt, %12, %c0_i32_7 : i32
    %c0_i32_8 = arith.constant 0 : i32
    %15 = arith.cmpi slt, %11, %c0_i32_8 : i32
    %16 = arith.xori %14, %15 : i1
    %17 = arith.andi %16, %13 : i1
    %18 = arith.addi %12, %11 : i32
    %19 = arith.select %17, %18, %12 : i32
    %c0_i32_9 = arith.constant 0 : i32
    %20 = arith.cmpi eq, %19, %c0_i32_9 : i32
    %21 = arith.andi %8, %20 : i1
    %22 = arith.extui %21 : i1 to i32
    %c0_i32_10 = arith.constant 0 : i32
    %23 = arith.cmpi ne, %22, %c0_i32_10 : i32
    scf.if %23 {
      %c0_i32_21 = arith.constant 0 : i32
      %c0 = arith.constant 0 : index
      %c0_22 = arith.constant 0 : index
      %40 = arith.index_cast %c0_i32_21 : i32 to index
      %c0_23 = arith.constant 0 : index
      %41 = vector.load %arg5[%c0, %c0_22, %40, %c0_23] : memref<1x1x2x256xf32, #tpu.memory_space<vmem>>, vector<1x1x1x256xf32>
      %42 = vector.shape_cast %41 : vector<1x1x1x256xf32> to vector<1x256xf32>
      %c1_i32_24 = arith.constant 1 : i32
      %43 = arith.addi %c1_i32_24, %c0_i32_21 : i32
      %c0_25 = arith.constant 0 : index
      %c0_26 = arith.constant 0 : index
      %44 = arith.index_cast %43 : i32 to index
      %c0_27 = arith.constant 0 : index
      %45 = vector.load %arg5[%c0_25, %c0_26, %44, %c0_27] : memref<1x1x2x256xf32, #tpu.memory_space<vmem>>, vector<1x1x1x256xf32>
      %46 = vector.shape_cast %45 : vector<1x1x1x256xf32> to vector<1x256xf32>
      %47 = math.floor %42 : vector<1x256xf32>
      %48 = math.floor %46 : vector<1x256xf32>
      %49 = arith.subf %42, %47 : vector<1x256xf32>
      %50 = arith.subf %46, %48 : vector<1x256xf32>
      %51 = arith.fptosi %47 : vector<1x256xf32> to vector<1x256xi32>
      %52 = arith.fptosi %48 : vector<1x256xf32> to vector<1x256xi32>
      %c1_i32_28 = arith.constant 1 : i32
      %53 = vector.broadcast %c1_i32_28 : i32 to vector<1x256xi32>
      %54 = arith.addi %51, %53 : vector<1x256xi32>
      %c1_i32_29 = arith.constant 1 : i32
      %55 = vector.broadcast %c1_i32_29 : i32 to vector<1x256xi32>
      %56 = arith.addi %52, %55 : vector<1x256xi32>
      %cst = arith.constant 1.000000e+00 : f32
      %57 = vector.broadcast %cst : f32 to vector<1x256xf32>
      %58 = arith.subf %57, %50 : vector<1x256xf32>
      %cst_30 = arith.constant 1.000000e+00 : f32
      %59 = vector.broadcast %cst_30 : f32 to vector<1x256xf32>
      %60 = arith.subf %59, %49 : vector<1x256xf32>
      %61 = arith.mulf %58, %60 : vector<1x256xf32>
      %cst_31 = arith.constant 1.000000e+00 : f32
      %62 = vector.broadcast %cst_31 : f32 to vector<1x256xf32>
      %63 = arith.subf %62, %50 : vector<1x256xf32>
      %64 = arith.mulf %63, %49 : vector<1x256xf32>
      %cst_32 = arith.constant 1.000000e+00 : f32
      %65 = vector.broadcast %cst_32 : f32 to vector<1x256xf32>
      %66 = arith.subf %65, %49 : vector<1x256xf32>
      %67 = arith.mulf %50, %66 : vector<1x256xf32>
      %68 = arith.mulf %50, %49 : vector<1x256xf32>
      %c0_i32_33 = arith.constant 0 : i32
      %69 = vector.broadcast %c0_i32_33 : i32 to vector<1x256xi32>
      %70 = arith.cmpi sge, %51, %69 : vector<1x256xi32>
      %c16_i32 = arith.constant 16 : i32
      %71 = vector.broadcast %c16_i32 : i32 to vector<1x256xi32>
      %72 = arith.cmpi slt, %51, %71 : vector<1x256xi32>
      %73 = arith.andi %70, %72 : vector<1x256xi1>
      %c0_i32_34 = arith.constant 0 : i32
      %74 = vector.broadcast %c0_i32_34 : i32 to vector<1x256xi32>
      %75 = arith.cmpi sge, %52, %74 : vector<1x256xi32>
      %76 = arith.andi %73, %75 : vector<1x256xi1>
      %c16_i32_35 = arith.constant 16 : i32
      %77 = vector.broadcast %c16_i32_35 : i32 to vector<1x256xi32>
      %78 = arith.cmpi slt, %52, %77 : vector<1x256xi32>
      %79 = arith.andi %76, %78 : vector<1x256xi1>
      %c16_i32_36 = arith.constant 16 : i32
      %80 = vector.broadcast %c16_i32_36 : i32 to vector<1x256xi32>
      %81 = arith.muli %52, %80 : vector<1x256xi32>
      %82 = arith.addi %81, %51 : vector<1x256xi32>
      %cst_37 = arith.constant 0.000000e+00 : f32
      %83 = vector.broadcast %cst_37 : f32 to vector<1x256xf32>
      %84 = arith.select %79, %61, %83 : vector<1x256xi1>, vector<1x256xf32>
      %c0_i32_38 = arith.constant 0 : i32
      %85 = vector.broadcast %c0_i32_38 : i32 to vector<1x256xi32>
      %86 = arith.cmpi sge, %54, %85 : vector<1x256xi32>
      %c16_i32_39 = arith.constant 16 : i32
      %87 = vector.broadcast %c16_i32_39 : i32 to vector<1x256xi32>
      %88 = arith.cmpi slt, %54, %87 : vector<1x256xi32>
      %89 = arith.andi %86, %88 : vector<1x256xi1>
      %c0_i32_40 = arith.constant 0 : i32
      %90 = vector.broadcast %c0_i32_40 : i32 to vector<1x256xi32>
      %91 = arith.cmpi sge, %52, %90 : vector<1x256xi32>
      %92 = arith.andi %89, %91 : vector<1x256xi1>
      %c16_i32_41 = arith.constant 16 : i32
      %93 = vector.broadcast %c16_i32_41 : i32 to vector<1x256xi32>
      %94 = arith.cmpi slt, %52, %93 : vector<1x256xi32>
      %95 = arith.andi %92, %94 : vector<1x256xi1>
      %c16_i32_42 = arith.constant 16 : i32
      %96 = vector.broadcast %c16_i32_42 : i32 to vector<1x256xi32>
      %97 = arith.muli %52, %96 : vector<1x256xi32>
      %98 = arith.addi %97, %54 : vector<1x256xi32>
      %cst_43 = arith.constant 0.000000e+00 : f32
      %99 = vector.broadcast %cst_43 : f32 to vector<1x256xf32>
      %100 = arith.select %95, %64, %99 : vector<1x256xi1>, vector<1x256xf32>
      %c0_i32_44 = arith.constant 0 : i32
      %101 = vector.broadcast %c0_i32_44 : i32 to vector<1x256xi32>
      %102 = arith.cmpi sge, %51, %101 : vector<1x256xi32>
      %c16_i32_45 = arith.constant 16 : i32
      %103 = vector.broadcast %c16_i32_45 : i32 to vector<1x256xi32>
      %104 = arith.cmpi slt, %51, %103 : vector<1x256xi32>
      %105 = arith.andi %102, %104 : vector<1x256xi1>
      %c0_i32_46 = arith.constant 0 : i32
      %106 = vector.broadcast %c0_i32_46 : i32 to vector<1x256xi32>
      %107 = arith.cmpi sge, %56, %106 : vector<1x256xi32>
      %108 = arith.andi %105, %107 : vector<1x256xi1>
      %c16_i32_47 = arith.constant 16 : i32
      %109 = vector.broadcast %c16_i32_47 : i32 to vector<1x256xi32>
      %110 = arith.cmpi slt, %56, %109 : vector<1x256xi32>
      %111 = arith.andi %108, %110 : vector<1x256xi1>
      %c16_i32_48 = arith.constant 16 : i32
      %112 = vector.broadcast %c16_i32_48 : i32 to vector<1x256xi32>
      %113 = arith.muli %56, %112 : vector<1x256xi32>
      %114 = arith.addi %113, %51 : vector<1x256xi32>
      %cst_49 = arith.constant 0.000000e+00 : f32
      %115 = vector.broadcast %cst_49 : f32 to vector<1x256xf32>
      %116 = arith.select %111, %67, %115 : vector<1x256xi1>, vector<1x256xf32>
      %c0_i32_50 = arith.constant 0 : i32
      %117 = vector.broadcast %c0_i32_50 : i32 to vector<1x256xi32>
      %118 = arith.cmpi sge, %54, %117 : vector<1x256xi32>
      %c16_i32_51 = arith.constant 16 : i32
      %119 = vector.broadcast %c16_i32_51 : i32 to vector<1x256xi32>
      %120 = arith.cmpi slt, %54, %119 : vector<1x256xi32>
      %121 = arith.andi %118, %120 : vector<1x256xi1>
      %c0_i32_52 = arith.constant 0 : i32
      %122 = vector.broadcast %c0_i32_52 : i32 to vector<1x256xi32>
      %123 = arith.cmpi sge, %56, %122 : vector<1x256xi32>
      %124 = arith.andi %121, %123 : vector<1x256xi1>
      %c16_i32_53 = arith.constant 16 : i32
      %125 = vector.broadcast %c16_i32_53 : i32 to vector<1x256xi32>
      %126 = arith.cmpi slt, %56, %125 : vector<1x256xi32>
      %127 = arith.andi %124, %126 : vector<1x256xi1>
      %c16_i32_54 = arith.constant 16 : i32
      %128 = vector.broadcast %c16_i32_54 : i32 to vector<1x256xi32>
      %129 = arith.muli %56, %128 : vector<1x256xi32>
      %130 = arith.addi %129, %54 : vector<1x256xi32>
      %cst_55 = arith.constant 0.000000e+00 : f32
      %131 = vector.broadcast %cst_55 : f32 to vector<1x256xf32>
      %132 = arith.select %127, %68, %131 : vector<1x256xi1>, vector<1x256xf32>
      %133 = arith.addi %3, %c0_i32_21 : i32
      %134 = arith.index_cast %133 : i32 to index
      %135 = memref.load %arg2[%134] : memref<6xi32, #tpu.memory_space<smem>>
      %136 = arith.addi %3, %c0_i32_21 : i32
      %137 = arith.index_cast %136 : i32 to index
      %138 = memref.load %arg3[%137] : memref<6xi32, #tpu.memory_space<smem>>
      %cst_56 = arith.constant 0.000000e+00 : f32
      %139 = vector.broadcast %cst_56 : f32 to vector<4x256xf32>
      %140 = arith.subi %138, %135 : i32
      %141 = arith.addi %135, %140 : i32
      %c1_i32_57 = arith.constant 1 : i32
      %142 = scf.for %arg8 = %135 to %141 step %c1_i32_57 iter_args(%arg9 = %139) -> (vector<4x256xf32>)  : i32 {
        %c256_i32 = arith.constant 256 : i32
        %147 = arith.muli %arg8, %c256_i32 : i32
        %148 = vector.broadcast %147 : i32 to vector<1x256xi32>
        %149 = arith.subi %82, %148 : vector<1x256xi32>
        %150 = vector.broadcast %149 : vector<1x256xi32> to vector<256x256xi32>
        %151 = arith.cmpi eq, %150, %4 : vector<256x256xi32>
        %cst_62 = arith.constant 0.000000e+00 : f32
        %152 = vector.shape_cast %84 : vector<1x256xf32> to vector<1x256xf32>
        %153 = vector.broadcast %152 : vector<1x256xf32> to vector<256x256xf32>
        %154 = vector.broadcast %cst_62 : f32 to vector<256x256xf32>
        %155 = arith.select %151, %153, %154 : vector<256x256xi1>, vector<256x256xf32>
        %156 = vector.broadcast %147 : i32 to vector<1x256xi32>
        %157 = arith.subi %98, %156 : vector<1x256xi32>
        %158 = vector.broadcast %157 : vector<1x256xi32> to vector<256x256xi32>
        %159 = arith.cmpi eq, %158, %4 : vector<256x256xi32>
        %cst_63 = arith.constant 0.000000e+00 : f32
        %160 = vector.shape_cast %100 : vector<1x256xf32> to vector<1x256xf32>
        %161 = vector.broadcast %160 : vector<1x256xf32> to vector<256x256xf32>
        %162 = vector.broadcast %cst_63 : f32 to vector<256x256xf32>
        %163 = arith.select %159, %161, %162 : vector<256x256xi1>, vector<256x256xf32>
        %164 = arith.addf %155, %163 : vector<256x256xf32>
        %165 = vector.broadcast %147 : i32 to vector<1x256xi32>
        %166 = arith.subi %114, %165 : vector<1x256xi32>
        %167 = vector.broadcast %166 : vector<1x256xi32> to vector<256x256xi32>
        %168 = arith.cmpi eq, %167, %4 : vector<256x256xi32>
        %cst_64 = arith.constant 0.000000e+00 : f32
        %169 = vector.shape_cast %116 : vector<1x256xf32> to vector<1x256xf32>
        %170 = vector.broadcast %169 : vector<1x256xf32> to vector<256x256xf32>
        %171 = vector.broadcast %cst_64 : f32 to vector<256x256xf32>
        %172 = arith.select %168, %170, %171 : vector<256x256xi1>, vector<256x256xf32>
        %173 = arith.addf %164, %172 : vector<256x256xf32>
        %174 = vector.broadcast %147 : i32 to vector<1x256xi32>
        %175 = arith.subi %130, %174 : vector<1x256xi32>
        %176 = vector.broadcast %175 : vector<1x256xi32> to vector<256x256xi32>
        %177 = arith.cmpi eq, %176, %4 : vector<256x256xi32>
        %cst_65 = arith.constant 0.000000e+00 : f32
        %178 = vector.shape_cast %132 : vector<1x256xf32> to vector<1x256xf32>
        %179 = vector.broadcast %178 : vector<1x256xf32> to vector<256x256xf32>
        %180 = vector.broadcast %cst_65 : f32 to vector<256x256xf32>
        %181 = arith.select %177, %179, %180 : vector<256x256xi1>, vector<256x256xf32>
        %182 = arith.addf %173, %181 : vector<256x256xf32>
        %183 = arith.index_cast %arg8 : i32 to index
        %c0_66 = arith.constant 0 : index
        %c0_67 = arith.constant 0 : index
        %184 = vector.load %arg7[%183, %c0_66, %c0_67] : memref<1x4x256xf32, #tpu.memory_space<vmem>>, vector<1x4x256xf32>
        %185 = vector.shape_cast %184 : vector<1x4x256xf32> to vector<4x256xf32>
        %cst_68 = arith.constant dense<0.000000e+00> : vector<4x256xf32>
        %186 = tpu.matmul %185, %182, %cst_68 {dimension_numbers = #tpu.dot_dimension_numbers<[1], [0], [0], [1], [0, 0, 1, 1], [], []>, precision = #tpu.contract_precision<fp32>} : vector<4x256xf32>, vector<256x256xf32>, vector<4x256xf32> -> vector<4x256xf32>
        %187 = arith.addf %arg9, %186 : vector<4x256xf32>
        scf.yield %187 : vector<4x256xf32>
      }
      %c0_58 = arith.constant 0 : index
      %143 = arith.index_cast %c0_i32_21 : i32 to index
      %c0_59 = arith.constant 0 : index
      %c0_60 = arith.constant 0 : index
      %144 = vector.load %arg6[%c0_58, %143, %c0_59, %c0_60] : memref<1x1x4x256xf32, #tpu.memory_space<vmem>>, vector<1x1x4x256xf32>
      %145 = vector.shape_cast %144 : vector<1x1x4x256xf32> to vector<4x256xf32>
      %146 = vector.shape_cast %142 : vector<4x256xf32> to vector<1x1x4x256xf32>
      tpu.vector_store %arg6[%c0_58, %143, %c0_59, %c0_60], %146 {strides = array<i32>} : memref<1x1x4x256xf32, #tpu.memory_space<vmem>>, vector<1x1x4x256xf32>,
      %c1_i32_61 = arith.constant 1 : i32
    } else {
    }
    %c0_i32_11 = arith.constant 0 : i32
    %24 = arith.cmpi ne, %arg1, %c0_i32_11 : i32
    %c2_i32_12 = arith.constant 2 : i32
    %25 = arith.subi %c2_i32_12, %arg1 : i32
    %c2_i32_13 = arith.constant 2 : i32
    %c0_i32_14 = arith.constant 0 : i32
    %26 = arith.cmpi eq, %c2_i32_13, %c0_i32_14 : i32
    %c1_i32_15 = arith.constant 1 : i32
    %27 = arith.select %26, %c1_i32_15, %c2_i32_13 : i32
    %28 = arith.remsi %25, %27 : i32
    %c0_i32_16 = arith.constant 0 : i32
    %29 = arith.cmpi ne, %28, %c0_i32_16 : i32
    %c0_i32_17 = arith.constant 0 : i32
    %30 = arith.cmpi slt, %28, %c0_i32_17 : i32
    %c0_i32_18 = arith.constant 0 : i32
    %31 = arith.cmpi slt, %27, %c0_i32_18 : i32
    %32 = arith.xori %30, %31 : i1
    %33 = arith.andi %32, %29 : i1
    %34 = arith.addi %28, %27 : i32
    %35 = arith.select %33, %34, %28 : i32
    %c1_i32_19 = arith.constant 1 : i32
    %36 = arith.cmpi eq, %35, %c1_i32_19 : i32
    %37 = arith.andi %24, %36 : i1
    %38 = arith.extui %37 : i1 to i32
    %c0_i32_20 = arith.constant 0 : i32
    %39 = arith.cmpi ne, %38, %c0_i32_20 : i32
    scf.if %39 {
      %c0_i32_21 = arith.constant 0 : i32
      %c0 = arith.constant 0 : index
      %c0_22 = arith.constant 0 : index
      %40 = arith.index_cast %c0_i32_21 : i32 to index
      %c0_23 = arith.constant 0 : index
      %41 = vector.load %arg5[%c0, %c0_22, %40, %c0_23] : memref<1x1x2x256xf32, #tpu.memory_space<vmem>>, vector<1x1x1x256xf32>
      %42 = vector.shape_cast %41 : vector<1x1x1x256xf32> to vector<1x256xf32>
      %c1_i32_24 = arith.constant 1 : i32
      %43 = arith.addi %c1_i32_24, %c0_i32_21 : i32
      %c0_25 = arith.constant 0 : index
      %c0_26 = arith.constant 0 : index
      %44 = arith.index_cast %43 : i32 to index
      %c0_27 = arith.constant 0 : index
      %45 = vector.load %arg5[%c0_25, %c0_26, %44, %c0_27] : memref<1x1x2x256xf32, #tpu.memory_space<vmem>>, vector<1x1x1x256xf32>
      %46 = vector.shape_cast %45 : vector<1x1x1x256xf32> to vector<1x256xf32>
      %47 = math.floor %42 : vector<1x256xf32>
      %48 = math.floor %46 : vector<1x256xf32>
      %49 = arith.subf %42, %47 : vector<1x256xf32>
      %50 = arith.subf %46, %48 : vector<1x256xf32>
      %51 = arith.fptosi %47 : vector<1x256xf32> to vector<1x256xi32>
      %52 = arith.fptosi %48 : vector<1x256xf32> to vector<1x256xi32>
      %c1_i32_28 = arith.constant 1 : i32
      %53 = vector.broadcast %c1_i32_28 : i32 to vector<1x256xi32>
      %54 = arith.addi %51, %53 : vector<1x256xi32>
      %c1_i32_29 = arith.constant 1 : i32
      %55 = vector.broadcast %c1_i32_29 : i32 to vector<1x256xi32>
      %56 = arith.addi %52, %55 : vector<1x256xi32>
      %cst = arith.constant 1.000000e+00 : f32
      %57 = vector.broadcast %cst : f32 to vector<1x256xf32>
      %58 = arith.subf %57, %50 : vector<1x256xf32>
      %cst_30 = arith.constant 1.000000e+00 : f32
      %59 = vector.broadcast %cst_30 : f32 to vector<1x256xf32>
      %60 = arith.subf %59, %49 : vector<1x256xf32>
      %61 = arith.mulf %58, %60 : vector<1x256xf32>
      %cst_31 = arith.constant 1.000000e+00 : f32
      %62 = vector.broadcast %cst_31 : f32 to vector<1x256xf32>
      %63 = arith.subf %62, %50 : vector<1x256xf32>
      %64 = arith.mulf %63, %49 : vector<1x256xf32>
      %cst_32 = arith.constant 1.000000e+00 : f32
      %65 = vector.broadcast %cst_32 : f32 to vector<1x256xf32>
      %66 = arith.subf %65, %49 : vector<1x256xf32>
      %67 = arith.mulf %50, %66 : vector<1x256xf32>
      %68 = arith.mulf %50, %49 : vector<1x256xf32>
      %c0_i32_33 = arith.constant 0 : i32
      %69 = vector.broadcast %c0_i32_33 : i32 to vector<1x256xi32>
      %70 = arith.cmpi sge, %51, %69 : vector<1x256xi32>
      %c16_i32 = arith.constant 16 : i32
      %71 = vector.broadcast %c16_i32 : i32 to vector<1x256xi32>
      %72 = arith.cmpi slt, %51, %71 : vector<1x256xi32>
      %73 = arith.andi %70, %72 : vector<1x256xi1>
      %c0_i32_34 = arith.constant 0 : i32
      %74 = vector.broadcast %c0_i32_34 : i32 to vector<1x256xi32>
      %75 = arith.cmpi sge, %52, %74 : vector<1x256xi32>
      %76 = arith.andi %73, %75 : vector<1x256xi1>
      %c16_i32_35 = arith.constant 16 : i32
      %77 = vector.broadcast %c16_i32_35 : i32 to vector<1x256xi32>
      %78 = arith.cmpi slt, %52, %77 : vector<1x256xi32>
      %79 = arith.andi %76, %78 : vector<1x256xi1>
      %c16_i32_36 = arith.constant 16 : i32
      %80 = vector.broadcast %c16_i32_36 : i32 to vector<1x256xi32>
      %81 = arith.muli %52, %80 : vector<1x256xi32>
      %82 = arith.addi %81, %51 : vector<1x256xi32>
      %cst_37 = arith.constant 0.000000e+00 : f32
      %83 = vector.broadcast %cst_37 : f32 to vector<1x256xf32>
      %84 = arith.select %79, %61, %83 : vector<1x256xi1>, vector<1x256xf32>
      %c0_i32_38 = arith.constant 0 : i32
      %85 = vector.broadcast %c0_i32_38 : i32 to vector<1x256xi32>
      %86 = arith.cmpi sge, %54, %85 : vector<1x256xi32>
      %c16_i32_39 = arith.constant 16 : i32
      %87 = vector.broadcast %c16_i32_39 : i32 to vector<1x256xi32>
      %88 = arith.cmpi slt, %54, %87 : vector<1x256xi32>
      %89 = arith.andi %86, %88 : vector<1x256xi1>
      %c0_i32_40 = arith.constant 0 : i32
      %90 = vector.broadcast %c0_i32_40 : i32 to vector<1x256xi32>
      %91 = arith.cmpi sge, %52, %90 : vector<1x256xi32>
      %92 = arith.andi %89, %91 : vector<1x256xi1>
      %c16_i32_41 = arith.constant 16 : i32
      %93 = vector.broadcast %c16_i32_41 : i32 to vector<1x256xi32>
      %94 = arith.cmpi slt, %52, %93 : vector<1x256xi32>
      %95 = arith.andi %92, %94 : vector<1x256xi1>
      %c16_i32_42 = arith.constant 16 : i32
      %96 = vector.broadcast %c16_i32_42 : i32 to vector<1x256xi32>
      %97 = arith.muli %52, %96 : vector<1x256xi32>
      %98 = arith.addi %97, %54 : vector<1x256xi32>
      %cst_43 = arith.constant 0.000000e+00 : f32
      %99 = vector.broadcast %cst_43 : f32 to vector<1x256xf32>
      %100 = arith.select %95, %64, %99 : vector<1x256xi1>, vector<1x256xf32>
      %c0_i32_44 = arith.constant 0 : i32
      %101 = vector.broadcast %c0_i32_44 : i32 to vector<1x256xi32>
      %102 = arith.cmpi sge, %51, %101 : vector<1x256xi32>
      %c16_i32_45 = arith.constant 16 : i32
      %103 = vector.broadcast %c16_i32_45 : i32 to vector<1x256xi32>
      %104 = arith.cmpi slt, %51, %103 : vector<1x256xi32>
      %105 = arith.andi %102, %104 : vector<1x256xi1>
      %c0_i32_46 = arith.constant 0 : i32
      %106 = vector.broadcast %c0_i32_46 : i32 to vector<1x256xi32>
      %107 = arith.cmpi sge, %56, %106 : vector<1x256xi32>
      %108 = arith.andi %105, %107 : vector<1x256xi1>
      %c16_i32_47 = arith.constant 16 : i32
      %109 = vector.broadcast %c16_i32_47 : i32 to vector<1x256xi32>
      %110 = arith.cmpi slt, %56, %109 : vector<1x256xi32>
      %111 = arith.andi %108, %110 : vector<1x256xi1>
      %c16_i32_48 = arith.constant 16 : i32
      %112 = vector.broadcast %c16_i32_48 : i32 to vector<1x256xi32>
      %113 = arith.muli %56, %112 : vector<1x256xi32>
      %114 = arith.addi %113, %51 : vector<1x256xi32>
      %cst_49 = arith.constant 0.000000e+00 : f32
      %115 = vector.broadcast %cst_49 : f32 to vector<1x256xf32>
      %116 = arith.select %111, %67, %115 : vector<1x256xi1>, vector<1x256xf32>
      %c0_i32_50 = arith.constant 0 : i32
      %117 = vector.broadcast %c0_i32_50 : i32 to vector<1x256xi32>
      %118 = arith.cmpi sge, %54, %117 : vector<1x256xi32>
      %c16_i32_51 = arith.constant 16 : i32
      %119 = vector.broadcast %c16_i32_51 : i32 to vector<1x256xi32>
      %120 = arith.cmpi slt, %54, %119 : vector<1x256xi32>
      %121 = arith.andi %118, %120 : vector<1x256xi1>
      %c0_i32_52 = arith.constant 0 : i32
      %122 = vector.broadcast %c0_i32_52 : i32 to vector<1x256xi32>
      %123 = arith.cmpi sge, %56, %122 : vector<1x256xi32>
      %124 = arith.andi %121, %123 : vector<1x256xi1>
      %c16_i32_53 = arith.constant 16 : i32
      %125 = vector.broadcast %c16_i32_53 : i32 to vector<1x256xi32>
      %126 = arith.cmpi slt, %56, %125 : vector<1x256xi32>
      %127 = arith.andi %124, %126 : vector<1x256xi1>
      %c16_i32_54 = arith.constant 16 : i32
      %128 = vector.broadcast %c16_i32_54 : i32 to vector<1x256xi32>
      %129 = arith.muli %56, %128 : vector<1x256xi32>
      %130 = arith.addi %129, %54 : vector<1x256xi32>
      %cst_55 = arith.constant 0.000000e+00 : f32
      %131 = vector.broadcast %cst_55 : f32 to vector<1x256xf32>
      %132 = arith.select %127, %68, %131 : vector<1x256xi1>, vector<1x256xf32>
      %133 = arith.addi %3, %c0_i32_21 : i32
      %134 = arith.index_cast %133 : i32 to index
      %135 = memref.load %arg2[%134] : memref<6xi32, #tpu.memory_space<smem>>
      %136 = arith.addi %3, %c0_i32_21 : i32
      %137 = arith.index_cast %136 : i32 to index
      %138 = memref.load %arg3[%137] : memref<6xi32, #tpu.memory_space<smem>>
      %cst_56 = arith.constant 0.000000e+00 : f32
      %139 = vector.broadcast %cst_56 : f32 to vector<4x256xf32>
      %140 = arith.subi %138, %135 : i32
      %141 = arith.addi %135, %140 : i32
      %c1_i32_57 = arith.constant 1 : i32
      %142 = scf.for %arg8 = %135 to %141 step %c1_i32_57 iter_args(%arg9 = %139) -> (vector<4x256xf32>)  : i32 {
        %c256_i32 = arith.constant 256 : i32
        %147 = arith.muli %arg8, %c256_i32 : i32
        %148 = vector.broadcast %147 : i32 to vector<1x256xi32>
        %149 = arith.subi %82, %148 : vector<1x256xi32>
        %150 = vector.broadcast %149 : vector<1x256xi32> to vector<256x256xi32>
        %151 = arith.cmpi eq, %150, %4 : vector<256x256xi32>
        %cst_61 = arith.constant 0.000000e+00 : f32
        %152 = vector.shape_cast %84 : vector<1x256xf32> to vector<1x256xf32>
        %153 = vector.broadcast %152 : vector<1x256xf32> to vector<256x256xf32>
        %154 = vector.broadcast %cst_61 : f32 to vector<256x256xf32>
        %155 = arith.select %151, %153, %154 : vector<256x256xi1>, vector<256x256xf32>
        %156 = vector.broadcast %147 : i32 to vector<1x256xi32>
        %157 = arith.subi %98, %156 : vector<1x256xi32>
        %158 = vector.broadcast %157 : vector<1x256xi32> to vector<256x256xi32>
        %159 = arith.cmpi eq, %158, %4 : vector<256x256xi32>
        %cst_62 = arith.constant 0.000000e+00 : f32
        %160 = vector.shape_cast %100 : vector<1x256xf32> to vector<1x256xf32>
        %161 = vector.broadcast %160 : vector<1x256xf32> to vector<256x256xf32>
        %162 = vector.broadcast %cst_62 : f32 to vector<256x256xf32>
        %163 = arith.select %159, %161, %162 : vector<256x256xi1>, vector<256x256xf32>
        %164 = arith.addf %155, %163 : vector<256x256xf32>
        %165 = vector.broadcast %147 : i32 to vector<1x256xi32>
        %166 = arith.subi %114, %165 : vector<1x256xi32>
        %167 = vector.broadcast %166 : vector<1x256xi32> to vector<256x256xi32>
        %168 = arith.cmpi eq, %167, %4 : vector<256x256xi32>
        %cst_63 = arith.constant 0.000000e+00 : f32
        %169 = vector.shape_cast %116 : vector<1x256xf32> to vector<1x256xf32>
        %170 = vector.broadcast %169 : vector<1x256xf32> to vector<256x256xf32>
        %171 = vector.broadcast %cst_63 : f32 to vector<256x256xf32>
        %172 = arith.select %168, %170, %171 : vector<256x256xi1>, vector<256x256xf32>
        %173 = arith.addf %164, %172 : vector<256x256xf32>
        %174 = vector.broadcast %147 : i32 to vector<1x256xi32>
        %175 = arith.subi %130, %174 : vector<1x256xi32>
        %176 = vector.broadcast %175 : vector<1x256xi32> to vector<256x256xi32>
        %177 = arith.cmpi eq, %176, %4 : vector<256x256xi32>
        %cst_64 = arith.constant 0.000000e+00 : f32
        %178 = vector.shape_cast %132 : vector<1x256xf32> to vector<1x256xf32>
        %179 = vector.broadcast %178 : vector<1x256xf32> to vector<256x256xf32>
        %180 = vector.broadcast %cst_64 : f32 to vector<256x256xf32>
        %181 = arith.select %177, %179, %180 : vector<256x256xi1>, vector<256x256xf32>
        %182 = arith.addf %173, %181 : vector<256x256xf32>
        %c0_65 = arith.constant 0 : index
        %183 = arith.index_cast %arg8 : i32 to index
        %c0_66 = arith.constant 0 : index
        %c0_67 = arith.constant 0 : index
        %184 = vector.load %arg6[%c0_65, %183, %c0_66, %c0_67] : memref<1x1x4x256xf32, #tpu.memory_space<vmem>>, vector<1x1x4x256xf32>
        %185 = vector.shape_cast %184 : vector<1x1x4x256xf32> to vector<4x256xf32>
        %cst_68 = arith.constant dense<0.000000e+00> : vector<4x256xf32>
        %186 = tpu.matmul %185, %182, %cst_68 {dimension_numbers = #tpu.dot_dimension_numbers<[1], [0], [0], [1], [0, 0, 1, 1], [], []>, precision = #tpu.contract_precision<fp32>} : vector<4x256xf32>, vector<256x256xf32>, vector<4x256xf32> -> vector<4x256xf32>
        %187 = arith.addf %arg9, %186 : vector<4x256xf32>
        scf.yield %187 : vector<4x256xf32>
      }
      %143 = arith.index_cast %c0_i32_21 : i32 to index
      %c0_58 = arith.constant 0 : index
      %c0_59 = arith.constant 0 : index
      %144 = vector.load %arg7[%143, %c0_58, %c0_59] : memref<1x4x256xf32, #tpu.memory_space<vmem>>, vector<1x4x256xf32>
      %145 = vector.shape_cast %144 : vector<1x4x256xf32> to vector<4x256xf32>
      %146 = vector.shape_cast %142 : vector<4x256xf32> to vector<1x4x256xf32>
      tpu.vector_store %arg7[%143, %c0_58, %c0_59], %146 {strides = array<i32>} : memref<1x4x256xf32, #tpu.memory_space<vmem>>, vector<1x4x256xf32>,
      %c1_i32_60 = arith.constant 1 : i32
    } else {
    }
    return
  }
  func.func @transform_0(%arg0: i32, %arg1: i32, %arg2: memref<6xi32, #tpu.memory_space<smem>>, %arg3: memref<6xi32, #tpu.memory_space<smem>>) -> (i32, i32, i32, i32) {
    %c0_i32 = arith.constant 0 : i32
    %c0_i32_0 = arith.constant 0 : i32
    %c0_i32_1 = arith.constant 0 : i32
    %c0_i32_2 = arith.constant 0 : i32
    return %arg0, %c0_i32, %c0_i32_0, %c0_i32_1 : i32, i32, i32, i32
  }
  func.func @transform_1(%arg0: i32, %arg1: i32, %arg2: memref<6xi32, #tpu.memory_space<smem>>, %arg3: memref<6xi32, #tpu.memory_space<smem>>) -> (i32, i32, i32, i32) {
    %c2_i32 = arith.constant 2 : i32
    %0 = arith.subi %c2_i32, %arg1 : i32
    %c0_i32 = arith.constant 0 : i32
    %c0_i32_0 = arith.constant 0 : i32
    %c0_i32_1 = arith.constant 0 : i32
    return %arg0, %0, %c0_i32, %c0_i32_0 : i32, i32, i32, i32
  }
  func.func @transform_2(%arg0: i32, %arg1: i32, %arg2: memref<6xi32, #tpu.memory_space<smem>>, %arg3: memref<6xi32, #tpu.memory_space<smem>>) -> (i32, i32, i32, i32) {
    %c0_i32 = arith.constant 0 : i32
    %c0_i32_0 = arith.constant 0 : i32
    %c0_i32_1 = arith.constant 0 : i32
    %c0_i32_2 = arith.constant 0 : i32
    return %arg0, %c0_i32, %c0_i32_0, %c0_i32_1 : i32, i32, i32, i32
  }
}

</mosaic_0001>

<llo_original>
// kernel: tpu_custom_call.1
$region0: #{tpu_custom_call.1}
  #allocation0 [shape = 'u32[]', space=smem, size = 0x4, offset = 0x4, fixed_abs, tag = 'smem constant byte address 0x4 - core index']
  #allocation1 [shape = 'u32[144,128]{1,0:T(1,128)}', space=vmem, size = 0x12000, scoped, tag = 'internal scratch']
  #allocation2 [shape = 'f32[1,4,256]{2,1,0:T(4,128)}', space=vmem, size = 0x1000, scoped, tag = 'scratch operand']
  #allocation3 [shape = 's32[1]{0}', space=sflag, size = 0x4, scoped, tag = 'scoped memory for tpu_custom_call.1']
  #allocation4 [shape = 'u8[512]{0}', space=smem, size = 0x200, scoped, tag = 'prefetched SMEM operand 0']
  #allocation5 [shape = 'u8[512]{0}', space=smem, size = 0x200, scoped, tag = 'prefetched SMEM operand 1']
  %s0 = inlined_call_operand.hbm [shape: s32[6], index: 0, kind: input, shape index: {}]
  %s1 = inlined_call_operand.vmem [shape: s32[6], index: 1, kind: input, shape index: {}]
  %s2 = inlined_call_operand.hbm [shape: f32[2,1,4,256], index: 2, kind: input, shape index: {}]
  %s3 = inlined_call_operand.hbm [shape: f32[2,3,2,256], index: 3, kind: input, shape index: {}]
  %s4 = inlined_call_operand.hbm [shape: f32[2,1,4,256], index: 4, kind: output, shape index: {}]
  %s5 = sld [smem:[#allocation0]]
  $region82: #{tpu_custom_call.1} parent=0
    _
  %s7 = ssub.s32 1, %s5
  %s8 = scalar_select 0, %s7, %s5
  %10 = dma.hbm_to_smem %s0, 16, [#allocation4], [#allocation3]
  %s11 = sshll.u32 %s1, 4
  %s12 = int_to_ptr.vmem [resolvable:$true] %s11
  %14 = dma.vmem_to_smem %s12, 16, [#allocation5], [#allocation3]
  %15 = dma.done [#allocation3], 32
  %16 = sfence
  $region1: #{tpu_custom_call.1} parent=0
    #allocation6 [shape = 'u8[8192]{0}', space=vmem, size = 0x2000, scoped, tag = 'input window, operand 2']
    #allocation7 [shape = 's32[2]{0}', space=sflag, size = 0x8, scoped, tag = 'scoped memory for tpu_custom_call.1']
    #allocation8 [shape = 's32[2]{0}', space=sflag, size = 0x8, scoped, tag = 'scoped memory for tpu_custom_call.1']
    #allocation9 [shape = 'u8[4096]{0}', space=vmem, size = 0x1000, scoped, tag = 'input window, operand 3']
    #allocation10 [shape = 's32[2]{0}', space=sflag, size = 0x8, scoped, tag = 'scoped memory for tpu_custom_call.1']
    #allocation11 [shape = 'u8[8192]{0}', space=vmem, size = 0x2000, scoped, tag = 'output window, operand 0']
    %17 = vsyncpa [#allocation7], 0
    %s18 = scalar_lea.sflag [#allocation7], 1
    %19 = vsyncpa %s18, 0
    %20 = vsyncpa [#allocation10], 0
    %s21 = scalar_lea.sflag [#allocation10], 1
    %22 = vsyncpa %s21, 0
    %23 = vsyncpa [#allocation8], 0
    %s24 = scalar_lea.sflag [#allocation8], 1
    %25 = vsyncpa %s24, 0
    loop: start=0, step=1, limit=8
    $region2: #{tpu_custom_call.1} parent=1 // loop_pre_header
      _
    $region3: #{tpu_custom_call.1} parent=1 // loop_header
      %s27 = sphi 0, %s31
      %p28 = scmp.ge.s32.totalorder %s27, 8
      %s34 = sphi 0, %s46
      %s35 = sphi 0, %s42
      %s36 = sphi 0, %s34
      %s37 = sphi 0, %s35
      %s38 = sphi 0, %s36
      %s39 = sphi 0, %s37
      %s49 = sphi 0, %s51
      %s52 = sphi 0, %s49
      %s53 = sphi 0, %s52
      %s69 = sphi 0, %s53
      %s79 = sphi 0, %s81
      %s82 = sphi 0, %s79
      %s83 = sphi 0, %s82
      %s99 = sphi 0, %s83
      %s105 = sphi 0, %s107
      %s108 = sphi 0, %s105
      %s109 = sphi 0, %s108
      %s125 = sphi 0, %s109
    $region4: #{tpu_custom_call.1} parent=1 // loop_header_branch
      %30 = sbr.rel (%p28) target = $region8
    $region5: #{tpu_custom_call.1} parent=1 // loop_body
      %s32 = ssub.s32 %s27, 1
      %s33 = ssub.s32 %s27, 2
      %s40 = sadd.s32 1, %s35
      %p41 = scmp.ge.s32.totalorder %s40, 3
      %s42 = scalar_select %p41, 0, %s40
      %s43 = sadd.s32 1, %s34
      %s44 = scalar_select %p41, %s43, %s34
      %p45 = scmp.ge.s32.totalorder %s44, 2
      %s46 = scalar_select %p45, 0, %s44
      %s47 = ssub.s32 %s34, %s46
      %p48 = scmp.eq.s32.totalorder %s47, 0
      %s50 = sadd.s32 %s49, 1
      %s51 = scalar_select %p48, %s49, %s50
      %p54 = pneg %p48
      %p55 = scmp.eq.s32.totalorder %s27, 5
      %p56 = por %p54, %p55
      %p57 = scmp.ne.s32.totalorder %s49, %s52
      %p58 = scmp.eq.s32.totalorder %s27, 0
      %p59 = por %p57, %p58
      %p60 = scmp.ne.s32.totalorder %s49, %s52
      %p61 = scmp.eq.s32.totalorder %s32, 5
      %p62 = por %p60, %p61
      %p63 = scmp.ne.s32.totalorder %s52, %s53
      %p64 = scmp.eq.s32.totalorder %s32, 0
      %p65 = por %p63, %p64
      %p66 = scmp.ne.s32.totalorder %s52, %s53
      %p67 = scmp.eq.s32.totalorder %s33, 5
      %p68 = por %p66, %p67
      %p70 = scmp.ne.s32.totalorder %s53, %s69
      %p71 = scmp.eq.s32.totalorder %s33, 0
      %p72 = por %p70, %p71
      %s73 = ssub.s32 2, %s35
      %s74 = ssub.s32 2, %s42
      %s75 = ssub.s32 %s34, %s46
      %s76 = ssub.s32 %s73, %s74
      %s77 = sor.u32 %s75, %s76
      %p78 = scmp.eq.s32.totalorder %s77, 0
      %s80 = sadd.s32 %s79, 1
      %s81 = scalar_select %p78, %s79, %s80
      %p84 = pneg %p78
      %p85 = scmp.eq.s32.totalorder %s27, 5
      %p86 = por %p84, %p85
      %p87 = scmp.ne.s32.totalorder %s79, %s82
      %p88 = scmp.eq.s32.totalorder %s27, 0
      %p89 = por %p87, %p88
      %p90 = scmp.ne.s32.totalorder %s79, %s82
      %p91 = scmp.eq.s32.totalorder %s32, 5
      %p92 = por %p90, %p91
      %p93 = scmp.ne.s32.totalorder %s82, %s83
      %p94 = scmp.eq.s32.totalorder %s32, 0
      %p95 = por %p93, %p94
      %p96 = scmp.ne.s32.totalorder %s82, %s83
      %p97 = scmp.eq.s32.totalorder %s33, 5
      %p98 = por %p96, %p97
      %p100 = scmp.ne.s32.totalorder %s83, %s99
      %p101 = scmp.eq.s32.totalorder %s33, 0
      %p102 = por %p100, %p101
      %s103 = ssub.s32 %s34, %s46
      %p104 = scmp.eq.s32.totalorder %s103, 0
      %s106 = sadd.s32 %s105, 1
      %s107 = scalar_select %p104, %s105, %s106
      %p110 = pneg %p104
      %p111 = scmp.eq.s32.totalorder %s27, 5
      %p112 = por %p110, %p111
      %p113 = scmp.ne.s32.totalorder %s105, %s108
      %p114 = scmp.eq.s32.totalorder %s27, 0
      %p115 = por %p113, %p114
      %p116 = scmp.ne.s32.totalorder %s105, %s108
      %p117 = scmp.eq.s32.totalorder %s32, 5
      %p118 = por %p116, %p117
      %p119 = scmp.ne.s32.totalorder %s108, %s109
      %p120 = scmp.eq.s32.totalorder %s32, 0
      %p121 = por %p119, %p120
      %p122 = scmp.ne.s32.totalorder %s108, %s109
      %p123 = scmp.eq.s32.totalorder %s33, 5
      %p124 = por %p122, %p123
      %p126 = scmp.ne.s32.totalorder %s109, %s125
      %p127 = scmp.eq.s32.totalorder %s33, 0
      %p128 = por %p126, %p127
      %p129 = scmp.le.s32.totalorder 1, %s27
      %p130 = scmp.lt.s32.totalorder %s27, 7
      %p131 = pnand %p129, %p130
      %p132 = pneg %p131
      // Predicated region
      $region9: #{tpu_custom_call.1} parent=5 // pred_check
        _
      $region10: #{tpu_custom_call.1} parent=5 // pred_check_branch
        %134 = sbr.rel (%p131) target = $region12
      $region11: #{tpu_custom_call.1} parent=5 // pred_region
        %s135 = ssub.s32 %s27, 1
      $region12: #{tpu_custom_call.1} parent=5 // pred_fallthru
        _
      %p136 = scmp.lt.s32.totalorder %s27, 6
      // Predicated region
      $region13: #{tpu_custom_call.1} parent=5 // pred_check
        %p137 = pneg %p136
      $region14: #{tpu_custom_call.1} parent=5 // pred_check_branch
        %139 = sbr.rel (%p137) target = $region16
      $region15: #{tpu_custom_call.1} parent=5 // pred_region
        // Predicated region
        $region17: #{tpu_custom_call.1} parent=15 // pred_check
          %p140 = pneg %p59
        $region18: #{tpu_custom_call.1} parent=15 // pred_check_branch
          %142 = sbr.rel (%p140) target = $region20
        $region19: #{tpu_custom_call.1} parent=15 // pred_region
          %s143 = sand.u32 %s49, 1
          %s144 = scalar_lea.sflag [#allocation7], %s143
          %s145 = sand.u32 %s49, 1
          %s146 = smul.addr %s145, 8
          %s147 = scalar_lea.vmem [#allocation6], %s146
          %s149 = ssub.s32 128, 128
          %150 = vsyncadd %s144, %s149
          %s151 = smul.addr %s34, 2
          %s152 = smul.addr %s151, 64
          %s153 = scalar_lea.hbm %s2, %s152
          %s155 = sshll.u32 %s147, 4
          %s156 = int_to_ptr.vmem [resolvable:$true] %s155
          %158 = dma.hbm_to_vmem [thread:$0]  %s153, 128, %s156, %s144
        $region20: #{tpu_custom_call.1} parent=15 // pred_fallthru
          _
        // Predicated region
        $region21: #{tpu_custom_call.1} parent=15 // pred_check
          %p159 = pneg %p89
        $region22: #{tpu_custom_call.1} parent=15 // pred_check_branch
          %161 = sbr.rel (%p159) target = $region24
        $region23: #{tpu_custom_call.1} parent=15 // pred_region
          %s162 = sand.u32 %s79, 1
          %s163 = scalar_lea.sflag [#allocation10], %s162
          %s164 = sand.u32 %s79, 1
          %s165 = smul.addr %s164, 4
          %s166 = scalar_lea.vmem [#allocation9], %s165
          %s167 = ssub.s32 2, %s35
          %s169 = ssub.s32 64, 64
          %170 = vsyncadd %s163, %s169
          %s171 = smul.addr %s167, 2
          %s172 = smul.addr %s34, 6
          %s173 = sadd.s32 %s171, %s172
          %s174 = smul.addr %s173, 32
          %s175 = scalar_lea.hbm %s3, %s174
          %s177 = sshll.u32 %s166, 4
          %s178 = int_to_ptr.vmem [resolvable:$true] %s177
          %180 = dma.hbm_to_vmem [thread:$0]  %s175, 64, %s178, %s163
        $region24: #{tpu_custom_call.1} parent=15 // pred_fallthru
          _
      $region16: #{tpu_custom_call.1} parent=5 // pred_fallthru
        _
      %p181 = scmp.le.s32.totalorder 1, %s27
      %p182 = scmp.lt.s32.totalorder %s27, 7
      %p183 = pnand %p181, %p182
      %p184 = pneg %p183
      // Predicated region
      $region25: #{tpu_custom_call.1} parent=5 // pred_check
        _
      $region26: #{tpu_custom_call.1} parent=5 // pred_check_branch
        %186 = sbr.rel (%p183) target = $region28
      $region27: #{tpu_custom_call.1} parent=5 // pred_region
        %s187 = ssub.s32 %s27, 1
        %s188 = sand.u32 %s52, 1
        %s189 = scalar_lea.sflag [#allocation7], %s188
        %s190 = sand.u32 %s52, 1
        %s191 = smul.addr %s190, 8
        %s192 = scalar_lea.vmem [#allocation6], %s191
        // Predicated region
        $region29: #{tpu_custom_call.1} parent=27 // pred_check
          %p193 = pneg %p65
        $region30: #{tpu_custom_call.1} parent=27 // pred_check_branch
          %195 = sbr.rel (%p193) target = $region32
        $region31: #{tpu_custom_call.1} parent=27 // pred_region
          %196 = dma.done %s189, 128
        $region32: #{tpu_custom_call.1} parent=27 // pred_fallthru
          _
        %s197 = sand.u32 %s82, 1
        %s198 = scalar_lea.sflag [#allocation10], %s197
        %s199 = sand.u32 %s82, 1
        %s200 = smul.addr %s199, 4
        %s201 = scalar_lea.vmem [#allocation9], %s200
        // Predicated region
        $region33: #{tpu_custom_call.1} parent=27 // pred_check
          %p202 = pneg %p95
        $region34: #{tpu_custom_call.1} parent=27 // pred_check_branch
          %204 = sbr.rel (%p202) target = $region36
        $region35: #{tpu_custom_call.1} parent=27 // pred_region
          %205 = dma.done %s198, 64
        $region36: #{tpu_custom_call.1} parent=27 // pred_fallthru
          _
        %s206 = sand.u32 %s52, 1
        %s207 = scalar_lea.sflag [#allocation7], %s206
        %s208 = sand.u32 %s52, 1
        %s209 = smul.addr %s208, 8
        %s210 = scalar_lea.vmem [#allocation6], %s209
        %p211 = pneg %p65
        %p212 = pneg %p62
        %s213 = sand.u32 %s82, 1
        %s214 = scalar_lea.sflag [#allocation10], %s213
        %s215 = sand.u32 %s82, 1
        %s216 = smul.addr %s215, 4
        %s217 = scalar_lea.vmem [#allocation9], %s216
        %p218 = pneg %p95
        %p219 = pneg %p92
        %p220 = pneg %p121
        %p221 = pneg %p118
        %s222 = sand.u32 %s108, 1
        %s223 = scalar_lea.sflag [#allocation8], %s222
        %s224 = sand.u32 %s108, 1
        %s225 = smul.addr %s224, 8
        %s226 = scalar_lea.vmem [#allocation11], %s225
        %s227 = ssub.s32 2, %s37
        %s228 = ssub.s32 2, %s37
        %s229 = smul.u32 %s36, 3
        %s230 = sadd.s32 %s229, %s228
        %v231 = vlaneseq
        %v232 = vshrl.u32 %v231, 7
        %v233 = vadd.s32 %v232, 8
        %v234 = vadd.s32 %v232, 16
        %v235 = vadd.s32 %v232, 24
        %v236 = vadd.s32 %v232, 32
        %v237 = vadd.s32 %v232, 40
        %v238 = vadd.s32 %v232, 48
        %v239 = vadd.s32 %v232, 56
        %v240 = vadd.s32 %v232, 64
        %v241 = vadd.s32 %v232, 72
        %v242 = vadd.s32 %v232, 80
        %v243 = vadd.s32 %v232, 88
        %v244 = vadd.s32 %v232, 96
        %v245 = vadd.s32 %v232, 104
        %v246 = vadd.s32 %v232, 112
        %v247 = vadd.s32 %v232, 120
        %v248 = vadd.s32 %v232, 128
        %v249 = vadd.s32 %v232, 136
        %v250 = vadd.s32 %v232, 144
        %v251 = vadd.s32 %v232, 152
        %v252 = vadd.s32 %v232, 160
        %v253 = vadd.s32 %v232, 168
        %v254 = vadd.s32 %v232, 176
        %v255 = vadd.s32 %v232, 184
        %v256 = vadd.s32 %v232, 192
        %v257 = vadd.s32 %v232, 200
        %v258 = vadd.s32 %v232, 208
        %v259 = vadd.s32 %v232, 216
        %v260 = vadd.s32 %v232, 224
        %v261 = vadd.s32 %v232, 232
        %v262 = vadd.s32 %v232, 240
        %v263 = vadd.s32 %v232, 248
        %p264 = scmp.eq.s32.totalorder %s37, 0
        // Predicated region
        $region37: #{tpu_custom_call.1} parent=27 // pred_check
          %p265 = pneg %p264
        $region38: #{tpu_custom_call.1} parent=27 // pred_check_branch
          %267 = sbr.rel (%p265) target = $region40
        $region39: #{tpu_custom_call.1} parent=27 // pred_region
          %v268 = vld [vmem:[%s201] ss:$2 sm:$0x3]
          %s269 = scalar_lea.vmem %s201, 1 [#allocation9]
          %v270 = vld [vmem:[%s269] ss:$2 sm:$0x3]
          %v271 = vfloor.f32 %v268
          %v272 = vfloor.f32 %v270
          %v273 = vsub.f32 %v268, %v271
          %v274 = vsub.f32 %v270, %v272
          %v275 = vcvt.f32.s32.to.zero.pseudo %v271
          %v276 = vcvt.f32.s32.to.zero.pseudo %v272
          %v277 = vadd.s32 %v275, 1
          %v278 = vadd.s32 %v276, 1
          %v279 = vsub.f32 1.0, %v274
          %v280 = vsub.f32 1.0, %v273
          %v281 = vmul.f32 %v279, %v280
          %v282 = vmul.f32 %v279, %v273
          %v283 = vmul.f32 %v274, %v280
          %v284 = vmul.f32 %v274, %v273
          %vm285 = vcmp.ge.s32.totalorder %v275, 0
          %vm286 = vcmp.lt.s32.totalorder %v275, 16
          %vm287 = vmand %vm285, %vm286
          %vm288 = vcmp.ge.s32.totalorder %v276, 0
          %vm289 = vmand %vm287, %vm288
          %vm290 = vcmp.lt.s32.totalorder %v276, 16
          %vm291 = vmand %vm289, %vm290
          %v292 = vmul.u32 %v276, 16
          %v293 = vadd.s32 %v292, %v275
          %v294 = vsel %vm291, %v281, 0.0
          %vm295 = vcmp.ge.s32.totalorder %v277, 0
          %vm296 = vcmp.lt.s32.totalorder %v277, 16
          %vm297 = vmand %vm295, %vm296
          %vm298 = vmand %vm297, %vm288
          %vm299 = vmand %vm298, %vm290
          %v300 = vadd.s32 %v292, %v277
          %v301 = vsel %vm299, %v282, 0.0
          %vm302 = vcmp.ge.s32.totalorder %v278, 0
          %vm303 = vmand %vm287, %vm302
          %vm304 = vcmp.lt.s32.totalorder %v278, 16
          %vm305 = vmand %vm303, %vm304
          %v306 = vmul.u32 %v278, 16
          %v307 = vadd.s32 %v306, %v275
          %v308 = vsel %vm305, %v283, 0.0
          %vm309 = vmand %vm297, %vm302
          %vm310 = vmand %vm309, %vm304
          %v311 = vadd.s32 %v306, %v277
          %v312 = vsel %vm310, %v284, 0.0
          %s313 = sld [smem:[#allocation4 + %s230]]
          %s314 = sld [smem:[#allocation5 + %s230]]
          // While loop
          $region41: #{tpu_custom_call.1} parent=39 // loop_pre_header
            _
          $region42: #{tpu_custom_call.1} parent=39 // loop_header
            %s316 = sphi %s313, %s318
            %p317 = scmp.ge.s32.totalorder %s316, %s314
            %v321 = vphi 0.0, %v2400
            %v322 = vphi 0.0, %v2401
          $region43: #{tpu_custom_call.1} parent=39 // loop_header_branch
            %320 = sbr.rel (%p317) target = $region47
          $region44: #{tpu_custom_call.1} parent=39 // loop_body
            %s323 = smul.u32 %s316, 256
            %v324 = vstv %s323
            %v325 = vsub.s32 %v293, %v324
            %v326 = vlaneseq
            %v327 = vshrl.u32 %v326, 7
            %v328 = vsub.s32 0, %v327
            %v329 = vrot.slane %v325, %v328
            %v330 = vlaneseq
            %v331 = vshrl.u32 %v330, 7
            %v332 = vsub.s32 1, %v331
            %v333 = vrot.slane %v325, %v332
            %vm334 = vcmp.eq.s32.totalorder %v329, %v232
            %vm335 = vcmp.eq.s32.totalorder %v333, %v232
            %vm336 = vcmp.eq.s32.totalorder %v329, %v233
            %vm337 = vcmp.eq.s32.totalorder %v333, %v233
            %vm338 = vcmp.eq.s32.totalorder %v329, %v234
            %vm339 = vcmp.eq.s32.totalorder %v333, %v234
            %vm340 = vcmp.eq.s32.totalorder %v329, %v235
            %vm341 = vcmp.eq.s32.totalorder %v333, %v235
            %vm342 = vcmp.eq.s32.totalorder %v329, %v236
            %vm343 = vcmp.eq.s32.totalorder %v333, %v236
            %vm344 = vcmp.eq.s32.totalorder %v329, %v237
            %vm345 = vcmp.eq.s32.totalorder %v333, %v237
            %vm346 = vcmp.eq.s32.totalorder %v329, %v238
            %vm347 = vcmp.eq.s32.totalorder %v333, %v238
            %vm348 = vcmp.eq.s32.totalorder %v329, %v239
            %vm349 = vcmp.eq.s32.totalorder %v333, %v239
            %vm350 = vcmp.eq.s32.totalorder %v329, %v240
            %vm351 = vcmp.eq.s32.totalorder %v333, %v240
            %vm352 = vcmp.eq.s32.totalorder %v329, %v241
            %vm353 = vcmp.eq.s32.totalorder %v333, %v241
            %vm354 = vcmp.eq.s32.totalorder %v329, %v242
            %vm355 = vcmp.eq.s32.totalorder %v333, %v242
            %vm356 = vcmp.eq.s32.totalorder %v329, %v243
            %vm357 = vcmp.eq.s32.totalorder %v333, %v243
            %vm358 = vcmp.eq.s32.totalorder %v329, %v244
            %vm359 = vcmp.eq.s32.totalorder %v333, %v244
            %vm360 = vcmp.eq.s32.totalorder %v329, %v245
            %vm361 = vcmp.eq.s32.totalorder %v333, %v245
            %vm362 = vcmp.eq.s32.totalorder %v329, %v246
            %vm363 = vcmp.eq.s32.totalorder %v333, %v246
            %vm364 = vcmp.eq.s32.totalorder %v329, %v247
            %vm365 = vcmp.eq.s32.totalorder %v333, %v247
            %vm366 = vcmp.eq.s32.totalorder %v329, %v248
            %vm367 = vcmp.eq.s32.totalorder %v333, %v248
            %vm368 = vcmp.eq.s32.totalorder %v329, %v249
            %vm369 = vcmp.eq.s32.totalorder %v333, %v249
            %vm370 = vcmp.eq.s32.totalorder %v329, %v250
            %vm371 = vcmp.eq.s32.totalorder %v333, %v250
            %vm372 = vcmp.eq.s32.totalorder %v329, %v251
            %vm373 = vcmp.eq.s32.totalorder %v333, %v251
            %vm374 = vcmp.eq.s32.totalorder %v329, %v252
            %vm375 = vcmp.eq.s32.totalorder %v333, %v252
            %vm376 = vcmp.eq.s32.totalorder %v329, %v253
            %vm377 = vcmp.eq.s32.totalorder %v333, %v253
            %vm378 = vcmp.eq.s32.totalorder %v329, %v254
            %vm379 = vcmp.eq.s32.totalorder %v333, %v254
            %vm380 = vcmp.eq.s32.totalorder %v329, %v255
            %vm381 = vcmp.eq.s32.totalorder %v333, %v255
            %vm382 = vcmp.eq.s32.totalorder %v329, %v256
            %vm383 = vcmp.eq.s32.totalorder %v333, %v256
            %vm384 = vcmp.eq.s32.totalorder %v329, %v257
            %vm385 = vcmp.eq.s32.totalorder %v333, %v257
            %vm386 = vcmp.eq.s32.totalorder %v329, %v258
            %vm387 = vcmp.eq.s32.totalorder %v333, %v258
            %vm388 = vcmp.eq.s32.totalorder %v329, %v259
            %vm389 = vcmp.eq.s32.totalorder %v333, %v259
            %vm390 = vcmp.eq.s32.totalorder %v329, %v260
            %vm391 = vcmp.eq.s32.totalorder %v333, %v260
            %vm392 = vcmp.eq.s32.totalorder %v329, %v261
            %vm393 = vcmp.eq.s32.totalorder %v333, %v261
            %vm394 = vcmp.eq.s32.totalorder %v329, %v262
            %vm395 = vcmp.eq.s32.totalorder %v333, %v262
            %vm396 = vcmp.eq.s32.totalorder %v329, %v263
            %vm397 = vcmp.eq.s32.totalorder %v333, %v263
            %v399 = vlaneseq
            %v400 = vshrl.u32 %v399, 7
            %v401 = vsub.s32 0, %v400
            %v402 = vrot.slane %v294, %v401
            %v403 = vlaneseq
            %v404 = vshrl.u32 %v403, 7
            %v405 = vsub.s32 1, %v404
            %v406 = vrot.slane %v294, %v405
            %v409 = vsel %vm334, %v402, 0.0
            %v410 = vsel %vm335, %v406, 0.0
            %v411 = vsel %vm336, %v402, 0.0
            %v412 = vsel %vm337, %v406, 0.0
            %v413 = vsel %vm338, %v402, 0.0
            %v414 = vsel %vm339, %v406, 0.0
            %v415 = vsel %vm340, %v402, 0.0
            %v416 = vsel %vm341, %v406, 0.0
            %v417 = vsel %vm342, %v402, 0.0
            %v418 = vsel %vm343, %v406, 0.0
            %v419 = vsel %vm344, %v402, 0.0
            %v420 = vsel %vm345, %v406, 0.0
            %v421 = vsel %vm346, %v402, 0.0
            %v422 = vsel %vm347, %v406, 0.0
            %v423 = vsel %vm348, %v402, 0.0
            %v424 = vsel %vm349, %v406, 0.0
            %v425 = vsel %vm350, %v402, 0.0
            %v426 = vsel %vm351, %v406, 0.0
            %v427 = vsel %vm352, %v402, 0.0
            %v428 = vsel %vm353, %v406, 0.0
            %v429 = vsel %vm354, %v402, 0.0
            %v430 = vsel %vm355, %v406, 0.0
            %v431 = vsel %vm356, %v402, 0.0
            %v432 = vsel %vm357, %v406, 0.0
            %v433 = vsel %vm358, %v402, 0.0
            %v434 = vsel %vm359, %v406, 0.0
            %v435 = vsel %vm360, %v402, 0.0
            %v436 = vsel %vm361, %v406, 0.0
            %v437 = vsel %vm362, %v402, 0.0
            %v438 = vsel %vm363, %v406, 0.0
            %v439 = vsel %vm364, %v402, 0.0
            %v440 = vsel %vm365, %v406, 0.0
            %v441 = vsel %vm366, %v402, 0.0
            %v442 = vsel %vm367, %v406, 0.0
            %v443 = vsel %vm368, %v402, 0.0
            %v444 = vsel %vm369, %v406, 0.0
            %v445 = vsel %vm370, %v402, 0.0
            %v446 = vsel %vm371, %v406, 0.0
            %v447 = vsel %vm372, %v402, 0.0
            %v448 = vsel %vm373, %v406, 0.0
            %v449 = vsel %vm374, %v402, 0.0
            %v450 = vsel %vm375, %v406, 0.0
            %v451 = vsel %vm376, %v402, 0.0
            %v452 = vsel %vm377, %v406, 0.0
            %v453 = vsel %vm378, %v402, 0.0
            %v454 = vsel %vm379, %v406, 0.0
            %v455 = vsel %vm380, %v402, 0.0
            %v456 = vsel %vm381, %v406, 0.0
            %v457 = vsel %vm382, %v402, 0.0
            %v458 = vsel %vm383, %v406, 0.0
            %v459 = vsel %vm384, %v402, 0.0
            %v460 = vsel %vm385, %v406, 0.0
            %v461 = vsel %vm386, %v402, 0.0
            %v462 = vsel %vm387, %v406, 0.0
            %v463 = vsel %vm388, %v402, 0.0
            %v464 = vsel %vm389, %v406, 0.0
            %v465 = vsel %vm390, %v402, 0.0
            %v466 = vsel %vm391, %v406, 0.0
            %v467 = vsel %vm392, %v402, 0.0
            %v468 = vsel %vm393, %v406, 0.0
            %v469 = vsel %vm394, %v402, 0.0
            %v470 = vsel %vm395, %v406, 0.0
            %v471 = vsel %vm396, %v402, 0.0
            %v472 = vsel %vm397, %v406, 0.0
            %v473 = vsub.s32 %v300, %v324
            %v474 = vlaneseq
            %v475 = vshrl.u32 %v474, 7
            %v476 = vsub.s32 0, %v475
            %v477 = vrot.slane %v473, %v476
            %v478 = vlaneseq
            %v479 = vshrl.u32 %v478, 7
            %v480 = vsub.s32 1, %v479
            %v481 = vrot.slane %v473, %v480
            %vm482 = vcmp.eq.s32.totalorder %v477, %v232
            %vm483 = vcmp.eq.s32.totalorder %v481, %v232
            %vm484 = vcmp.eq.s32.totalorder %v477, %v233
            %vm485 = vcmp.eq.s32.totalorder %v481, %v233
            %vm486 = vcmp.eq.s32.totalorder %v477, %v234
            %vm487 = vcmp.eq.s32.totalorder %v481, %v234
            %vm488 = vcmp.eq.s32.totalorder %v477, %v235
            %vm489 = vcmp.eq.s32.totalorder %v481, %v235
            %vm490 = vcmp.eq.s32.totalorder %v477, %v236
            %vm491 = vcmp.eq.s32.totalorder %v481, %v236
            %vm492 = vcmp.eq.s32.totalorder %v477, %v237
            %vm493 = vcmp.eq.s32.totalorder %v481, %v237
            %vm494 = vcmp.eq.s32.totalorder %v477, %v238
            %vm495 = vcmp.eq.s32.totalorder %v481, %v238
            %vm496 = vcmp.eq.s32.totalorder %v477, %v239
            %vm497 = vcmp.eq.s32.totalorder %v481, %v239
            %vm498 = vcmp.eq.s32.totalorder %v477, %v240
            %vm499 = vcmp.eq.s32.totalorder %v481, %v240
            %vm500 = vcmp.eq.s32.totalorder %v477, %v241
            %vm501 = vcmp.eq.s32.totalorder %v481, %v241
            %vm502 = vcmp.eq.s32.totalorder %v477, %v242
            %vm503 = vcmp.eq.s32.totalorder %v481, %v242
            %vm504 = vcmp.eq.s32.totalorder %v477, %v243
            %vm505 = vcmp.eq.s32.totalorder %v481, %v243
            %vm506 = vcmp.eq.s32.totalorder %v477, %v244
            %vm507 = vcmp.eq.s32.totalorder %v481, %v244
            %vm508 = vcmp.eq.s32.totalorder %v477, %v245
            %vm509 = vcmp.eq.s32.totalorder %v481, %v245
            %vm510 = vcmp.eq.s32.totalorder %v477, %v246
            %vm511 = vcmp.eq.s32.totalorder %v481, %v246
            %vm512 = vcmp.eq.s32.totalorder %v477, %v247
            %vm513 = vcmp.eq.s32.totalorder %v481, %v247
            %vm514 = vcmp.eq.s32.totalorder %v477, %v248
            %vm515 = vcmp.eq.s32.totalorder %v481, %v248
            %vm516 = vcmp.eq.s32.totalorder %v477, %v249
            %vm517 = vcmp.eq.s32.totalorder %v481, %v249
            %vm518 = vcmp.eq.s32.totalorder %v477, %v250
            %vm519 = vcmp.eq.s32.totalorder %v481, %v250
            %vm520 = vcmp.eq.s32.totalorder %v477, %v251
            %vm521 = vcmp.eq.s32.totalorder %v481, %v251
            %vm522 = vcmp.eq.s32.totalorder %v477, %v252
            %vm523 = vcmp.eq.s32.totalorder %v481, %v252
            %vm524 = vcmp.eq.s32.totalorder %v477, %v253
            %vm525 = vcmp.eq.s32.totalorder %v481, %v253
            %vm526 = vcmp.eq.s32.totalorder %v477, %v254
            %vm527 = vcmp.eq.s32.totalorder %v481, %v254
            %vm528 = vcmp.eq.s32.totalorder %v477, %v255
            %vm529 = vcmp.eq.s32.totalorder %v481, %v255
            %vm530 = vcmp.eq.s32.totalorder %v477, %v256
            %vm531 = vcmp.eq.s32.totalorder %v481, %v256
            %vm532 = vcmp.eq.s32.totalorder %v477, %v257
            %vm533 = vcmp.eq.s32.totalorder %v481, %v257
            %vm534 = vcmp.eq.s32.totalorder %v477, %v258
            %vm535 = vcmp.eq.s32.totalorder %v481, %v258
            %vm536 = vcmp.eq.s32.totalorder %v477, %v259
            %vm537 = vcmp.eq.s32.totalorder %v481, %v259
            %vm538 = vcmp.eq.s32.totalorder %v477, %v260
            %vm539 = vcmp.eq.s32.totalorder %v481, %v260
            %vm540 = vcmp.eq.s32.totalorder %v477, %v261
            %vm541 = vcmp.eq.s32.totalorder %v481, %v261
            %vm542 = vcmp.eq.s32.totalorder %v477, %v262
            %vm543 = vcmp.eq.s32.totalorder %v481, %v262
            %vm544 = vcmp.eq.s32.totalorder %v477, %v263
            %vm545 = vcmp.eq.s32.totalorder %v481, %v263
            %v547 = vlaneseq
            %v548 = vshrl.u32 %v547, 7
            %v549 = vsub.s32 0, %v548
            %v550 = vrot.slane %v301, %v549
            %v551 = vlaneseq
            %v552 = vshrl.u32 %v551, 7
            %v553 = vsub.s32 1, %v552
            %v554 = vrot.slane %v301, %v553
            %v557 = vsel %vm482, %v550, 0.0
            %v558 = vsel %vm483, %v554, 0.0
            %v559 = vsel %vm484, %v550, 0.0
            %v560 = vsel %vm485, %v554, 0.0
            %v561 = vsel %vm486, %v550, 0.0
            %v562 = vsel %vm487, %v554, 0.0
            %v563 = vsel %vm488, %v550, 0.0
            %v564 = vsel %vm489, %v554, 0.0
            %v565 = vsel %vm490, %v550, 0.0
            %v566 = vsel %vm491, %v554, 0.0
            %v567 = vsel %vm492, %v550, 0.0
            %v568 = vsel %vm493, %v554, 0.0
            %v569 = vsel %vm494, %v550, 0.0
            %v570 = vsel %vm495, %v554, 0.0
            %v571 = vsel %vm496, %v550, 0.0
            %v572 = vsel %vm497, %v554, 0.0
            %v573 = vsel %vm498, %v550, 0.0
            %v574 = vsel %vm499, %v554, 0.0
            %v575 = vsel %vm500, %v550, 0.0
            %v576 = vsel %vm501, %v554, 0.0
            %v577 = vsel %vm502, %v550, 0.0
            %v578 = vsel %vm503, %v554, 0.0
            %v579 = vsel %vm504, %v550, 0.0
            %v580 = vsel %vm505, %v554, 0.0
            %v581 = vsel %vm506, %v550, 0.0
            %v582 = vsel %vm507, %v554, 0.0
            %v583 = vsel %vm508, %v550, 0.0
            %v584 = vsel %vm509, %v554, 0.0
            %v585 = vsel %vm510, %v550, 0.0
            %v586 = vsel %vm511, %v554, 0.0
            %v587 = vsel %vm512, %v550, 0.0
            %v588 = vsel %vm513, %v554, 0.0
            %v589 = vsel %vm514, %v550, 0.0
            %v590 = vsel %vm515, %v554, 0.0
            %v591 = vsel %vm516, %v550, 0.0
            %v592 = vsel %vm517, %v554, 0.0
            %v593 = vsel %vm518, %v550, 0.0
            %v594 = vsel %vm519, %v554, 0.0
            %v595 = vsel %vm520, %v550, 0.0
            %v596 = vsel %vm521, %v554, 0.0
            %v597 = vsel %vm522, %v550, 0.0
            %v598 = vsel %vm523, %v554, 0.0
            %v599 = vsel %vm524, %v550, 0.0
            %v600 = vsel %vm525, %v554, 0.0
            %v601 = vsel %vm526, %v550, 0.0
            %v602 = vsel %vm527, %v554, 0.0
            %v603 = vsel %vm528, %v550, 0.0
            %v604 = vsel %vm529, %v554, 0.0
            %v605 = vsel %vm530, %v550, 0.0
            %v606 = vsel %vm531, %v554, 0.0
            %v607 = vsel %vm532, %v550, 0.0
            %v608 = vsel %vm533, %v554, 0.0
            %v609 = vsel %vm534, %v550, 0.0
            %v610 = vsel %vm535, %v554, 0.0
            %v611 = vsel %vm536, %v550, 0.0
            %v612 = vsel %vm537, %v554, 0.0
            %v613 = vsel %vm538, %v550, 0.0
            %v614 = vsel %vm539, %v554, 0.0
            %v615 = vsel %vm540, %v550, 0.0
            %v616 = vsel %vm541, %v554, 0.0
            %v617 = vsel %vm542, %v550, 0.0
            %v618 = vsel %vm543, %v554, 0.0
            %v619 = vsel %vm544, %v550, 0.0
            %v620 = vsel %vm545, %v554, 0.0
            %v621 = vadd.f32 %v409, %v557
            %v622 = vadd.f32 %v410, %v558
            %v623 = vadd.f32 %v411, %v559
            %v624 = vadd.f32 %v412, %v560
            %v625 = vadd.f32 %v413, %v561
            %v626 = vadd.f32 %v414, %v562
            %v627 = vadd.f32 %v415, %v563
            %v628 = vadd.f32 %v416, %v564
            %v629 = vadd.f32 %v417, %v565
            %v630 = vadd.f32 %v418, %v566
            %v631 = vadd.f32 %v419, %v567
            %v632 = vadd.f32 %v420, %v568
            %v633 = vadd.f32 %v421, %v569
            %v634 = vadd.f32 %v422, %v570
            %v635 = vadd.f32 %v423, %v571
            %v636 = vadd.f32 %v424, %v572
            %v637 = vadd.f32 %v425, %v573
            %v638 = vadd.f32 %v426, %v574
            %v639 = vadd.f32 %v427, %v575
            %v640 = vadd.f32 %v428, %v576
            %v641 = vadd.f32 %v429, %v577
            %v642 = vadd.f32 %v430, %v578
            %v643 = vadd.f32 %v431, %v579
            %v644 = vadd.f32 %v432, %v580
            %v645 = vadd.f32 %v433, %v581
            %v646 = vadd.f32 %v434, %v582
            %v647 = vadd.f32 %v435, %v583
            %v648 = vadd.f32 %v436, %v584
            %v649 = vadd.f32 %v437, %v585
            %v650 = vadd.f32 %v438, %v586
            %v651 = vadd.f32 %v439, %v587
            %v652 = vadd.f32 %v440, %v588
            %v653 = vadd.f32 %v441, %v589
            %v654 = vadd.f32 %v442, %v590
            %v655 = vadd.f32 %v443, %v591
            %v656 = vadd.f32 %v444, %v592
            %v657 = vadd.f32 %v445, %v593
            %v658 = vadd.f32 %v446, %v594
            %v659 = vadd.f32 %v447, %v595
            %v660 = vadd.f32 %v448, %v596
            %v661 = vadd.f32 %v449, %v597
            %v662 = vadd.f32 %v450, %v598
            %v663 = vadd.f32 %v451, %v599
            %v664 = vadd.f32 %v452, %v600
            %v665 = vadd.f32 %v453, %v601
            %v666 = vadd.f32 %v454, %v602
            %v667 = vadd.f32 %v455, %v603
            %v668 = vadd.f32 %v456, %v604
            %v669 = vadd.f32 %v457, %v605
            %v670 = vadd.f32 %v458, %v606
            %v671 = vadd.f32 %v459, %v607
            %v672 = vadd.f32 %v460, %v608
            %v673 = vadd.f32 %v461, %v609
            %v674 = vadd.f32 %v462, %v610
            %v675 = vadd.f32 %v463, %v611
            %v676 = vadd.f32 %v464, %v612
            %v677 = vadd.f32 %v465, %v613
            %v678 = vadd.f32 %v466, %v614
            %v679 = vadd.f32 %v467, %v615
            %v680 = vadd.f32 %v468, %v616
            %v681 = vadd.f32 %v469, %v617
            %v682 = vadd.f32 %v470, %v618
            %v683 = vadd.f32 %v471, %v619
            %v684 = vadd.f32 %v472, %v620
            %v685 = vsub.s32 %v307, %v324
            %v686 = vlaneseq
            %v687 = vshrl.u32 %v686, 7
            %v688 = vsub.s32 0, %v687
            %v689 = vrot.slane %v685, %v688
            %v690 = vlaneseq
            %v691 = vshrl.u32 %v690, 7
            %v692 = vsub.s32 1, %v691
            %v693 = vrot.slane %v685, %v692
            %vm694 = vcmp.eq.s32.totalorder %v689, %v232
            %vm695 = vcmp.eq.s32.totalorder %v693, %v232
            %vm696 = vcmp.eq.s32.totalorder %v689, %v233
            %vm697 = vcmp.eq.s32.totalorder %v693, %v233
            %vm698 = vcmp.eq.s32.totalorder %v689, %v234
            %vm699 = vcmp.eq.s32.totalorder %v693, %v234
            %vm700 = vcmp.eq.s32.totalorder %v689, %v235
            %vm701 = vcmp.eq.s32.totalorder %v693, %v235
            %vm702 = vcmp.eq.s32.totalorder %v689, %v236
            %vm703 = vcmp.eq.s32.totalorder %v693, %v236
            %vm704 = vcmp.eq.s32.totalorder %v689, %v237
            %vm705 = vcmp.eq.s32.totalorder %v693, %v237
            %vm706 = vcmp.eq.s32.totalorder %v689, %v238
            %vm707 = vcmp.eq.s32.totalorder %v693, %v238
            %vm708 = vcmp.eq.s32.totalorder %v689, %v239
            %vm709 = vcmp.eq.s32.totalorder %v693, %v239
            %vm710 = vcmp.eq.s32.totalorder %v689, %v240
            %vm711 = vcmp.eq.s32.totalorder %v693, %v240
            %vm712 = vcmp.eq.s32.totalorder %v689, %v241
            %vm713 = vcmp.eq.s32.totalorder %v693, %v241
            %vm714 = vcmp.eq.s32.totalorder %v689, %v242
            %vm715 = vcmp.eq.s32.totalorder %v693, %v242
            %vm716 = vcmp.eq.s32.totalorder %v689, %v243
            %vm717 = vcmp.eq.s32.totalorder %v693, %v243
            %vm718 = vcmp.eq.s32.totalorder %v689, %v244
            %vm719 = vcmp.eq.s32.totalorder %v693, %v244
            %vm720 = vcmp.eq.s32.totalorder %v689, %v245
            %vm721 = vcmp.eq.s32.totalorder %v693, %v245
            %vm722 = vcmp.eq.s32.totalorder %v689, %v246
            %vm723 = vcmp.eq.s32.totalorder %v693, %v246
            %vm724 = vcmp.eq.s32.totalorder %v689, %v247
            %vm725 = vcmp.eq.s32.totalorder %v693, %v247
            %vm726 = vcmp.eq.s32.totalorder %v689, %v248
            %vm727 = vcmp.eq.s32.totalorder %v693, %v248
            %vm728 = vcmp.eq.s32.totalorder %v689, %v249
            %vm729 = vcmp.eq.s32.totalorder %v693, %v249
            %vm730 = vcmp.eq.s32.totalorder %v689, %v250
            %vm731 = vcmp.eq.s32.totalorder %v693, %v250
            %vm732 = vcmp.eq.s32.totalorder %v689, %v251
            %vm733 = vcmp.eq.s32.totalorder %v693, %v251
            %vm734 = vcmp.eq.s32.totalorder %v689, %v252
            %vm735 = vcmp.eq.s32.totalorder %v693, %v252
            %vm736 = vcmp.eq.s32.totalorder %v689, %v253
            %vm737 = vcmp.eq.s32.totalorder %v693, %v253
            %vm738 = vcmp.eq.s32.totalorder %v689, %v254
            %vm739 = vcmp.eq.s32.totalorder %v693, %v254
            %vm740 = vcmp.eq.s32.totalorder %v689, %v255
            %vm741 = vcmp.eq.s32.totalorder %v693, %v255
            %vm742 = vcmp.eq.s32.totalorder %v689, %v256
            %vm743 = vcmp.eq.s32.totalorder %v693, %v256
            %vm744 = vcmp.eq.s32.totalorder %v689, %v257
            %vm745 = vcmp.eq.s32.totalorder %v693, %v257
            %vm746 = vcmp.eq.s32.totalorder %v689, %v258
            %vm747 = vcmp.eq.s32.totalorder %v693, %v258
            %vm748 = vcmp.eq.s32.totalorder %v689, %v259
            %vm749 = vcmp.eq.s32.totalorder %v693, %v259
            %vm750 = vcmp.eq.s32.totalorder %v689, %v260
            %vm751 = vcmp.eq.s32.totalorder %v693, %v260
            %vm752 = vcmp.eq.s32.totalorder %v689, %v261
            %vm753 = vcmp.eq.s32.totalorder %v693, %v261
            %vm754 = vcmp.eq.s32.totalorder %v689, %v262
            %vm755 = vcmp.eq.s32.totalorder %v693, %v262
            %vm756 = vcmp.eq.s32.totalorder %v689, %v263
            %vm757 = vcmp.eq.s32.totalorder %v693, %v263
            %v759 = vlaneseq
            %v760 = vshrl.u32 %v759, 7
            %v761 = vsub.s32 0, %v760
            %v762 = vrot.slane %v308, %v761
            %v763 = vlaneseq
            %v764 = vshrl.u32 %v763, 7
            %v765 = vsub.s32 1, %v764
            %v766 = vrot.slane %v308, %v765
            %v769 = vsel %vm694, %v762, 0.0
            %v770 = vsel %vm695, %v766, 0.0
            %v771 = vsel %vm696, %v762, 0.0
            %v772 = vsel %vm697, %v766, 0.0
            %v773 = vsel %vm698, %v762, 0.0
            %v774 = vsel %vm699, %v766, 0.0
            %v775 = vsel %vm700, %v762, 0.0
            %v776 = vsel %vm701, %v766, 0.0
            %v777 = vsel %vm702, %v762, 0.0
            %v778 = vsel %vm703, %v766, 0.0
            %v779 = vsel %vm704, %v762, 0.0
            %v780 = vsel %vm705, %v766, 0.0
            %v781 = vsel %vm706, %v762, 0.0
            %v782 = vsel %vm707, %v766, 0.0
            %v783 = vsel %vm708, %v762, 0.0
            %v784 = vsel %vm709, %v766, 0.0
            %v785 = vsel %vm710, %v762, 0.0
            %v786 = vsel %vm711, %v766, 0.0
            %v787 = vsel %vm712, %v762, 0.0
            %v788 = vsel %vm713, %v766, 0.0
            %v789 = vsel %vm714, %v762, 0.0
            %v790 = vsel %vm715, %v766, 0.0
            %v791 = vsel %vm716, %v762, 0.0
            %v792 = vsel %vm717, %v766, 0.0
            %v793 = vsel %vm718, %v762, 0.0
            %v794 = vsel %vm719, %v766, 0.0
            %v795 = vsel %vm720, %v762, 0.0
            %v796 = vsel %vm721, %v766, 0.0
            %v797 = vsel %vm722, %v762, 0.0
            %v798 = vsel %vm723, %v766, 0.0
            %v799 = vsel %vm724, %v762, 0.0
            %v800 = vsel %vm725, %v766, 0.0
            %v801 = vsel %vm726, %v762, 0.0
            %v802 = vsel %vm727, %v766, 0.0
            %v803 = vsel %vm728, %v762, 0.0
            %v804 = vsel %vm729, %v766, 0.0
            %v805 = vsel %vm730, %v762, 0.0
            %v806 = vsel %vm731, %v766, 0.0
            %v807 = vsel %vm732, %v762, 0.0
            %v808 = vsel %vm733, %v766, 0.0
            %v809 = vsel %vm734, %v762, 0.0
            %v810 = vsel %vm735, %v766, 0.0
            %v811 = vsel %vm736, %v762, 0.0
            %v812 = vsel %vm737, %v766, 0.0
            %v813 = vsel %vm738, %v762, 0.0
            %v814 = vsel %vm739, %v766, 0.0
            %v815 = vsel %vm740, %v762, 0.0
            %v816 = vsel %vm741, %v766, 0.0
            %v817 = vsel %vm742, %v762, 0.0
            %v818 = vsel %vm743, %v766, 0.0
            %v819 = vsel %vm744, %v762, 0.0
            %v820 = vsel %vm745, %v766, 0.0
            %v821 = vsel %vm746, %v762, 0.0
            %v822 = vsel %vm747, %v766, 0.0
            %v823 = vsel %vm748, %v762, 0.0
            %v824 = vsel %vm749, %v766, 0.0
            %v825 = vsel %vm750, %v762, 0.0
            %v826 = vsel %vm751, %v766, 0.0
            %v827 = vsel %vm752, %v762, 0.0
            %v828 = vsel %vm753, %v766, 0.0
            %v829 = vsel %vm754, %v762, 0.0
            %v830 = vsel %vm755, %v766, 0.0
            %v831 = vsel %vm756, %v762, 0.0
            %v832 = vsel %vm757, %v766, 0.0
            %v833 = vadd.f32 %v621, %v769
            %v834 = vadd.f32 %v622, %v770
            %v835 = vadd.f32 %v623, %v771
            %v836 = vadd.f32 %v624, %v772
            %v837 = vadd.f32 %v625, %v773
            %v838 = vadd.f32 %v626, %v774
            %v839 = vadd.f32 %v627, %v775
            %v840 = vadd.f32 %v628, %v776
            %v841 = vadd.f32 %v629, %v777
            %v842 = vadd.f32 %v630, %v778
            %v843 = vadd.f32 %v631, %v779
            %v844 = vadd.f32 %v632, %v780
            %v845 = vadd.f32 %v633, %v781
            %v846 = vadd.f32 %v634, %v782
            %v847 = vadd.f32 %v635, %v783
            %v848 = vadd.f32 %v636, %v784
            %v849 = vadd.f32 %v637, %v785
            %v850 = vadd.f32 %v638, %v786
            %v851 = vadd.f32 %v639, %v787
            %v852 = vadd.f32 %v640, %v788
            %v853 = vadd.f32 %v641, %v789
            %v854 = vadd.f32 %v642, %v790
            %v855 = vadd.f32 %v643, %v791
            %v856 = vadd.f32 %v644, %v792
            %v857 = vadd.f32 %v645, %v793
            %v858 = vadd.f32 %v646, %v794
            %v859 = vadd.f32 %v647, %v795
            %v860 = vadd.f32 %v648, %v796
            %v861 = vadd.f32 %v649, %v797
            %v862 = vadd.f32 %v650, %v798
            %v863 = vadd.f32 %v651, %v799
            %v864 = vadd.f32 %v652, %v800
            %v865 = vadd.f32 %v653, %v801
            %v866 = vadd.f32 %v654, %v802
            %v867 = vadd.f32 %v655, %v803
            %v868 = vadd.f32 %v656, %v804
            %v869 = vadd.f32 %v657, %v805
            %v870 = vadd.f32 %v658, %v806
            %v871 = vadd.f32 %v659, %v807
            %v872 = vadd.f32 %v660, %v808
            %v873 = vadd.f32 %v661, %v809
            %v874 = vadd.f32 %v662, %v810
            %v875 = vadd.f32 %v663, %v811
            %v876 = vadd.f32 %v664, %v812
            %v877 = vadd.f32 %v665, %v813
            %v878 = vadd.f32 %v666, %v814
            %v879 = vadd.f32 %v667, %v815
            %v880 = vadd.f32 %v668, %v816
            %v881 = vadd.f32 %v669, %v817
            %v882 = vadd.f32 %v670, %v818
            %v883 = vadd.f32 %v671, %v819
            %v884 = vadd.f32 %v672, %v820
            %v885 = vadd.f32 %v673, %v821
            %v886 = vadd.f32 %v674, %v822
            %v887 = vadd.f32 %v675, %v823
            %v888 = vadd.f32 %v676, %v824
            %v889 = vadd.f32 %v677, %v825
            %v890 = vadd.f32 %v678, %v826
            %v891 = vadd.f32 %v679, %v827
            %v892 = vadd.f32 %v680, %v828
            %v893 = vadd.f32 %v681, %v829
            %v894 = vadd.f32 %v682, %v830
            %v895 = vadd.f32 %v683, %v831
            %v896 = vadd.f32 %v684, %v832
            %v897 = vsub.s32 %v311, %v324
            %v898 = vlaneseq
            %v899 = vshrl.u32 %v898, 7
            %v900 = vsub.s32 0, %v899
            %v901 = vrot.slane %v897, %v900
            %v902 = vlaneseq
            %v903 = vshrl.u32 %v902, 7
            %v904 = vsub.s32 1, %v903
            %v905 = vrot.slane %v897, %v904
            %vm906 = vcmp.eq.s32.totalorder %v901, %v232
            %vm907 = vcmp.eq.s32.totalorder %v905, %v232
            %vm908 = vcmp.eq.s32.totalorder %v901, %v233
            %vm909 = vcmp.eq.s32.totalorder %v905, %v233
            %vm910 = vcmp.eq.s32.totalorder %v901, %v234
            %vm911 = vcmp.eq.s32.totalorder %v905, %v234
            %vm912 = vcmp.eq.s32.totalorder %v901, %v235
            %vm913 = vcmp.eq.s32.totalorder %v905, %v235
            %vm914 = vcmp.eq.s32.totalorder %v901, %v236
            %vm915 = vcmp.eq.s32.totalorder %v905, %v236
            %vm916 = vcmp.eq.s32.totalorder %v901, %v237
            %vm917 = vcmp.eq.s32.totalorder %v905, %v237
            %vm918 = vcmp.eq.s32.totalorder %v901, %v238
            %vm919 = vcmp.eq.s32.totalorder %v905, %v238
            %vm920 = vcmp.eq.s32.totalorder %v901, %v239
            %vm921 = vcmp.eq.s32.totalorder %v905, %v239
            %vm922 = vcmp.eq.s32.totalorder %v901, %v240
            %vm923 = vcmp.eq.s32.totalorder %v905, %v240
            %vm924 = vcmp.eq.s32.totalorder %v901, %v241
            %vm925 = vcmp.eq.s32.totalorder %v905, %v241
            %vm926 = vcmp.eq.s32.totalorder %v901, %v242
            %vm927 = vcmp.eq.s32.totalorder %v905, %v242
            %vm928 = vcmp.eq.s32.totalorder %v901, %v243
            %vm929 = vcmp.eq.s32.totalorder %v905, %v243
            %vm930 = vcmp.eq.s32.totalorder %v901, %v244
            %vm931 = vcmp.eq.s32.totalorder %v905, %v244
            %vm932 = vcmp.eq.s32.totalorder %v901, %v245
            %vm933 = vcmp.eq.s32.totalorder %v905, %v245
            %vm934 = vcmp.eq.s32.totalorder %v901, %v246
            %vm935 = vcmp.eq.s32.totalorder %v905, %v246
            %vm936 = vcmp.eq.s32.totalorder %v901, %v247
            %vm937 = vcmp.eq.s32.totalorder %v905, %v247
            %vm938 = vcmp.eq.s32.totalorder %v901, %v248
            %vm939 = vcmp.eq.s32.totalorder %v905, %v248
            %vm940 = vcmp.eq.s32.totalorder %v901, %v249
            %vm941 = vcmp.eq.s32.totalorder %v905, %v249
            %vm942 = vcmp.eq.s32.totalorder %v901, %v250
            %vm943 = vcmp.eq.s32.totalorder %v905, %v250
            %vm944 = vcmp.eq.s32.totalorder %v901, %v251
            %vm945 = vcmp.eq.s32.totalorder %v905, %v251
            %vm946 = vcmp.eq.s32.totalorder %v901, %v252
            %vm947 = vcmp.eq.s32.totalorder %v905, %v252
            %vm948 = vcmp.eq.s32.totalorder %v901, %v253
            %vm949 = vcmp.eq.s32.totalorder %v905, %v253
            %vm950 = vcmp.eq.s32.totalorder %v901, %v254
            %vm951 = vcmp.eq.s32.totalorder %v905, %v254
            %vm952 = vcmp.eq.s32.totalorder %v901, %v255
            %vm953 = vcmp.eq.s32.totalorder %v905, %v255
            %vm954 = vcmp.eq.s32.totalorder %v901, %v256
            %vm955 = vcmp.eq.s32.totalorder %v905, %v256
            %vm956 = vcmp.eq.s32.totalorder %v901, %v257
            %vm957 = vcmp.eq.s32.totalorder %v905, %v257
            %vm958 = vcmp.eq.s32.totalorder %v901, %v258
            %vm959 = vcmp.eq.s32.totalorder %v905, %v258
            %vm960 = vcmp.eq.s32.totalorder %v901, %v259
            %vm961 = vcmp.eq.s32.totalorder %v905, %v259
            %vm962 = vcmp.eq.s32.totalorder %v901, %v260
            %vm963 = vcmp.eq.s32.totalorder %v905, %v260
            %vm964 = vcmp.eq.s32.totalorder %v901, %v261
            %vm965 = vcmp.eq.s32.totalorder %v905, %v261
            %vm966 = vcmp.eq.s32.totalorder %v901, %v262
            %vm967 = vcmp.eq.s32.totalorder %v905, %v262
            %vm968 = vcmp.eq.s32.totalorder %v901, %v263
            %vm969 = vcmp.eq.s32.totalorder %v905, %v263
            %v971 = vlaneseq
            %v972 = vshrl.u32 %v971, 7
            %v973 = vsub.s32 0, %v972
            %v974 = vrot.slane %v312, %v973
            %v975 = vlaneseq
            %v976 = vshrl.u32 %v975, 7
            %v977 = vsub.s32 1, %v976
            %v978 = vrot.slane %v312, %v977
            %v981 = vsel %vm906, %v974, 0.0
            %v982 = vsel %vm907, %v978, 0.0
            %v983 = vsel %vm908, %v974, 0.0
            %v984 = vsel %vm909, %v978, 0.0
            %v985 = vsel %vm910, %v974, 0.0
            %v986 = vsel %vm911, %v978, 0.0
            %v987 = vsel %vm912, %v974, 0.0
            %v988 = vsel %vm913, %v978, 0.0
            %v989 = vsel %vm914, %v974, 0.0
            %v990 = vsel %vm915, %v978, 0.0
            %v991 = vsel %vm916, %v974, 0.0
            %v992 = vsel %vm917, %v978, 0.0
            %v993 = vsel %vm918, %v974, 0.0
            %v994 = vsel %vm919, %v978, 0.0
            %v995 = vsel %vm920, %v974, 0.0
            %v996 = vsel %vm921, %v978, 0.0
            %v997 = vsel %vm922, %v974, 0.0
            %v998 = vsel %vm923, %v978, 0.0
            %v999 = vsel %vm924, %v974, 0.0
            %v1000 = vsel %vm925, %v978, 0.0
            %v1001 = vsel %vm926, %v974, 0.0
            %v1002 = vsel %vm927, %v978, 0.0
            %v1003 = vsel %vm928, %v974, 0.0
            %v1004 = vsel %vm929, %v978, 0.0
            %v1005 = vsel %vm930, %v974, 0.0
            %v1006 = vsel %vm931, %v978, 0.0
            %v1007 = vsel %vm932, %v974, 0.0
            %v1008 = vsel %vm933, %v978, 0.0
            %v1009 = vsel %vm934, %v974, 0.0
            %v1010 = vsel %vm935, %v978, 0.0
            %v1011 = vsel %vm936, %v974, 0.0
            %v1012 = vsel %vm937, %v978, 0.0
            %v1013 = vsel %vm938, %v974, 0.0
            %v1014 = vsel %vm939, %v978, 0.0
            %v1015 = vsel %vm940, %v974, 0.0
            %v1016 = vsel %vm941, %v978, 0.0
            %v1017 = vsel %vm942, %v974, 0.0
            %v1018 = vsel %vm943, %v978, 0.0
            %v1019 = vsel %vm944, %v974, 0.0
            %v1020 = vsel %vm945, %v978, 0.0
            %v1021 = vsel %vm946, %v974, 0.0
            %v1022 = vsel %vm947, %v978, 0.0
            %v1023 = vsel %vm948, %v974, 0.0
            %v1024 = vsel %vm949, %v978, 0.0
            %v1025 = vsel %vm950, %v974, 0.0
            %v1026 = vsel %vm951, %v978, 0.0
            %v1027 = vsel %vm952, %v974, 0.0
            %v1028 = vsel %vm953, %v978, 0.0
            %v1029 = vsel %vm954, %v974, 0.0
            %v1030 = vsel %vm955, %v978, 0.0
            %v1031 = vsel %vm956, %v974, 0.0
            %v1032 = vsel %vm957, %v978, 0.0
            %v1033 = vsel %vm958, %v974, 0.0
            %v1034 = vsel %vm959, %v978, 0.0
            %v1035 = vsel %vm960, %v974, 0.0
            %v1036 = vsel %vm961, %v978, 0.0
            %v1037 = vsel %vm962, %v974, 0.0
            %v1038 = vsel %vm963, %v978, 0.0
            %v1039 = vsel %vm964, %v974, 0.0
            %v1040 = vsel %vm965, %v978, 0.0
            %v1041 = vsel %vm966, %v974, 0.0
            %v1042 = vsel %vm967, %v978, 0.0
            %v1043 = vsel %vm968, %v974, 0.0
            %v1044 = vsel %vm969, %v978, 0.0
            %v1045 = vadd.f32 %v833, %v981
            %v1046 = vadd.f32 %v834, %v982
            %v1047 = vadd.f32 %v835, %v983
            %v1048 = vadd.f32 %v836, %v984
            %v1049 = vadd.f32 %v837, %v985
            %v1050 = vadd.f32 %v838, %v986
            %v1051 = vadd.f32 %v839, %v987
            %v1052 = vadd.f32 %v840, %v988
            %v1053 = vadd.f32 %v841, %v989
            %v1054 = vadd.f32 %v842, %v990
            %v1055 = vadd.f32 %v843, %v991
            %v1056 = vadd.f32 %v844, %v992
            %v1057 = vadd.f32 %v845, %v993
            %v1058 = vadd.f32 %v846, %v994
            %v1059 = vadd.f32 %v847, %v995
            %v1060 = vadd.f32 %v848, %v996
            %v1061 = vadd.f32 %v849, %v997
            %v1062 = vadd.f32 %v850, %v998
            %v1063 = vadd.f32 %v851, %v999
            %v1064 = vadd.f32 %v852, %v1000
            %v1065 = vadd.f32 %v853, %v1001
            %v1066 = vadd.f32 %v854, %v1002
            %v1067 = vadd.f32 %v855, %v1003
            %v1068 = vadd.f32 %v856, %v1004
            %v1069 = vadd.f32 %v857, %v1005
            %v1070 = vadd.f32 %v858, %v1006
            %v1071 = vadd.f32 %v859, %v1007
            %v1072 = vadd.f32 %v860, %v1008
            %v1073 = vadd.f32 %v861, %v1009
            %v1074 = vadd.f32 %v862, %v1010
            %v1075 = vadd.f32 %v863, %v1011
            %v1076 = vadd.f32 %v864, %v1012
            %v1077 = vadd.f32 %v865, %v1013
            %v1078 = vadd.f32 %v866, %v1014
            %v1079 = vadd.f32 %v867, %v1015
            %v1080 = vadd.f32 %v868, %v1016
            %v1081 = vadd.f32 %v869, %v1017
            %v1082 = vadd.f32 %v870, %v1018
            %v1083 = vadd.f32 %v871, %v1019
            %v1084 = vadd.f32 %v872, %v1020
            %v1085 = vadd.f32 %v873, %v1021
            %v1086 = vadd.f32 %v874, %v1022
            %v1087 = vadd.f32 %v875, %v1023
            %v1088 = vadd.f32 %v876, %v1024
            %v1089 = vadd.f32 %v877, %v1025
            %v1090 = vadd.f32 %v878, %v1026
            %v1091 = vadd.f32 %v879, %v1027
            %v1092 = vadd.f32 %v880, %v1028
            %v1093 = vadd.f32 %v881, %v1029
            %v1094 = vadd.f32 %v882, %v1030
            %v1095 = vadd.f32 %v883, %v1031
            %v1096 = vadd.f32 %v884, %v1032
            %v1097 = vadd.f32 %v885, %v1033
            %v1098 = vadd.f32 %v886, %v1034
            %v1099 = vadd.f32 %v887, %v1035
            %v1100 = vadd.f32 %v888, %v1036
            %v1101 = vadd.f32 %v889, %v1037
            %v1102 = vadd.f32 %v890, %v1038
            %v1103 = vadd.f32 %v891, %v1039
            %v1104 = vadd.f32 %v892, %v1040
            %v1105 = vadd.f32 %v893, %v1041
            %v1106 = vadd.f32 %v894, %v1042
            %v1107 = vadd.f32 %v895, %v1043
            %v1108 = vadd.f32 %v896, %v1044
            %s1109 = smul.u32 %s316, 2
            %s1110 = smul.addr %s1109, 4
            %s1111 = scalar_lea.vmem %s192, %s1110 [#allocation6]
            %v1112 = vld [vmem:[%s1111] sm:$0xff]
            %v1114 = vcombine.high %v1112, %v1112
            %v1116 = vand.u32 %v1046, 4294901760
            %1117 = vmatprep.subr.mxu0 %v1116
            %v1118 = vand.u32 %v1045, 4294901760
            %1119 = vmatpush1.msra.mxu0 %v1118
            %v1120 = vand.u32 %v1048, 4294901760
            %1121 = vmatprep.subr.mxu0 %v1120
            %v1122 = vand.u32 %v1047, 4294901760
            %1123 = vmatpush1.msra.mxu0 %v1122
            %v1124 = vand.u32 %v1050, 4294901760
            %1125 = vmatprep.subr.mxu0 %v1124
            %v1126 = vand.u32 %v1049, 4294901760
            %1127 = vmatpush1.msra.mxu0 %v1126
            %v1128 = vand.u32 %v1052, 4294901760
            %1129 = vmatprep.subr.mxu0 %v1128
            %v1130 = vand.u32 %v1051, 4294901760
            %1131 = vmatpush1.msra.mxu0 %v1130
            %v1132 = vand.u32 %v1054, 4294901760
            %1133 = vmatprep.subr.mxu0 %v1132
            %v1134 = vand.u32 %v1053, 4294901760
            %1135 = vmatpush1.msra.mxu0 %v1134
            %v1136 = vand.u32 %v1056, 4294901760
            %1137 = vmatprep.subr.mxu0 %v1136
            %v1138 = vand.u32 %v1055, 4294901760
            %1139 = vmatpush1.msra.mxu0 %v1138
            %v1140 = vand.u32 %v1058, 4294901760
            %1141 = vmatprep.subr.mxu0 %v1140
            %v1142 = vand.u32 %v1057, 4294901760
            %1143 = vmatpush1.msra.mxu0 %v1142
            %v1144 = vand.u32 %v1060, 4294901760
            %1145 = vmatprep.subr.mxu0 %v1144
            %v1146 = vand.u32 %v1059, 4294901760
            %1147 = vmatpush1.msra.mxu0 %v1146
            %v1148 = vand.u32 %v1062, 4294901760
            %1149 = vmatprep.subr.mxu0 %v1148
            %v1150 = vand.u32 %v1061, 4294901760
            %1151 = vmatpush1.msra.mxu0 %v1150
            %v1152 = vand.u32 %v1064, 4294901760
            %1153 = vmatprep.subr.mxu0 %v1152
            %v1154 = vand.u32 %v1063, 4294901760
            %1155 = vmatpush1.msra.mxu0 %v1154
            %v1156 = vand.u32 %v1066, 4294901760
            %1157 = vmatprep.subr.mxu0 %v1156
            %v1158 = vand.u32 %v1065, 4294901760
            %1159 = vmatpush1.msra.mxu0 %v1158
            %v1160 = vand.u32 %v1068, 4294901760
            %1161 = vmatprep.subr.mxu0 %v1160
            %v1162 = vand.u32 %v1067, 4294901760
            %1163 = vmatpush1.msra.mxu0 %v1162
            %v1164 = vand.u32 %v1070, 4294901760
            %1165 = vmatprep.subr.mxu0 %v1164
            %v1166 = vand.u32 %v1069, 4294901760
            %1167 = vmatpush1.msra.mxu0 %v1166
            %v1168 = vand.u32 %v1072, 4294901760
            %1169 = vmatprep.subr.mxu0 %v1168
            %v1170 = vand.u32 %v1071, 4294901760
            %1171 = vmatpush1.msra.mxu0 %v1170
            %v1172 = vand.u32 %v1074, 4294901760
            %1173 = vmatprep.subr.mxu0 %v1172
            %v1174 = vand.u32 %v1073, 4294901760
            %1175 = vmatpush1.msra.mxu0 %v1174
            %v1176 = vand.u32 %v1076, 4294901760
            %1177 = vmatprep.subr.mxu0 %v1176
            %v1178 = vand.u32 %v1075, 4294901760
            %1179 = vmatpush1.msra.mxu0 %v1178
            %v1180 = vand.u32 %v1078, 4294901760
            %1181 = vmatprep.subr.mxu0 %v1180
            %v1182 = vand.u32 %v1077, 4294901760
            %1183 = vmatpush1.msra.mxu0 %v1182
            %v1184 = vand.u32 %v1080, 4294901760
            %1185 = vmatprep.subr.mxu0 %v1184
            %v1186 = vand.u32 %v1079, 4294901760
            %1187 = vmatpush1.msra.mxu0 %v1186
            %v1188 = vand.u32 %v1082, 4294901760
            %1189 = vmatprep.subr.mxu0 %v1188
            %v1190 = vand.u32 %v1081, 4294901760
            %1191 = vmatpush1.msra.mxu0 %v1190
            %v1192 = vand.u32 %v1084, 4294901760
            %1193 = vmatprep.subr.mxu0 %v1192
            %v1194 = vand.u32 %v1083, 4294901760
            %1195 = vmatpush1.msra.mxu0 %v1194
            %v1196 = vand.u32 %v1086, 4294901760
            %1197 = vmatprep.subr.mxu0 %v1196
            %v1198 = vand.u32 %v1085, 4294901760
            %1199 = vmatpush1.msra.mxu0 %v1198
            %v1200 = vand.u32 %v1088, 4294901760
            %1201 = vmatprep.subr.mxu0 %v1200
            %v1202 = vand.u32 %v1087, 4294901760
            %1203 = vmatpush1.msra.mxu0 %v1202
            %v1204 = vand.u32 %v1090, 4294901760
            %1205 = vmatprep.subr.mxu0 %v1204
            %v1206 = vand.u32 %v1089, 4294901760
            %1207 = vmatpush1.msra.mxu0 %v1206
            %v1208 = vand.u32 %v1092, 4294901760
            %1209 = vmatprep.subr.mxu0 %v1208
            %v1210 = vand.u32 %v1091, 4294901760
            %1211 = vmatpush1.msra.mxu0 %v1210
            %v1212 = vand.u32 %v1094, 4294901760
            %1213 = vmatprep.subr.mxu0 %v1212
            %v1214 = vand.u32 %v1093, 4294901760
            %1215 = vmatpush1.msra.mxu0 %v1214
            %v1216 = vand.u32 %v1096, 4294901760
            %1217 = vmatprep.subr.mxu0 %v1216
            %v1218 = vand.u32 %v1095, 4294901760
            %1219 = vmatpush1.msra.mxu0 %v1218
            %v1220 = vand.u32 %v1098, 4294901760
            %1221 = vmatprep.subr.mxu0 %v1220
            %v1222 = vand.u32 %v1097, 4294901760
            %1223 = vmatpush1.msra.mxu0 %v1222
            %v1224 = vand.u32 %v1100, 4294901760
            %1225 = vmatprep.subr.mxu0 %v1224
            %v1226 = vand.u32 %v1099, 4294901760
            %1227 = vmatpush1.msra.mxu0 %v1226
            %v1228 = vand.u32 %v1102, 4294901760
            %1229 = vmatprep.subr.mxu0 %v1228
            %v1230 = vand.u32 %v1101, 4294901760
            %1231 = vmatpush1.msra.mxu0 %v1230
            %v1232 = vand.u32 %v1104, 4294901760
            %1233 = vmatprep.subr.mxu0 %v1232
            %v1234 = vand.u32 %v1103, 4294901760
            %1235 = vmatpush1.msra.mxu0 %v1234
            %v1236 = vand.u32 %v1106, 4294901760
            %1237 = vmatprep.subr.mxu0 %v1236
            %v1238 = vand.u32 %v1105, 4294901760
            %1239 = vmatpush1.msra.mxu0 %v1238
            %v1240 = vand.u32 %v1108, 4294901760
            %1241 = vmatprep.subr.mxu0 %v1240
            %v1242 = vand.u32 %v1107, 4294901760
            %1243 = vmatpush1.msra.mxu0 %v1242
            %v1244 = vand.u32 %v1114, 4294901760
            %v1245 = vsub.f32 %v1114, %v1244
            %v1246 = vand.u32 %v1245, 4294901760
            %v1247 = vsub.f32 %v1245, %v1246
            %v1248 = vand.u32 %v1247, 4294901760
            %1249 = vmatprep.mubr.f32.mxu0 %v1248
            %v1250 = vand.u32 %v1112, 4294901760
            %v1251 = vsub.f32 %v1112, %v1250
            %v1252 = vand.u32 %v1251, 4294901760
            %v1253 = vsub.f32 %v1251, %v1252
            %v1254 = vand.u32 %v1253, 4294901760
            %1255 = vmatmul.mubr.f32.gmra.mrb[0].mxu0 %v1254
            %v1256 = vpop.f32.mrb[0].mxu0
            %v1257 = vadd.f32 0.0, %v1256
            %v1258 = vpop.f32.mrb[0].mxu0
            %v1259 = vadd.f32 0.0, %v1258
            %1260 = vdwg.mxu0
            %v1261 = vand.u32 %v1046, 4294901760
            %v1262 = vsub.f32 %v1046, %v1261
            %v1263 = vand.u32 %v1262, 4294901760
            %v1264 = vsub.f32 %v1262, %v1263
            %v1265 = vand.u32 %v1264, 4294901760
            %1266 = vmatprep.subr.mxu0 %v1265
            %v1267 = vand.u32 %v1045, 4294901760
            %v1268 = vsub.f32 %v1045, %v1267
            %v1269 = vand.u32 %v1268, 4294901760
            %v1270 = vsub.f32 %v1268, %v1269
            %v1271 = vand.u32 %v1270, 4294901760
            %1272 = vmatpush1.msra.mxu0 %v1271
            %v1273 = vand.u32 %v1048, 4294901760
            %v1274 = vsub.f32 %v1048, %v1273
            %v1275 = vand.u32 %v1274, 4294901760
            %v1276 = vsub.f32 %v1274, %v1275
            %v1277 = vand.u32 %v1276, 4294901760
            %1278 = vmatprep.subr.mxu0 %v1277
            %v1279 = vand.u32 %v1047, 4294901760
            %v1280 = vsub.f32 %v1047, %v1279
            %v1281 = vand.u32 %v1280, 4294901760
            %v1282 = vsub.f32 %v1280, %v1281
            %v1283 = vand.u32 %v1282, 4294901760
            %1284 = vmatpush1.msra.mxu0 %v1283
            %v1285 = vand.u32 %v1050, 4294901760
            %v1286 = vsub.f32 %v1050, %v1285
            %v1287 = vand.u32 %v1286, 4294901760
            %v1288 = vsub.f32 %v1286, %v1287
            %v1289 = vand.u32 %v1288, 4294901760
            %1290 = vmatprep.subr.mxu0 %v1289
            %v1291 = vand.u32 %v1049, 4294901760
            %v1292 = vsub.f32 %v1049, %v1291
            %v1293 = vand.u32 %v1292, 4294901760
            %v1294 = vsub.f32 %v1292, %v1293
            %v1295 = vand.u32 %v1294, 4294901760
            %1296 = vmatpush1.msra.mxu0 %v1295
            %v1297 = vand.u32 %v1052, 4294901760
            %v1298 = vsub.f32 %v1052, %v1297
            %v1299 = vand.u32 %v1298, 4294901760
            %v1300 = vsub.f32 %v1298, %v1299
            %v1301 = vand.u32 %v1300, 4294901760
            %1302 = vmatprep.subr.mxu0 %v1301
            %v1303 = vand.u32 %v1051, 4294901760
            %v1304 = vsub.f32 %v1051, %v1303
            %v1305 = vand.u32 %v1304, 4294901760
            %v1306 = vsub.f32 %v1304, %v1305
            %v1307 = vand.u32 %v1306, 4294901760
            %1308 = vmatpush1.msra.mxu0 %v1307
            %v1309 = vand.u32 %v1054, 4294901760
            %v1310 = vsub.f32 %v1054, %v1309
            %v1311 = vand.u32 %v1310, 4294901760
            %v1312 = vsub.f32 %v1310, %v1311
            %v1313 = vand.u32 %v1312, 4294901760
            %1314 = vmatprep.subr.mxu0 %v1313
            %v1315 = vand.u32 %v1053, 4294901760
            %v1316 = vsub.f32 %v1053, %v1315
            %v1317 = vand.u32 %v1316, 4294901760
            %v1318 = vsub.f32 %v1316, %v1317
            %v1319 = vand.u32 %v1318, 4294901760
            %1320 = vmatpush1.msra.mxu0 %v1319
            %v1321 = vand.u32 %v1056, 4294901760
            %v1322 = vsub.f32 %v1056, %v1321
            %v1323 = vand.u32 %v1322, 4294901760
            %v1324 = vsub.f32 %v1322, %v1323
            %v1325 = vand.u32 %v1324, 4294901760
            %1326 = vmatprep.subr.mxu0 %v1325
            %v1327 = vand.u32 %v1055, 4294901760
            %v1328 = vsub.f32 %v1055, %v1327
            %v1329 = vand.u32 %v1328, 4294901760
            %v1330 = vsub.f32 %v1328, %v1329
            %v1331 = vand.u32 %v1330, 4294901760
            %1332 = vmatpush1.msra.mxu0 %v1331
            %v1333 = vand.u32 %v1058, 4294901760
            %v1334 = vsub.f32 %v1058, %v1333
            %v1335 = vand.u32 %v1334, 4294901760
            %v1336 = vsub.f32 %v1334, %v1335
            %v1337 = vand.u32 %v1336, 4294901760
            %1338 = vmatprep.subr.mxu0 %v1337
            %v1339 = vand.u32 %v1057, 4294901760
            %v1340 = vsub.f32 %v1057, %v1339
            %v1341 = vand.u32 %v1340, 4294901760
            %v1342 = vsub.f32 %v1340, %v1341
            %v1343 = vand.u32 %v1342, 4294901760
            %1344 = vmatpush1.msra.mxu0 %v1343
            %v1345 = vand.u32 %v1060, 4294901760
            %v1346 = vsub.f32 %v1060, %v1345
            %v1347 = vand.u32 %v1346, 4294901760
            %v1348 = vsub.f32 %v1346, %v1347
            %v1349 = vand.u32 %v1348, 4294901760
            %1350 = vmatprep.subr.mxu0 %v1349
            %v1351 = vand.u32 %v1059, 4294901760
            %v1352 = vsub.f32 %v1059, %v1351
            %v1353 = vand.u32 %v1352, 4294901760
            %v1354 = vsub.f32 %v1352, %v1353
            %v1355 = vand.u32 %v1354, 4294901760
            %1356 = vmatpush1.msra.mxu0 %v1355
            %v1357 = vand.u32 %v1062, 4294901760
            %v1358 = vsub.f32 %v1062, %v1357
            %v1359 = vand.u32 %v1358, 4294901760
            %v1360 = vsub.f32 %v1358, %v1359
            %v1361 = vand.u32 %v1360, 4294901760
            %1362 = vmatprep.subr.mxu0 %v1361
            %v1363 = vand.u32 %v1061, 4294901760
            %v1364 = vsub.f32 %v1061, %v1363
            %v1365 = vand.u32 %v1364, 4294901760
            %v1366 = vsub.f32 %v1364, %v1365
            %v1367 = vand.u32 %v1366, 4294901760
            %1368 = vmatpush1.msra.mxu0 %v1367
            %v1369 = vand.u32 %v1064, 4294901760
            %v1370 = vsub.f32 %v1064, %v1369
            %v1371 = vand.u32 %v1370, 4294901760
            %v1372 = vsub.f32 %v1370, %v1371
            %v1373 = vand.u32 %v1372, 4294901760
            %1374 = vmatprep.subr.mxu0 %v1373
            %v1375 = vand.u32 %v1063, 4294901760
            %v1376 = vsub.f32 %v1063, %v1375
            %v1377 = vand.u32 %v1376, 4294901760
            %v1378 = vsub.f32 %v1376, %v1377
            %v1379 = vand.u32 %v1378, 4294901760
            %1380 = vmatpush1.msra.mxu0 %v1379
            %v1381 = vand.u32 %v1066, 4294901760
            %v1382 = vsub.f32 %v1066, %v1381
            %v1383 = vand.u32 %v1382, 4294901760
            %v1384 = vsub.f32 %v1382, %v1383
            %v1385 = vand.u32 %v1384, 4294901760
            %1386 = vmatprep.subr.mxu0 %v1385
            %v1387 = vand.u32 %v1065, 4294901760
            %v1388 = vsub.f32 %v1065, %v1387
            %v1389 = vand.u32 %v1388, 4294901760
            %v1390 = vsub.f32 %v1388, %v1389
            %v1391 = vand.u32 %v1390, 4294901760
            %1392 = vmatpush1.msra.mxu0 %v1391
            %v1393 = vand.u32 %v1068, 4294901760
            %v1394 = vsub.f32 %v1068, %v1393
            %v1395 = vand.u32 %v1394, 4294901760
            %v1396 = vsub.f32 %v1394, %v1395
            %v1397 = vand.u32 %v1396, 4294901760
            %1398 = vmatprep.subr.mxu0 %v1397
            %v1399 = vand.u32 %v1067, 4294901760
            %v1400 = vsub.f32 %v1067, %v1399
            %v1401 = vand.u32 %v1400, 4294901760
            %v1402 = vsub.f32 %v1400, %v1401
            %v1403 = vand.u32 %v1402, 4294901760
            %1404 = vmatpush1.msra.mxu0 %v1403
            %v1405 = vand.u32 %v1070, 4294901760
            %v1406 = vsub.f32 %v1070, %v1405
            %v1407 = vand.u32 %v1406, 4294901760
            %v1408 = vsub.f32 %v1406, %v1407
            %v1409 = vand.u32 %v1408, 4294901760
            %1410 = vmatprep.subr.mxu0 %v1409
            %v1411 = vand.u32 %v1069, 4294901760
            %v1412 = vsub.f32 %v1069, %v1411
            %v1413 = vand.u32 %v1412, 4294901760
            %v1414 = vsub.f32 %v1412, %v1413
            %v1415 = vand.u32 %v1414, 4294901760
            %1416 = vmatpush1.msra.mxu0 %v1415
            %v1417 = vand.u32 %v1072, 4294901760
            %v1418 = vsub.f32 %v1072, %v1417
            %v1419 = vand.u32 %v1418, 4294901760
            %v1420 = vsub.f32 %v1418, %v1419
            %v1421 = vand.u32 %v1420, 4294901760
            %1422 = vmatprep.subr.mxu0 %v1421
            %v1423 = vand.u32 %v1071, 4294901760
            %v1424 = vsub.f32 %v1071, %v1423
            %v1425 = vand.u32 %v1424, 4294901760
            %v1426 = vsub.f32 %v1424, %v1425
            %v1427 = vand.u32 %v1426, 4294901760
            %1428 = vmatpush1.msra.mxu0 %v1427
            %v1429 = vand.u32 %v1074, 4294901760
            %v1430 = vsub.f32 %v1074, %v1429
            %v1431 = vand.u32 %v1430, 4294901760
            %v1432 = vsub.f32 %v1430, %v1431
            %v1433 = vand.u32 %v1432, 4294901760
            %1434 = vmatprep.subr.mxu0 %v1433
            %v1435 = vand.u32 %v1073, 4294901760
            %v1436 = vsub.f32 %v1073, %v1435
            %v1437 = vand.u32 %v1436, 4294901760
            %v1438 = vsub.f32 %v1436, %v1437
            %v1439 = vand.u32 %v1438, 4294901760
            %1440 = vmatpush1.msra.mxu0 %v1439
            %v1441 = vand.u32 %v1076, 4294901760
            %v1442 = vsub.f32 %v1076, %v1441
            %v1443 = vand.u32 %v1442, 4294901760
            %v1444 = vsub.f32 %v1442, %v1443
            %v1445 = vand.u32 %v1444, 4294901760
            %1446 = vmatprep.subr.mxu0 %v1445
            %v1447 = vand.u32 %v1075, 4294901760
            %v1448 = vsub.f32 %v1075, %v1447
            %v1449 = vand.u32 %v1448, 4294901760
            %v1450 = vsub.f32 %v1448, %v1449
            %v1451 = vand.u32 %v1450, 4294901760
            %1452 = vmatpush1.msra.mxu0 %v1451
            %v1453 = vand.u32 %v1078, 4294901760
            %v1454 = vsub.f32 %v1078, %v1453
            %v1455 = vand.u32 %v1454, 4294901760
            %v1456 = vsub.f32 %v1454, %v1455
            %v1457 = vand.u32 %v1456, 4294901760
            %1458 = vmatprep.subr.mxu0 %v1457
            %v1459 = vand.u32 %v1077, 4294901760
            %v1460 = vsub.f32 %v1077, %v1459
            %v1461 = vand.u32 %v1460, 4294901760
            %v1462 = vsub.f32 %v1460, %v1461
            %v1463 = vand.u32 %v1462, 4294901760
            %1464 = vmatpush1.msra.mxu0 %v1463
            %v1465 = vand.u32 %v1080, 4294901760
            %v1466 = vsub.f32 %v1080, %v1465
            %v1467 = vand.u32 %v1466, 4294901760
            %v1468 = vsub.f32 %v1466, %v1467
            %v1469 = vand.u32 %v1468, 4294901760
            %1470 = vmatprep.subr.mxu0 %v1469
            %v1471 = vand.u32 %v1079, 4294901760
            %v1472 = vsub.f32 %v1079, %v1471
            %v1473 = vand.u32 %v1472, 4294901760
            %v1474 = vsub.f32 %v1472, %v1473
            %v1475 = vand.u32 %v1474, 4294901760
            %1476 = vmatpush1.msra.mxu0 %v1475
            %v1477 = vand.u32 %v1082, 4294901760
            %v1478 = vsub.f32 %v1082, %v1477
            %v1479 = vand.u32 %v1478, 4294901760
            %v1480 = vsub.f32 %v1478, %v1479
            %v1481 = vand.u32 %v1480, 4294901760
            %1482 = vmatprep.subr.mxu0 %v1481
            %v1483 = vand.u32 %v1081, 4294901760
            %v1484 = vsub.f32 %v1081, %v1483
            %v1485 = vand.u32 %v1484, 4294901760
            %v1486 = vsub.f32 %v1484, %v1485
            %v1487 = vand.u32 %v1486, 4294901760
            %1488 = vmatpush1.msra.mxu0 %v1487
            %v1489 = vand.u32 %v1084, 4294901760
            %v1490 = vsub.f32 %v1084, %v1489
            %v1491 = vand.u32 %v1490, 4294901760
            %v1492 = vsub.f32 %v1490, %v1491
            %v1493 = vand.u32 %v1492, 4294901760
            %1494 = vmatprep.subr.mxu0 %v1493
            %v1495 = vand.u32 %v1083, 4294901760
            %v1496 = vsub.f32 %v1083, %v1495
            %v1497 = vand.u32 %v1496, 4294901760
            %v1498 = vsub.f32 %v1496, %v1497
            %v1499 = vand.u32 %v1498, 4294901760
            %1500 = vmatpush1.msra.mxu0 %v1499
            %v1501 = vand.u32 %v1086, 4294901760
            %v1502 = vsub.f32 %v1086, %v1501
            %v1503 = vand.u32 %v1502, 4294901760
            %v1504 = vsub.f32 %v1502, %v1503
            %v1505 = vand.u32 %v1504, 4294901760
            %1506 = vmatprep.subr.mxu0 %v1505
            %v1507 = vand.u32 %v1085, 4294901760
            %v1508 = vsub.f32 %v1085, %v1507
            %v1509 = vand.u32 %v1508, 4294901760
            %v1510 = vsub.f32 %v1508, %v1509
            %v1511 = vand.u32 %v1510, 4294901760
            %1512 = vmatpush1.msra.mxu0 %v1511
            %v1513 = vand.u32 %v1088, 4294901760
            %v1514 = vsub.f32 %v1088, %v1513
            %v1515 = vand.u32 %v1514, 4294901760
            %v1516 = vsub.f32 %v1514, %v1515
            %v1517 = vand.u32 %v1516, 4294901760
            %1518 = vmatprep.subr.mxu0 %v1517
            %v1519 = vand.u32 %v1087, 4294901760
            %v1520 = vsub.f32 %v1087, %v1519
            %v1521 = vand.u32 %v1520, 4294901760
            %v1522 = vsub.f32 %v1520, %v1521
            %v1523 = vand.u32 %v1522, 4294901760
            %1524 = vmatpush1.msra.mxu0 %v1523
            %v1525 = vand.u32 %v1090, 4294901760
            %v1526 = vsub.f32 %v1090, %v1525
            %v1527 = vand.u32 %v1526, 4294901760
            %v1528 = vsub.f32 %v1526, %v1527
            %v1529 = vand.u32 %v1528, 4294901760
            %1530 = vmatprep.subr.mxu0 %v1529
            %v1531 = vand.u32 %v1089, 4294901760
            %v1532 = vsub.f32 %v1089, %v1531
            %v1533 = vand.u32 %v1532, 4294901760
            %v1534 = vsub.f32 %v1532, %v1533
            %v1535 = vand.u32 %v1534, 4294901760
            %1536 = vmatpush1.msra.mxu0 %v1535
            %v1537 = vand.u32 %v1092, 4294901760
            %v1538 = vsub.f32 %v1092, %v1537
            %v1539 = vand.u32 %v1538, 4294901760
            %v1540 = vsub.f32 %v1538, %v1539
            %v1541 = vand.u32 %v1540, 4294901760
            %1542 = vmatprep.subr.mxu0 %v1541
            %v1543 = vand.u32 %v1091, 4294901760
            %v1544 = vsub.f32 %v1091, %v1543
            %v1545 = vand.u32 %v1544, 4294901760
            %v1546 = vsub.f32 %v1544, %v1545
            %v1547 = vand.u32 %v1546, 4294901760
            %1548 = vmatpush1.msra.mxu0 %v1547
            %v1549 = vand.u32 %v1094, 4294901760
            %v1550 = vsub.f32 %v1094, %v1549
            %v1551 = vand.u32 %v1550, 4294901760
            %v1552 = vsub.f32 %v1550, %v1551
            %v1553 = vand.u32 %v1552, 4294901760
            %1554 = vmatprep.subr.mxu0 %v1553
            %v1555 = vand.u32 %v1093, 4294901760
            %v1556 = vsub.f32 %v1093, %v1555
            %v1557 = vand.u32 %v1556, 4294901760
            %v1558 = vsub.f32 %v1556, %v1557
            %v1559 = vand.u32 %v1558, 4294901760
            %1560 = vmatpush1.msra.mxu0 %v1559
            %v1561 = vand.u32 %v1096, 4294901760
            %v1562 = vsub.f32 %v1096, %v1561
            %v1563 = vand.u32 %v1562, 4294901760
            %v1564 = vsub.f32 %v1562, %v1563
            %v1565 = vand.u32 %v1564, 4294901760
            %1566 = vmatprep.subr.mxu0 %v1565
            %v1567 = vand.u32 %v1095, 4294901760
            %v1568 = vsub.f32 %v1095, %v1567
            %v1569 = vand.u32 %v1568, 4294901760
            %v1570 = vsub.f32 %v1568, %v1569
            %v1571 = vand.u32 %v1570, 4294901760
            %1572 = vmatpush1.msra.mxu0 %v1571
            %v1573 = vand.u32 %v1098, 4294901760
            %v1574 = vsub.f32 %v1098, %v1573
            %v1575 = vand.u32 %v1574, 4294901760
            %v1576 = vsub.f32 %v1574, %v1575
            %v1577 = vand.u32 %v1576, 4294901760
            %1578 = vmatprep.subr.mxu0 %v1577
            %v1579 = vand.u32 %v1097, 4294901760
            %v1580 = vsub.f32 %v1097, %v1579
            %v1581 = vand.u32 %v1580, 4294901760
            %v1582 = vsub.f32 %v1580, %v1581
            %v1583 = vand.u32 %v1582, 4294901760
            %1584 = vmatpush1.msra.mxu0 %v1583
            %v1585 = vand.u32 %v1100, 4294901760
            %v1586 = vsub.f32 %v1100, %v1585
            %v1587 = vand.u32 %v1586, 4294901760
            %v1588 = vsub.f32 %v1586, %v1587
            %v1589 = vand.u32 %v1588, 4294901760
            %1590 = vmatprep.subr.mxu0 %v1589
            %v1591 = vand.u32 %v1099, 4294901760
            %v1592 = vsub.f32 %v1099, %v1591
            %v1593 = vand.u32 %v1592, 4294901760
            %v1594 = vsub.f32 %v1592, %v1593
            %v1595 = vand.u32 %v1594, 4294901760
            %1596 = vmatpush1.msra.mxu0 %v1595
            %v1597 = vand.u32 %v1102, 4294901760
            %v1598 = vsub.f32 %v1102, %v1597
            %v1599 = vand.u32 %v1598, 4294901760
            %v1600 = vsub.f32 %v1598, %v1599
            %v1601 = vand.u32 %v1600, 4294901760
            %1602 = vmatprep.subr.mxu0 %v1601
            %v1603 = vand.u32 %v1101, 4294901760
            %v1604 = vsub.f32 %v1101, %v1603
            %v1605 = vand.u32 %v1604, 4294901760
            %v1606 = vsub.f32 %v1604, %v1605
            %v1607 = vand.u32 %v1606, 4294901760
            %1608 = vmatpush1.msra.mxu0 %v1607
            %v1609 = vand.u32 %v1104, 4294901760
            %v1610 = vsub.f32 %v1104, %v1609
            %v1611 = vand.u32 %v1610, 4294901760
            %v1612 = vsub.f32 %v1610, %v1611
            %v1613 = vand.u32 %v1612, 4294901760
            %1614 = vmatprep.subr.mxu0 %v1613
            %v1615 = vand.u32 %v1103, 4294901760
            %v1616 = vsub.f32 %v1103, %v1615
            %v1617 = vand.u32 %v1616, 4294901760
            %v1618 = vsub.f32 %v1616, %v1617
            %v1619 = vand.u32 %v1618, 4294901760
            %1620 = vmatpush1.msra.mxu0 %v1619
            %v1621 = vand.u32 %v1106, 4294901760
            %v1622 = vsub.f32 %v1106, %v1621
            %v1623 = vand.u32 %v1622, 4294901760
            %v1624 = vsub.f32 %v1622, %v1623
            %v1625 = vand.u32 %v1624, 4294901760
            %1626 = vmatprep.subr.mxu0 %v1625
            %v1627 = vand.u32 %v1105, 4294901760
            %v1628 = vsub.f32 %v1105, %v1627
            %v1629 = vand.u32 %v1628, 4294901760
            %v1630 = vsub.f32 %v1628, %v1629
            %v1631 = vand.u32 %v1630, 4294901760
            %1632 = vmatpush1.msra.mxu0 %v1631
            %v1633 = vand.u32 %v1108, 4294901760
            %v1634 = vsub.f32 %v1108, %v1633
            %v1635 = vand.u32 %v1634, 4294901760
            %v1636 = vsub.f32 %v1634, %v1635
            %v1637 = vand.u32 %v1636, 4294901760
            %1638 = vmatprep.subr.mxu0 %v1637
            %v1639 = vand.u32 %v1107, 4294901760
            %v1640 = vsub.f32 %v1107, %v1639
            %v1641 = vand.u32 %v1640, 4294901760
            %v1642 = vsub.f32 %v1640, %v1641
            %v1643 = vand.u32 %v1642, 4294901760
            %1644 = vmatpush1.msra.mxu0 %v1643
            %v1645 = vand.u32 %v1114, 4294901760
            %1646 = vmatprep.mubr.f32.mxu0 %v1645
            %v1647 = vand.u32 %v1112, 4294901760
            %1648 = vmatmul.mubr.f32.gmra.mrb[0].mxu0 %v1647
            %v1649 = vpop.f32.mrb[0].mxu0
            %v1650 = vadd.f32 %v1257, %v1649
            %v1651 = vpop.f32.mrb[0].mxu0
            %v1652 = vadd.f32 %v1259, %v1651
            %1653 = vdwg.mxu0
            %v1654 = vand.u32 %v1046, 4294901760
            %v1655 = vsub.f32 %v1046, %v1654
            %1656 = vmatprep.subr.mxu0 %v1655
            %v1657 = vand.u32 %v1045, 4294901760
            %v1658 = vsub.f32 %v1045, %v1657
            %1659 = vmatpush1.msra.mxu0 %v1658
            %v1660 = vand.u32 %v1048, 4294901760
            %v1661 = vsub.f32 %v1048, %v1660
            %1662 = vmatprep.subr.mxu0 %v1661
            %v1663 = vand.u32 %v1047, 4294901760
            %v1664 = vsub.f32 %v1047, %v1663
            %1665 = vmatpush1.msra.mxu0 %v1664
            %v1666 = vand.u32 %v1050, 4294901760
            %v1667 = vsub.f32 %v1050, %v1666
            %1668 = vmatprep.subr.mxu0 %v1667
            %v1669 = vand.u32 %v1049, 4294901760
            %v1670 = vsub.f32 %v1049, %v1669
            %1671 = vmatpush1.msra.mxu0 %v1670
            %v1672 = vand.u32 %v1052, 4294901760
            %v1673 = vsub.f32 %v1052, %v1672
            %1674 = vmatprep.subr.mxu0 %v1673
            %v1675 = vand.u32 %v1051, 4294901760
            %v1676 = vsub.f32 %v1051, %v1675
            %1677 = vmatpush1.msra.mxu0 %v1676
            %v1678 = vand.u32 %v1054, 4294901760
            %v1679 = vsub.f32 %v1054, %v1678
            %1680 = vmatprep.subr.mxu0 %v1679
            %v1681 = vand.u32 %v1053, 4294901760
            %v1682 = vsub.f32 %v1053, %v1681
            %1683 = vmatpush1.msra.mxu0 %v1682
            %v1684 = vand.u32 %v1056, 4294901760
            %v1685 = vsub.f32 %v1056, %v1684
            %1686 = vmatprep.subr.mxu0 %v1685
            %v1687 = vand.u32 %v1055, 4294901760
            %v1688 = vsub.f32 %v1055, %v1687
            %1689 = vmatpush1.msra.mxu0 %v1688
            %v1690 = vand.u32 %v1058, 4294901760
            %v1691 = vsub.f32 %v1058, %v1690
            %1692 = vmatprep.subr.mxu0 %v1691
            %v1693 = vand.u32 %v1057, 4294901760
            %v1694 = vsub.f32 %v1057, %v1693
            %1695 = vmatpush1.msra.mxu0 %v1694
            %v1696 = vand.u32 %v1060, 4294901760
            %v1697 = vsub.f32 %v1060, %v1696
            %1698 = vmatprep.subr.mxu0 %v1697
            %v1699 = vand.u32 %v1059, 4294901760
            %v1700 = vsub.f32 %v1059, %v1699
            %1701 = vmatpush1.msra.mxu0 %v1700
            %v1702 = vand.u32 %v1062, 4294901760
            %v1703 = vsub.f32 %v1062, %v1702
            %1704 = vmatprep.subr.mxu0 %v1703
            %v1705 = vand.u32 %v1061, 4294901760
            %v1706 = vsub.f32 %v1061, %v1705
            %1707 = vmatpush1.msra.mxu0 %v1706
            %v1708 = vand.u32 %v1064, 4294901760
            %v1709 = vsub.f32 %v1064, %v1708
            %1710 = vmatprep.subr.mxu0 %v1709
            %v1711 = vand.u32 %v1063, 4294901760
            %v1712 = vsub.f32 %v1063, %v1711
            %1713 = vmatpush1.msra.mxu0 %v1712
            %v1714 = vand.u32 %v1066, 4294901760
            %v1715 = vsub.f32 %v1066, %v1714
            %1716 = vmatprep.subr.mxu0 %v1715
            %v1717 = vand.u32 %v1065, 4294901760
            %v1718 = vsub.f32 %v1065, %v1717
            %1719 = vmatpush1.msra.mxu0 %v1718
            %v1720 = vand.u32 %v1068, 4294901760
            %v1721 = vsub.f32 %v1068, %v1720
            %1722 = vmatprep.subr.mxu0 %v1721
            %v1723 = vand.u32 %v1067, 4294901760
            %v1724 = vsub.f32 %v1067, %v1723
            %1725 = vmatpush1.msra.mxu0 %v1724
            %v1726 = vand.u32 %v1070, 4294901760
            %v1727 = vsub.f32 %v1070, %v1726
            %1728 = vmatprep.subr.mxu0 %v1727
            %v1729 = vand.u32 %v1069, 4294901760
            %v1730 = vsub.f32 %v1069, %v1729
            %1731 = vmatpush1.msra.mxu0 %v1730
            %v1732 = vand.u32 %v1072, 4294901760
            %v1733 = vsub.f32 %v1072, %v1732
            %1734 = vmatprep.subr.mxu0 %v1733
            %v1735 = vand.u32 %v1071, 4294901760
            %v1736 = vsub.f32 %v1071, %v1735
            %1737 = vmatpush1.msra.mxu0 %v1736
            %v1738 = vand.u32 %v1074, 4294901760
            %v1739 = vsub.f32 %v1074, %v1738
            %1740 = vmatprep.subr.mxu0 %v1739
            %v1741 = vand.u32 %v1073, 4294901760
            %v1742 = vsub.f32 %v1073, %v1741
            %1743 = vmatpush1.msra.mxu0 %v1742
            %v1744 = vand.u32 %v1076, 4294901760
            %v1745 = vsub.f32 %v1076, %v1744
            %1746 = vmatprep.subr.mxu0 %v1745
            %v1747 = vand.u32 %v1075, 4294901760
            %v1748 = vsub.f32 %v1075, %v1747
            %1749 = vmatpush1.msra.mxu0 %v1748
            %v1750 = vand.u32 %v1078, 4294901760
            %v1751 = vsub.f32 %v1078, %v1750
            %1752 = vmatprep.subr.mxu0 %v1751
            %v1753 = vand.u32 %v1077, 4294901760
            %v1754 = vsub.f32 %v1077, %v1753
            %1755 = vmatpush1.msra.mxu0 %v1754
            %v1756 = vand.u32 %v1080, 4294901760
            %v1757 = vsub.f32 %v1080, %v1756
            %1758 = vmatprep.subr.mxu0 %v1757
            %v1759 = vand.u32 %v1079, 4294901760
            %v1760 = vsub.f32 %v1079, %v1759
            %1761 = vmatpush1.msra.mxu0 %v1760
            %v1762 = vand.u32 %v1082, 4294901760
            %v1763 = vsub.f32 %v1082, %v1762
            %1764 = vmatprep.subr.mxu0 %v1763
            %v1765 = vand.u32 %v1081, 4294901760
            %v1766 = vsub.f32 %v1081, %v1765
            %1767 = vmatpush1.msra.mxu0 %v1766
            %v1768 = vand.u32 %v1084, 4294901760
            %v1769 = vsub.f32 %v1084, %v1768
            %1770 = vmatprep.subr.mxu0 %v1769
            %v1771 = vand.u32 %v1083, 4294901760
            %v1772 = vsub.f32 %v1083, %v1771
            %1773 = vmatpush1.msra.mxu0 %v1772
            %v1774 = vand.u32 %v1086, 4294901760
            %v1775 = vsub.f32 %v1086, %v1774
            %1776 = vmatprep.subr.mxu0 %v1775
            %v1777 = vand.u32 %v1085, 4294901760
            %v1778 = vsub.f32 %v1085, %v1777
            %1779 = vmatpush1.msra.mxu0 %v1778
            %v1780 = vand.u32 %v1088, 4294901760
            %v1781 = vsub.f32 %v1088, %v1780
            %1782 = vmatprep.subr.mxu0 %v1781
            %v1783 = vand.u32 %v1087, 4294901760
            %v1784 = vsub.f32 %v1087, %v1783
            %1785 = vmatpush1.msra.mxu0 %v1784
            %v1786 = vand.u32 %v1090, 4294901760
            %v1787 = vsub.f32 %v1090, %v1786
            %1788 = vmatprep.subr.mxu0 %v1787
            %v1789 = vand.u32 %v1089, 4294901760
            %v1790 = vsub.f32 %v1089, %v1789
            %1791 = vmatpush1.msra.mxu0 %v1790
            %v1792 = vand.u32 %v1092, 4294901760
            %v1793 = vsub.f32 %v1092, %v1792
            %1794 = vmatprep.subr.mxu0 %v1793
            %v1795 = vand.u32 %v1091, 4294901760
            %v1796 = vsub.f32 %v1091, %v1795
            %1797 = vmatpush1.msra.mxu0 %v1796
            %v1798 = vand.u32 %v1094, 4294901760
            %v1799 = vsub.f32 %v1094, %v1798
            %1800 = vmatprep.subr.mxu0 %v1799
            %v1801 = vand.u32 %v1093, 4294901760
            %v1802 = vsub.f32 %v1093, %v1801
            %1803 = vmatpush1.msra.mxu0 %v1802
            %v1804 = vand.u32 %v1096, 4294901760
            %v1805 = vsub.f32 %v1096, %v1804
            %1806 = vmatprep.subr.mxu0 %v1805
            %v1807 = vand.u32 %v1095, 4294901760
            %v1808 = vsub.f32 %v1095, %v1807
            %1809 = vmatpush1.msra.mxu0 %v1808
            %v1810 = vand.u32 %v1098, 4294901760
            %v1811 = vsub.f32 %v1098, %v1810
            %1812 = vmatprep.subr.mxu0 %v1811
            %v1813 = vand.u32 %v1097, 4294901760
            %v1814 = vsub.f32 %v1097, %v1813
            %1815 = vmatpush1.msra.mxu0 %v1814
            %v1816 = vand.u32 %v1100, 4294901760
            %v1817 = vsub.f32 %v1100, %v1816
            %1818 = vmatprep.subr.mxu0 %v1817
            %v1819 = vand.u32 %v1099, 4294901760
            %v1820 = vsub.f32 %v1099, %v1819
            %1821 = vmatpush1.msra.mxu0 %v1820
            %v1822 = vand.u32 %v1102, 4294901760
            %v1823 = vsub.f32 %v1102, %v1822
            %1824 = vmatprep.subr.mxu0 %v1823
            %v1825 = vand.u32 %v1101, 4294901760
            %v1826 = vsub.f32 %v1101, %v1825
            %1827 = vmatpush1.msra.mxu0 %v1826
            %v1828 = vand.u32 %v1104, 4294901760
            %v1829 = vsub.f32 %v1104, %v1828
            %1830 = vmatprep.subr.mxu0 %v1829
            %v1831 = vand.u32 %v1103, 4294901760
            %v1832 = vsub.f32 %v1103, %v1831
            %1833 = vmatpush1.msra.mxu0 %v1832
            %v1834 = vand.u32 %v1106, 4294901760
            %v1835 = vsub.f32 %v1106, %v1834
            %1836 = vmatprep.subr.mxu0 %v1835
            %v1837 = vand.u32 %v1105, 4294901760
            %v1838 = vsub.f32 %v1105, %v1837
            %1839 = vmatpush1.msra.mxu0 %v1838
            %v1840 = vand.u32 %v1108, 4294901760
            %v1841 = vsub.f32 %v1108, %v1840
            %1842 = vmatprep.subr.mxu0 %v1841
            %v1843 = vand.u32 %v1107, 4294901760
            %v1844 = vsub.f32 %v1107, %v1843
            %1845 = vmatpush1.msra.mxu0 %v1844
            %v1846 = vand.u32 %v1114, 4294901760
            %v1847 = vsub.f32 %v1114, %v1846
            %1848 = vmatprep.mubr.f32.mxu0 %v1847
            %v1849 = vand.u32 %v1112, 4294901760
            %v1850 = vsub.f32 %v1112, %v1849
            %1851 = vmatmul.mubr.f32.gmra.mrb[0].mxu0 %v1850
            %v1852 = vpop.f32.mrb[0].mxu0
            %v1853 = vadd.f32 %v1650, %v1852
            %v1854 = vpop.f32.mrb[0].mxu0
            %v1855 = vadd.f32 %v1652, %v1854
            %1856 = vdwg.mxu0
            %v1857 = vand.u32 %v1046, 4294901760
            %1858 = vmatprep.subr.mxu0 %v1857
            %v1859 = vand.u32 %v1045, 4294901760
            %1860 = vmatpush1.msra.mxu0 %v1859
            %v1861 = vand.u32 %v1048, 4294901760
            %1862 = vmatprep.subr.mxu0 %v1861
            %v1863 = vand.u32 %v1047, 4294901760
            %1864 = vmatpush1.msra.mxu0 %v1863
            %v1865 = vand.u32 %v1050, 4294901760
            %1866 = vmatprep.subr.mxu0 %v1865
            %v1867 = vand.u32 %v1049, 4294901760
            %1868 = vmatpush1.msra.mxu0 %v1867
            %v1869 = vand.u32 %v1052, 4294901760
            %1870 = vmatprep.subr.mxu0 %v1869
            %v1871 = vand.u32 %v1051, 4294901760
            %1872 = vmatpush1.msra.mxu0 %v1871
            %v1873 = vand.u32 %v1054, 4294901760
            %1874 = vmatprep.subr.mxu0 %v1873
            %v1875 = vand.u32 %v1053, 4294901760
            %1876 = vmatpush1.msra.mxu0 %v1875
            %v1877 = vand.u32 %v1056, 4294901760
            %1878 = vmatprep.subr.mxu0 %v1877
            %v1879 = vand.u32 %v1055, 4294901760
            %1880 = vmatpush1.msra.mxu0 %v1879
            %v1881 = vand.u32 %v1058, 4294901760
            %1882 = vmatprep.subr.mxu0 %v1881
            %v1883 = vand.u32 %v1057, 4294901760
            %1884 = vmatpush1.msra.mxu0 %v1883
            %v1885 = vand.u32 %v1060, 4294901760
            %1886 = vmatprep.subr.mxu0 %v1885
            %v1887 = vand.u32 %v1059, 4294901760
            %1888 = vmatpush1.msra.mxu0 %v1887
            %v1889 = vand.u32 %v1062, 4294901760
            %1890 = vmatprep.subr.mxu0 %v1889
            %v1891 = vand.u32 %v1061, 4294901760
            %1892 = vmatpush1.msra.mxu0 %v1891
            %v1893 = vand.u32 %v1064, 4294901760
            %1894 = vmatprep.subr.mxu0 %v1893
            %v1895 = vand.u32 %v1063, 4294901760
            %1896 = vmatpush1.msra.mxu0 %v1895
            %v1897 = vand.u32 %v1066, 4294901760
            %1898 = vmatprep.subr.mxu0 %v1897
            %v1899 = vand.u32 %v1065, 4294901760
            %1900 = vmatpush1.msra.mxu0 %v1899
            %v1901 = vand.u32 %v1068, 4294901760
            %1902 = vmatprep.subr.mxu0 %v1901
            %v1903 = vand.u32 %v1067, 4294901760
            %1904 = vmatpush1.msra.mxu0 %v1903
            %v1905 = vand.u32 %v1070, 4294901760
            %1906 = vmatprep.subr.mxu0 %v1905
            %v1907 = vand.u32 %v1069, 4294901760
            %1908 = vmatpush1.msra.mxu0 %v1907
            %v1909 = vand.u32 %v1072, 4294901760
            %1910 = vmatprep.subr.mxu0 %v1909
            %v1911 = vand.u32 %v1071, 4294901760
            %1912 = vmatpush1.msra.mxu0 %v1911
            %v1913 = vand.u32 %v1074, 4294901760
            %1914 = vmatprep.subr.mxu0 %v1913
            %v1915 = vand.u32 %v1073, 4294901760
            %1916 = vmatpush1.msra.mxu0 %v1915
            %v1917 = vand.u32 %v1076, 4294901760
            %1918 = vmatprep.subr.mxu0 %v1917
            %v1919 = vand.u32 %v1075, 4294901760
            %1920 = vmatpush1.msra.mxu0 %v1919
            %v1921 = vand.u32 %v1078, 4294901760
            %1922 = vmatprep.subr.mxu0 %v1921
            %v1923 = vand.u32 %v1077, 4294901760
            %1924 = vmatpush1.msra.mxu0 %v1923
            %v1925 = vand.u32 %v1080, 4294901760
            %1926 = vmatprep.subr.mxu0 %v1925
            %v1927 = vand.u32 %v1079, 4294901760
            %1928 = vmatpush1.msra.mxu0 %v1927
            %v1929 = vand.u32 %v1082, 4294901760
            %1930 = vmatprep.subr.mxu0 %v1929
            %v1931 = vand.u32 %v1081, 4294901760
            %1932 = vmatpush1.msra.mxu0 %v1931
            %v1933 = vand.u32 %v1084, 4294901760
            %1934 = vmatprep.subr.mxu0 %v1933
            %v1935 = vand.u32 %v1083, 4294901760
            %1936 = vmatpush1.msra.mxu0 %v1935
            %v1937 = vand.u32 %v1086, 4294901760
            %1938 = vmatprep.subr.mxu0 %v1937
            %v1939 = vand.u32 %v1085, 4294901760
            %1940 = vmatpush1.msra.mxu0 %v1939
            %v1941 = vand.u32 %v1088, 4294901760
            %1942 = vmatprep.subr.mxu0 %v1941
            %v1943 = vand.u32 %v1087, 4294901760
            %1944 = vmatpush1.msra.mxu0 %v1943
            %v1945 = vand.u32 %v1090, 4294901760
            %1946 = vmatprep.subr.mxu0 %v1945
            %v1947 = vand.u32 %v1089, 4294901760
            %1948 = vmatpush1.msra.mxu0 %v1947
            %v1949 = vand.u32 %v1092, 4294901760
            %1950 = vmatprep.subr.mxu0 %v1949
            %v1951 = vand.u32 %v1091, 4294901760
            %1952 = vmatpush1.msra.mxu0 %v1951
            %v1953 = vand.u32 %v1094, 4294901760
            %1954 = vmatprep.subr.mxu0 %v1953
            %v1955 = vand.u32 %v1093, 4294901760
            %1956 = vmatpush1.msra.mxu0 %v1955
            %v1957 = vand.u32 %v1096, 4294901760
            %1958 = vmatprep.subr.mxu0 %v1957
            %v1959 = vand.u32 %v1095, 4294901760
            %1960 = vmatpush1.msra.mxu0 %v1959
            %v1961 = vand.u32 %v1098, 4294901760
            %1962 = vmatprep.subr.mxu0 %v1961
            %v1963 = vand.u32 %v1097, 4294901760
            %1964 = vmatpush1.msra.mxu0 %v1963
            %v1965 = vand.u32 %v1100, 4294901760
            %1966 = vmatprep.subr.mxu0 %v1965
            %v1967 = vand.u32 %v1099, 4294901760
            %1968 = vmatpush1.msra.mxu0 %v1967
            %v1969 = vand.u32 %v1102, 4294901760
            %1970 = vmatprep.subr.mxu0 %v1969
            %v1971 = vand.u32 %v1101, 4294901760
            %1972 = vmatpush1.msra.mxu0 %v1971
            %v1973 = vand.u32 %v1104, 4294901760
            %1974 = vmatprep.subr.mxu0 %v1973
            %v1975 = vand.u32 %v1103, 4294901760
            %1976 = vmatpush1.msra.mxu0 %v1975
            %v1977 = vand.u32 %v1106, 4294901760
            %1978 = vmatprep.subr.mxu0 %v1977
            %v1979 = vand.u32 %v1105, 4294901760
            %1980 = vmatpush1.msra.mxu0 %v1979
            %v1981 = vand.u32 %v1108, 4294901760
            %1982 = vmatprep.subr.mxu0 %v1981
            %v1983 = vand.u32 %v1107, 4294901760
            %1984 = vmatpush1.msra.mxu0 %v1983
            %v1985 = vand.u32 %v1114, 4294901760
            %v1986 = vsub.f32 %v1114, %v1985
            %v1987 = vand.u32 %v1986, 4294901760
            %1988 = vmatprep.mubr.f32.mxu0 %v1987
            %v1989 = vand.u32 %v1112, 4294901760
            %v1990 = vsub.f32 %v1112, %v1989
            %v1991 = vand.u32 %v1990, 4294901760
            %1992 = vmatmul.mubr.f32.gmra.mrb[0].mxu0 %v1991
            %v1993 = vpop.f32.mrb[0].mxu0
            %v1994 = vadd.f32 %v1853, %v1993
            %v1995 = vpop.f32.mrb[0].mxu0
            %v1996 = vadd.f32 %v1855, %v1995
            %1997 = vdwg.mxu0
            %v1998 = vand.u32 %v1046, 4294901760
            %v1999 = vsub.f32 %v1046, %v1998
            %v2000 = vand.u32 %v1999, 4294901760
            %2001 = vmatprep.subr.mxu0 %v2000
            %v2002 = vand.u32 %v1045, 4294901760
            %v2003 = vsub.f32 %v1045, %v2002
            %v2004 = vand.u32 %v2003, 4294901760
            %2005 = vmatpush1.msra.mxu0 %v2004
            %v2006 = vand.u32 %v1048, 4294901760
            %v2007 = vsub.f32 %v1048, %v2006
            %v2008 = vand.u32 %v2007, 4294901760
            %2009 = vmatprep.subr.mxu0 %v2008
            %v2010 = vand.u32 %v1047, 4294901760
            %v2011 = vsub.f32 %v1047, %v2010
            %v2012 = vand.u32 %v2011, 4294901760
            %2013 = vmatpush1.msra.mxu0 %v2012
            %v2014 = vand.u32 %v1050, 4294901760
            %v2015 = vsub.f32 %v1050, %v2014
            %v2016 = vand.u32 %v2015, 4294901760
            %2017 = vmatprep.subr.mxu0 %v2016
            %v2018 = vand.u32 %v1049, 4294901760
            %v2019 = vsub.f32 %v1049, %v2018
            %v2020 = vand.u32 %v2019, 4294901760
            %2021 = vmatpush1.msra.mxu0 %v2020
            %v2022 = vand.u32 %v1052, 4294901760
            %v2023 = vsub.f32 %v1052, %v2022
            %v2024 = vand.u32 %v2023, 4294901760
            %2025 = vmatprep.subr.mxu0 %v2024
            %v2026 = vand.u32 %v1051, 4294901760
            %v2027 = vsub.f32 %v1051, %v2026
            %v2028 = vand.u32 %v2027, 4294901760
            %2029 = vmatpush1.msra.mxu0 %v2028
            %v2030 = vand.u32 %v1054, 4294901760
            %v2031 = vsub.f32 %v1054, %v2030
            %v2032 = vand.u32 %v2031, 4294901760
            %2033 = vmatprep.subr.mxu0 %v2032
            %v2034 = vand.u32 %v1053, 4294901760
            %v2035 = vsub.f32 %v1053, %v2034
            %v2036 = vand.u32 %v2035, 4294901760
            %2037 = vmatpush1.msra.mxu0 %v2036
            %v2038 = vand.u32 %v1056, 4294901760
            %v2039 = vsub.f32 %v1056, %v2038
            %v2040 = vand.u32 %v2039, 4294901760
            %2041 = vmatprep.subr.mxu0 %v2040
            %v2042 = vand.u32 %v1055, 4294901760
            %v2043 = vsub.f32 %v1055, %v2042
            %v2044 = vand.u32 %v2043, 4294901760
            %2045 = vmatpush1.msra.mxu0 %v2044
            %v2046 = vand.u32 %v1058, 4294901760
            %v2047 = vsub.f32 %v1058, %v2046
            %v2048 = vand.u32 %v2047, 4294901760
            %2049 = vmatprep.subr.mxu0 %v2048
            %v2050 = vand.u32 %v1057, 4294901760
            %v2051 = vsub.f32 %v1057, %v2050
            %v2052 = vand.u32 %v2051, 4294901760
            %2053 = vmatpush1.msra.mxu0 %v2052
            %v2054 = vand.u32 %v1060, 4294901760
            %v2055 = vsub.f32 %v1060, %v2054
            %v2056 = vand.u32 %v2055, 4294901760
            %2057 = vmatprep.subr.mxu0 %v2056
            %v2058 = vand.u32 %v1059, 4294901760
            %v2059 = vsub.f32 %v1059, %v2058
            %v2060 = vand.u32 %v2059, 4294901760
            %2061 = vmatpush1.msra.mxu0 %v2060
            %v2062 = vand.u32 %v1062, 4294901760
            %v2063 = vsub.f32 %v1062, %v2062
            %v2064 = vand.u32 %v2063, 4294901760
            %2065 = vmatprep.subr.mxu0 %v2064
            %v2066 = vand.u32 %v1061, 4294901760
            %v2067 = vsub.f32 %v1061, %v2066
            %v2068 = vand.u32 %v2067, 4294901760
            %2069 = vmatpush1.msra.mxu0 %v2068
            %v2070 = vand.u32 %v1064, 4294901760
            %v2071 = vsub.f32 %v1064, %v2070
            %v2072 = vand.u32 %v2071, 4294901760
            %2073 = vmatprep.subr.mxu0 %v2072
            %v2074 = vand.u32 %v1063, 4294901760
            %v2075 = vsub.f32 %v1063, %v2074
            %v2076 = vand.u32 %v2075, 4294901760
            %2077 = vmatpush1.msra.mxu0 %v2076
            %v2078 = vand.u32 %v1066, 4294901760
            %v2079 = vsub.f32 %v1066, %v2078
            %v2080 = vand.u32 %v2079, 4294901760
            %2081 = vmatprep.subr.mxu0 %v2080
            %v2082 = vand.u32 %v1065, 4294901760
            %v2083 = vsub.f32 %v1065, %v2082
            %v2084 = vand.u32 %v2083, 4294901760
            %2085 = vmatpush1.msra.mxu0 %v2084
            %v2086 = vand.u32 %v1068, 4294901760
            %v2087 = vsub.f32 %v1068, %v2086
            %v2088 = vand.u32 %v2087, 4294901760
            %2089 = vmatprep.subr.mxu0 %v2088
            %v2090 = vand.u32 %v1067, 4294901760
            %v2091 = vsub.f32 %v1067, %v2090
            %v2092 = vand.u32 %v2091, 4294901760
            %2093 = vmatpush1.msra.mxu0 %v2092
            %v2094 = vand.u32 %v1070, 4294901760
            %v2095 = vsub.f32 %v1070, %v2094
            %v2096 = vand.u32 %v2095, 4294901760
            %2097 = vmatprep.subr.mxu0 %v2096
            %v2098 = vand.u32 %v1069, 4294901760
            %v2099 = vsub.f32 %v1069, %v2098
            %v2100 = vand.u32 %v2099, 4294901760
            %2101 = vmatpush1.msra.mxu0 %v2100
            %v2102 = vand.u32 %v1072, 4294901760
            %v2103 = vsub.f32 %v1072, %v2102
            %v2104 = vand.u32 %v2103, 4294901760
            %2105 = vmatprep.subr.mxu0 %v2104
            %v2106 = vand.u32 %v1071, 4294901760
            %v2107 = vsub.f32 %v1071, %v2106
            %v2108 = vand.u32 %v2107, 4294901760
            %2109 = vmatpush1.msra.mxu0 %v2108
            %v2110 = vand.u32 %v1074, 4294901760
            %v2111 = vsub.f32 %v1074, %v2110
            %v2112 = vand.u32 %v2111, 4294901760
            %2113 = vmatprep.subr.mxu0 %v2112
            %v2114 = vand.u32 %v1073, 4294901760
            %v2115 = vsub.f32 %v1073, %v2114
            %v2116 = vand.u32 %v2115, 4294901760
            %2117 = vmatpush1.msra.mxu0 %v2116
            %v2118 = vand.u32 %v1076, 4294901760
            %v2119 = vsub.f32 %v1076, %v2118
            %v2120 = vand.u32 %v2119, 4294901760
            %2121 = vmatprep.subr.mxu0 %v2120
            %v2122 = vand.u32 %v1075, 4294901760
            %v2123 = vsub.f32 %v1075, %v2122
            %v2124 = vand.u32 %v2123, 4294901760
            %2125 = vmatpush1.msra.mxu0 %v2124
            %v2126 = vand.u32 %v1078, 4294901760
            %v2127 = vsub.f32 %v1078, %v2126
            %v2128 = vand.u32 %v2127, 4294901760
            %2129 = vmatprep.subr.mxu0 %v2128
            %v2130 = vand.u32 %v1077, 4294901760
            %v2131 = vsub.f32 %v1077, %v2130
            %v2132 = vand.u32 %v2131, 4294901760
            %2133 = vmatpush1.msra.mxu0 %v2132
            %v2134 = vand.u32 %v1080, 4294901760
            %v2135 = vsub.f32 %v1080, %v2134
            %v2136 = vand.u32 %v2135, 4294901760
            %2137 = vmatprep.subr.mxu0 %v2136
            %v2138 = vand.u32 %v1079, 4294901760
            %v2139 = vsub.f32 %v1079, %v2138
            %v2140 = vand.u32 %v2139, 4294901760
            %2141 = vmatpush1.msra.mxu0 %v2140
            %v2142 = vand.u32 %v1082, 4294901760
            %v2143 = vsub.f32 %v1082, %v2142
            %v2144 = vand.u32 %v2143, 4294901760
            %2145 = vmatprep.subr.mxu0 %v2144
            %v2146 = vand.u32 %v1081, 4294901760
            %v2147 = vsub.f32 %v1081, %v2146
            %v2148 = vand.u32 %v2147, 4294901760
            %2149 = vmatpush1.msra.mxu0 %v2148
            %v2150 = vand.u32 %v1084, 4294901760
            %v2151 = vsub.f32 %v1084, %v2150
            %v2152 = vand.u32 %v2151, 4294901760
            %2153 = vmatprep.subr.mxu0 %v2152
            %v2154 = vand.u32 %v1083, 4294901760
            %v2155 = vsub.f32 %v1083, %v2154
            %v2156 = vand.u32 %v2155, 4294901760
            %2157 = vmatpush1.msra.mxu0 %v2156
            %v2158 = vand.u32 %v1086, 4294901760
            %v2159 = vsub.f32 %v1086, %v2158
            %v2160 = vand.u32 %v2159, 4294901760
            %2161 = vmatprep.subr.mxu0 %v2160
            %v2162 = vand.u32 %v1085, 4294901760
            %v2163 = vsub.f32 %v1085, %v2162
            %v2164 = vand.u32 %v2163, 4294901760
            %2165 = vmatpush1.msra.mxu0 %v2164
            %v2166 = vand.u32 %v1088, 4294901760
            %v2167 = vsub.f32 %v1088, %v2166
            %v2168 = vand.u32 %v2167, 4294901760
            %2169 = vmatprep.subr.mxu0 %v2168
            %v2170 = vand.u32 %v1087, 4294901760
            %v2171 = vsub.f32 %v1087, %v2170
            %v2172 = vand.u32 %v2171, 4294901760
            %2173 = vmatpush1.msra.mxu0 %v2172
            %v2174 = vand.u32 %v1090, 4294901760
            %v2175 = vsub.f32 %v1090, %v2174
            %v2176 = vand.u32 %v2175, 4294901760
            %2177 = vmatprep.subr.mxu0 %v2176
            %v2178 = vand.u32 %v1089, 4294901760
            %v2179 = vsub.f32 %v1089, %v2178
            %v2180 = vand.u32 %v2179, 4294901760
            %2181 = vmatpush1.msra.mxu0 %v2180
            %v2182 = vand.u32 %v1092, 4294901760
            %v2183 = vsub.f32 %v1092, %v2182
            %v2184 = vand.u32 %v2183, 4294901760
            %2185 = vmatprep.subr.mxu0 %v2184
            %v2186 = vand.u32 %v1091, 4294901760
            %v2187 = vsub.f32 %v1091, %v2186
            %v2188 = vand.u32 %v2187, 4294901760
            %2189 = vmatpush1.msra.mxu0 %v2188
            %v2190 = vand.u32 %v1094, 4294901760
            %v2191 = vsub.f32 %v1094, %v2190
            %v2192 = vand.u32 %v2191, 4294901760
            %2193 = vmatprep.subr.mxu0 %v2192
            %v2194 = vand.u32 %v1093, 4294901760
            %v2195 = vsub.f32 %v1093, %v2194
            %v2196 = vand.u32 %v2195, 4294901760
            %2197 = vmatpush1.msra.mxu0 %v2196
            %v2198 = vand.u32 %v1096, 4294901760
            %v2199 = vsub.f32 %v1096, %v2198
            %v2200 = vand.u32 %v2199, 4294901760
            %2201 = vmatprep.subr.mxu0 %v2200
            %v2202 = vand.u32 %v1095, 4294901760
            %v2203 = vsub.f32 %v1095, %v2202
            %v2204 = vand.u32 %v2203, 4294901760
            %2205 = vmatpush1.msra.mxu0 %v2204
            %v2206 = vand.u32 %v1098, 4294901760
            %v2207 = vsub.f32 %v1098, %v2206
            %v2208 = vand.u32 %v2207, 4294901760
            %2209 = vmatprep.subr.mxu0 %v2208
            %v2210 = vand.u32 %v1097, 4294901760
            %v2211 = vsub.f32 %v1097, %v2210
            %v2212 = vand.u32 %v2211, 4294901760
            %2213 = vmatpush1.msra.mxu0 %v2212
            %v2214 = vand.u32 %v1100, 4294901760
            %v2215 = vsub.f32 %v1100, %v2214
            %v2216 = vand.u32 %v2215, 4294901760
            %2217 = vmatprep.subr.mxu0 %v2216
            %v2218 = vand.u32 %v1099, 4294901760
            %v2219 = vsub.f32 %v1099, %v2218
            %v2220 = vand.u32 %v2219, 4294901760
            %2221 = vmatpush1.msra.mxu0 %v2220
            %v2222 = vand.u32 %v1102, 4294901760
            %v2223 = vsub.f32 %v1102, %v2222
            %v2224 = vand.u32 %v2223, 4294901760
            %2225 = vmatprep.subr.mxu0 %v2224
            %v2226 = vand.u32 %v1101, 4294901760
            %v2227 = vsub.f32 %v1101, %v2226
            %v2228 = vand.u32 %v2227, 4294901760
            %2229 = vmatpush1.msra.mxu0 %v2228
            %v2230 = vand.u32 %v1104, 4294901760
            %v2231 = vsub.f32 %v1104, %v2230
            %v2232 = vand.u32 %v2231, 4294901760
            %2233 = vmatprep.subr.mxu0 %v2232
            %v2234 = vand.u32 %v1103, 4294901760
            %v2235 = vsub.f32 %v1103, %v2234
            %v2236 = vand.u32 %v2235, 4294901760
            %2237 = vmatpush1.msra.mxu0 %v2236
            %v2238 = vand.u32 %v1106, 4294901760
            %v2239 = vsub.f32 %v1106, %v2238
            %v2240 = vand.u32 %v2239, 4294901760
            %2241 = vmatprep.subr.mxu0 %v2240
            %v2242 = vand.u32 %v1105, 4294901760
            %v2243 = vsub.f32 %v1105, %v2242
            %v2244 = vand.u32 %v2243, 4294901760
            %2245 = vmatpush1.msra.mxu0 %v2244
            %v2246 = vand.u32 %v1108, 4294901760
            %v2247 = vsub.f32 %v1108, %v2246
            %v2248 = vand.u32 %v2247, 4294901760
            %2249 = vmatprep.subr.mxu0 %v2248
            %v2250 = vand.u32 %v1107, 4294901760
            %v2251 = vsub.f32 %v1107, %v2250
            %v2252 = vand.u32 %v2251, 4294901760
            %2253 = vmatpush1.msra.mxu0 %v2252
            %v2254 = vand.u32 %v1114, 4294901760
            %2255 = vmatprep.mubr.f32.mxu0 %v2254
            %v2256 = vand.u32 %v1112, 4294901760
            %2257 = vmatmul.mubr.f32.gmra.mrb[0].mxu0 %v2256
            %v2258 = vpop.f32.mrb[0].mxu0
            %v2259 = vadd.f32 %v1994, %v2258
            %v2260 = vpop.f32.mrb[0].mxu0
            %v2261 = vadd.f32 %v1996, %v2260
            %2262 = vdwg.mxu0
            %v2263 = vand.u32 %v1046, 4294901760
            %2264 = vmatprep.subr.mxu0 %v2263
            %v2265 = vand.u32 %v1045, 4294901760
            %2266 = vmatpush1.msra.mxu0 %v2265
            %v2267 = vand.u32 %v1048, 4294901760
            %2268 = vmatprep.subr.mxu0 %v2267
            %v2269 = vand.u32 %v1047, 4294901760
            %2270 = vmatpush1.msra.mxu0 %v2269
            %v2271 = vand.u32 %v1050, 4294901760
            %2272 = vmatprep.subr.mxu0 %v2271
            %v2273 = vand.u32 %v1049, 4294901760
            %2274 = vmatpush1.msra.mxu0 %v2273
            %v2275 = vand.u32 %v1052, 4294901760
            %2276 = vmatprep.subr.mxu0 %v2275
            %v2277 = vand.u32 %v1051, 4294901760
            %2278 = vmatpush1.msra.mxu0 %v2277
            %v2279 = vand.u32 %v1054, 4294901760
            %2280 = vmatprep.subr.mxu0 %v2279
            %v2281 = vand.u32 %v1053, 4294901760
            %2282 = vmatpush1.msra.mxu0 %v2281
            %v2283 = vand.u32 %v1056, 4294901760
            %2284 = vmatprep.subr.mxu0 %v2283
            %v2285 = vand.u32 %v1055, 4294901760
            %2286 = vmatpush1.msra.mxu0 %v2285
            %v2287 = vand.u32 %v1058, 4294901760
            %2288 = vmatprep.subr.mxu0 %v2287
            %v2289 = vand.u32 %v1057, 4294901760
            %2290 = vmatpush1.msra.mxu0 %v2289
            %v2291 = vand.u32 %v1060, 4294901760
            %2292 = vmatprep.subr.mxu0 %v2291
            %v2293 = vand.u32 %v1059, 4294901760
            %2294 = vmatpush1.msra.mxu0 %v2293
            %v2295 = vand.u32 %v1062, 4294901760
            %2296 = vmatprep.subr.mxu0 %v2295
            %v2297 = vand.u32 %v1061, 4294901760
            %2298 = vmatpush1.msra.mxu0 %v2297
            %v2299 = vand.u32 %v1064, 4294901760
            %2300 = vmatprep.subr.mxu0 %v2299
            %v2301 = vand.u32 %v1063, 4294901760
            %2302 = vmatpush1.msra.mxu0 %v2301
            %v2303 = vand.u32 %v1066, 4294901760
            %2304 = vmatprep.subr.mxu0 %v2303
            %v2305 = vand.u32 %v1065, 4294901760
            %2306 = vmatpush1.msra.mxu0 %v2305
            %v2307 = vand.u32 %v1068, 4294901760
            %2308 = vmatprep.subr.mxu0 %v2307
            %v2309 = vand.u32 %v1067, 4294901760
            %2310 = vmatpush1.msra.mxu0 %v2309
            %v2311 = vand.u32 %v1070, 4294901760
            %2312 = vmatprep.subr.mxu0 %v2311
            %v2313 = vand.u32 %v1069, 4294901760
            %2314 = vmatpush1.msra.mxu0 %v2313
            %v2315 = vand.u32 %v1072, 4294901760
            %2316 = vmatprep.subr.mxu0 %v2315
            %v2317 = vand.u32 %v1071, 4294901760
            %2318 = vmatpush1.msra.mxu0 %v2317
            %v2319 = vand.u32 %v1074, 4294901760
            %2320 = vmatprep.subr.mxu0 %v2319
            %v2321 = vand.u32 %v1073, 4294901760
            %2322 = vmatpush1.msra.mxu0 %v2321
            %v2323 = vand.u32 %v1076, 4294901760
            %2324 = vmatprep.subr.mxu0 %v2323
            %v2325 = vand.u32 %v1075, 4294901760
            %2326 = vmatpush1.msra.mxu0 %v2325
            %v2327 = vand.u32 %v1078, 4294901760
            %2328 = vmatprep.subr.mxu0 %v2327
            %v2329 = vand.u32 %v1077, 4294901760
            %2330 = vmatpush1.msra.mxu0 %v2329
            %v2331 = vand.u32 %v1080, 4294901760
            %2332 = vmatprep.subr.mxu0 %v2331
            %v2333 = vand.u32 %v1079, 4294901760
            %2334 = vmatpush1.msra.mxu0 %v2333
            %v2335 = vand.u32 %v1082, 4294901760
            %2336 = vmatprep.subr.mxu0 %v2335
            %v2337 = vand.u32 %v1081, 4294901760
            %2338 = vmatpush1.msra.mxu0 %v2337
            %v2339 = vand.u32 %v1084, 4294901760
            %2340 = vmatprep.subr.mxu0 %v2339
            %v2341 = vand.u32 %v1083, 4294901760
            %2342 = vmatpush1.msra.mxu0 %v2341
            %v2343 = vand.u32 %v1086, 4294901760
            %2344 = vmatprep.subr.mxu0 %v2343
            %v2345 = vand.u32 %v1085, 4294901760
            %2346 = vmatpush1.msra.mxu0 %v2345
            %v2347 = vand.u32 %v1088, 4294901760
            %2348 = vmatprep.subr.mxu0 %v2347
            %v2349 = vand.u32 %v1087, 4294901760
            %2350 = vmatpush1.msra.mxu0 %v2349
            %v2351 = vand.u32 %v1090, 4294901760
            %2352 = vmatprep.subr.mxu0 %v2351
            %v2353 = vand.u32 %v1089, 4294901760
            %2354 = vmatpush1.msra.mxu0 %v2353
            %v2355 = vand.u32 %v1092, 4294901760
            %2356 = vmatprep.subr.mxu0 %v2355
            %v2357 = vand.u32 %v1091, 4294901760
            %2358 = vmatpush1.msra.mxu0 %v2357
            %v2359 = vand.u32 %v1094, 4294901760
            %2360 = vmatprep.subr.mxu0 %v2359
            %v2361 = vand.u32 %v1093, 4294901760
            %2362 = vmatpush1.msra.mxu0 %v2361
            %v2363 = vand.u32 %v1096, 4294901760
            %2364 = vmatprep.subr.mxu0 %v2363
            %v2365 = vand.u32 %v1095, 4294901760
            %2366 = vmatpush1.msra.mxu0 %v2365
            %v2367 = vand.u32 %v1098, 4294901760
            %2368 = vmatprep.subr.mxu0 %v2367
            %v2369 = vand.u32 %v1097, 4294901760
            %2370 = vmatpush1.msra.mxu0 %v2369
            %v2371 = vand.u32 %v1100, 4294901760
            %2372 = vmatprep.subr.mxu0 %v2371
            %v2373 = vand.u32 %v1099, 4294901760
            %2374 = vmatpush1.msra.mxu0 %v2373
            %v2375 = vand.u32 %v1102, 4294901760
            %2376 = vmatprep.subr.mxu0 %v2375
            %v2377 = vand.u32 %v1101, 4294901760
            %2378 = vmatpush1.msra.mxu0 %v2377
            %v2379 = vand.u32 %v1104, 4294901760
            %2380 = vmatprep.subr.mxu0 %v2379
            %v2381 = vand.u32 %v1103, 4294901760
            %2382 = vmatpush1.msra.mxu0 %v2381
            %v2383 = vand.u32 %v1106, 4294901760
            %2384 = vmatprep.subr.mxu0 %v2383
            %v2385 = vand.u32 %v1105, 4294901760
            %2386 = vmatpush1.msra.mxu0 %v2385
            %v2387 = vand.u32 %v1108, 4294901760
            %2388 = vmatprep.subr.mxu0 %v2387
            %v2389 = vand.u32 %v1107, 4294901760
            %2390 = vmatpush1.msra.mxu0 %v2389
            %v2391 = vand.u32 %v1114, 4294901760
            %2392 = vmatprep.mubr.f32.mxu0 %v2391
            %v2393 = vand.u32 %v1112, 4294901760
            %2394 = vmatmul.mubr.f32.gmra.mrb[0].mxu0 %v2393
            %v2395 = vpop.f32.mrb[0].mxu0
            %v2396 = vadd.f32 %v2259, %v2395
            %v2397 = vpop.f32.mrb[0].mxu0
            %v2398 = vadd.f32 %v2261, %v2397
            %2399 = vdwg.mxu0
            %v2400 = vadd.f32 %v321, %v2396
            %v2401 = vadd.f32 %v322, %v2398
          $region45: #{tpu_custom_call.1} parent=39 // loop_footer
            %s318 = sadd.s32 %s316, 1
          $region46: #{tpu_custom_call.1} parent=39 // loop_footer_branch
            %315 = sbr.rel target = $region42
          $region47: #{tpu_custom_call.1} parent=39 // loop_exit
            _
          %v2404 = vcombine.low %v321, %v322
          %2406 = vst [vmem:[%s226] sm:$0xff] %v2404
        $region40: #{tpu_custom_call.1} parent=27 // pred_fallthru
          _
        %p2407 = scmp.ne.s32.totalorder %s37, 0
        %p2408 = scmp.lt.s32.totalorder %s228, 0
        %s2409 = ssub.s32 0, %s228
        %s2410 = scalar_select %p2408, %s2409, %s228
        %s2411 = sand.u32 %s2410, 1
        %s2412 = ssub.s32 0, %s2411
        %s2413 = scalar_select %p2408, %s2412, %s2411
        %p2414 = scmp.ne.s32.totalorder %s2413, 0
        %p2415 = scmp.lt.s32.totalorder %s2413, 0
        %p2416 = pnand %p2415, %p2414
        %p2417 = pneg %p2416
        %s2418 = sadd.s32 %s2413, 2
        %s2419 = scalar_select %p2417, %s2418, %s2413
        %p2420 = scmp.eq.s32.totalorder %s2419, 0
        %p2421 = pnand %p2407, %p2420
        %p2422 = pneg %p2421
        // Predicated region
        $region48: #{tpu_custom_call.1} parent=27 // pred_check
          _
        $region49: #{tpu_custom_call.1} parent=27 // pred_check_branch
          %2424 = sbr.rel (%p2421) target = $region51
        $region50: #{tpu_custom_call.1} parent=27 // pred_region
          %v2425 = vld [vmem:[%s201] ss:$2 sm:$0x3]
          %s2426 = scalar_lea.vmem %s201, 1 [#allocation9]
          %v2427 = vld [vmem:[%s2426] ss:$2 sm:$0x3]
          %v2428 = vfloor.f32 %v2425
          %v2429 = vfloor.f32 %v2427
          %v2430 = vsub.f32 %v2425, %v2428
          %v2431 = vsub.f32 %v2427, %v2429
          %v2432 = vcvt.f32.s32.to.zero.pseudo %v2428
          %v2433 = vcvt.f32.s32.to.zero.pseudo %v2429
          %v2434 = vadd.s32 %v2432, 1
          %v2435 = vadd.s32 %v2433, 1
          %v2436 = vsub.f32 1.0, %v2431
          %v2437 = vsub.f32 1.0, %v2430
          %v2438 = vmul.f32 %v2436, %v2437
          %v2439 = vmul.f32 %v2436, %v2430
          %v2440 = vmul.f32 %v2431, %v2437
          %v2441 = vmul.f32 %v2431, %v2430
          %vm2442 = vcmp.ge.s32.totalorder %v2432, 0
          %vm2443 = vcmp.lt.s32.totalorder %v2432, 16
          %vm2444 = vmand %vm2442, %vm2443
          %vm2445 = vcmp.ge.s32.totalorder %v2433, 0
          %vm2446 = vmand %vm2444, %vm2445
          %vm2447 = vcmp.lt.s32.totalorder %v2433, 16
          %vm2448 = vmand %vm2446, %vm2447
          %v2449 = vmul.u32 %v2433, 16
          %v2450 = vadd.s32 %v2449, %v2432
          %v2451 = vsel %vm2448, %v2438, 0.0
          %vm2452 = vcmp.ge.s32.totalorder %v2434, 0
          %vm2453 = vcmp.lt.s32.totalorder %v2434, 16
          %vm2454 = vmand %vm2452, %vm2453
          %vm2455 = vmand %vm2454, %vm2445
          %vm2456 = vmand %vm2455, %vm2447
          %v2457 = vadd.s32 %v2449, %v2434
          %v2458 = vsel %vm2456, %v2439, 0.0
          %vm2459 = vcmp.ge.s32.totalorder %v2435, 0
          %vm2460 = vmand %vm2444, %vm2459
          %vm2461 = vcmp.lt.s32.totalorder %v2435, 16
          %vm2462 = vmand %vm2460, %vm2461
          %v2463 = vmul.u32 %v2435, 16
          %v2464 = vadd.s32 %v2463, %v2432
          %v2465 = vsel %vm2462, %v2440, 0.0
          %vm2466 = vmand %vm2454, %vm2459
          %vm2467 = vmand %vm2466, %vm2461
          %v2468 = vadd.s32 %v2463, %v2434
          %v2469 = vsel %vm2467, %v2441, 0.0
          %s2470 = sld [smem:[#allocation4 + %s230]]
          %s2471 = sld [smem:[#allocation5 + %s230]]
          // While loop
          $region52: #{tpu_custom_call.1} parent=50 // loop_pre_header
            _
          $region53: #{tpu_custom_call.1} parent=50 // loop_header
            %s2473 = sphi %s2470, %s2475
            %p2474 = scmp.ge.s32.totalorder %s2473, %s2471
            %v2478 = vphi 0.0, %v4557
            %v2479 = vphi 0.0, %v4558
          $region54: #{tpu_custom_call.1} parent=50 // loop_header_branch
            %2477 = sbr.rel (%p2474) target = $region58
          $region55: #{tpu_custom_call.1} parent=50 // loop_body
            %s2480 = smul.u32 %s2473, 256
            %v2481 = vstv %s2480
            %v2482 = vsub.s32 %v2450, %v2481
            %v2483 = vlaneseq
            %v2484 = vshrl.u32 %v2483, 7
            %v2485 = vsub.s32 0, %v2484
            %v2486 = vrot.slane %v2482, %v2485
            %v2487 = vlaneseq
            %v2488 = vshrl.u32 %v2487, 7
            %v2489 = vsub.s32 1, %v2488
            %v2490 = vrot.slane %v2482, %v2489
            %vm2491 = vcmp.eq.s32.totalorder %v2486, %v232
            %vm2492 = vcmp.eq.s32.totalorder %v2490, %v232
            %vm2493 = vcmp.eq.s32.totalorder %v2486, %v233
            %vm2494 = vcmp.eq.s32.totalorder %v2490, %v233
            %vm2495 = vcmp.eq.s32.totalorder %v2486, %v234
            %vm2496 = vcmp.eq.s32.totalorder %v2490, %v234
            %vm2497 = vcmp.eq.s32.totalorder %v2486, %v235
            %vm2498 = vcmp.eq.s32.totalorder %v2490, %v235
            %vm2499 = vcmp.eq.s32.totalorder %v2486, %v236
            %vm2500 = vcmp.eq.s32.totalorder %v2490, %v236
            %vm2501 = vcmp.eq.s32.totalorder %v2486, %v237
            %vm2502 = vcmp.eq.s32.totalorder %v2490, %v237
            %vm2503 = vcmp.eq.s32.totalorder %v2486, %v238
            %vm2504 = vcmp.eq.s32.totalorder %v2490, %v238
            %vm2505 = vcmp.eq.s32.totalorder %v2486, %v239
            %vm2506 = vcmp.eq.s32.totalorder %v2490, %v239
            %vm2507 = vcmp.eq.s32.totalorder %v2486, %v240
            %vm2508 = vcmp.eq.s32.totalorder %v2490, %v240
            %vm2509 = vcmp.eq.s32.totalorder %v2486, %v241
            %vm2510 = vcmp.eq.s32.totalorder %v2490, %v241
            %vm2511 = vcmp.eq.s32.totalorder %v2486, %v242
            %vm2512 = vcmp.eq.s32.totalorder %v2490, %v242
            %vm2513 = vcmp.eq.s32.totalorder %v2486, %v243
            %vm2514 = vcmp.eq.s32.totalorder %v2490, %v243
            %vm2515 = vcmp.eq.s32.totalorder %v2486, %v244
            %vm2516 = vcmp.eq.s32.totalorder %v2490, %v244
            %vm2517 = vcmp.eq.s32.totalorder %v2486, %v245
            %vm2518 = vcmp.eq.s32.totalorder %v2490, %v245
            %vm2519 = vcmp.eq.s32.totalorder %v2486, %v246
            %vm2520 = vcmp.eq.s32.totalorder %v2490, %v246
            %vm2521 = vcmp.eq.s32.totalorder %v2486, %v247
            %vm2522 = vcmp.eq.s32.totalorder %v2490, %v247
            %vm2523 = vcmp.eq.s32.totalorder %v2486, %v248
            %vm2524 = vcmp.eq.s32.totalorder %v2490, %v248
            %vm2525 = vcmp.eq.s32.totalorder %v2486, %v249
            %vm2526 = vcmp.eq.s32.totalorder %v2490, %v249
            %vm2527 = vcmp.eq.s32.totalorder %v2486, %v250
            %vm2528 = vcmp.eq.s32.totalorder %v2490, %v250
            %vm2529 = vcmp.eq.s32.totalorder %v2486, %v251
            %vm2530 = vcmp.eq.s32.totalorder %v2490, %v251
            %vm2531 = vcmp.eq.s32.totalorder %v2486, %v252
            %vm2532 = vcmp.eq.s32.totalorder %v2490, %v252
            %vm2533 = vcmp.eq.s32.totalorder %v2486, %v253
            %vm2534 = vcmp.eq.s32.totalorder %v2490, %v253
            %vm2535 = vcmp.eq.s32.totalorder %v2486, %v254
            %vm2536 = vcmp.eq.s32.totalorder %v2490, %v254
            %vm2537 = vcmp.eq.s32.totalorder %v2486, %v255
            %vm2538 = vcmp.eq.s32.totalorder %v2490, %v255
            %vm2539 = vcmp.eq.s32.totalorder %v2486, %v256
            %vm2540 = vcmp.eq.s32.totalorder %v2490, %v256
            %vm2541 = vcmp.eq.s32.totalorder %v2486, %v257
            %vm2542 = vcmp.eq.s32.totalorder %v2490, %v257
            %vm2543 = vcmp.eq.s32.totalorder %v2486, %v258
            %vm2544 = vcmp.eq.s32.totalorder %v2490, %v258
            %vm2545 = vcmp.eq.s32.totalorder %v2486, %v259
            %vm2546 = vcmp.eq.s32.totalorder %v2490, %v259
            %vm2547 = vcmp.eq.s32.totalorder %v2486, %v260
            %vm2548 = vcmp.eq.s32.totalorder %v2490, %v260
            %vm2549 = vcmp.eq.s32.totalorder %v2486, %v261
            %vm2550 = vcmp.eq.s32.totalorder %v2490, %v261
            %vm2551 = vcmp.eq.s32.totalorder %v2486, %v262
            %vm2552 = vcmp.eq.s32.totalorder %v2490, %v262
            %vm2553 = vcmp.eq.s32.totalorder %v2486, %v263
            %vm2554 = vcmp.eq.s32.totalorder %v2490, %v263
            %v2556 = vlaneseq
            %v2557 = vshrl.u32 %v2556, 7
            %v2558 = vsub.s32 0, %v2557
            %v2559 = vrot.slane %v2451, %v2558
            %v2560 = vlaneseq
            %v2561 = vshrl.u32 %v2560, 7
            %v2562 = vsub.s32 1, %v2561
            %v2563 = vrot.slane %v2451, %v2562
            %v2566 = vsel %vm2491, %v2559, 0.0
            %v2567 = vsel %vm2492, %v2563, 0.0
            %v2568 = vsel %vm2493, %v2559, 0.0
            %v2569 = vsel %vm2494, %v2563, 0.0
            %v2570 = vsel %vm2495, %v2559, 0.0
            %v2571 = vsel %vm2496, %v2563, 0.0
            %v2572 = vsel %vm2497, %v2559, 0.0
            %v2573 = vsel %vm2498, %v2563, 0.0
            %v2574 = vsel %vm2499, %v2559, 0.0
            %v2575 = vsel %vm2500, %v2563, 0.0
            %v2576 = vsel %vm2501, %v2559, 0.0
            %v2577 = vsel %vm2502, %v2563, 0.0
            %v2578 = vsel %vm2503, %v2559, 0.0
            %v2579 = vsel %vm2504, %v2563, 0.0
            %v2580 = vsel %vm2505, %v2559, 0.0
            %v2581 = vsel %vm2506, %v2563, 0.0
            %v2582 = vsel %vm2507, %v2559, 0.0
            %v2583 = vsel %vm2508, %v2563, 0.0
            %v2584 = vsel %vm2509, %v2559, 0.0
            %v2585 = vsel %vm2510, %v2563, 0.0
            %v2586 = vsel %vm2511, %v2559, 0.0
            %v2587 = vsel %vm2512, %v2563, 0.0
            %v2588 = vsel %vm2513, %v2559, 0.0
            %v2589 = vsel %vm2514, %v2563, 0.0
            %v2590 = vsel %vm2515, %v2559, 0.0
            %v2591 = vsel %vm2516, %v2563, 0.0
            %v2592 = vsel %vm2517, %v2559, 0.0
            %v2593 = vsel %vm2518, %v2563, 0.0
            %v2594 = vsel %vm2519, %v2559, 0.0
            %v2595 = vsel %vm2520, %v2563, 0.0
            %v2596 = vsel %vm2521, %v2559, 0.0
            %v2597 = vsel %vm2522, %v2563, 0.0
            %v2598 = vsel %vm2523, %v2559, 0.0
            %v2599 = vsel %vm2524, %v2563, 0.0
            %v2600 = vsel %vm2525, %v2559, 0.0
            %v2601 = vsel %vm2526, %v2563, 0.0
            %v2602 = vsel %vm2527, %v2559, 0.0
            %v2603 = vsel %vm2528, %v2563, 0.0
            %v2604 = vsel %vm2529, %v2559, 0.0
            %v2605 = vsel %vm2530, %v2563, 0.0
            %v2606 = vsel %vm2531, %v2559, 0.0
            %v2607 = vsel %vm2532, %v2563, 0.0
            %v2608 = vsel %vm2533, %v2559, 0.0
            %v2609 = vsel %vm2534, %v2563, 0.0
            %v2610 = vsel %vm2535, %v2559, 0.0
            %v2611 = vsel %vm2536, %v2563, 0.0
            %v2612 = vsel %vm2537, %v2559, 0.0
            %v2613 = vsel %vm2538, %v2563, 0.0
            %v2614 = vsel %vm2539, %v2559, 0.0
            %v2615 = vsel %vm2540, %v2563, 0.0
            %v2616 = vsel %vm2541, %v2559, 0.0
            %v2617 = vsel %vm2542, %v2563, 0.0
            %v2618 = vsel %vm2543, %v2559, 0.0
            %v2619 = vsel %vm2544, %v2563, 0.0
            %v2620 = vsel %vm2545, %v2559, 0.0
            %v2621 = vsel %vm2546, %v2563, 0.0
            %v2622 = vsel %vm2547, %v2559, 0.0
            %v2623 = vsel %vm2548, %v2563, 0.0
            %v2624 = vsel %vm2549, %v2559, 0.0
            %v2625 = vsel %vm2550, %v2563, 0.0
            %v2626 = vsel %vm2551, %v2559, 0.0
            %v2627 = vsel %vm2552, %v2563, 0.0
            %v2628 = vsel %vm2553, %v2559, 0.0
            %v2629 = vsel %vm2554, %v2563, 0.0
            %v2630 = vsub.s32 %v2457, %v2481
            %v2631 = vlaneseq
            %v2632 = vshrl.u32 %v2631, 7
            %v2633 = vsub.s32 0, %v2632
            %v2634 = vrot.slane %v2630, %v2633
            %v2635 = vlaneseq
            %v2636 = vshrl.u32 %v2635, 7
            %v2637 = vsub.s32 1, %v2636
            %v2638 = vrot.slane %v2630, %v2637
            %vm2639 = vcmp.eq.s32.totalorder %v2634, %v232
            %vm2640 = vcmp.eq.s32.totalorder %v2638, %v232
            %vm2641 = vcmp.eq.s32.totalorder %v2634, %v233
            %vm2642 = vcmp.eq.s32.totalorder %v2638, %v233
            %vm2643 = vcmp.eq.s32.totalorder %v2634, %v234
            %vm2644 = vcmp.eq.s32.totalorder %v2638, %v234
            %vm2645 = vcmp.eq.s32.totalorder %v2634, %v235
            %vm2646 = vcmp.eq.s32.totalorder %v2638, %v235
            %vm2647 = vcmp.eq.s32.totalorder %v2634, %v236
            %vm2648 = vcmp.eq.s32.totalorder %v2638, %v236
            %vm2649 = vcmp.eq.s32.totalorder %v2634, %v237
            %vm2650 = vcmp.eq.s32.totalorder %v2638, %v237
            %vm2651 = vcmp.eq.s32.totalorder %v2634, %v238
            %vm2652 = vcmp.eq.s32.totalorder %v2638, %v238
            %vm2653 = vcmp.eq.s32.totalorder %v2634, %v239
            %vm2654 = vcmp.eq.s32.totalorder %v2638, %v239
            %vm2655 = vcmp.eq.s32.totalorder %v2634, %v240
            %vm2656 = vcmp.eq.s32.totalorder %v2638, %v240
            %vm2657 = vcmp.eq.s32.totalorder %v2634, %v241
            %vm2658 = vcmp.eq.s32.totalorder %v2638, %v241
            %vm2659 = vcmp.eq.s32.totalorder %v2634, %v242
            %vm2660 = vcmp.eq.s32.totalorder %v2638, %v242
            %vm2661 = vcmp.eq.s32.totalorder %v2634, %v243
            %vm2662 = vcmp.eq.s32.totalorder %v2638, %v243
            %vm2663 = vcmp.eq.s32.totalorder %v2634, %v244
            %vm2664 = vcmp.eq.s32.totalorder %v2638, %v244
            %vm2665 = vcmp.eq.s32.totalorder %v2634, %v245
            %vm2666 = vcmp.eq.s32.totalorder %v2638, %v245
            %vm2667 = vcmp.eq.s32.totalorder %v2634, %v246
            %vm2668 = vcmp.eq.s32.totalorder %v2638, %v246
            %vm2669 = vcmp.eq.s32.totalorder %v2634, %v247
            %vm2670 = vcmp.eq.s32.totalorder %v2638, %v247
            %vm2671 = vcmp.eq.s32.totalorder %v2634, %v248
            %vm2672 = vcmp.eq.s32.totalorder %v2638, %v248
            %vm2673 = vcmp.eq.s32.totalorder %v2634, %v249
            %vm2674 = vcmp.eq.s32.totalorder %v2638, %v249
            %vm2675 = vcmp.eq.s32.totalorder %v2634, %v250
            %vm2676 = vcmp.eq.s32.totalorder %v2638, %v250
            %vm2677 = vcmp.eq.s32.totalorder %v2634, %v251
            %vm2678 = vcmp.eq.s32.totalorder %v2638, %v251
            %vm2679 = vcmp.eq.s32.totalorder %v2634, %v252
            %vm2680 = vcmp.eq.s32.totalorder %v2638, %v252
            %vm2681 = vcmp.eq.s32.totalorder %v2634, %v253
            %vm2682 = vcmp.eq.s32.totalorder %v2638, %v253
            %vm2683 = vcmp.eq.s32.totalorder %v2634, %v254
            %vm2684 = vcmp.eq.s32.totalorder %v2638, %v254
            %vm2685 = vcmp.eq.s32.totalorder %v2634, %v255
            %vm2686 = vcmp.eq.s32.totalorder %v2638, %v255
            %vm2687 = vcmp.eq.s32.totalorder %v2634, %v256
            %vm2688 = vcmp.eq.s32.totalorder %v2638, %v256
            %vm2689 = vcmp.eq.s32.totalorder %v2634, %v257
            %vm2690 = vcmp.eq.s32.totalorder %v2638, %v257
            %vm2691 = vcmp.eq.s32.totalorder %v2634, %v258
            %vm2692 = vcmp.eq.s32.totalorder %v2638, %v258
            %vm2693 = vcmp.eq.s32.totalorder %v2634, %v259
            %vm2694 = vcmp.eq.s32.totalorder %v2638, %v259
            %vm2695 = vcmp.eq.s32.totalorder %v2634, %v260
            %vm2696 = vcmp.eq.s32.totalorder %v2638, %v260
            %vm2697 = vcmp.eq.s32.totalorder %v2634, %v261
            %vm2698 = vcmp.eq.s32.totalorder %v2638, %v261
            %vm2699 = vcmp.eq.s32.totalorder %v2634, %v262
            %vm2700 = vcmp.eq.s32.totalorder %v2638, %v262
            %vm2701 = vcmp.eq.s32.totalorder %v2634, %v263
            %vm2702 = vcmp.eq.s32.totalorder %v2638, %v263
            %v2704 = vlaneseq
            %v2705 = vshrl.u32 %v2704, 7
            %v2706 = vsub.s32 0, %v2705
            %v2707 = vrot.slane %v2458, %v2706
            %v2708 = vlaneseq
            %v2709 = vshrl.u32 %v2708, 7
            %v2710 = vsub.s32 1, %v2709
            %v2711 = vrot.slane %v2458, %v2710
            %v2714 = vsel %vm2639, %v2707, 0.0
            %v2715 = vsel %vm2640, %v2711, 0.0
            %v2716 = vsel %vm2641, %v2707, 0.0
            %v2717 = vsel %vm2642, %v2711, 0.0
            %v2718 = vsel %vm2643, %v2707, 0.0
            %v2719 = vsel %vm2644, %v2711, 0.0
            %v2720 = vsel %vm2645, %v2707, 0.0
            %v2721 = vsel %vm2646, %v2711, 0.0
            %v2722 = vsel %vm2647, %v2707, 0.0
            %v2723 = vsel %vm2648, %v2711, 0.0
            %v2724 = vsel %vm2649, %v2707, 0.0
            %v2725 = vsel %vm2650, %v2711, 0.0
            %v2726 = vsel %vm2651, %v2707, 0.0
            %v2727 = vsel %vm2652, %v2711, 0.0
            %v2728 = vsel %vm2653, %v2707, 0.0
            %v2729 = vsel %vm2654, %v2711, 0.0
            %v2730 = vsel %vm2655, %v2707, 0.0
            %v2731 = vsel %vm2656, %v2711, 0.0
            %v2732 = vsel %vm2657, %v2707, 0.0
            %v2733 = vsel %vm2658, %v2711, 0.0
            %v2734 = vsel %vm2659, %v2707, 0.0
            %v2735 = vsel %vm2660, %v2711, 0.0
            %v2736 = vsel %vm2661, %v2707, 0.0
            %v2737 = vsel %vm2662, %v2711, 0.0
            %v2738 = vsel %vm2663, %v2707, 0.0
            %v2739 = vsel %vm2664, %v2711, 0.0
            %v2740 = vsel %vm2665, %v2707, 0.0
            %v2741 = vsel %vm2666, %v2711, 0.0
            %v2742 = vsel %vm2667, %v2707, 0.0
            %v2743 = vsel %vm2668, %v2711, 0.0
            %v2744 = vsel %vm2669, %v2707, 0.0
            %v2745 = vsel %vm2670, %v2711, 0.0
            %v2746 = vsel %vm2671, %v2707, 0.0
            %v2747 = vsel %vm2672, %v2711, 0.0
            %v2748 = vsel %vm2673, %v2707, 0.0
            %v2749 = vsel %vm2674, %v2711, 0.0
            %v2750 = vsel %vm2675, %v2707, 0.0
            %v2751 = vsel %vm2676, %v2711, 0.0
            %v2752 = vsel %vm2677, %v2707, 0.0
            %v2753 = vsel %vm2678, %v2711, 0.0
            %v2754 = vsel %vm2679, %v2707, 0.0
            %v2755 = vsel %vm2680, %v2711, 0.0
            %v2756 = vsel %vm2681, %v2707, 0.0
            %v2757 = vsel %vm2682, %v2711, 0.0
            %v2758 = vsel %vm2683, %v2707, 0.0
            %v2759 = vsel %vm2684, %v2711, 0.0
            %v2760 = vsel %vm2685, %v2707, 0.0
            %v2761 = vsel %vm2686, %v2711, 0.0
            %v2762 = vsel %vm2687, %v2707, 0.0
            %v2763 = vsel %vm2688, %v2711, 0.0
            %v2764 = vsel %vm2689, %v2707, 0.0
            %v2765 = vsel %vm2690, %v2711, 0.0
            %v2766 = vsel %vm2691, %v2707, 0.0
            %v2767 = vsel %vm2692, %v2711, 0.0
            %v2768 = vsel %vm2693, %v2707, 0.0
            %v2769 = vsel %vm2694, %v2711, 0.0
            %v2770 = vsel %vm2695, %v2707, 0.0
            %v2771 = vsel %vm2696, %v2711, 0.0
            %v2772 = vsel %vm2697, %v2707, 0.0
            %v2773 = vsel %vm2698, %v2711, 0.0
            %v2774 = vsel %vm2699, %v2707, 0.0
            %v2775 = vsel %vm2700, %v2711, 0.0
            %v2776 = vsel %vm2701, %v2707, 0.0
            %v2777 = vsel %vm2702, %v2711, 0.0
            %v2778 = vadd.f32 %v2566, %v2714
            %v2779 = vadd.f32 %v2567, %v2715
            %v2780 = vadd.f32 %v2568, %v2716
            %v2781 = vadd.f32 %v2569, %v2717
            %v2782 = vadd.f32 %v2570, %v2718
            %v2783 = vadd.f32 %v2571, %v2719
            %v2784 = vadd.f32 %v2572, %v2720
            %v2785 = vadd.f32 %v2573, %v2721
            %v2786 = vadd.f32 %v2574, %v2722
            %v2787 = vadd.f32 %v2575, %v2723
            %v2788 = vadd.f32 %v2576, %v2724
            %v2789 = vadd.f32 %v2577, %v2725
            %v2790 = vadd.f32 %v2578, %v2726
            %v2791 = vadd.f32 %v2579, %v2727
            %v2792 = vadd.f32 %v2580, %v2728
            %v2793 = vadd.f32 %v2581, %v2729
            %v2794 = vadd.f32 %v2582, %v2730
            %v2795 = vadd.f32 %v2583, %v2731
            %v2796 = vadd.f32 %v2584, %v2732
            %v2797 = vadd.f32 %v2585, %v2733
            %v2798 = vadd.f32 %v2586, %v2734
            %v2799 = vadd.f32 %v2587, %v2735
            %v2800 = vadd.f32 %v2588, %v2736
            %v2801 = vadd.f32 %v2589, %v2737
            %v2802 = vadd.f32 %v2590, %v2738
            %v2803 = vadd.f32 %v2591, %v2739
            %v2804 = vadd.f32 %v2592, %v2740
            %v2805 = vadd.f32 %v2593, %v2741
            %v2806 = vadd.f32 %v2594, %v2742
            %v2807 = vadd.f32 %v2595, %v2743
            %v2808 = vadd.f32 %v2596, %v2744
            %v2809 = vadd.f32 %v2597, %v2745
            %v2810 = vadd.f32 %v2598, %v2746
            %v2811 = vadd.f32 %v2599, %v2747
            %v2812 = vadd.f32 %v2600, %v2748
            %v2813 = vadd.f32 %v2601, %v2749
            %v2814 = vadd.f32 %v2602, %v2750
            %v2815 = vadd.f32 %v2603, %v2751
            %v2816 = vadd.f32 %v2604, %v2752
            %v2817 = vadd.f32 %v2605, %v2753
            %v2818 = vadd.f32 %v2606, %v2754
            %v2819 = vadd.f32 %v2607, %v2755
            %v2820 = vadd.f32 %v2608, %v2756
            %v2821 = vadd.f32 %v2609, %v2757
            %v2822 = vadd.f32 %v2610, %v2758
            %v2823 = vadd.f32 %v2611, %v2759
            %v2824 = vadd.f32 %v2612, %v2760
            %v2825 = vadd.f32 %v2613, %v2761
            %v2826 = vadd.f32 %v2614, %v2762
            %v2827 = vadd.f32 %v2615, %v2763
            %v2828 = vadd.f32 %v2616, %v2764
            %v2829 = vadd.f32 %v2617, %v2765
            %v2830 = vadd.f32 %v2618, %v2766
            %v2831 = vadd.f32 %v2619, %v2767
            %v2832 = vadd.f32 %v2620, %v2768
            %v2833 = vadd.f32 %v2621, %v2769
            %v2834 = vadd.f32 %v2622, %v2770
            %v2835 = vadd.f32 %v2623, %v2771
            %v2836 = vadd.f32 %v2624, %v2772
            %v2837 = vadd.f32 %v2625, %v2773
            %v2838 = vadd.f32 %v2626, %v2774
            %v2839 = vadd.f32 %v2627, %v2775
            %v2840 = vadd.f32 %v2628, %v2776
            %v2841 = vadd.f32 %v2629, %v2777
            %v2842 = vsub.s32 %v2464, %v2481
            %v2843 = vlaneseq
            %v2844 = vshrl.u32 %v2843, 7
            %v2845 = vsub.s32 0, %v2844
            %v2846 = vrot.slane %v2842, %v2845
            %v2847 = vlaneseq
            %v2848 = vshrl.u32 %v2847, 7
            %v2849 = vsub.s32 1, %v2848
            %v2850 = vrot.slane %v2842, %v2849
            %vm2851 = vcmp.eq.s32.totalorder %v2846, %v232
            %vm2852 = vcmp.eq.s32.totalorder %v2850, %v232
            %vm2853 = vcmp.eq.s32.totalorder %v2846, %v233
            %vm2854 = vcmp.eq.s32.totalorder %v2850, %v233
            %vm2855 = vcmp.eq.s32.totalorder %v2846, %v234
            %vm2856 = vcmp.eq.s32.totalorder %v2850, %v234
            %vm2857 = vcmp.eq.s32.totalorder %v2846, %v235
            %vm2858 = vcmp.eq.s32.totalorder %v2850, %v235
            %vm2859 = vcmp.eq.s32.totalorder %v2846, %v236
            %vm2860 = vcmp.eq.s32.totalorder %v2850, %v236
            %vm2861 = vcmp.eq.s32.totalorder %v2846, %v237
            %vm2862 = vcmp.eq.s32.totalorder %v2850, %v237
            %vm2863 = vcmp.eq.s32.totalorder %v2846, %v238
            %vm2864 = vcmp.eq.s32.totalorder %v2850, %v238
            %vm2865 = vcmp.eq.s32.totalorder %v2846, %v239
            %vm2866 = vcmp.eq.s32.totalorder %v2850, %v239
            %vm2867 = vcmp.eq.s32.totalorder %v2846, %v240
            %vm2868 = vcmp.eq.s32.totalorder %v2850, %v240
            %vm2869 = vcmp.eq.s32.totalorder %v2846, %v241
            %vm2870 = vcmp.eq.s32.totalorder %v2850, %v241
            %vm2871 = vcmp.eq.s32.totalorder %v2846, %v242
            %vm2872 = vcmp.eq.s32.totalorder %v2850, %v242
            %vm2873 = vcmp.eq.s32.totalorder %v2846, %v243
            %vm2874 = vcmp.eq.s32.totalorder %v2850, %v243
            %vm2875 = vcmp.eq.s32.totalorder %v2846, %v244
            %vm2876 = vcmp.eq.s32.totalorder %v2850, %v244
            %vm2877 = vcmp.eq.s32.totalorder %v2846, %v245
            %vm2878 = vcmp.eq.s32.totalorder %v2850, %v245
            %vm2879 = vcmp.eq.s32.totalorder %v2846, %v246
            %vm2880 = vcmp.eq.s32.totalorder %v2850, %v246
            %vm2881 = vcmp.eq.s32.totalorder %v2846, %v247
            %vm2882 = vcmp.eq.s32.totalorder %v2850, %v247
            %vm2883 = vcmp.eq.s32.totalorder %v2846, %v248
            %vm2884 = vcmp.eq.s32.totalorder %v2850, %v248
            %vm2885 = vcmp.eq.s32.totalorder %v2846, %v249
            %vm2886 = vcmp.eq.s32.totalorder %v2850, %v249
            %vm2887 = vcmp.eq.s32.totalorder %v2846, %v250
            %vm2888 = vcmp.eq.s32.totalorder %v2850, %v250
            %vm2889 = vcmp.eq.s32.totalorder %v2846, %v251
            %vm2890 = vcmp.eq.s32.totalorder %v2850, %v251
            %vm2891 = vcmp.eq.s32.totalorder %v2846, %v252
            %vm2892 = vcmp.eq.s32.totalorder %v2850, %v252
            %vm2893 = vcmp.eq.s32.totalorder %v2846, %v253
            %vm2894 = vcmp.eq.s32.totalorder %v2850, %v253
            %vm2895 = vcmp.eq.s32.totalorder %v2846, %v254
            %vm2896 = vcmp.eq.s32.totalorder %v2850, %v254
            %vm2897 = vcmp.eq.s32.totalorder %v2846, %v255
            %vm2898 = vcmp.eq.s32.totalorder %v2850, %v255
            %vm2899 = vcmp.eq.s32.totalorder %v2846, %v256
            %vm2900 = vcmp.eq.s32.totalorder %v2850, %v256
            %vm2901 = vcmp.eq.s32.totalorder %v2846, %v257
            %vm2902 = vcmp.eq.s32.totalorder %v2850, %v257
            %vm2903 = vcmp.eq.s32.totalorder %v2846, %v258
            %vm2904 = vcmp.eq.s32.totalorder %v2850, %v258
            %vm2905 = vcmp.eq.s32.totalorder %v2846, %v259
            %vm2906 = vcmp.eq.s32.totalorder %v2850, %v259
            %vm2907 = vcmp.eq.s32.totalorder %v2846, %v260
            %vm2908 = vcmp.eq.s32.totalorder %v2850, %v260
            %vm2909 = vcmp.eq.s32.totalorder %v2846, %v261
            %vm2910 = vcmp.eq.s32.totalorder %v2850, %v261
            %vm2911 = vcmp.eq.s32.totalorder %v2846, %v262
            %vm2912 = vcmp.eq.s32.totalorder %v2850, %v262
            %vm2913 = vcmp.eq.s32.totalorder %v2846, %v263
            %vm2914 = vcmp.eq.s32.totalorder %v2850, %v263
            %v2916 = vlaneseq
            %v2917 = vshrl.u32 %v2916, 7
            %v2918 = vsub.s32 0, %v2917
            %v2919 = vrot.slane %v2465, %v2918
            %v2920 = vlaneseq
            %v2921 = vshrl.u32 %v2920, 7
            %v2922 = vsub.s32 1, %v2921
            %v2923 = vrot.slane %v2465, %v2922
            %v2926 = vsel %vm2851, %v2919, 0.0
            %v2927 = vsel %vm2852, %v2923, 0.0
            %v2928 = vsel %vm2853, %v2919, 0.0
            %v2929 = vsel %vm2854, %v2923, 0.0
            %v2930 = vsel %vm2855, %v2919, 0.0
            %v2931 = vsel %vm2856, %v2923, 0.0
            %v2932 = vsel %vm2857, %v2919, 0.0
            %v2933 = vsel %vm2858, %v2923, 0.0
            %v2934 = vsel %vm2859, %v2919, 0.0
            %v2935 = vsel %vm2860, %v2923, 0.0
            %v2936 = vsel %vm2861, %v2919, 0.0
            %v2937 = vsel %vm2862, %v2923, 0.0
            %v2938 = vsel %vm2863, %v2919, 0.0
            %v2939 = vsel %vm2864, %v2923, 0.0
            %v2940 = vsel %vm2865, %v2919, 0.0
            %v2941 = vsel %vm2866, %v2923, 0.0
            %v2942 = vsel %vm2867, %v2919, 0.0
            %v2943 = vsel %vm2868, %v2923, 0.0
            %v2944 = vsel %vm2869, %v2919, 0.0
            %v2945 = vsel %vm2870, %v2923, 0.0
            %v2946 = vsel %vm2871, %v2919, 0.0
            %v2947 = vsel %vm2872, %v2923, 0.0
            %v2948 = vsel %vm2873, %v2919, 0.0
            %v2949 = vsel %vm2874, %v2923, 0.0
            %v2950 = vsel %vm2875, %v2919, 0.0
            %v2951 = vsel %vm2876, %v2923, 0.0
            %v2952 = vsel %vm2877, %v2919, 0.0
            %v2953 = vsel %vm2878, %v2923, 0.0
            %v2954 = vsel %vm2879, %v2919, 0.0
            %v2955 = vsel %vm2880, %v2923, 0.0
            %v2956 = vsel %vm2881, %v2919, 0.0
            %v2957 = vsel %vm2882, %v2923, 0.0
            %v2958 = vsel %vm2883, %v2919, 0.0
            %v2959 = vsel %vm2884, %v2923, 0.0
            %v2960 = vsel %vm2885, %v2919, 0.0
            %v2961 = vsel %vm2886, %v2923, 0.0
            %v2962 = vsel %vm2887, %v2919, 0.0
            %v2963 = vsel %vm2888, %v2923, 0.0
            %v2964 = vsel %vm2889, %v2919, 0.0
            %v2965 = vsel %vm2890, %v2923, 0.0
            %v2966 = vsel %vm2891, %v2919, 0.0
            %v2967 = vsel %vm2892, %v2923, 0.0
            %v2968 = vsel %vm2893, %v2919, 0.0
            %v2969 = vsel %vm2894, %v2923, 0.0
            %v2970 = vsel %vm2895, %v2919, 0.0
            %v2971 = vsel %vm2896, %v2923, 0.0
            %v2972 = vsel %vm2897, %v2919, 0.0
            %v2973 = vsel %vm2898, %v2923, 0.0
            %v2974 = vsel %vm2899, %v2919, 0.0
            %v2975 = vsel %vm2900, %v2923, 0.0
            %v2976 = vsel %vm2901, %v2919, 0.0
            %v2977 = vsel %vm2902, %v2923, 0.0
            %v2978 = vsel %vm2903, %v2919, 0.0
            %v2979 = vsel %vm2904, %v2923, 0.0
            %v2980 = vsel %vm2905, %v2919, 0.0
            %v2981 = vsel %vm2906, %v2923, 0.0
            %v2982 = vsel %vm2907, %v2919, 0.0
            %v2983 = vsel %vm2908, %v2923, 0.0
            %v2984 = vsel %vm2909, %v2919, 0.0
            %v2985 = vsel %vm2910, %v2923, 0.0
            %v2986 = vsel %vm2911, %v2919, 0.0
            %v2987 = vsel %vm2912, %v2923, 0.0
            %v2988 = vsel %vm2913, %v2919, 0.0
            %v2989 = vsel %vm2914, %v2923, 0.0
            %v2990 = vadd.f32 %v2778, %v2926
            %v2991 = vadd.f32 %v2779, %v2927
            %v2992 = vadd.f32 %v2780, %v2928
            %v2993 = vadd.f32 %v2781, %v2929
            %v2994 = vadd.f32 %v2782, %v2930
            %v2995 = vadd.f32 %v2783, %v2931
            %v2996 = vadd.f32 %v2784, %v2932
            %v2997 = vadd.f32 %v2785, %v2933
            %v2998 = vadd.f32 %v2786, %v2934
            %v2999 = vadd.f32 %v2787, %v2935
            %v3000 = vadd.f32 %v2788, %v2936
            %v3001 = vadd.f32 %v2789, %v2937
            %v3002 = vadd.f32 %v2790, %v2938
            %v3003 = vadd.f32 %v2791, %v2939
            %v3004 = vadd.f32 %v2792, %v2940
            %v3005 = vadd.f32 %v2793, %v2941
            %v3006 = vadd.f32 %v2794, %v2942
            %v3007 = vadd.f32 %v2795, %v2943
            %v3008 = vadd.f32 %v2796, %v2944
            %v3009 = vadd.f32 %v2797, %v2945
            %v3010 = vadd.f32 %v2798, %v2946
            %v3011 = vadd.f32 %v2799, %v2947
            %v3012 = vadd.f32 %v2800, %v2948
            %v3013 = vadd.f32 %v2801, %v2949
            %v3014 = vadd.f32 %v2802, %v2950
            %v3015 = vadd.f32 %v2803, %v2951
            %v3016 = vadd.f32 %v2804, %v2952
            %v3017 = vadd.f32 %v2805, %v2953
            %v3018 = vadd.f32 %v2806, %v2954
            %v3019 = vadd.f32 %v2807, %v2955
            %v3020 = vadd.f32 %v2808, %v2956
            %v3021 = vadd.f32 %v2809, %v2957
            %v3022 = vadd.f32 %v2810, %v2958
            %v3023 = vadd.f32 %v2811, %v2959
            %v3024 = vadd.f32 %v2812, %v2960
            %v3025 = vadd.f32 %v2813, %v2961
            %v3026 = vadd.f32 %v2814, %v2962
            %v3027 = vadd.f32 %v2815, %v2963
            %v3028 = vadd.f32 %v2816, %v2964
            %v3029 = vadd.f32 %v2817, %v2965
            %v3030 = vadd.f32 %v2818, %v2966
            %v3031 = vadd.f32 %v2819, %v2967
            %v3032 = vadd.f32 %v2820, %v2968
            %v3033 = vadd.f32 %v2821, %v2969
            %v3034 = vadd.f32 %v2822, %v2970
            %v3035 = vadd.f32 %v2823, %v2971
            %v3036 = vadd.f32 %v2824, %v2972
            %v3037 = vadd.f32 %v2825, %v2973
            %v3038 = vadd.f32 %v2826, %v2974
            %v3039 = vadd.f32 %v2827, %v2975
            %v3040 = vadd.f32 %v2828, %v2976
            %v3041 = vadd.f32 %v2829, %v2977
            %v3042 = vadd.f32 %v2830, %v2978
            %v3043 = vadd.f32 %v2831, %v2979
            %v3044 = vadd.f32 %v2832, %v2980
            %v3045 = vadd.f32 %v2833, %v2981
            %v3046 = vadd.f32 %v2834, %v2982
            %v3047 = vadd.f32 %v2835, %v2983
            %v3048 = vadd.f32 %v2836, %v2984
            %v3049 = vadd.f32 %v2837, %v2985
            %v3050 = vadd.f32 %v2838, %v2986
            %v3051 = vadd.f32 %v2839, %v2987
            %v3052 = vadd.f32 %v2840, %v2988
            %v3053 = vadd.f32 %v2841, %v2989
            %v3054 = vsub.s32 %v2468, %v2481
            %v3055 = vlaneseq
            %v3056 = vshrl.u32 %v3055, 7
            %v3057 = vsub.s32 0, %v3056
            %v3058 = vrot.slane %v3054, %v3057
            %v3059 = vlaneseq
            %v3060 = vshrl.u32 %v3059, 7
            %v3061 = vsub.s32 1, %v3060
            %v3062 = vrot.slane %v3054, %v3061
            %vm3063 = vcmp.eq.s32.totalorder %v3058, %v232
            %vm3064 = vcmp.eq.s32.totalorder %v3062, %v232
            %vm3065 = vcmp.eq.s32.totalorder %v3058, %v233
            %vm3066 = vcmp.eq.s32.totalorder %v3062, %v233
            %vm3067 = vcmp.eq.s32.totalorder %v3058, %v234
            %vm3068 = vcmp.eq.s32.totalorder %v3062, %v234
            %vm3069 = vcmp.eq.s32.totalorder %v3058, %v235
            %vm3070 = vcmp.eq.s32.totalorder %v3062, %v235
            %vm3071 = vcmp.eq.s32.totalorder %v3058, %v236
            %vm3072 = vcmp.eq.s32.totalorder %v3062, %v236
            %vm3073 = vcmp.eq.s32.totalorder %v3058, %v237
            %vm3074 = vcmp.eq.s32.totalorder %v3062, %v237
            %vm3075 = vcmp.eq.s32.totalorder %v3058, %v238
            %vm3076 = vcmp.eq.s32.totalorder %v3062, %v238
            %vm3077 = vcmp.eq.s32.totalorder %v3058, %v239
            %vm3078 = vcmp.eq.s32.totalorder %v3062, %v239
            %vm3079 = vcmp.eq.s32.totalorder %v3058, %v240
            %vm3080 = vcmp.eq.s32.totalorder %v3062, %v240
            %vm3081 = vcmp.eq.s32.totalorder %v3058, %v241
            %vm3082 = vcmp.eq.s32.totalorder %v3062, %v241
            %vm3083 = vcmp.eq.s32.totalorder %v3058, %v242
            %vm3084 = vcmp.eq.s32.totalorder %v3062, %v242
            %vm3085 = vcmp.eq.s32.totalorder %v3058, %v243
            %vm3086 = vcmp.eq.s32.totalorder %v3062, %v243
            %vm3087 = vcmp.eq.s32.totalorder %v3058, %v244
            %vm3088 = vcmp.eq.s32.totalorder %v3062, %v244
            %vm3089 = vcmp.eq.s32.totalorder %v3058, %v245
            %vm3090 = vcmp.eq.s32.totalorder %v3062, %v245
            %vm3091 = vcmp.eq.s32.totalorder %v3058, %v246
            %vm3092 = vcmp.eq.s32.totalorder %v3062, %v246
            %vm3093 = vcmp.eq.s32.totalorder %v3058, %v247
            %vm3094 = vcmp.eq.s32.totalorder %v3062, %v247
            %vm3095 = vcmp.eq.s32.totalorder %v3058, %v248
            %vm3096 = vcmp.eq.s32.totalorder %v3062, %v248
            %vm3097 = vcmp.eq.s32.totalorder %v3058, %v249
            %vm3098 = vcmp.eq.s32.totalorder %v3062, %v249
            %vm3099 = vcmp.eq.s32.totalorder %v3058, %v250
            %vm3100 = vcmp.eq.s32.totalorder %v3062, %v250
            %vm3101 = vcmp.eq.s32.totalorder %v3058, %v251
            %vm3102 = vcmp.eq.s32.totalorder %v3062, %v251
            %vm3103 = vcmp.eq.s32.totalorder %v3058, %v252
            %vm3104 = vcmp.eq.s32.totalorder %v3062, %v252
            %vm3105 = vcmp.eq.s32.totalorder %v3058, %v253
            %vm3106 = vcmp.eq.s32.totalorder %v3062, %v253
            %vm3107 = vcmp.eq.s32.totalorder %v3058, %v254
            %vm3108 = vcmp.eq.s32.totalorder %v3062, %v254
            %vm3109 = vcmp.eq.s32.totalorder %v3058, %v255
            %vm3110 = vcmp.eq.s32.totalorder %v3062, %v255
            %vm3111 = vcmp.eq.s32.totalorder %v3058, %v256
            %vm3112 = vcmp.eq.s32.totalorder %v3062, %v256
            %vm3113 = vcmp.eq.s32.totalorder %v3058, %v257
            %vm3114 = vcmp.eq.s32.totalorder %v3062, %v257
            %vm3115 = vcmp.eq.s32.totalorder %v3058, %v258
            %vm3116 = vcmp.eq.s32.totalorder %v3062, %v258
            %vm3117 = vcmp.eq.s32.totalorder %v3058, %v259
            %vm3118 = vcmp.eq.s32.totalorder %v3062, %v259
            %vm3119 = vcmp.eq.s32.totalorder %v3058, %v260
            %vm3120 = vcmp.eq.s32.totalorder %v3062, %v260
            %vm3121 = vcmp.eq.s32.totalorder %v3058, %v261
            %vm3122 = vcmp.eq.s32.totalorder %v3062, %v261
            %vm3123 = vcmp.eq.s32.totalorder %v3058, %v262
            %vm3124 = vcmp.eq.s32.totalorder %v3062, %v262
            %vm3125 = vcmp.eq.s32.totalorder %v3058, %v263
            %vm3126 = vcmp.eq.s32.totalorder %v3062, %v263
            %v3128 = vlaneseq
            %v3129 = vshrl.u32 %v3128, 7
            %v3130 = vsub.s32 0, %v3129
            %v3131 = vrot.slane %v2469, %v3130
            %v3132 = vlaneseq
            %v3133 = vshrl.u32 %v3132, 7
            %v3134 = vsub.s32 1, %v3133
            %v3135 = vrot.slane %v2469, %v3134
            %v3138 = vsel %vm3063, %v3131, 0.0
            %v3139 = vsel %vm3064, %v3135, 0.0
            %v3140 = vsel %vm3065, %v3131, 0.0
            %v3141 = vsel %vm3066, %v3135, 0.0
            %v3142 = vsel %vm3067, %v3131, 0.0
            %v3143 = vsel %vm3068, %v3135, 0.0
            %v3144 = vsel %vm3069, %v3131, 0.0
            %v3145 = vsel %vm3070, %v3135, 0.0
            %v3146 = vsel %vm3071, %v3131, 0.0
            %v3147 = vsel %vm3072, %v3135, 0.0
            %v3148 = vsel %vm3073, %v3131, 0.0
            %v3149 = vsel %vm3074, %v3135, 0.0
            %v3150 = vsel %vm3075, %v3131, 0.0
            %v3151 = vsel %vm3076, %v3135, 0.0
            %v3152 = vsel %vm3077, %v3131, 0.0
            %v3153 = vsel %vm3078, %v3135, 0.0
            %v3154 = vsel %vm3079, %v3131, 0.0
            %v3155 = vsel %vm3080, %v3135, 0.0
            %v3156 = vsel %vm3081, %v3131, 0.0
            %v3157 = vsel %vm3082, %v3135, 0.0
            %v3158 = vsel %vm3083, %v3131, 0.0
            %v3159 = vsel %vm3084, %v3135, 0.0
            %v3160 = vsel %vm3085, %v3131, 0.0
            %v3161 = vsel %vm3086, %v3135, 0.0
            %v3162 = vsel %vm3087, %v3131, 0.0
            %v3163 = vsel %vm3088, %v3135, 0.0
            %v3164 = vsel %vm3089, %v3131, 0.0
            %v3165 = vsel %vm3090, %v3135, 0.0
            %v3166 = vsel %vm3091, %v3131, 0.0
            %v3167 = vsel %vm3092, %v3135, 0.0
            %v3168 = vsel %vm3093, %v3131, 0.0
            %v3169 = vsel %vm3094, %v3135, 0.0
            %v3170 = vsel %vm3095, %v3131, 0.0
            %v3171 = vsel %vm3096, %v3135, 0.0
            %v3172 = vsel %vm3097, %v3131, 0.0
            %v3173 = vsel %vm3098, %v3135, 0.0
            %v3174 = vsel %vm3099, %v3131, 0.0
            %v3175 = vsel %vm3100, %v3135, 0.0
            %v3176 = vsel %vm3101, %v3131, 0.0
            %v3177 = vsel %vm3102, %v3135, 0.0
            %v3178 = vsel %vm3103, %v3131, 0.0
            %v3179 = vsel %vm3104, %v3135, 0.0
            %v3180 = vsel %vm3105, %v3131, 0.0
            %v3181 = vsel %vm3106, %v3135, 0.0
            %v3182 = vsel %vm3107, %v3131, 0.0
            %v3183 = vsel %vm3108, %v3135, 0.0
            %v3184 = vsel %vm3109, %v3131, 0.0
            %v3185 = vsel %vm3110, %v3135, 0.0
            %v3186 = vsel %vm3111, %v3131, 0.0
            %v3187 = vsel %vm3112, %v3135, 0.0
            %v3188 = vsel %vm3113, %v3131, 0.0
            %v3189 = vsel %vm3114, %v3135, 0.0
            %v3190 = vsel %vm3115, %v3131, 0.0
            %v3191 = vsel %vm3116, %v3135, 0.0
            %v3192 = vsel %vm3117, %v3131, 0.0
            %v3193 = vsel %vm3118, %v3135, 0.0
            %v3194 = vsel %vm3119, %v3131, 0.0
            %v3195 = vsel %vm3120, %v3135, 0.0
            %v3196 = vsel %vm3121, %v3131, 0.0
            %v3197 = vsel %vm3122, %v3135, 0.0
            %v3198 = vsel %vm3123, %v3131, 0.0
            %v3199 = vsel %vm3124, %v3135, 0.0
            %v3200 = vsel %vm3125, %v3131, 0.0
            %v3201 = vsel %vm3126, %v3135, 0.0
            %v3202 = vadd.f32 %v2990, %v3138
            %v3203 = vadd.f32 %v2991, %v3139
            %v3204 = vadd.f32 %v2992, %v3140
            %v3205 = vadd.f32 %v2993, %v3141
            %v3206 = vadd.f32 %v2994, %v3142
            %v3207 = vadd.f32 %v2995, %v3143
            %v3208 = vadd.f32 %v2996, %v3144
            %v3209 = vadd.f32 %v2997, %v3145
            %v3210 = vadd.f32 %v2998, %v3146
            %v3211 = vadd.f32 %v2999, %v3147
            %v3212 = vadd.f32 %v3000, %v3148
            %v3213 = vadd.f32 %v3001, %v3149
            %v3214 = vadd.f32 %v3002, %v3150
            %v3215 = vadd.f32 %v3003, %v3151
            %v3216 = vadd.f32 %v3004, %v3152
            %v3217 = vadd.f32 %v3005, %v3153
            %v3218 = vadd.f32 %v3006, %v3154
            %v3219 = vadd.f32 %v3007, %v3155
            %v3220 = vadd.f32 %v3008, %v3156
            %v3221 = vadd.f32 %v3009, %v3157
            %v3222 = vadd.f32 %v3010, %v3158
            %v3223 = vadd.f32 %v3011, %v3159
            %v3224 = vadd.f32 %v3012, %v3160
            %v3225 = vadd.f32 %v3013, %v3161
            %v3226 = vadd.f32 %v3014, %v3162
            %v3227 = vadd.f32 %v3015, %v3163
            %v3228 = vadd.f32 %v3016, %v3164
            %v3229 = vadd.f32 %v3017, %v3165
            %v3230 = vadd.f32 %v3018, %v3166
            %v3231 = vadd.f32 %v3019, %v3167
            %v3232 = vadd.f32 %v3020, %v3168
            %v3233 = vadd.f32 %v3021, %v3169
            %v3234 = vadd.f32 %v3022, %v3170
            %v3235 = vadd.f32 %v3023, %v3171
            %v3236 = vadd.f32 %v3024, %v3172
            %v3237 = vadd.f32 %v3025, %v3173
            %v3238 = vadd.f32 %v3026, %v3174
            %v3239 = vadd.f32 %v3027, %v3175
            %v3240 = vadd.f32 %v3028, %v3176
            %v3241 = vadd.f32 %v3029, %v3177
            %v3242 = vadd.f32 %v3030, %v3178
            %v3243 = vadd.f32 %v3031, %v3179
            %v3244 = vadd.f32 %v3032, %v3180
            %v3245 = vadd.f32 %v3033, %v3181
            %v3246 = vadd.f32 %v3034, %v3182
            %v3247 = vadd.f32 %v3035, %v3183
            %v3248 = vadd.f32 %v3036, %v3184
            %v3249 = vadd.f32 %v3037, %v3185
            %v3250 = vadd.f32 %v3038, %v3186
            %v3251 = vadd.f32 %v3039, %v3187
            %v3252 = vadd.f32 %v3040, %v3188
            %v3253 = vadd.f32 %v3041, %v3189
            %v3254 = vadd.f32 %v3042, %v3190
            %v3255 = vadd.f32 %v3043, %v3191
            %v3256 = vadd.f32 %v3044, %v3192
            %v3257 = vadd.f32 %v3045, %v3193
            %v3258 = vadd.f32 %v3046, %v3194
            %v3259 = vadd.f32 %v3047, %v3195
            %v3260 = vadd.f32 %v3048, %v3196
            %v3261 = vadd.f32 %v3049, %v3197
            %v3262 = vadd.f32 %v3050, %v3198
            %v3263 = vadd.f32 %v3051, %v3199
            %v3264 = vadd.f32 %v3052, %v3200
            %v3265 = vadd.f32 %v3053, %v3201
            %s3266 = smul.u32 %s2473, 2
            %s3267 = smul.addr %s3266, 4
            %s3268 = scalar_lea.vmem [#allocation2], %s3267
            %v3269 = vld [vmem:[%s3268] sm:$0xff]
            %v3271 = vcombine.high %v3269, %v3269
            %v3273 = vand.u32 %v3203, 4294901760
            %3274 = vmatprep.subr.mxu0 %v3273
            %v3275 = vand.u32 %v3202, 4294901760
            %3276 = vmatpush1.msra.mxu0 %v3275
            %v3277 = vand.u32 %v3205, 4294901760
            %3278 = vmatprep.subr.mxu0 %v3277
            %v3279 = vand.u32 %v3204, 4294901760
            %3280 = vmatpush1.msra.mxu0 %v3279
            %v3281 = vand.u32 %v3207, 4294901760
            %3282 = vmatprep.subr.mxu0 %v3281
            %v3283 = vand.u32 %v3206, 4294901760
            %3284 = vmatpush1.msra.mxu0 %v3283
            %v3285 = vand.u32 %v3209, 4294901760
            %3286 = vmatprep.subr.mxu0 %v3285
            %v3287 = vand.u32 %v3208, 4294901760
            %3288 = vmatpush1.msra.mxu0 %v3287
            %v3289 = vand.u32 %v3211, 4294901760
            %3290 = vmatprep.subr.mxu0 %v3289
            %v3291 = vand.u32 %v3210, 4294901760
            %3292 = vmatpush1.msra.mxu0 %v3291
            %v3293 = vand.u32 %v3213, 4294901760
            %3294 = vmatprep.subr.mxu0 %v3293
            %v3295 = vand.u32 %v3212, 4294901760
            %3296 = vmatpush1.msra.mxu0 %v3295
            %v3297 = vand.u32 %v3215, 4294901760
            %3298 = vmatprep.subr.mxu0 %v3297
            %v3299 = vand.u32 %v3214, 4294901760
            %3300 = vmatpush1.msra.mxu0 %v3299
            %v3301 = vand.u32 %v3217, 4294901760
            %3302 = vmatprep.subr.mxu0 %v3301
            %v3303 = vand.u32 %v3216, 4294901760
            %3304 = vmatpush1.msra.mxu0 %v3303
            %v3305 = vand.u32 %v3219, 4294901760
            %3306 = vmatprep.subr.mxu0 %v3305
            %v3307 = vand.u32 %v3218, 4294901760
            %3308 = vmatpush1.msra.mxu0 %v3307
            %v3309 = vand.u32 %v3221, 4294901760
            %3310 = vmatprep.subr.mxu0 %v3309
            %v3311 = vand.u32 %v3220, 4294901760
            %3312 = vmatpush1.msra.mxu0 %v3311
            %v3313 = vand.u32 %v3223, 4294901760
            %3314 = vmatprep.subr.mxu0 %v3313
            %v3315 = vand.u32 %v3222, 4294901760
            %3316 = vmatpush1.msra.mxu0 %v3315
            %v3317 = vand.u32 %v3225, 4294901760
            %3318 = vmatprep.subr.mxu0 %v3317
            %v3319 = vand.u32 %v3224, 4294901760
            %3320 = vmatpush1.msra.mxu0 %v3319
            %v3321 = vand.u32 %v3227, 4294901760
            %3322 = vmatprep.subr.mxu0 %v3321
            %v3323 = vand.u32 %v3226, 4294901760
            %3324 = vmatpush1.msra.mxu0 %v3323
            %v3325 = vand.u32 %v3229, 4294901760
            %3326 = vmatprep.subr.mxu0 %v3325
            %v3327 = vand.u32 %v3228, 4294901760
            %3328 = vmatpush1.msra.mxu0 %v3327
            %v3329 = vand.u32 %v3231, 4294901760
            %3330 = vmatprep.subr.mxu0 %v3329
            %v3331 = vand.u32 %v3230, 4294901760
            %3332 = vmatpush1.msra.mxu0 %v3331
            %v3333 = vand.u32 %v3233, 4294901760
            %3334 = vmatprep.subr.mxu0 %v3333
            %v3335 = vand.u32 %v3232, 4294901760
            %3336 = vmatpush1.msra.mxu0 %v3335
            %v3337 = vand.u32 %v3235, 4294901760
            %3338 = vmatprep.subr.mxu0 %v3337
            %v3339 = vand.u32 %v3234, 4294901760
            %3340 = vmatpush1.msra.mxu0 %v3339
            %v3341 = vand.u32 %v3237, 4294901760
            %3342 = vmatprep.subr.mxu0 %v3341
            %v3343 = vand.u32 %v3236, 4294901760
            %3344 = vmatpush1.msra.mxu0 %v3343
            %v3345 = vand.u32 %v3239, 4294901760
            %3346 = vmatprep.subr.mxu0 %v3345
            %v3347 = vand.u32 %v3238, 4294901760
            %3348 = vmatpush1.msra.mxu0 %v3347
            %v3349 = vand.u32 %v3241, 4294901760
            %3350 = vmatprep.subr.mxu0 %v3349
            %v3351 = vand.u32 %v3240, 4294901760
            %3352 = vmatpush1.msra.mxu0 %v3351
            %v3353 = vand.u32 %v3243, 4294901760
            %3354 = vmatprep.subr.mxu0 %v3353
            %v3355 = vand.u32 %v3242, 4294901760
            %3356 = vmatpush1.msra.mxu0 %v3355
            %v3357 = vand.u32 %v3245, 4294901760
            %3358 = vmatprep.subr.mxu0 %v3357
            %v3359 = vand.u32 %v3244, 4294901760
            %3360 = vmatpush1.msra.mxu0 %v3359
            %v3361 = vand.u32 %v3247, 4294901760
            %3362 = vmatprep.subr.mxu0 %v3361
            %v3363 = vand.u32 %v3246, 4294901760
            %3364 = vmatpush1.msra.mxu0 %v3363
            %v3365 = vand.u32 %v3249, 4294901760
            %3366 = vmatprep.subr.mxu0 %v3365
            %v3367 = vand.u32 %v3248, 4294901760
            %3368 = vmatpush1.msra.mxu0 %v3367
            %v3369 = vand.u32 %v3251, 4294901760
            %3370 = vmatprep.subr.mxu0 %v3369
            %v3371 = vand.u32 %v3250, 4294901760
            %3372 = vmatpush1.msra.mxu0 %v3371
            %v3373 = vand.u32 %v3253, 4294901760
            %3374 = vmatprep.subr.mxu0 %v3373
            %v3375 = vand.u32 %v3252, 4294901760
            %3376 = vmatpush1.msra.mxu0 %v3375
            %v3377 = vand.u32 %v3255, 4294901760
            %3378 = vmatprep.subr.mxu0 %v3377
            %v3379 = vand.u32 %v3254, 4294901760
            %3380 = vmatpush1.msra.mxu0 %v3379
            %v3381 = vand.u32 %v3257, 4294901760
            %3382 = vmatprep.subr.mxu0 %v3381
            %v3383 = vand.u32 %v3256, 4294901760
            %3384 = vmatpush1.msra.mxu0 %v3383
            %v3385 = vand.u32 %v3259, 4294901760
            %3386 = vmatprep.subr.mxu0 %v3385
            %v3387 = vand.u32 %v3258, 4294901760
            %3388 = vmatpush1.msra.mxu0 %v3387
            %v3389 = vand.u32 %v3261, 4294901760
            %3390 = vmatprep.subr.mxu0 %v3389
            %v3391 = vand.u32 %v3260, 4294901760
            %3392 = vmatpush1.msra.mxu0 %v3391
            %v3393 = vand.u32 %v3263, 4294901760
            %3394 = vmatprep.subr.mxu0 %v3393
            %v3395 = vand.u32 %v3262, 4294901760
            %3396 = vmatpush1.msra.mxu0 %v3395
            %v3397 = vand.u32 %v3265, 4294901760
            %3398 = vmatprep.subr.mxu0 %v3397
            %v3399 = vand.u32 %v3264, 4294901760
            %3400 = vmatpush1.msra.mxu0 %v3399
            %v3401 = vand.u32 %v3271, 4294901760
            %v3402 = vsub.f32 %v3271, %v3401
            %v3403 = vand.u32 %v3402, 4294901760
            %v3404 = vsub.f32 %v3402, %v3403
            %v3405 = vand.u32 %v3404, 4294901760
            %3406 = vmatprep.mubr.f32.mxu0 %v3405
            %v3407 = vand.u32 %v3269, 4294901760
            %v3408 = vsub.f32 %v3269, %v3407
            %v3409 = vand.u32 %v3408, 4294901760
            %v3410 = vsub.f32 %v3408, %v3409
            %v3411 = vand.u32 %v3410, 4294901760
            %3412 = vmatmul.mubr.f32.gmra.mrb[0].mxu0 %v3411
            %v3413 = vpop.f32.mrb[0].mxu0
            %v3414 = vadd.f32 0.0, %v3413
            %v3415 = vpop.f32.mrb[0].mxu0
            %v3416 = vadd.f32 0.0, %v3415
            %3417 = vdwg.mxu0
            %v3418 = vand.u32 %v3203, 4294901760
            %v3419 = vsub.f32 %v3203, %v3418
            %v3420 = vand.u32 %v3419, 4294901760
            %v3421 = vsub.f32 %v3419, %v3420
            %v3422 = vand.u32 %v3421, 4294901760
            %3423 = vmatprep.subr.mxu0 %v3422
            %v3424 = vand.u32 %v3202, 4294901760
            %v3425 = vsub.f32 %v3202, %v3424
            %v3426 = vand.u32 %v3425, 4294901760
            %v3427 = vsub.f32 %v3425, %v3426
            %v3428 = vand.u32 %v3427, 4294901760
            %3429 = vmatpush1.msra.mxu0 %v3428
            %v3430 = vand.u32 %v3205, 4294901760
            %v3431 = vsub.f32 %v3205, %v3430
            %v3432 = vand.u32 %v3431, 4294901760
            %v3433 = vsub.f32 %v3431, %v3432
            %v3434 = vand.u32 %v3433, 4294901760
            %3435 = vmatprep.subr.mxu0 %v3434
            %v3436 = vand.u32 %v3204, 4294901760
            %v3437 = vsub.f32 %v3204, %v3436
            %v3438 = vand.u32 %v3437, 4294901760
            %v3439 = vsub.f32 %v3437, %v3438
            %v3440 = vand.u32 %v3439, 4294901760
            %3441 = vmatpush1.msra.mxu0 %v3440
            %v3442 = vand.u32 %v3207, 4294901760
            %v3443 = vsub.f32 %v3207, %v3442
            %v3444 = vand.u32 %v3443, 4294901760
            %v3445 = vsub.f32 %v3443, %v3444
            %v3446 = vand.u32 %v3445, 4294901760
            %3447 = vmatprep.subr.mxu0 %v3446
            %v3448 = vand.u32 %v3206, 4294901760
            %v3449 = vsub.f32 %v3206, %v3448
            %v3450 = vand.u32 %v3449, 4294901760
            %v3451 = vsub.f32 %v3449, %v3450
            %v3452 = vand.u32 %v3451, 4294901760
            %3453 = vmatpush1.msra.mxu0 %v3452
            %v3454 = vand.u32 %v3209, 4294901760
            %v3455 = vsub.f32 %v3209, %v3454
            %v3456 = vand.u32 %v3455, 4294901760
            %v3457 = vsub.f32 %v3455, %v3456
            %v3458 = vand.u32 %v3457, 4294901760
            %3459 = vmatprep.subr.mxu0 %v3458
            %v3460 = vand.u32 %v3208, 4294901760
            %v3461 = vsub.f32 %v3208, %v3460
            %v3462 = vand.u32 %v3461, 4294901760
            %v3463 = vsub.f32 %v3461, %v3462
            %v3464 = vand.u32 %v3463, 4294901760
            %3465 = vmatpush1.msra.mxu0 %v3464
            %v3466 = vand.u32 %v3211, 4294901760
            %v3467 = vsub.f32 %v3211, %v3466
            %v3468 = vand.u32 %v3467, 4294901760
            %v3469 = vsub.f32 %v3467, %v3468
            %v3470 = vand.u32 %v3469, 4294901760
            %3471 = vmatprep.subr.mxu0 %v3470
            %v3472 = vand.u32 %v3210, 4294901760
            %v3473 = vsub.f32 %v3210, %v3472
            %v3474 = vand.u32 %v3473, 4294901760
            %v3475 = vsub.f32 %v3473, %v3474
            %v3476 = vand.u32 %v3475, 4294901760
            %3477 = vmatpush1.msra.mxu0 %v3476
            %v3478 = vand.u32 %v3213, 4294901760
            %v3479 = vsub.f32 %v3213, %v3478
            %v3480 = vand.u32 %v3479, 4294901760
            %v3481 = vsub.f32 %v3479, %v3480
            %v3482 = vand.u32 %v3481, 4294901760
            %3483 = vmatprep.subr.mxu0 %v3482
            %v3484 = vand.u32 %v3212, 4294901760
            %v3485 = vsub.f32 %v3212, %v3484
            %v3486 = vand.u32 %v3485, 4294901760
            %v3487 = vsub.f32 %v3485, %v3486
            %v3488 = vand.u32 %v3487, 4294901760
            %3489 = vmatpush1.msra.mxu0 %v3488
            %v3490 = vand.u32 %v3215, 4294901760
            %v3491 = vsub.f32 %v3215, %v3490
            %v3492 = vand.u32 %v3491, 4294901760
            %v3493 = vsub.f32 %v3491, %v3492
            %v3494 = vand.u32 %v3493, 4294901760
            %3495 = vmatprep.subr.mxu0 %v3494
            %v3496 = vand.u32 %v3214, 4294901760
            %v3497 = vsub.f32 %v3214, %v3496
            %v3498 = vand.u32 %v3497, 4294901760
            %v3499 = vsub.f32 %v3497, %v3498
            %v3500 = vand.u32 %v3499, 4294901760
            %3501 = vmatpush1.msra.mxu0 %v3500
            %v3502 = vand.u32 %v3217, 4294901760
            %v3503 = vsub.f32 %v3217, %v3502
            %v3504 = vand.u32 %v3503, 4294901760
            %v3505 = vsub.f32 %v3503, %v3504
            %v3506 = vand.u32 %v3505, 4294901760
            %3507 = vmatprep.subr.mxu0 %v3506
            %v3508 = vand.u32 %v3216, 4294901760
            %v3509 = vsub.f32 %v3216, %v3508
            %v3510 = vand.u32 %v3509, 4294901760
            %v3511 = vsub.f32 %v3509, %v3510
            %v3512 = vand.u32 %v3511, 4294901760
            %3513 = vmatpush1.msra.mxu0 %v3512
            %v3514 = vand.u32 %v3219, 4294901760
            %v3515 = vsub.f32 %v3219, %v3514
            %v3516 = vand.u32 %v3515, 4294901760
            %v3517 = vsub.f32 %v3515, %v3516
            %v3518 = vand.u32 %v3517, 4294901760
            %3519 = vmatprep.subr.mxu0 %v3518
            %v3520 = vand.u32 %v3218, 4294901760
            %v3521 = vsub.f32 %v3218, %v3520
            %v3522 = vand.u32 %v3521, 4294901760
            %v3523 = vsub.f32 %v3521, %v3522
            %v3524 = vand.u32 %v3523, 4294901760
            %3525 = vmatpush1.msra.mxu0 %v3524
            %v3526 = vand.u32 %v3221, 4294901760
            %v3527 = vsub.f32 %v3221, %v3526
            %v3528 = vand.u32 %v3527, 4294901760
            %v3529 = vsub.f32 %v3527, %v3528
            %v3530 = vand.u32 %v3529, 4294901760
            %3531 = vmatprep.subr.mxu0 %v3530
            %v3532 = vand.u32 %v3220, 4294901760
            %v3533 = vsub.f32 %v3220, %v3532
            %v3534 = vand.u32 %v3533, 4294901760
            %v3535 = vsub.f32 %v3533, %v3534
            %v3536 = vand.u32 %v3535, 4294901760
            %3537 = vmatpush1.msra.mxu0 %v3536
            %v3538 = vand.u32 %v3223, 4294901760
            %v3539 = vsub.f32 %v3223, %v3538
            %v3540 = vand.u32 %v3539, 4294901760
            %v3541 = vsub.f32 %v3539, %v3540
            %v3542 = vand.u32 %v3541, 4294901760
            %3543 = vmatprep.subr.mxu0 %v3542
            %v3544 = vand.u32 %v3222, 4294901760
            %v3545 = vsub.f32 %v3222, %v3544
            %v3546 = vand.u32 %v3545, 4294901760
            %v3547 = vsub.f32 %v3545, %v3546
            %v3548 = vand.u32 %v3547, 4294901760
            %3549 = vmatpush1.msra.mxu0 %v3548
            %v3550 = vand.u32 %v3225, 4294901760
            %v3551 = vsub.f32 %v3225, %v3550
            %v3552 = vand.u32 %v3551, 4294901760
            %v3553 = vsub.f32 %v3551, %v3552
            %v3554 = vand.u32 %v3553, 4294901760
            %3555 = vmatprep.subr.mxu0 %v3554
            %v3556 = vand.u32 %v3224, 4294901760
            %v3557 = vsub.f32 %v3224, %v3556
            %v3558 = vand.u32 %v3557, 4294901760
            %v3559 = vsub.f32 %v3557, %v3558
            %v3560 = vand.u32 %v3559, 4294901760
            %3561 = vmatpush1.msra.mxu0 %v3560
            %v3562 = vand.u32 %v3227, 4294901760
            %v3563 = vsub.f32 %v3227, %v3562
            %v3564 = vand.u32 %v3563, 4294901760
            %v3565 = vsub.f32 %v3563, %v3564
            %v3566 = vand.u32 %v3565, 4294901760
            %3567 = vmatprep.subr.mxu0 %v3566
            %v3568 = vand.u32 %v3226, 4294901760
            %v3569 = vsub.f32 %v3226, %v3568
            %v3570 = vand.u32 %v3569, 4294901760
            %v3571 = vsub.f32 %v3569, %v3570
            %v3572 = vand.u32 %v3571, 4294901760
            %3573 = vmatpush1.msra.mxu0 %v3572
            %v3574 = vand.u32 %v3229, 4294901760
            %v3575 = vsub.f32 %v3229, %v3574
            %v3576 = vand.u32 %v3575, 4294901760
            %v3577 = vsub.f32 %v3575, %v3576
            %v3578 = vand.u32 %v3577, 4294901760
            %3579 = vmatprep.subr.mxu0 %v3578
            %v3580 = vand.u32 %v3228, 4294901760
            %v3581 = vsub.f32 %v3228, %v3580
            %v3582 = vand.u32 %v3581, 4294901760
            %v3583 = vsub.f32 %v3581, %v3582
            %v3584 = vand.u32 %v3583, 4294901760
            %3585 = vmatpush1.msra.mxu0 %v3584
            %v3586 = vand.u32 %v3231, 4294901760
            %v3587 = vsub.f32 %v3231, %v3586
            %v3588 = vand.u32 %v3587, 4294901760
            %v3589 = vsub.f32 %v3587, %v3588
            %v3590 = vand.u32 %v3589, 4294901760
            %3591 = vmatprep.subr.mxu0 %v3590
            %v3592 = vand.u32 %v3230, 4294901760
            %v3593 = vsub.f32 %v3230, %v3592
            %v3594 = vand.u32 %v3593, 4294901760
            %v3595 = vsub.f32 %v3593, %v3594
            %v3596 = vand.u32 %v3595, 4294901760
            %3597 = vmatpush1.msra.mxu0 %v3596
            %v3598 = vand.u32 %v3233, 4294901760
            %v3599 = vsub.f32 %v3233, %v3598
            %v3600 = vand.u32 %v3599, 4294901760
            %v3601 = vsub.f32 %v3599, %v3600
            %v3602 = vand.u32 %v3601, 4294901760
            %3603 = vmatprep.subr.mxu0 %v3602
            %v3604 = vand.u32 %v3232, 4294901760
            %v3605 = vsub.f32 %v3232, %v3604
            %v3606 = vand.u32 %v3605, 4294901760
            %v3607 = vsub.f32 %v3605, %v3606
            %v3608 = vand.u32 %v3607, 4294901760
            %3609 = vmatpush1.msra.mxu0 %v3608
            %v3610 = vand.u32 %v3235, 4294901760
            %v3611 = vsub.f32 %v3235, %v3610
            %v3612 = vand.u32 %v3611, 4294901760
            %v3613 = vsub.f32 %v3611, %v3612
            %v3614 = vand.u32 %v3613, 4294901760
            %3615 = vmatprep.subr.mxu0 %v3614
            %v3616 = vand.u32 %v3234, 4294901760
            %v3617 = vsub.f32 %v3234, %v3616
            %v3618 = vand.u32 %v3617, 4294901760
            %v3619 = vsub.f32 %v3617, %v3618
            %v3620 = vand.u32 %v3619, 4294901760
            %3621 = vmatpush1.msra.mxu0 %v3620
            %v3622 = vand.u32 %v3237, 4294901760
            %v3623 = vsub.f32 %v3237, %v3622
            %v3624 = vand.u32 %v3623, 4294901760
            %v3625 = vsub.f32 %v3623, %v3624
            %v3626 = vand.u32 %v3625, 4294901760
            %3627 = vmatprep.subr.mxu0 %v3626
            %v3628 = vand.u32 %v3236, 4294901760
            %v3629 = vsub.f32 %v3236, %v3628
            %v3630 = vand.u32 %v3629, 4294901760
            %v3631 = vsub.f32 %v3629, %v3630
            %v3632 = vand.u32 %v3631, 4294901760
            %3633 = vmatpush1.msra.mxu0 %v3632
            %v3634 = vand.u32 %v3239, 4294901760
            %v3635 = vsub.f32 %v3239, %v3634
            %v3636 = vand.u32 %v3635, 4294901760
            %v3637 = vsub.f32 %v3635, %v3636
            %v3638 = vand.u32 %v3637, 4294901760
            %3639 = vmatprep.subr.mxu0 %v3638
            %v3640 = vand.u32 %v3238, 4294901760
            %v3641 = vsub.f32 %v3238, %v3640
            %v3642 = vand.u32 %v3641, 4294901760
            %v3643 = vsub.f32 %v3641, %v3642
            %v3644 = vand.u32 %v3643, 4294901760
            %3645 = vmatpush1.msra.mxu0 %v3644
            %v3646 = vand.u32 %v3241, 4294901760
            %v3647 = vsub.f32 %v3241, %v3646
            %v3648 = vand.u32 %v3647, 4294901760
            %v3649 = vsub.f32 %v3647, %v3648
            %v3650 = vand.u32 %v3649, 4294901760
            %3651 = vmatprep.subr.mxu0 %v3650
            %v3652 = vand.u32 %v3240, 4294901760
            %v3653 = vsub.f32 %v3240, %v3652
            %v3654 = vand.u32 %v3653, 4294901760
            %v3655 = vsub.f32 %v3653, %v3654
            %v3656 = vand.u32 %v3655, 4294901760
            %3657 = vmatpush1.msra.mxu0 %v3656
            %v3658 = vand.u32 %v3243, 4294901760
            %v3659 = vsub.f32 %v3243, %v3658
            %v3660 = vand.u32 %v3659, 4294901760
            %v3661 = vsub.f32 %v3659, %v3660
            %v3662 = vand.u32 %v3661, 4294901760
            %3663 = vmatprep.subr.mxu0 %v3662
            %v3664 = vand.u32 %v3242, 4294901760
            %v3665 = vsub.f32 %v3242, %v3664
            %v3666 = vand.u32 %v3665, 4294901760
            %v3667 = vsub.f32 %v3665, %v3666
            %v3668 = vand.u32 %v3667, 4294901760
            %3669 = vmatpush1.msra.mxu0 %v3668
            %v3670 = vand.u32 %v3245, 4294901760
            %v3671 = vsub.f32 %v3245, %v3670
            %v3672 = vand.u32 %v3671, 4294901760
            %v3673 = vsub.f32 %v3671, %v3672
            %v3674 = vand.u32 %v3673, 4294901760
            %3675 = vmatprep.subr.mxu0 %v3674
            %v3676 = vand.u32 %v3244, 4294901760
            %v3677 = vsub.f32 %v3244, %v3676
            %v3678 = vand.u32 %v3677, 4294901760
            %v3679 = vsub.f32 %v3677, %v3678
            %v3680 = vand.u32 %v3679, 4294901760
            %3681 = vmatpush1.msra.mxu0 %v3680
            %v3682 = vand.u32 %v3247, 4294901760
            %v3683 = vsub.f32 %v3247, %v3682
            %v3684 = vand.u32 %v3683, 4294901760
            %v3685 = vsub.f32 %v3683, %v3684
            %v3686 = vand.u32 %v3685, 4294901760
            %3687 = vmatprep.subr.mxu0 %v3686
            %v3688 = vand.u32 %v3246, 4294901760
            %v3689 = vsub.f32 %v3246, %v3688
            %v3690 = vand.u32 %v3689, 4294901760
            %v3691 = vsub.f32 %v3689, %v3690
            %v3692 = vand.u32 %v3691, 4294901760
            %3693 = vmatpush1.msra.mxu0 %v3692
            %v3694 = vand.u32 %v3249, 4294901760
            %v3695 = vsub.f32 %v3249, %v3694
            %v3696 = vand.u32 %v3695, 4294901760
            %v3697 = vsub.f32 %v3695, %v3696
            %v3698 = vand.u32 %v3697, 4294901760
            %3699 = vmatprep.subr.mxu0 %v3698
            %v3700 = vand.u32 %v3248, 4294901760
            %v3701 = vsub.f32 %v3248, %v3700
            %v3702 = vand.u32 %v3701, 4294901760
            %v3703 = vsub.f32 %v3701, %v3702
            %v3704 = vand.u32 %v3703, 4294901760
            %3705 = vmatpush1.msra.mxu0 %v3704
            %v3706 = vand.u32 %v3251, 4294901760
            %v3707 = vsub.f32 %v3251, %v3706
            %v3708 = vand.u32 %v3707, 4294901760
            %v3709 = vsub.f32 %v3707, %v3708
            %v3710 = vand.u32 %v3709, 4294901760
            %3711 = vmatprep.subr.mxu0 %v3710
            %v3712 = vand.u32 %v3250, 4294901760
            %v3713 = vsub.f32 %v3250, %v3712
            %v3714 = vand.u32 %v3713, 4294901760
            %v3715 = vsub.f32 %v3713, %v3714
            %v3716 = vand.u32 %v3715, 4294901760
            %3717 = vmatpush1.msra.mxu0 %v3716
            %v3718 = vand.u32 %v3253, 4294901760
            %v3719 = vsub.f32 %v3253, %v3718
            %v3720 = vand.u32 %v3719, 4294901760
            %v3721 = vsub.f32 %v3719, %v3720
            %v3722 = vand.u32 %v3721, 4294901760
            %3723 = vmatprep.subr.mxu0 %v3722
            %v3724 = vand.u32 %v3252, 4294901760
            %v3725 = vsub.f32 %v3252, %v3724
            %v3726 = vand.u32 %v3725, 4294901760
            %v3727 = vsub.f32 %v3725, %v3726
            %v3728 = vand.u32 %v3727, 4294901760
            %3729 = vmatpush1.msra.mxu0 %v3728
            %v3730 = vand.u32 %v3255, 4294901760
            %v3731 = vsub.f32 %v3255, %v3730
            %v3732 = vand.u32 %v3731, 4294901760
            %v3733 = vsub.f32 %v3731, %v3732
            %v3734 = vand.u32 %v3733, 4294901760
            %3735 = vmatprep.subr.mxu0 %v3734
            %v3736 = vand.u32 %v3254, 4294901760
            %v3737 = vsub.f32 %v3254, %v3736
            %v3738 = vand.u32 %v3737, 4294901760
            %v3739 = vsub.f32 %v3737, %v3738
            %v3740 = vand.u32 %v3739, 4294901760
            %3741 = vmatpush1.msra.mxu0 %v3740
            %v3742 = vand.u32 %v3257, 4294901760
            %v3743 = vsub.f32 %v3257, %v3742
            %v3744 = vand.u32 %v3743, 4294901760
            %v3745 = vsub.f32 %v3743, %v3744
            %v3746 = vand.u32 %v3745, 4294901760
            %3747 = vmatprep.subr.mxu0 %v3746
            %v3748 = vand.u32 %v3256, 4294901760
            %v3749 = vsub.f32 %v3256, %v3748
            %v3750 = vand.u32 %v3749, 4294901760
            %v3751 = vsub.f32 %v3749, %v3750
            %v3752 = vand.u32 %v3751, 4294901760
            %3753 = vmatpush1.msra.mxu0 %v3752
            %v3754 = vand.u32 %v3259, 4294901760
            %v3755 = vsub.f32 %v3259, %v3754
            %v3756 = vand.u32 %v3755, 4294901760
            %v3757 = vsub.f32 %v3755, %v3756
            %v3758 = vand.u32 %v3757, 4294901760
            %3759 = vmatprep.subr.mxu0 %v3758
            %v3760 = vand.u32 %v3258, 4294901760
            %v3761 = vsub.f32 %v3258, %v3760
            %v3762 = vand.u32 %v3761, 4294901760
            %v3763 = vsub.f32 %v3761, %v3762
            %v3764 = vand.u32 %v3763, 4294901760
            %3765 = vmatpush1.msra.mxu0 %v3764
            %v3766 = vand.u32 %v3261, 4294901760
            %v3767 = vsub.f32 %v3261, %v3766
            %v3768 = vand.u32 %v3767, 4294901760
            %v3769 = vsub.f32 %v3767, %v3768
            %v3770 = vand.u32 %v3769, 4294901760
            %3771 = vmatprep.subr.mxu0 %v3770
            %v3772 = vand.u32 %v3260, 4294901760
            %v3773 = vsub.f32 %v3260, %v3772
            %v3774 = vand.u32 %v3773, 4294901760
            %v3775 = vsub.f32 %v3773, %v3774
            %v3776 = vand.u32 %v3775, 4294901760
            %3777 = vmatpush1.msra.mxu0 %v3776
            %v3778 = vand.u32 %v3263, 4294901760
            %v3779 = vsub.f32 %v3263, %v3778
            %v3780 = vand.u32 %v3779, 4294901760
            %v3781 = vsub.f32 %v3779, %v3780
            %v3782 = vand.u32 %v3781, 4294901760
            %3783 = vmatprep.subr.mxu0 %v3782
            %v3784 = vand.u32 %v3262, 4294901760
            %v3785 = vsub.f32 %v3262, %v3784
            %v3786 = vand.u32 %v3785, 4294901760
            %v3787 = vsub.f32 %v3785, %v3786
            %v3788 = vand.u32 %v3787, 4294901760
            %3789 = vmatpush1.msra.mxu0 %v3788
            %v3790 = vand.u32 %v3265, 4294901760
            %v3791 = vsub.f32 %v3265, %v3790
            %v3792 = vand.u32 %v3791, 4294901760
            %v3793 = vsub.f32 %v3791, %v3792
            %v3794 = vand.u32 %v3793, 4294901760
            %3795 = vmatprep.subr.mxu0 %v3794
            %v3796 = vand.u32 %v3264, 4294901760
            %v3797 = vsub.f32 %v3264, %v3796
            %v3798 = vand.u32 %v3797, 4294901760
            %v3799 = vsub.f32 %v3797, %v3798
            %v3800 = vand.u32 %v3799, 4294901760
            %3801 = vmatpush1.msra.mxu0 %v3800
            %v3802 = vand.u32 %v3271, 4294901760
            %3803 = vmatprep.mubr.f32.mxu0 %v3802
            %v3804 = vand.u32 %v3269, 4294901760
            %3805 = vmatmul.mubr.f32.gmra.mrb[0].mxu0 %v3804
            %v3806 = vpop.f32.mrb[0].mxu0
            %v3807 = vadd.f32 %v3414, %v3806
            %v3808 = vpop.f32.mrb[0].mxu0
            %v3809 = vadd.f32 %v3416, %v3808
            %3810 = vdwg.mxu0
            %v3811 = vand.u32 %v3203, 4294901760
            %v3812 = vsub.f32 %v3203, %v3811
            %3813 = vmatprep.subr.mxu0 %v3812
            %v3814 = vand.u32 %v3202, 4294901760
            %v3815 = vsub.f32 %v3202, %v3814
            %3816 = vmatpush1.msra.mxu0 %v3815
            %v3817 = vand.u32 %v3205, 4294901760
            %v3818 = vsub.f32 %v3205, %v3817
            %3819 = vmatprep.subr.mxu0 %v3818
            %v3820 = vand.u32 %v3204, 4294901760
            %v3821 = vsub.f32 %v3204, %v3820
            %3822 = vmatpush1.msra.mxu0 %v3821
            %v3823 = vand.u32 %v3207, 4294901760
            %v3824 = vsub.f32 %v3207, %v3823
            %3825 = vmatprep.subr.mxu0 %v3824
            %v3826 = vand.u32 %v3206, 4294901760
            %v3827 = vsub.f32 %v3206, %v3826
            %3828 = vmatpush1.msra.mxu0 %v3827
            %v3829 = vand.u32 %v3209, 4294901760
            %v3830 = vsub.f32 %v3209, %v3829
            %3831 = vmatprep.subr.mxu0 %v3830
            %v3832 = vand.u32 %v3208, 4294901760
            %v3833 = vsub.f32 %v3208, %v3832
            %3834 = vmatpush1.msra.mxu0 %v3833
            %v3835 = vand.u32 %v3211, 4294901760
            %v3836 = vsub.f32 %v3211, %v3835
            %3837 = vmatprep.subr.mxu0 %v3836
            %v3838 = vand.u32 %v3210, 4294901760
            %v3839 = vsub.f32 %v3210, %v3838
            %3840 = vmatpush1.msra.mxu0 %v3839
            %v3841 = vand.u32 %v3213, 4294901760
            %v3842 = vsub.f32 %v3213, %v3841
            %3843 = vmatprep.subr.mxu0 %v3842
            %v3844 = vand.u32 %v3212, 4294901760
            %v3845 = vsub.f32 %v3212, %v3844
            %3846 = vmatpush1.msra.mxu0 %v3845
            %v3847 = vand.u32 %v3215, 4294901760
            %v3848 = vsub.f32 %v3215, %v3847
            %3849 = vmatprep.subr.mxu0 %v3848
            %v3850 = vand.u32 %v3214, 4294901760
            %v3851 = vsub.f32 %v3214, %v3850
            %3852 = vmatpush1.msra.mxu0 %v3851
            %v3853 = vand.u32 %v3217, 4294901760
            %v3854 = vsub.f32 %v3217, %v3853
            %3855 = vmatprep.subr.mxu0 %v3854
            %v3856 = vand.u32 %v3216, 4294901760
            %v3857 = vsub.f32 %v3216, %v3856
            %3858 = vmatpush1.msra.mxu0 %v3857
            %v3859 = vand.u32 %v3219, 4294901760
            %v3860 = vsub.f32 %v3219, %v3859
            %3861 = vmatprep.subr.mxu0 %v3860
            %v3862 = vand.u32 %v3218, 4294901760
            %v3863 = vsub.f32 %v3218, %v3862
            %3864 = vmatpush1.msra.mxu0 %v3863
            %v3865 = vand.u32 %v3221, 4294901760
            %v3866 = vsub.f32 %v3221, %v3865
            %3867 = vmatprep.subr.mxu0 %v3866
            %v3868 = vand.u32 %v3220, 4294901760
            %v3869 = vsub.f32 %v3220, %v3868
            %3870 = vmatpush1.msra.mxu0 %v3869
            %v3871 = vand.u32 %v3223, 4294901760
            %v3872 = vsub.f32 %v3223, %v3871
            %3873 = vmatprep.subr.mxu0 %v3872
            %v3874 = vand.u32 %v3222, 4294901760
            %v3875 = vsub.f32 %v3222, %v3874
            %3876 = vmatpush1.msra.mxu0 %v3875
            %v3877 = vand.u32 %v3225, 4294901760
            %v3878 = vsub.f32 %v3225, %v3877
            %3879 = vmatprep.subr.mxu0 %v3878
            %v3880 = vand.u32 %v3224, 4294901760
            %v3881 = vsub.f32 %v3224, %v3880
            %3882 = vmatpush1.msra.mxu0 %v3881
            %v3883 = vand.u32 %v3227, 4294901760
            %v3884 = vsub.f32 %v3227, %v3883
            %3885 = vmatprep.subr.mxu0 %v3884
            %v3886 = vand.u32 %v3226, 4294901760
            %v3887 = vsub.f32 %v3226, %v3886
            %3888 = vmatpush1.msra.mxu0 %v3887
            %v3889 = vand.u32 %v3229, 4294901760
            %v3890 = vsub.f32 %v3229, %v3889
            %3891 = vmatprep.subr.mxu0 %v3890
            %v3892 = vand.u32 %v3228, 4294901760
            %v3893 = vsub.f32 %v3228, %v3892
            %3894 = vmatpush1.msra.mxu0 %v3893
            %v3895 = vand.u32 %v3231, 4294901760
            %v3896 = vsub.f32 %v3231, %v3895
            %3897 = vmatprep.subr.mxu0 %v3896
            %v3898 = vand.u32 %v3230, 4294901760
            %v3899 = vsub.f32 %v3230, %v3898
            %3900 = vmatpush1.msra.mxu0 %v3899
            %v3901 = vand.u32 %v3233, 4294901760
            %v3902 = vsub.f32 %v3233, %v3901
            %3903 = vmatprep.subr.mxu0 %v3902
            %v3904 = vand.u32 %v3232, 4294901760
            %v3905 = vsub.f32 %v3232, %v3904
            %3906 = vmatpush1.msra.mxu0 %v3905
            %v3907 = vand.u32 %v3235, 4294901760
            %v3908 = vsub.f32 %v3235, %v3907
            %3909 = vmatprep.subr.mxu0 %v3908
            %v3910 = vand.u32 %v3234, 4294901760
            %v3911 = vsub.f32 %v3234, %v3910
            %3912 = vmatpush1.msra.mxu0 %v3911
            %v3913 = vand.u32 %v3237, 4294901760
            %v3914 = vsub.f32 %v3237, %v3913
            %3915 = vmatprep.subr.mxu0 %v3914
            %v3916 = vand.u32 %v3236, 4294901760
            %v3917 = vsub.f32 %v3236, %v3916
            %3918 = vmatpush1.msra.mxu0 %v3917
            %v3919 = vand.u32 %v3239, 4294901760
            %v3920 = vsub.f32 %v3239, %v3919
            %3921 = vmatprep.subr.mxu0 %v3920
            %v3922 = vand.u32 %v3238, 4294901760
            %v3923 = vsub.f32 %v3238, %v3922
            %3924 = vmatpush1.msra.mxu0 %v3923
            %v3925 = vand.u32 %v3241, 4294901760
            %v3926 = vsub.f32 %v3241, %v3925
            %3927 = vmatprep.subr.mxu0 %v3926
            %v3928 = vand.u32 %v3240, 4294901760
            %v3929 = vsub.f32 %v3240, %v3928
            %3930 = vmatpush1.msra.mxu0 %v3929
            %v3931 = vand.u32 %v3243, 4294901760
            %v3932 = vsub.f32 %v3243, %v3931
            %3933 = vmatprep.subr.mxu0 %v3932
            %v3934 = vand.u32 %v3242, 4294901760
            %v3935 = vsub.f32 %v3242, %v3934
            %3936 = vmatpush1.msra.mxu0 %v3935
            %v3937 = vand.u32 %v3245, 4294901760
            %v3938 = vsub.f32 %v3245, %v3937
            %3939 = vmatprep.subr.mxu0 %v3938
            %v3940 = vand.u32 %v3244, 4294901760
            %v3941 = vsub.f32 %v3244, %v3940
            %3942 = vmatpush1.msra.mxu0 %v3941
            %v3943 = vand.u32 %v3247, 4294901760
            %v3944 = vsub.f32 %v3247, %v3943
            %3945 = vmatprep.subr.mxu0 %v3944
            %v3946 = vand.u32 %v3246, 4294901760
            %v3947 = vsub.f32 %v3246, %v3946
            %3948 = vmatpush1.msra.mxu0 %v3947
            %v3949 = vand.u32 %v3249, 4294901760
            %v3950 = vsub.f32 %v3249, %v3949
            %3951 = vmatprep.subr.mxu0 %v3950
            %v3952 = vand.u32 %v3248, 4294901760
            %v3953 = vsub.f32 %v3248, %v3952
            %3954 = vmatpush1.msra.mxu0 %v3953
            %v3955 = vand.u32 %v3251, 4294901760
            %v3956 = vsub.f32 %v3251, %v3955
            %3957 = vmatprep.subr.mxu0 %v3956
            %v3958 = vand.u32 %v3250, 4294901760
            %v3959 = vsub.f32 %v3250, %v3958
            %3960 = vmatpush1.msra.mxu0 %v3959
            %v3961 = vand.u32 %v3253, 4294901760
            %v3962 = vsub.f32 %v3253, %v3961
            %3963 = vmatprep.subr.mxu0 %v3962
            %v3964 = vand.u32 %v3252, 4294901760
            %v3965 = vsub.f32 %v3252, %v3964
            %3966 = vmatpush1.msra.mxu0 %v3965
            %v3967 = vand.u32 %v3255, 4294901760
            %v3968 = vsub.f32 %v3255, %v3967
            %3969 = vmatprep.subr.mxu0 %v3968
            %v3970 = vand.u32 %v3254, 4294901760
            %v3971 = vsub.f32 %v3254, %v3970
            %3972 = vmatpush1.msra.mxu0 %v3971
            %v3973 = vand.u32 %v3257, 4294901760
            %v3974 = vsub.f32 %v3257, %v3973
            %3975 = vmatprep.subr.mxu0 %v3974
            %v3976 = vand.u32 %v3256, 4294901760
            %v3977 = vsub.f32 %v3256, %v3976
            %3978 = vmatpush1.msra.mxu0 %v3977
            %v3979 = vand.u32 %v3259, 4294901760
            %v3980 = vsub.f32 %v3259, %v3979
            %3981 = vmatprep.subr.mxu0 %v3980
            %v3982 = vand.u32 %v3258, 4294901760
            %v3983 = vsub.f32 %v3258, %v3982
            %3984 = vmatpush1.msra.mxu0 %v3983
            %v3985 = vand.u32 %v3261, 4294901760
            %v3986 = vsub.f32 %v3261, %v3985
            %3987 = vmatprep.subr.mxu0 %v3986
            %v3988 = vand.u32 %v3260, 4294901760
            %v3989 = vsub.f32 %v3260, %v3988
            %3990 = vmatpush1.msra.mxu0 %v3989
            %v3991 = vand.u32 %v3263, 4294901760
            %v3992 = vsub.f32 %v3263, %v3991
            %3993 = vmatprep.subr.mxu0 %v3992
            %v3994 = vand.u32 %v3262, 4294901760
            %v3995 = vsub.f32 %v3262, %v3994
            %3996 = vmatpush1.msra.mxu0 %v3995
            %v3997 = vand.u32 %v3265, 4294901760
            %v3998 = vsub.f32 %v3265, %v3997
            %3999 = vmatprep.subr.mxu0 %v3998
            %v4000 = vand.u32 %v3264, 4294901760
            %v4001 = vsub.f32 %v3264, %v4000
            %4002 = vmatpush1.msra.mxu0 %v4001
            %v4003 = vand.u32 %v3271, 4294901760
            %v4004 = vsub.f32 %v3271, %v4003
            %4005 = vmatprep.mubr.f32.mxu0 %v4004
            %v4006 = vand.u32 %v3269, 4294901760
            %v4007 = vsub.f32 %v3269, %v4006
            %4008 = vmatmul.mubr.f32.gmra.mrb[0].mxu0 %v4007
            %v4009 = vpop.f32.mrb[0].mxu0
            %v4010 = vadd.f32 %v3807, %v4009
            %v4011 = vpop.f32.mrb[0].mxu0
            %v4012 = vadd.f32 %v3809, %v4011
            %4013 = vdwg.mxu0
            %v4014 = vand.u32 %v3203, 4294901760
            %4015 = vmatprep.subr.mxu0 %v4014
            %v4016 = vand.u32 %v3202, 4294901760
            %4017 = vmatpush1.msra.mxu0 %v4016
            %v4018 = vand.u32 %v3205, 4294901760
            %4019 = vmatprep.subr.mxu0 %v4018
            %v4020 = vand.u32 %v3204, 4294901760
            %4021 = vmatpush1.msra.mxu0 %v4020
            %v4022 = vand.u32 %v3207, 4294901760
            %4023 = vmatprep.subr.mxu0 %v4022
            %v4024 = vand.u32 %v3206, 4294901760
            %4025 = vmatpush1.msra.mxu0 %v4024
            %v4026 = vand.u32 %v3209, 4294901760
            %4027 = vmatprep.subr.mxu0 %v4026
            %v4028 = vand.u32 %v3208, 4294901760
            %4029 = vmatpush1.msra.mxu0 %v4028
            %v4030 = vand.u32 %v3211, 4294901760
            %4031 = vmatprep.subr.mxu0 %v4030
            %v4032 = vand.u32 %v3210, 4294901760
            %4033 = vmatpush1.msra.mxu0 %v4032
            %v4034 = vand.u32 %v3213, 4294901760
            %4035 = vmatprep.subr.mxu0 %v4034
            %v4036 = vand.u32 %v3212, 4294901760
            %4037 = vmatpush1.msra.mxu0 %v4036
            %v4038 = vand.u32 %v3215, 4294901760
            %4039 = vmatprep.subr.mxu0 %v4038
            %v4040 = vand.u32 %v3214, 4294901760
            %4041 = vmatpush1.msra.mxu0 %v4040
            %v4042 = vand.u32 %v3217, 4294901760
            %4043 = vmatprep.subr.mxu0 %v4042
            %v4044 = vand.u32 %v3216, 4294901760
            %4045 = vmatpush1.msra.mxu0 %v4044
            %v4046 = vand.u32 %v3219, 4294901760
            %4047 = vmatprep.subr.mxu0 %v4046
            %v4048 = vand.u32 %v3218, 4294901760
            %4049 = vmatpush1.msra.mxu0 %v4048
            %v4050 = vand.u32 %v3221, 4294901760
            %4051 = vmatprep.subr.mxu0 %v4050
            %v4052 = vand.u32 %v3220, 4294901760
            %4053 = vmatpush1.msra.mxu0 %v4052
            %v4054 = vand.u32 %v3223, 4294901760
            %4055 = vmatprep.subr.mxu0 %v4054
            %v4056 = vand.u32 %v3222, 4294901760
            %4057 = vmatpush1.msra.mxu0 %v4056
            %v4058 = vand.u32 %v3225, 4294901760
            %4059 = vmatprep.subr.mxu0 %v4058
            %v4060 = vand.u32 %v3224, 4294901760
            %4061 = vmatpush1.msra.mxu0 %v4060
            %v4062 = vand.u32 %v3227, 4294901760
            %4063 = vmatprep.subr.mxu0 %v4062
            %v4064 = vand.u32 %v3226, 4294901760
            %4065 = vmatpush1.msra.mxu0 %v4064
            %v4066 = vand.u32 %v3229, 4294901760
            %4067 = vmatprep.subr.mxu0 %v4066
            %v4068 = vand.u32 %v3228, 4294901760
            %4069 = vmatpush1.msra.mxu0 %v4068
            %v4070 = vand.u32 %v3231, 4294901760
            %4071 = vmatprep.subr.mxu0 %v4070
            %v4072 = vand.u32 %v3230, 4294901760
            %4073 = vmatpush1.msra.mxu0 %v4072
            %v4074 = vand.u32 %v3233, 4294901760
            %4075 = vmatprep.subr.mxu0 %v4074
            %v4076 = vand.u32 %v3232, 4294901760
            %4077 = vmatpush1.msra.mxu0 %v4076
            %v4078 = vand.u32 %v3235, 4294901760
            %4079 = vmatprep.subr.mxu0 %v4078
            %v4080 = vand.u32 %v3234, 4294901760
            %4081 = vmatpush1.msra.mxu0 %v4080
            %v4082 = vand.u32 %v3237, 4294901760
            %4083 = vmatprep.subr.mxu0 %v4082
            %v4084 = vand.u32 %v3236, 4294901760
            %4085 = vmatpush1.msra.mxu0 %v4084
            %v4086 = vand.u32 %v3239, 4294901760
            %4087 = vmatprep.subr.mxu0 %v4086
            %v4088 = vand.u32 %v3238, 4294901760
            %4089 = vmatpush1.msra.mxu0 %v4088
            %v4090 = vand.u32 %v3241, 4294901760
            %4091 = vmatprep.subr.mxu0 %v4090
            %v4092 = vand.u32 %v3240, 4294901760
            %4093 = vmatpush1.msra.mxu0 %v4092
            %v4094 = vand.u32 %v3243, 4294901760
            %4095 = vmatprep.subr.mxu0 %v4094
            %v4096 = vand.u32 %v3242, 4294901760
            %4097 = vmatpush1.msra.mxu0 %v4096
            %v4098 = vand.u32 %v3245, 4294901760
            %4099 = vmatprep.subr.mxu0 %v4098
            %v4100 = vand.u32 %v3244, 4294901760
            %4101 = vmatpush1.msra.mxu0 %v4100
            %v4102 = vand.u32 %v3247, 4294901760
            %4103 = vmatprep.subr.mxu0 %v4102
            %v4104 = vand.u32 %v3246, 4294901760
            %4105 = vmatpush1.msra.mxu0 %v4104
            %v4106 = vand.u32 %v3249, 4294901760
            %4107 = vmatprep.subr.mxu0 %v4106
            %v4108 = vand.u32 %v3248, 4294901760
            %4109 = vmatpush1.msra.mxu0 %v4108
            %v4110 = vand.u32 %v3251, 4294901760
            %4111 = vmatprep.subr.mxu0 %v4110
            %v4112 = vand.u32 %v3250, 4294901760
            %4113 = vmatpush1.msra.mxu0 %v4112
            %v4114 = vand.u32 %v3253, 4294901760
            %4115 = vmatprep.subr.mxu0 %v4114
            %v4116 = vand.u32 %v3252, 4294901760
            %4117 = vmatpush1.msra.mxu0 %v4116
            %v4118 = vand.u32 %v3255, 4294901760
            %4119 = vmatprep.subr.mxu0 %v4118
            %v4120 = vand.u32 %v3254, 4294901760
            %4121 = vmatpush1.msra.mxu0 %v4120
            %v4122 = vand.u32 %v3257, 4294901760
            %4123 = vmatprep.subr.mxu0 %v4122
            %v4124 = vand.u32 %v3256, 4294901760
            %4125 = vmatpush1.msra.mxu0 %v4124
            %v4126 = vand.u32 %v3259, 4294901760
            %4127 = vmatprep.subr.mxu0 %v4126
            %v4128 = vand.u32 %v3258, 4294901760
            %4129 = vmatpush1.msra.mxu0 %v4128
            %v4130 = vand.u32 %v3261, 4294901760
            %4131 = vmatprep.subr.mxu0 %v4130
            %v4132 = vand.u32 %v3260, 4294901760
            %4133 = vmatpush1.msra.mxu0 %v4132
            %v4134 = vand.u32 %v3263, 4294901760
            %4135 = vmatprep.subr.mxu0 %v4134
            %v4136 = vand.u32 %v3262, 4294901760
            %4137 = vmatpush1.msra.mxu0 %v4136
            %v4138 = vand.u32 %v3265, 4294901760
            %4139 = vmatprep.subr.mxu0 %v4138
            %v4140 = vand.u32 %v3264, 4294901760
            %4141 = vmatpush1.msra.mxu0 %v4140
            %v4142 = vand.u32 %v3271, 4294901760
            %v4143 = vsub.f32 %v3271, %v4142
            %v4144 = vand.u32 %v4143, 4294901760
            %4145 = vmatprep.mubr.f32.mxu0 %v4144
            %v4146 = vand.u32 %v3269, 4294901760
            %v4147 = vsub.f32 %v3269, %v4146
            %v4148 = vand.u32 %v4147, 4294901760
            %4149 = vmatmul.mubr.f32.gmra.mrb[0].mxu0 %v4148
            %v4150 = vpop.f32.mrb[0].mxu0
            %v4151 = vadd.f32 %v4010, %v4150
            %v4152 = vpop.f32.mrb[0].mxu0
            %v4153 = vadd.f32 %v4012, %v4152
            %4154 = vdwg.mxu0
            %v4155 = vand.u32 %v3203, 4294901760
            %v4156 = vsub.f32 %v3203, %v4155
            %v4157 = vand.u32 %v4156, 4294901760
            %4158 = vmatprep.subr.mxu0 %v4157
            %v4159 = vand.u32 %v3202, 4294901760
            %v4160 = vsub.f32 %v3202, %v4159
            %v4161 = vand.u32 %v4160, 4294901760
            %4162 = vmatpush1.msra.mxu0 %v4161
            %v4163 = vand.u32 %v3205, 4294901760
            %v4164 = vsub.f32 %v3205, %v4163
            %v4165 = vand.u32 %v4164, 4294901760
            %4166 = vmatprep.subr.mxu0 %v4165
            %v4167 = vand.u32 %v3204, 4294901760
            %v4168 = vsub.f32 %v3204, %v4167
            %v4169 = vand.u32 %v4168, 4294901760
            %4170 = vmatpush1.msra.mxu0 %v4169
            %v4171 = vand.u32 %v3207, 4294901760
            %v4172 = vsub.f32 %v3207, %v4171
            %v4173 = vand.u32 %v4172, 4294901760
            %4174 = vmatprep.subr.mxu0 %v4173
            %v4175 = vand.u32 %v3206, 4294901760
            %v4176 = vsub.f32 %v3206, %v4175
            %v4177 = vand.u32 %v4176, 4294901760
            %4178 = vmatpush1.msra.mxu0 %v4177
            %v4179 = vand.u32 %v3209, 4294901760
            %v4180 = vsub.f32 %v3209, %v4179
            %v4181 = vand.u32 %v4180, 4294901760
            %4182 = vmatprep.subr.mxu0 %v4181
            %v4183 = vand.u32 %v3208, 4294901760
            %v4184 = vsub.f32 %v3208, %v4183
            %v4185 = vand.u32 %v4184, 4294901760
            %4186 = vmatpush1.msra.mxu0 %v4185
            %v4187 = vand.u32 %v3211, 4294901760
            %v4188 = vsub.f32 %v3211, %v4187
            %v4189 = vand.u32 %v4188, 4294901760
            %4190 = vmatprep.subr.mxu0 %v4189
            %v4191 = vand.u32 %v3210, 4294901760
            %v4192 = vsub.f32 %v3210, %v4191
            %v4193 = vand.u32 %v4192, 4294901760
            %4194 = vmatpush1.msra.mxu0 %v4193
            %v4195 = vand.u32 %v3213, 4294901760
            %v4196 = vsub.f32 %v3213, %v4195
            %v4197 = vand.u32 %v4196, 4294901760
            %4198 = vmatprep.subr.mxu0 %v4197
            %v4199 = vand.u32 %v3212, 4294901760
            %v4200 = vsub.f32 %v3212, %v4199
            %v4201 = vand.u32 %v4200, 4294901760
            %4202 = vmatpush1.msra.mxu0 %v4201
            %v4203 = vand.u32 %v3215, 4294901760
            %v4204 = vsub.f32 %v3215, %v4203
            %v4205 = vand.u32 %v4204, 4294901760
            %4206 = vmatprep.subr.mxu0 %v4205
            %v4207 = vand.u32 %v3214, 4294901760
            %v4208 = vsub.f32 %v3214, %v4207
            %v4209 = vand.u32 %v4208, 4294901760
            %4210 = vmatpush1.msra.mxu0 %v4209
            %v4211 = vand.u32 %v3217, 4294901760
            %v4212 = vsub.f32 %v3217, %v4211
            %v4213 = vand.u32 %v4212, 4294901760
            %4214 = vmatprep.subr.mxu0 %v4213
            %v4215 = vand.u32 %v3216, 4294901760
            %v4216 = vsub.f32 %v3216, %v4215
            %v4217 = vand.u32 %v4216, 4294901760
            %4218 = vmatpush1.msra.mxu0 %v4217
            %v4219 = vand.u32 %v3219, 4294901760
            %v4220 = vsub.f32 %v3219, %v4219
            %v4221 = vand.u32 %v4220, 4294901760
            %4222 = vmatprep.subr.mxu0 %v4221
            %v4223 = vand.u32 %v3218, 4294901760
            %v4224 = vsub.f32 %v3218, %v4223
            %v4225 = vand.u32 %v4224, 4294901760
            %4226 = vmatpush1.msra.mxu0 %v4225
            %v4227 = vand.u32 %v3221, 4294901760
            %v4228 = vsub.f32 %v3221, %v4227
            %v4229 = vand.u32 %v4228, 4294901760
            %4230 = vmatprep.subr.mxu0 %v4229
            %v4231 = vand.u32 %v3220, 4294901760
            %v4232 = vsub.f32 %v3220, %v4231
            %v4233 = vand.u32 %v4232, 4294901760
            %4234 = vmatpush1.msra.mxu0 %v4233
            %v4235 = vand.u32 %v3223, 4294901760
            %v4236 = vsub.f32 %v3223, %v4235
            %v4237 = vand.u32 %v4236, 4294901760
            %4238 = vmatprep.subr.mxu0 %v4237
            %v4239 = vand.u32 %v3222, 4294901760
            %v4240 = vsub.f32 %v3222, %v4239
            %v4241 = vand.u32 %v4240, 4294901760
            %4242 = vmatpush1.msra.mxu0 %v4241
            %v4243 = vand.u32 %v3225, 4294901760
            %v4244 = vsub.f32 %v3225, %v4243
            %v4245 = vand.u32 %v4244, 4294901760
            %4246 = vmatprep.subr.mxu0 %v4245
            %v4247 = vand.u32 %v3224, 4294901760
            %v4248 = vsub.f32 %v3224, %v4247
            %v4249 = vand.u32 %v4248, 4294901760
            %4250 = vmatpush1.msra.mxu0 %v4249
            %v4251 = vand.u32 %v3227, 4294901760
            %v4252 = vsub.f32 %v3227, %v4251
            %v4253 = vand.u32 %v4252, 4294901760
            %4254 = vmatprep.subr.mxu0 %v4253
            %v4255 = vand.u32 %v3226, 4294901760
            %v4256 = vsub.f32 %v3226, %v4255
            %v4257 = vand.u32 %v4256, 4294901760
            %4258 = vmatpush1.msra.mxu0 %v4257
            %v4259 = vand.u32 %v3229, 4294901760
            %v4260 = vsub.f32 %v3229, %v4259
            %v4261 = vand.u32 %v4260, 4294901760
            %4262 = vmatprep.subr.mxu0 %v4261
            %v4263 = vand.u32 %v3228, 4294901760
            %v4264 = vsub.f32 %v3228, %v4263
            %v4265 = vand.u32 %v4264, 4294901760
            %4266 = vmatpush1.msra.mxu0 %v4265
            %v4267 = vand.u32 %v3231, 4294901760
            %v4268 = vsub.f32 %v3231, %v4267
            %v4269 = vand.u32 %v4268, 4294901760
            %4270 = vmatprep.subr.mxu0 %v4269
            %v4271 = vand.u32 %v3230, 4294901760
            %v4272 = vsub.f32 %v3230, %v4271
            %v4273 = vand.u32 %v4272, 4294901760
            %4274 = vmatpush1.msra.mxu0 %v4273
            %v4275 = vand.u32 %v3233, 4294901760
            %v4276 = vsub.f32 %v3233, %v4275
            %v4277 = vand.u32 %v4276, 4294901760
            %4278 = vmatprep.subr.mxu0 %v4277
            %v4279 = vand.u32 %v3232, 4294901760
            %v4280 = vsub.f32 %v3232, %v4279
            %v4281 = vand.u32 %v4280, 4294901760
            %4282 = vmatpush1.msra.mxu0 %v4281
            %v4283 = vand.u32 %v3235, 4294901760
            %v4284 = vsub.f32 %v3235, %v4283
            %v4285 = vand.u32 %v4284, 4294901760
            %4286 = vmatprep.subr.mxu0 %v4285
            %v4287 = vand.u32 %v3234, 4294901760
            %v4288 = vsub.f32 %v3234, %v4287
            %v4289 = vand.u32 %v4288, 4294901760
            %4290 = vmatpush1.msra.mxu0 %v4289
            %v4291 = vand.u32 %v3237, 4294901760
            %v4292 = vsub.f32 %v3237, %v4291
            %v4293 = vand.u32 %v4292, 4294901760
            %4294 = vmatprep.subr.mxu0 %v4293
            %v4295 = vand.u32 %v3236, 4294901760
            %v4296 = vsub.f32 %v3236, %v4295
            %v4297 = vand.u32 %v4296, 4294901760
            %4298 = vmatpush1.msra.mxu0 %v4297
            %v4299 = vand.u32 %v3239, 4294901760
            %v4300 = vsub.f32 %v3239, %v4299
            %v4301 = vand.u32 %v4300, 4294901760
            %4302 = vmatprep.subr.mxu0 %v4301
            %v4303 = vand.u32 %v3238, 4294901760
            %v4304 = vsub.f32 %v3238, %v4303
            %v4305 = vand.u32 %v4304, 4294901760
            %4306 = vmatpush1.msra.mxu0 %v4305
            %v4307 = vand.u32 %v3241, 4294901760
            %v4308 = vsub.f32 %v3241, %v4307
            %v4309 = vand.u32 %v4308, 4294901760
            %4310 = vmatprep.subr.mxu0 %v4309
            %v4311 = vand.u32 %v3240, 4294901760
            %v4312 = vsub.f32 %v3240, %v4311
            %v4313 = vand.u32 %v4312, 4294901760
            %4314 = vmatpush1.msra.mxu0 %v4313
            %v4315 = vand.u32 %v3243, 4294901760
            %v4316 = vsub.f32 %v3243, %v4315
            %v4317 = vand.u32 %v4316, 4294901760
            %4318 = vmatprep.subr.mxu0 %v4317
            %v4319 = vand.u32 %v3242, 4294901760
            %v4320 = vsub.f32 %v3242, %v4319
            %v4321 = vand.u32 %v4320, 4294901760
            %4322 = vmatpush1.msra.mxu0 %v4321
            %v4323 = vand.u32 %v3245, 4294901760
            %v4324 = vsub.f32 %v3245, %v4323
            %v4325 = vand.u32 %v4324, 4294901760
            %4326 = vmatprep.subr.mxu0 %v4325
            %v4327 = vand.u32 %v3244, 4294901760
            %v4328 = vsub.f32 %v3244, %v4327
            %v4329 = vand.u32 %v4328, 4294901760
            %4330 = vmatpush1.msra.mxu0 %v4329
            %v4331 = vand.u32 %v3247, 4294901760
            %v4332 = vsub.f32 %v3247, %v4331
            %v4333 = vand.u32 %v4332, 4294901760
            %4334 = vmatprep.subr.mxu0 %v4333
            %v4335 = vand.u32 %v3246, 4294901760
            %v4336 = vsub.f32 %v3246, %v4335
            %v4337 = vand.u32 %v4336, 4294901760
            %4338 = vmatpush1.msra.mxu0 %v4337
            %v4339 = vand.u32 %v3249, 4294901760
            %v4340 = vsub.f32 %v3249, %v4339
            %v4341 = vand.u32 %v4340, 4294901760
            %4342 = vmatprep.subr.mxu0 %v4341
            %v4343 = vand.u32 %v3248, 4294901760
            %v4344 = vsub.f32 %v3248, %v4343
            %v4345 = vand.u32 %v4344, 4294901760
            %4346 = vmatpush1.msra.mxu0 %v4345
            %v4347 = vand.u32 %v3251, 4294901760
            %v4348 = vsub.f32 %v3251, %v4347
            %v4349 = vand.u32 %v4348, 4294901760
            %4350 = vmatprep.subr.mxu0 %v4349
            %v4351 = vand.u32 %v3250, 4294901760
            %v4352 = vsub.f32 %v3250, %v4351
            %v4353 = vand.u32 %v4352, 4294901760
            %4354 = vmatpush1.msra.mxu0 %v4353
            %v4355 = vand.u32 %v3253, 4294901760
            %v4356 = vsub.f32 %v3253, %v4355
            %v4357 = vand.u32 %v4356, 4294901760
            %4358 = vmatprep.subr.mxu0 %v4357
            %v4359 = vand.u32 %v3252, 4294901760
            %v4360 = vsub.f32 %v3252, %v4359
            %v4361 = vand.u32 %v4360, 4294901760
            %4362 = vmatpush1.msra.mxu0 %v4361
            %v4363 = vand.u32 %v3255, 4294901760
            %v4364 = vsub.f32 %v3255, %v4363
            %v4365 = vand.u32 %v4364, 4294901760
            %4366 = vmatprep.subr.mxu0 %v4365
            %v4367 = vand.u32 %v3254, 4294901760
            %v4368 = vsub.f32 %v3254, %v4367
            %v4369 = vand.u32 %v4368, 4294901760
            %4370 = vmatpush1.msra.mxu0 %v4369
            %v4371 = vand.u32 %v3257, 4294901760
            %v4372 = vsub.f32 %v3257, %v4371
            %v4373 = vand.u32 %v4372, 4294901760
            %4374 = vmatprep.subr.mxu0 %v4373
            %v4375 = vand.u32 %v3256, 4294901760
            %v4376 = vsub.f32 %v3256, %v4375
            %v4377 = vand.u32 %v4376, 4294901760
            %4378 = vmatpush1.msra.mxu0 %v4377
            %v4379 = vand.u32 %v3259, 4294901760
            %v4380 = vsub.f32 %v3259, %v4379
            %v4381 = vand.u32 %v4380, 4294901760
            %4382 = vmatprep.subr.mxu0 %v4381
            %v4383 = vand.u32 %v3258, 4294901760
            %v4384 = vsub.f32 %v3258, %v4383
            %v4385 = vand.u32 %v4384, 4294901760
            %4386 = vmatpush1.msra.mxu0 %v4385
            %v4387 = vand.u32 %v3261, 4294901760
            %v4388 = vsub.f32 %v3261, %v4387
            %v4389 = vand.u32 %v4388, 4294901760
            %4390 = vmatprep.subr.mxu0 %v4389
            %v4391 = vand.u32 %v3260, 4294901760
            %v4392 = vsub.f32 %v3260, %v4391
            %v4393 = vand.u32 %v4392, 4294901760
            %4394 = vmatpush1.msra.mxu0 %v4393
            %v4395 = vand.u32 %v3263, 4294901760
            %v4396 = vsub.f32 %v3263, %v4395
            %v4397 = vand.u32 %v4396, 4294901760
            %4398 = vmatprep.subr.mxu0 %v4397
            %v4399 = vand.u32 %v3262, 4294901760
            %v4400 = vsub.f32 %v3262, %v4399
            %v4401 = vand.u32 %v4400, 4294901760
            %4402 = vmatpush1.msra.mxu0 %v4401
            %v4403 = vand.u32 %v3265, 4294901760
            %v4404 = vsub.f32 %v3265, %v4403
            %v4405 = vand.u32 %v4404, 4294901760
            %4406 = vmatprep.subr.mxu0 %v4405
            %v4407 = vand.u32 %v3264, 4294901760
            %v4408 = vsub.f32 %v3264, %v4407
            %v4409 = vand.u32 %v4408, 4294901760
            %4410 = vmatpush1.msra.mxu0 %v4409
            %v4411 = vand.u32 %v3271, 4294901760
            %4412 = vmatprep.mubr.f32.mxu0 %v4411
            %v4413 = vand.u32 %v3269, 4294901760
            %4414 = vmatmul.mubr.f32.gmra.mrb[0].mxu0 %v4413
            %v4415 = vpop.f32.mrb[0].mxu0
            %v4416 = vadd.f32 %v4151, %v4415
            %v4417 = vpop.f32.mrb[0].mxu0
            %v4418 = vadd.f32 %v4153, %v4417
            %4419 = vdwg.mxu0
            %v4420 = vand.u32 %v3203, 4294901760
            %4421 = vmatprep.subr.mxu0 %v4420
            %v4422 = vand.u32 %v3202, 4294901760
            %4423 = vmatpush1.msra.mxu0 %v4422
            %v4424 = vand.u32 %v3205, 4294901760
            %4425 = vmatprep.subr.mxu0 %v4424
            %v4426 = vand.u32 %v3204, 4294901760
            %4427 = vmatpush1.msra.mxu0 %v4426
            %v4428 = vand.u32 %v3207, 4294901760
            %4429 = vmatprep.subr.mxu0 %v4428
            %v4430 = vand.u32 %v3206, 4294901760
            %4431 = vmatpush1.msra.mxu0 %v4430
            %v4432 = vand.u32 %v3209, 4294901760
            %4433 = vmatprep.subr.mxu0 %v4432
            %v4434 = vand.u32 %v3208, 4294901760
            %4435 = vmatpush1.msra.mxu0 %v4434
            %v4436 = vand.u32 %v3211, 4294901760
            %4437 = vmatprep.subr.mxu0 %v4436
            %v4438 = vand.u32 %v3210, 4294901760
            %4439 = vmatpush1.msra.mxu0 %v4438
            %v4440 = vand.u32 %v3213, 4294901760
            %4441 = vmatprep.subr.mxu0 %v4440
            %v4442 = vand.u32 %v3212, 4294901760
            %4443 = vmatpush1.msra.mxu0 %v4442
            %v4444 = vand.u32 %v3215, 4294901760
            %4445 = vmatprep.subr.mxu0 %v4444
            %v4446 = vand.u32 %v3214, 4294901760
            %4447 = vmatpush1.msra.mxu0 %v4446
            %v4448 = vand.u32 %v3217, 4294901760
            %4449 = vmatprep.subr.mxu0 %v4448
            %v4450 = vand.u32 %v3216, 4294901760
            %4451 = vmatpush1.msra.mxu0 %v4450
            %v4452 = vand.u32 %v3219, 4294901760
            %4453 = vmatprep.subr.mxu0 %v4452
            %v4454 = vand.u32 %v3218, 4294901760
            %4455 = vmatpush1.msra.mxu0 %v4454
            %v4456 = vand.u32 %v3221, 4294901760
            %4457 = vmatprep.subr.mxu0 %v4456
            %v4458 = vand.u32 %v3220, 4294901760
            %4459 = vmatpush1.msra.mxu0 %v4458
            %v4460 = vand.u32 %v3223, 4294901760
            %4461 = vmatprep.subr.mxu0 %v4460
            %v4462 = vand.u32 %v3222, 4294901760
            %4463 = vmatpush1.msra.mxu0 %v4462
            %v4464 = vand.u32 %v3225, 4294901760
            %4465 = vmatprep.subr.mxu0 %v4464
            %v4466 = vand.u32 %v3224, 4294901760
            %4467 = vmatpush1.msra.mxu0 %v4466
            %v4468 = vand.u32 %v3227, 4294901760
            %4469 = vmatprep.subr.mxu0 %v4468
            %v4470 = vand.u32 %v3226, 4294901760
            %4471 = vmatpush1.msra.mxu0 %v4470
            %v4472 = vand.u32 %v3229, 4294901760
            %4473 = vmatprep.subr.mxu0 %v4472
            %v4474 = vand.u32 %v3228, 4294901760
            %4475 = vmatpush1.msra.mxu0 %v4474
            %v4476 = vand.u32 %v3231, 4294901760
            %4477 = vmatprep.subr.mxu0 %v4476
            %v4478 = vand.u32 %v3230, 4294901760
            %4479 = vmatpush1.msra.mxu0 %v4478
            %v4480 = vand.u32 %v3233, 4294901760
            %4481 = vmatprep.subr.mxu0 %v4480
            %v4482 = vand.u32 %v3232, 4294901760
            %4483 = vmatpush1.msra.mxu0 %v4482
            %v4484 = vand.u32 %v3235, 4294901760
            %4485 = vmatprep.subr.mxu0 %v4484
            %v4486 = vand.u32 %v3234, 4294901760
            %4487 = vmatpush1.msra.mxu0 %v4486
            %v4488 = vand.u32 %v3237, 4294901760
            %4489 = vmatprep.subr.mxu0 %v4488
            %v4490 = vand.u32 %v3236, 4294901760
            %4491 = vmatpush1.msra.mxu0 %v4490
            %v4492 = vand.u32 %v3239, 4294901760
            %4493 = vmatprep.subr.mxu0 %v4492
            %v4494 = vand.u32 %v3238, 4294901760
            %4495 = vmatpush1.msra.mxu0 %v4494
            %v4496 = vand.u32 %v3241, 4294901760
            %4497 = vmatprep.subr.mxu0 %v4496
            %v4498 = vand.u32 %v3240, 4294901760
            %4499 = vmatpush1.msra.mxu0 %v4498
            %v4500 = vand.u32 %v3243, 4294901760
            %4501 = vmatprep.subr.mxu0 %v4500
            %v4502 = vand.u32 %v3242, 4294901760
            %4503 = vmatpush1.msra.mxu0 %v4502
            %v4504 = vand.u32 %v3245, 4294901760
            %4505 = vmatprep.subr.mxu0 %v4504
            %v4506 = vand.u32 %v3244, 4294901760
            %4507 = vmatpush1.msra.mxu0 %v4506
            %v4508 = vand.u32 %v3247, 4294901760
            %4509 = vmatprep.subr.mxu0 %v4508
            %v4510 = vand.u32 %v3246, 4294901760
            %4511 = vmatpush1.msra.mxu0 %v4510
            %v4512 = vand.u32 %v3249, 4294901760
            %4513 = vmatprep.subr.mxu0 %v4512
            %v4514 = vand.u32 %v3248, 4294901760
            %4515 = vmatpush1.msra.mxu0 %v4514
            %v4516 = vand.u32 %v3251, 4294901760
            %4517 = vmatprep.subr.mxu0 %v4516
            %v4518 = vand.u32 %v3250, 4294901760
            %4519 = vmatpush1.msra.mxu0 %v4518
            %v4520 = vand.u32 %v3253, 4294901760
            %4521 = vmatprep.subr.mxu0 %v4520
            %v4522 = vand.u32 %v3252, 4294901760
            %4523 = vmatpush1.msra.mxu0 %v4522
            %v4524 = vand.u32 %v3255, 4294901760
            %4525 = vmatprep.subr.mxu0 %v4524
            %v4526 = vand.u32 %v3254, 4294901760
            %4527 = vmatpush1.msra.mxu0 %v4526
            %v4528 = vand.u32 %v3257, 4294901760
            %4529 = vmatprep.subr.mxu0 %v4528
            %v4530 = vand.u32 %v3256, 4294901760
            %4531 = vmatpush1.msra.mxu0 %v4530
            %v4532 = vand.u32 %v3259, 4294901760
            %4533 = vmatprep.subr.mxu0 %v4532
            %v4534 = vand.u32 %v3258, 4294901760
            %4535 = vmatpush1.msra.mxu0 %v4534
            %v4536 = vand.u32 %v3261, 4294901760
            %4537 = vmatprep.subr.mxu0 %v4536
            %v4538 = vand.u32 %v3260, 4294901760
            %4539 = vmatpush1.msra.mxu0 %v4538
            %v4540 = vand.u32 %v3263, 4294901760
            %4541 = vmatprep.subr.mxu0 %v4540
            %v4542 = vand.u32 %v3262, 4294901760
            %4543 = vmatpush1.msra.mxu0 %v4542
            %v4544 = vand.u32 %v3265, 4294901760
            %4545 = vmatprep.subr.mxu0 %v4544
            %v4546 = vand.u32 %v3264, 4294901760
            %4547 = vmatpush1.msra.mxu0 %v4546
            %v4548 = vand.u32 %v3271, 4294901760
            %4549 = vmatprep.mubr.f32.mxu0 %v4548
            %v4550 = vand.u32 %v3269, 4294901760
            %4551 = vmatmul.mubr.f32.gmra.mrb[0].mxu0 %v4550
            %v4552 = vpop.f32.mrb[0].mxu0
            %v4553 = vadd.f32 %v4416, %v4552
            %v4554 = vpop.f32.mrb[0].mxu0
            %v4555 = vadd.f32 %v4418, %v4554
            %4556 = vdwg.mxu0
            %v4557 = vadd.f32 %v2478, %v4553
            %v4558 = vadd.f32 %v2479, %v4555
          $region56: #{tpu_custom_call.1} parent=50 // loop_footer
            %s2475 = sadd.s32 %s2473, 1
          $region57: #{tpu_custom_call.1} parent=50 // loop_footer_branch
            %2472 = sbr.rel target = $region53
          $region58: #{tpu_custom_call.1} parent=50 // loop_exit
            _
          %v4561 = vcombine.low %v2478, %v2479
          %4563 = vst [vmem:[%s226] sm:$0xff] %v4561
        $region51: #{tpu_custom_call.1} parent=27 // pred_fallthru
          _
        %p4564 = scmp.eq.s32.totalorder %s2419, 1
        %p4565 = pnand %p2407, %p4564
        %p4566 = pneg %p4565
        // Predicated region
        $region59: #{tpu_custom_call.1} parent=27 // pred_check
          _
        $region60: #{tpu_custom_call.1} parent=27 // pred_check_branch
          %4568 = sbr.rel (%p4565) target = $region62
        $region61: #{tpu_custom_call.1} parent=27 // pred_region
          %v4569 = vld [vmem:[%s201] ss:$2 sm:$0x3]
          %s4570 = scalar_lea.vmem %s201, 1 [#allocation9]
          %v4571 = vld [vmem:[%s4570] ss:$2 sm:$0x3]
          %v4572 = vfloor.f32 %v4569
          %v4573 = vfloor.f32 %v4571
          %v4574 = vsub.f32 %v4569, %v4572
          %v4575 = vsub.f32 %v4571, %v4573
          %v4576 = vcvt.f32.s32.to.zero.pseudo %v4572
          %v4577 = vcvt.f32.s32.to.zero.pseudo %v4573
          %v4578 = vadd.s32 %v4576, 1
          %v4579 = vadd.s32 %v4577, 1
          %v4580 = vsub.f32 1.0, %v4575
          %v4581 = vsub.f32 1.0, %v4574
          %v4582 = vmul.f32 %v4580, %v4581
          %v4583 = vmul.f32 %v4580, %v4574
          %v4584 = vmul.f32 %v4575, %v4581
          %v4585 = vmul.f32 %v4575, %v4574
          %vm4586 = vcmp.ge.s32.totalorder %v4576, 0
          %vm4587 = vcmp.lt.s32.totalorder %v4576, 16
          %vm4588 = vmand %vm4586, %vm4587
          %vm4589 = vcmp.ge.s32.totalorder %v4577, 0
          %vm4590 = vmand %vm4588, %vm4589
          %vm4591 = vcmp.lt.s32.totalorder %v4577, 16
          %vm4592 = vmand %vm4590, %vm4591
          %v4593 = vmul.u32 %v4577, 16
          %v4594 = vadd.s32 %v4593, %v4576
          %v4595 = vsel %vm4592, %v4582, 0.0
          %vm4596 = vcmp.ge.s32.totalorder %v4578, 0
          %vm4597 = vcmp.lt.s32.totalorder %v4578, 16
          %vm4598 = vmand %vm4596, %vm4597
          %vm4599 = vmand %vm4598, %vm4589
          %vm4600 = vmand %vm4599, %vm4591
          %v4601 = vadd.s32 %v4593, %v4578
          %v4602 = vsel %vm4600, %v4583, 0.0
          %vm4603 = vcmp.ge.s32.totalorder %v4579, 0
          %vm4604 = vmand %vm4588, %vm4603
          %vm4605 = vcmp.lt.s32.totalorder %v4579, 16
          %vm4606 = vmand %vm4604, %vm4605
          %v4607 = vmul.u32 %v4579, 16
          %v4608 = vadd.s32 %v4607, %v4576
          %v4609 = vsel %vm4606, %v4584, 0.0
          %vm4610 = vmand %vm4598, %vm4603
          %vm4611 = vmand %vm4610, %vm4605
          %v4612 = vadd.s32 %v4607, %v4578
          %v4613 = vsel %vm4611, %v4585, 0.0
          %s4614 = sld [smem:[#allocation4 + %s230]]
          %s4615 = sld [smem:[#allocation5 + %s230]]
          // While loop
          $region63: #{tpu_custom_call.1} parent=61 // loop_pre_header
            _
          $region64: #{tpu_custom_call.1} parent=61 // loop_header
            %s4617 = sphi %s4614, %s4619
            %p4618 = scmp.ge.s32.totalorder %s4617, %s4615
            %v4622 = vphi 0.0, %v6701
            %v4623 = vphi 0.0, %v6702
          $region65: #{tpu_custom_call.1} parent=61 // loop_header_branch
            %4621 = sbr.rel (%p4618) target = $region69
          $region66: #{tpu_custom_call.1} parent=61 // loop_body
            %s4624 = smul.u32 %s4617, 256
            %v4625 = vstv %s4624
            %v4626 = vsub.s32 %v4594, %v4625
            %v4627 = vlaneseq
            %v4628 = vshrl.u32 %v4627, 7
            %v4629 = vsub.s32 0, %v4628
            %v4630 = vrot.slane %v4626, %v4629
            %v4631 = vlaneseq
            %v4632 = vshrl.u32 %v4631, 7
            %v4633 = vsub.s32 1, %v4632
            %v4634 = vrot.slane %v4626, %v4633
            %vm4635 = vcmp.eq.s32.totalorder %v4630, %v232
            %vm4636 = vcmp.eq.s32.totalorder %v4634, %v232
            %vm4637 = vcmp.eq.s32.totalorder %v4630, %v233
            %vm4638 = vcmp.eq.s32.totalorder %v4634, %v233
            %vm4639 = vcmp.eq.s32.totalorder %v4630, %v234
            %vm4640 = vcmp.eq.s32.totalorder %v4634, %v234
            %vm4641 = vcmp.eq.s32.totalorder %v4630, %v235
            %vm4642 = vcmp.eq.s32.totalorder %v4634, %v235
            %vm4643 = vcmp.eq.s32.totalorder %v4630, %v236
            %vm4644 = vcmp.eq.s32.totalorder %v4634, %v236
            %vm4645 = vcmp.eq.s32.totalorder %v4630, %v237
            %vm4646 = vcmp.eq.s32.totalorder %v4634, %v237
            %vm4647 = vcmp.eq.s32.totalorder %v4630, %v238
            %vm4648 = vcmp.eq.s32.totalorder %v4634, %v238
            %vm4649 = vcmp.eq.s32.totalorder %v4630, %v239
            %vm4650 = vcmp.eq.s32.totalorder %v4634, %v239
            %vm4651 = vcmp.eq.s32.totalorder %v4630, %v240
            %vm4652 = vcmp.eq.s32.totalorder %v4634, %v240
            %vm4653 = vcmp.eq.s32.totalorder %v4630, %v241
            %vm4654 = vcmp.eq.s32.totalorder %v4634, %v241
            %vm4655 = vcmp.eq.s32.totalorder %v4630, %v242
            %vm4656 = vcmp.eq.s32.totalorder %v4634, %v242
            %vm4657 = vcmp.eq.s32.totalorder %v4630, %v243
            %vm4658 = vcmp.eq.s32.totalorder %v4634, %v243
            %vm4659 = vcmp.eq.s32.totalorder %v4630, %v244
            %vm4660 = vcmp.eq.s32.totalorder %v4634, %v244
            %vm4661 = vcmp.eq.s32.totalorder %v4630, %v245
            %vm4662 = vcmp.eq.s32.totalorder %v4634, %v245
            %vm4663 = vcmp.eq.s32.totalorder %v4630, %v246
            %vm4664 = vcmp.eq.s32.totalorder %v4634, %v246
            %vm4665 = vcmp.eq.s32.totalorder %v4630, %v247
            %vm4666 = vcmp.eq.s32.totalorder %v4634, %v247
            %vm4667 = vcmp.eq.s32.totalorder %v4630, %v248
            %vm4668 = vcmp.eq.s32.totalorder %v4634, %v248
            %vm4669 = vcmp.eq.s32.totalorder %v4630, %v249
            %vm4670 = vcmp.eq.s32.totalorder %v4634, %v249
            %vm4671 = vcmp.eq.s32.totalorder %v4630, %v250
            %vm4672 = vcmp.eq.s32.totalorder %v4634, %v250
            %vm4673 = vcmp.eq.s32.totalorder %v4630, %v251
            %vm4674 = vcmp.eq.s32.totalorder %v4634, %v251
            %vm4675 = vcmp.eq.s32.totalorder %v4630, %v252
            %vm4676 = vcmp.eq.s32.totalorder %v4634, %v252
            %vm4677 = vcmp.eq.s32.totalorder %v4630, %v253
            %vm4678 = vcmp.eq.s32.totalorder %v4634, %v253
            %vm4679 = vcmp.eq.s32.totalorder %v4630, %v254
            %vm4680 = vcmp.eq.s32.totalorder %v4634, %v254
            %vm4681 = vcmp.eq.s32.totalorder %v4630, %v255
            %vm4682 = vcmp.eq.s32.totalorder %v4634, %v255
            %vm4683 = vcmp.eq.s32.totalorder %v4630, %v256
            %vm4684 = vcmp.eq.s32.totalorder %v4634, %v256
            %vm4685 = vcmp.eq.s32.totalorder %v4630, %v257
            %vm4686 = vcmp.eq.s32.totalorder %v4634, %v257
            %vm4687 = vcmp.eq.s32.totalorder %v4630, %v258
            %vm4688 = vcmp.eq.s32.totalorder %v4634, %v258
            %vm4689 = vcmp.eq.s32.totalorder %v4630, %v259
            %vm4690 = vcmp.eq.s32.totalorder %v4634, %v259
            %vm4691 = vcmp.eq.s32.totalorder %v4630, %v260
            %vm4692 = vcmp.eq.s32.totalorder %v4634, %v260
            %vm4693 = vcmp.eq.s32.totalorder %v4630, %v261
            %vm4694 = vcmp.eq.s32.totalorder %v4634, %v261
            %vm4695 = vcmp.eq.s32.totalorder %v4630, %v262
            %vm4696 = vcmp.eq.s32.totalorder %v4634, %v262
            %vm4697 = vcmp.eq.s32.totalorder %v4630, %v263
            %vm4698 = vcmp.eq.s32.totalorder %v4634, %v263
            %v4700 = vlaneseq
            %v4701 = vshrl.u32 %v4700, 7
            %v4702 = vsub.s32 0, %v4701
            %v4703 = vrot.slane %v4595, %v4702
            %v4704 = vlaneseq
            %v4705 = vshrl.u32 %v4704, 7
            %v4706 = vsub.s32 1, %v4705
            %v4707 = vrot.slane %v4595, %v4706
            %v4710 = vsel %vm4635, %v4703, 0.0
            %v4711 = vsel %vm4636, %v4707, 0.0
            %v4712 = vsel %vm4637, %v4703, 0.0
            %v4713 = vsel %vm4638, %v4707, 0.0
            %v4714 = vsel %vm4639, %v4703, 0.0
            %v4715 = vsel %vm4640, %v4707, 0.0
            %v4716 = vsel %vm4641, %v4703, 0.0
            %v4717 = vsel %vm4642, %v4707, 0.0
            %v4718 = vsel %vm4643, %v4703, 0.0
            %v4719 = vsel %vm4644, %v4707, 0.0
            %v4720 = vsel %vm4645, %v4703, 0.0
            %v4721 = vsel %vm4646, %v4707, 0.0
            %v4722 = vsel %vm4647, %v4703, 0.0
            %v4723 = vsel %vm4648, %v4707, 0.0
            %v4724 = vsel %vm4649, %v4703, 0.0
            %v4725 = vsel %vm4650, %v4707, 0.0
            %v4726 = vsel %vm4651, %v4703, 0.0
            %v4727 = vsel %vm4652, %v4707, 0.0
            %v4728 = vsel %vm4653, %v4703, 0.0
            %v4729 = vsel %vm4654, %v4707, 0.0
            %v4730 = vsel %vm4655, %v4703, 0.0
            %v4731 = vsel %vm4656, %v4707, 0.0
            %v4732 = vsel %vm4657, %v4703, 0.0
            %v4733 = vsel %vm4658, %v4707, 0.0
            %v4734 = vsel %vm4659, %v4703, 0.0
            %v4735 = vsel %vm4660, %v4707, 0.0
            %v4736 = vsel %vm4661, %v4703, 0.0
            %v4737 = vsel %vm4662, %v4707, 0.0
            %v4738 = vsel %vm4663, %v4703, 0.0
            %v4739 = vsel %vm4664, %v4707, 0.0
            %v4740 = vsel %vm4665, %v4703, 0.0
            %v4741 = vsel %vm4666, %v4707, 0.0
            %v4742 = vsel %vm4667, %v4703, 0.0
            %v4743 = vsel %vm4668, %v4707, 0.0
            %v4744 = vsel %vm4669, %v4703, 0.0
            %v4745 = vsel %vm4670, %v4707, 0.0
            %v4746 = vsel %vm4671, %v4703, 0.0
            %v4747 = vsel %vm4672, %v4707, 0.0
            %v4748 = vsel %vm4673, %v4703, 0.0
            %v4749 = vsel %vm4674, %v4707, 0.0
            %v4750 = vsel %vm4675, %v4703, 0.0
            %v4751 = vsel %vm4676, %v4707, 0.0
            %v4752 = vsel %vm4677, %v4703, 0.0
            %v4753 = vsel %vm4678, %v4707, 0.0
            %v4754 = vsel %vm4679, %v4703, 0.0
            %v4755 = vsel %vm4680, %v4707, 0.0
            %v4756 = vsel %vm4681, %v4703, 0.0
            %v4757 = vsel %vm4682, %v4707, 0.0
            %v4758 = vsel %vm4683, %v4703, 0.0
            %v4759 = vsel %vm4684, %v4707, 0.0
            %v4760 = vsel %vm4685, %v4703, 0.0
            %v4761 = vsel %vm4686, %v4707, 0.0
            %v4762 = vsel %vm4687, %v4703, 0.0
            %v4763 = vsel %vm4688, %v4707, 0.0
            %v4764 = vsel %vm4689, %v4703, 0.0
            %v4765 = vsel %vm4690, %v4707, 0.0
            %v4766 = vsel %vm4691, %v4703, 0.0
            %v4767 = vsel %vm4692, %v4707, 0.0
            %v4768 = vsel %vm4693, %v4703, 0.0
            %v4769 = vsel %vm4694, %v4707, 0.0
            %v4770 = vsel %vm4695, %v4703, 0.0
            %v4771 = vsel %vm4696, %v4707, 0.0
            %v4772 = vsel %vm4697, %v4703, 0.0
            %v4773 = vsel %vm4698, %v4707, 0.0
            %v4774 = vsub.s32 %v4601, %v4625
            %v4775 = vlaneseq
            %v4776 = vshrl.u32 %v4775, 7
            %v4777 = vsub.s32 0, %v4776
            %v4778 = vrot.slane %v4774, %v4777
            %v4779 = vlaneseq
            %v4780 = vshrl.u32 %v4779, 7
            %v4781 = vsub.s32 1, %v4780
            %v4782 = vrot.slane %v4774, %v4781
            %vm4783 = vcmp.eq.s32.totalorder %v4778, %v232
            %vm4784 = vcmp.eq.s32.totalorder %v4782, %v232
            %vm4785 = vcmp.eq.s32.totalorder %v4778, %v233
            %vm4786 = vcmp.eq.s32.totalorder %v4782, %v233
            %vm4787 = vcmp.eq.s32.totalorder %v4778, %v234
            %vm4788 = vcmp.eq.s32.totalorder %v4782, %v234
            %vm4789 = vcmp.eq.s32.totalorder %v4778, %v235
            %vm4790 = vcmp.eq.s32.totalorder %v4782, %v235
            %vm4791 = vcmp.eq.s32.totalorder %v4778, %v236
            %vm4792 = vcmp.eq.s32.totalorder %v4782, %v236
            %vm4793 = vcmp.eq.s32.totalorder %v4778, %v237
            %vm4794 = vcmp.eq.s32.totalorder %v4782, %v237
            %vm4795 = vcmp.eq.s32.totalorder %v4778, %v238
            %vm4796 = vcmp.eq.s32.totalorder %v4782, %v238
            %vm4797 = vcmp.eq.s32.totalorder %v4778, %v239
            %vm4798 = vcmp.eq.s32.totalorder %v4782, %v239
            %vm4799 = vcmp.eq.s32.totalorder %v4778, %v240
            %vm4800 = vcmp.eq.s32.totalorder %v4782, %v240
            %vm4801 = vcmp.eq.s32.totalorder %v4778, %v241
            %vm4802 = vcmp.eq.s32.totalorder %v4782, %v241
            %vm4803 = vcmp.eq.s32.totalorder %v4778, %v242
            %vm4804 = vcmp.eq.s32.totalorder %v4782, %v242
            %vm4805 = vcmp.eq.s32.totalorder %v4778, %v243
            %vm4806 = vcmp.eq.s32.totalorder %v4782, %v243
            %vm4807 = vcmp.eq.s32.totalorder %v4778, %v244
            %vm4808 = vcmp.eq.s32.totalorder %v4782, %v244
            %vm4809 = vcmp.eq.s32.totalorder %v4778, %v245
            %vm4810 = vcmp.eq.s32.totalorder %v4782, %v245
            %vm4811 = vcmp.eq.s32.totalorder %v4778, %v246
            %vm4812 = vcmp.eq.s32.totalorder %v4782, %v246
            %vm4813 = vcmp.eq.s32.totalorder %v4778, %v247
            %vm4814 = vcmp.eq.s32.totalorder %v4782, %v247
            %vm4815 = vcmp.eq.s32.totalorder %v4778, %v248
            %vm4816 = vcmp.eq.s32.totalorder %v4782, %v248
            %vm4817 = vcmp.eq.s32.totalorder %v4778, %v249
            %vm4818 = vcmp.eq.s32.totalorder %v4782, %v249
            %vm4819 = vcmp.eq.s32.totalorder %v4778, %v250
            %vm4820 = vcmp.eq.s32.totalorder %v4782, %v250
            %vm4821 = vcmp.eq.s32.totalorder %v4778, %v251
            %vm4822 = vcmp.eq.s32.totalorder %v4782, %v251
            %vm4823 = vcmp.eq.s32.totalorder %v4778, %v252
            %vm4824 = vcmp.eq.s32.totalorder %v4782, %v252
            %vm4825 = vcmp.eq.s32.totalorder %v4778, %v253
            %vm4826 = vcmp.eq.s32.totalorder %v4782, %v253
            %vm4827 = vcmp.eq.s32.totalorder %v4778, %v254
            %vm4828 = vcmp.eq.s32.totalorder %v4782, %v254
            %vm4829 = vcmp.eq.s32.totalorder %v4778, %v255
            %vm4830 = vcmp.eq.s32.totalorder %v4782, %v255
            %vm4831 = vcmp.eq.s32.totalorder %v4778, %v256
            %vm4832 = vcmp.eq.s32.totalorder %v4782, %v256
            %vm4833 = vcmp.eq.s32.totalorder %v4778, %v257
            %vm4834 = vcmp.eq.s32.totalorder %v4782, %v257
            %vm4835 = vcmp.eq.s32.totalorder %v4778, %v258
            %vm4836 = vcmp.eq.s32.totalorder %v4782, %v258
            %vm4837 = vcmp.eq.s32.totalorder %v4778, %v259
            %vm4838 = vcmp.eq.s32.totalorder %v4782, %v259
            %vm4839 = vcmp.eq.s32.totalorder %v4778, %v260
            %vm4840 = vcmp.eq.s32.totalorder %v4782, %v260
            %vm4841 = vcmp.eq.s32.totalorder %v4778, %v261
            %vm4842 = vcmp.eq.s32.totalorder %v4782, %v261
            %vm4843 = vcmp.eq.s32.totalorder %v4778, %v262
            %vm4844 = vcmp.eq.s32.totalorder %v4782, %v262
            %vm4845 = vcmp.eq.s32.totalorder %v4778, %v263
            %vm4846 = vcmp.eq.s32.totalorder %v4782, %v263
            %v4848 = vlaneseq
            %v4849 = vshrl.u32 %v4848, 7
            %v4850 = vsub.s32 0, %v4849
            %v4851 = vrot.slane %v4602, %v4850
            %v4852 = vlaneseq
            %v4853 = vshrl.u32 %v4852, 7
            %v4854 = vsub.s32 1, %v4853
            %v4855 = vrot.slane %v4602, %v4854
            %v4858 = vsel %vm4783, %v4851, 0.0
            %v4859 = vsel %vm4784, %v4855, 0.0
            %v4860 = vsel %vm4785, %v4851, 0.0
            %v4861 = vsel %vm4786, %v4855, 0.0
            %v4862 = vsel %vm4787, %v4851, 0.0
            %v4863 = vsel %vm4788, %v4855, 0.0
            %v4864 = vsel %vm4789, %v4851, 0.0
            %v4865 = vsel %vm4790, %v4855, 0.0
            %v4866 = vsel %vm4791, %v4851, 0.0
            %v4867 = vsel %vm4792, %v4855, 0.0
            %v4868 = vsel %vm4793, %v4851, 0.0
            %v4869 = vsel %vm4794, %v4855, 0.0
            %v4870 = vsel %vm4795, %v4851, 0.0
            %v4871 = vsel %vm4796, %v4855, 0.0
            %v4872 = vsel %vm4797, %v4851, 0.0
            %v4873 = vsel %vm4798, %v4855, 0.0
            %v4874 = vsel %vm4799, %v4851, 0.0
            %v4875 = vsel %vm4800, %v4855, 0.0
            %v4876 = vsel %vm4801, %v4851, 0.0
            %v4877 = vsel %vm4802, %v4855, 0.0
            %v4878 = vsel %vm4803, %v4851, 0.0
            %v4879 = vsel %vm4804, %v4855, 0.0
            %v4880 = vsel %vm4805, %v4851, 0.0
            %v4881 = vsel %vm4806, %v4855, 0.0
            %v4882 = vsel %vm4807, %v4851, 0.0
            %v4883 = vsel %vm4808, %v4855, 0.0
            %v4884 = vsel %vm4809, %v4851, 0.0
            %v4885 = vsel %vm4810, %v4855, 0.0
            %v4886 = vsel %vm4811, %v4851, 0.0
            %v4887 = vsel %vm4812, %v4855, 0.0
            %v4888 = vsel %vm4813, %v4851, 0.0
            %v4889 = vsel %vm4814, %v4855, 0.0
            %v4890 = vsel %vm4815, %v4851, 0.0
            %v4891 = vsel %vm4816, %v4855, 0.0
            %v4892 = vsel %vm4817, %v4851, 0.0
            %v4893 = vsel %vm4818, %v4855, 0.0
            %v4894 = vsel %vm4819, %v4851, 0.0
            %v4895 = vsel %vm4820, %v4855, 0.0
            %v4896 = vsel %vm4821, %v4851, 0.0
            %v4897 = vsel %vm4822, %v4855, 0.0
            %v4898 = vsel %vm4823, %v4851, 0.0
            %v4899 = vsel %vm4824, %v4855, 0.0
            %v4900 = vsel %vm4825, %v4851, 0.0
            %v4901 = vsel %vm4826, %v4855, 0.0
            %v4902 = vsel %vm4827, %v4851, 0.0
            %v4903 = vsel %vm4828, %v4855, 0.0
            %v4904 = vsel %vm4829, %v4851, 0.0
            %v4905 = vsel %vm4830, %v4855, 0.0
            %v4906 = vsel %vm4831, %v4851, 0.0
            %v4907 = vsel %vm4832, %v4855, 0.0
            %v4908 = vsel %vm4833, %v4851, 0.0
            %v4909 = vsel %vm4834, %v4855, 0.0
            %v4910 = vsel %vm4835, %v4851, 0.0
            %v4911 = vsel %vm4836, %v4855, 0.0
            %v4912 = vsel %vm4837, %v4851, 0.0
            %v4913 = vsel %vm4838, %v4855, 0.0
            %v4914 = vsel %vm4839, %v4851, 0.0
            %v4915 = vsel %vm4840, %v4855, 0.0
            %v4916 = vsel %vm4841, %v4851, 0.0
            %v4917 = vsel %vm4842, %v4855, 0.0
            %v4918 = vsel %vm4843, %v4851, 0.0
            %v4919 = vsel %vm4844, %v4855, 0.0
            %v4920 = vsel %vm4845, %v4851, 0.0
            %v4921 = vsel %vm4846, %v4855, 0.0
            %v4922 = vadd.f32 %v4710, %v4858
            %v4923 = vadd.f32 %v4711, %v4859
            %v4924 = vadd.f32 %v4712, %v4860
            %v4925 = vadd.f32 %v4713, %v4861
            %v4926 = vadd.f32 %v4714, %v4862
            %v4927 = vadd.f32 %v4715, %v4863
            %v4928 = vadd.f32 %v4716, %v4864
            %v4929 = vadd.f32 %v4717, %v4865
            %v4930 = vadd.f32 %v4718, %v4866
            %v4931 = vadd.f32 %v4719, %v4867
            %v4932 = vadd.f32 %v4720, %v4868
            %v4933 = vadd.f32 %v4721, %v4869
            %v4934 = vadd.f32 %v4722, %v4870
            %v4935 = vadd.f32 %v4723, %v4871
            %v4936 = vadd.f32 %v4724, %v4872
            %v4937 = vadd.f32 %v4725, %v4873
            %v4938 = vadd.f32 %v4726, %v4874
            %v4939 = vadd.f32 %v4727, %v4875
            %v4940 = vadd.f32 %v4728, %v4876
            %v4941 = vadd.f32 %v4729, %v4877
            %v4942 = vadd.f32 %v4730, %v4878
            %v4943 = vadd.f32 %v4731, %v4879
            %v4944 = vadd.f32 %v4732, %v4880
            %v4945 = vadd.f32 %v4733, %v4881
            %v4946 = vadd.f32 %v4734, %v4882
            %v4947 = vadd.f32 %v4735, %v4883
            %v4948 = vadd.f32 %v4736, %v4884
            %v4949 = vadd.f32 %v4737, %v4885
            %v4950 = vadd.f32 %v4738, %v4886
            %v4951 = vadd.f32 %v4739, %v4887
            %v4952 = vadd.f32 %v4740, %v4888
            %v4953 = vadd.f32 %v4741, %v4889
            %v4954 = vadd.f32 %v4742, %v4890
            %v4955 = vadd.f32 %v4743, %v4891
            %v4956 = vadd.f32 %v4744, %v4892
            %v4957 = vadd.f32 %v4745, %v4893
            %v4958 = vadd.f32 %v4746, %v4894
            %v4959 = vadd.f32 %v4747, %v4895
            %v4960 = vadd.f32 %v4748, %v4896
            %v4961 = vadd.f32 %v4749, %v4897
            %v4962 = vadd.f32 %v4750, %v4898
            %v4963 = vadd.f32 %v4751, %v4899
            %v4964 = vadd.f32 %v4752, %v4900
            %v4965 = vadd.f32 %v4753, %v4901
            %v4966 = vadd.f32 %v4754, %v4902
            %v4967 = vadd.f32 %v4755, %v4903
            %v4968 = vadd.f32 %v4756, %v4904
            %v4969 = vadd.f32 %v4757, %v4905
            %v4970 = vadd.f32 %v4758, %v4906
            %v4971 = vadd.f32 %v4759, %v4907
            %v4972 = vadd.f32 %v4760, %v4908
            %v4973 = vadd.f32 %v4761, %v4909
            %v4974 = vadd.f32 %v4762, %v4910
            %v4975 = vadd.f32 %v4763, %v4911
            %v4976 = vadd.f32 %v4764, %v4912
            %v4977 = vadd.f32 %v4765, %v4913
            %v4978 = vadd.f32 %v4766, %v4914
            %v4979 = vadd.f32 %v4767, %v4915
            %v4980 = vadd.f32 %v4768, %v4916
            %v4981 = vadd.f32 %v4769, %v4917
            %v4982 = vadd.f32 %v4770, %v4918
            %v4983 = vadd.f32 %v4771, %v4919
            %v4984 = vadd.f32 %v4772, %v4920
            %v4985 = vadd.f32 %v4773, %v4921
            %v4986 = vsub.s32 %v4608, %v4625
            %v4987 = vlaneseq
            %v4988 = vshrl.u32 %v4987, 7
            %v4989 = vsub.s32 0, %v4988
            %v4990 = vrot.slane %v4986, %v4989
            %v4991 = vlaneseq
            %v4992 = vshrl.u32 %v4991, 7
            %v4993 = vsub.s32 1, %v4992
            %v4994 = vrot.slane %v4986, %v4993
            %vm4995 = vcmp.eq.s32.totalorder %v4990, %v232
            %vm4996 = vcmp.eq.s32.totalorder %v4994, %v232
            %vm4997 = vcmp.eq.s32.totalorder %v4990, %v233
            %vm4998 = vcmp.eq.s32.totalorder %v4994, %v233
            %vm4999 = vcmp.eq.s32.totalorder %v4990, %v234
            %vm5000 = vcmp.eq.s32.totalorder %v4994, %v234
            %vm5001 = vcmp.eq.s32.totalorder %v4990, %v235
            %vm5002 = vcmp.eq.s32.totalorder %v4994, %v235
            %vm5003 = vcmp.eq.s32.totalorder %v4990, %v236
            %vm5004 = vcmp.eq.s32.totalorder %v4994, %v236
            %vm5005 = vcmp.eq.s32.totalorder %v4990, %v237
            %vm5006 = vcmp.eq.s32.totalorder %v4994, %v237
            %vm5007 = vcmp.eq.s32.totalorder %v4990, %v238
            %vm5008 = vcmp.eq.s32.totalorder %v4994, %v238
            %vm5009 = vcmp.eq.s32.totalorder %v4990, %v239
            %vm5010 = vcmp.eq.s32.totalorder %v4994, %v239
            %vm5011 = vcmp.eq.s32.totalorder %v4990, %v240
            %vm5012 = vcmp.eq.s32.totalorder %v4994, %v240
            %vm5013 = vcmp.eq.s32.totalorder %v4990, %v241
            %vm5014 = vcmp.eq.s32.totalorder %v4994, %v241
            %vm5015 = vcmp.eq.s32.totalorder %v4990, %v242
            %vm5016 = vcmp.eq.s32.totalorder %v4994, %v242
            %vm5017 = vcmp.eq.s32.totalorder %v4990, %v243
            %vm5018 = vcmp.eq.s32.totalorder %v4994, %v243
            %vm5019 = vcmp.eq.s32.totalorder %v4990, %v244
            %vm5020 = vcmp.eq.s32.totalorder %v4994, %v244
            %vm5021 = vcmp.eq.s32.totalorder %v4990, %v245
            %vm5022 = vcmp.eq.s32.totalorder %v4994, %v245
            %vm5023 = vcmp.eq.s32.totalorder %v4990, %v246
            %vm5024 = vcmp.eq.s32.totalorder %v4994, %v246
            %vm5025 = vcmp.eq.s32.totalorder %v4990, %v247
            %vm5026 = vcmp.eq.s32.totalorder %v4994, %v247
            %vm5027 = vcmp.eq.s32.totalorder %v4990, %v248
            %vm5028 = vcmp.eq.s32.totalorder %v4994, %v248
            %vm5029 = vcmp.eq.s32.totalorder %v4990, %v249
            %vm5030 = vcmp.eq.s32.totalorder %v4994, %v249
            %vm5031 = vcmp.eq.s32.totalorder %v4990, %v250
            %vm5032 = vcmp.eq.s32.totalorder %v4994, %v250
            %vm5033 = vcmp.eq.s32.totalorder %v4990, %v251
            %vm5034 = vcmp.eq.s32.totalorder %v4994, %v251
            %vm5035 = vcmp.eq.s32.totalorder %v4990, %v252
            %vm5036 = vcmp.eq.s32.totalorder %v4994, %v252
            %vm5037 = vcmp.eq.s32.totalorder %v4990, %v253
            %vm5038 = vcmp.eq.s32.totalorder %v4994, %v253
            %vm5039 = vcmp.eq.s32.totalorder %v4990, %v254
            %vm5040 = vcmp.eq.s32.totalorder %v4994, %v254
            %vm5041 = vcmp.eq.s32.totalorder %v4990, %v255
            %vm5042 = vcmp.eq.s32.totalorder %v4994, %v255
            %vm5043 = vcmp.eq.s32.totalorder %v4990, %v256
            %vm5044 = vcmp.eq.s32.totalorder %v4994, %v256
            %vm5045 = vcmp.eq.s32.totalorder %v4990, %v257
            %vm5046 = vcmp.eq.s32.totalorder %v4994, %v257
            %vm5047 = vcmp.eq.s32.totalorder %v4990, %v258
            %vm5048 = vcmp.eq.s32.totalorder %v4994, %v258
            %vm5049 = vcmp.eq.s32.totalorder %v4990, %v259
            %vm5050 = vcmp.eq.s32.totalorder %v4994, %v259
            %vm5051 = vcmp.eq.s32.totalorder %v4990, %v260
            %vm5052 = vcmp.eq.s32.totalorder %v4994, %v260
            %vm5053 = vcmp.eq.s32.totalorder %v4990, %v261
            %vm5054 = vcmp.eq.s32.totalorder %v4994, %v261
            %vm5055 = vcmp.eq.s32.totalorder %v4990, %v262
            %vm5056 = vcmp.eq.s32.totalorder %v4994, %v262
            %vm5057 = vcmp.eq.s32.totalorder %v4990, %v263
            %vm5058 = vcmp.eq.s32.totalorder %v4994, %v263
            %v5060 = vlaneseq
            %v5061 = vshrl.u32 %v5060, 7
            %v5062 = vsub.s32 0, %v5061
            %v5063 = vrot.slane %v4609, %v5062
            %v5064 = vlaneseq
            %v5065 = vshrl.u32 %v5064, 7
            %v5066 = vsub.s32 1, %v5065
            %v5067 = vrot.slane %v4609, %v5066
            %v5070 = vsel %vm4995, %v5063, 0.0
            %v5071 = vsel %vm4996, %v5067, 0.0
            %v5072 = vsel %vm4997, %v5063, 0.0
            %v5073 = vsel %vm4998, %v5067, 0.0
            %v5074 = vsel %vm4999, %v5063, 0.0
            %v5075 = vsel %vm5000, %v5067, 0.0
            %v5076 = vsel %vm5001, %v5063, 0.0
            %v5077 = vsel %vm5002, %v5067, 0.0
            %v5078 = vsel %vm5003, %v5063, 0.0
            %v5079 = vsel %vm5004, %v5067, 0.0
            %v5080 = vsel %vm5005, %v5063, 0.0
            %v5081 = vsel %vm5006, %v5067, 0.0
            %v5082 = vsel %vm5007, %v5063, 0.0
            %v5083 = vsel %vm5008, %v5067, 0.0
            %v5084 = vsel %vm5009, %v5063, 0.0
            %v5085 = vsel %vm5010, %v5067, 0.0
            %v5086 = vsel %vm5011, %v5063, 0.0
            %v5087 = vsel %vm5012, %v5067, 0.0
            %v5088 = vsel %vm5013, %v5063, 0.0
            %v5089 = vsel %vm5014, %v5067, 0.0
            %v5090 = vsel %vm5015, %v5063, 0.0
            %v5091 = vsel %vm5016, %v5067, 0.0
            %v5092 = vsel %vm5017, %v5063, 0.0
            %v5093 = vsel %vm5018, %v5067, 0.0
            %v5094 = vsel %vm5019, %v5063, 0.0
            %v5095 = vsel %vm5020, %v5067, 0.0
            %v5096 = vsel %vm5021, %v5063, 0.0
            %v5097 = vsel %vm5022, %v5067, 0.0
            %v5098 = vsel %vm5023, %v5063, 0.0
            %v5099 = vsel %vm5024, %v5067, 0.0
            %v5100 = vsel %vm5025, %v5063, 0.0
            %v5101 = vsel %vm5026, %v5067, 0.0
            %v5102 = vsel %vm5027, %v5063, 0.0
            %v5103 = vsel %vm5028, %v5067, 0.0
            %v5104 = vsel %vm5029, %v5063, 0.0
            %v5105 = vsel %vm5030, %v5067, 0.0
            %v5106 = vsel %vm5031, %v5063, 0.0
            %v5107 = vsel %vm5032, %v5067, 0.0
            %v5108 = vsel %vm5033, %v5063, 0.0
            %v5109 = vsel %vm5034, %v5067, 0.0
            %v5110 = vsel %vm5035, %v5063, 0.0
            %v5111 = vsel %vm5036, %v5067, 0.0
            %v5112 = vsel %vm5037, %v5063, 0.0
            %v5113 = vsel %vm5038, %v5067, 0.0
            %v5114 = vsel %vm5039, %v5063, 0.0
            %v5115 = vsel %vm5040, %v5067, 0.0
            %v5116 = vsel %vm5041, %v5063, 0.0
            %v5117 = vsel %vm5042, %v5067, 0.0
            %v5118 = vsel %vm5043, %v5063, 0.0
            %v5119 = vsel %vm5044, %v5067, 0.0
            %v5120 = vsel %vm5045, %v5063, 0.0
            %v5121 = vsel %vm5046, %v5067, 0.0
            %v5122 = vsel %vm5047, %v5063, 0.0
            %v5123 = vsel %vm5048, %v5067, 0.0
            %v5124 = vsel %vm5049, %v5063, 0.0
            %v5125 = vsel %vm5050, %v5067, 0.0
            %v5126 = vsel %vm5051, %v5063, 0.0
            %v5127 = vsel %vm5052, %v5067, 0.0
            %v5128 = vsel %vm5053, %v5063, 0.0
            %v5129 = vsel %vm5054, %v5067, 0.0
            %v5130 = vsel %vm5055, %v5063, 0.0
            %v5131 = vsel %vm5056, %v5067, 0.0
            %v5132 = vsel %vm5057, %v5063, 0.0
            %v5133 = vsel %vm5058, %v5067, 0.0
            %v5134 = vadd.f32 %v4922, %v5070
            %v5135 = vadd.f32 %v4923, %v5071
            %v5136 = vadd.f32 %v4924, %v5072
            %v5137 = vadd.f32 %v4925, %v5073
            %v5138 = vadd.f32 %v4926, %v5074
            %v5139 = vadd.f32 %v4927, %v5075
            %v5140 = vadd.f32 %v4928, %v5076
            %v5141 = vadd.f32 %v4929, %v5077
            %v5142 = vadd.f32 %v4930, %v5078
            %v5143 = vadd.f32 %v4931, %v5079
            %v5144 = vadd.f32 %v4932, %v5080
            %v5145 = vadd.f32 %v4933, %v5081
            %v5146 = vadd.f32 %v4934, %v5082
            %v5147 = vadd.f32 %v4935, %v5083
            %v5148 = vadd.f32 %v4936, %v5084
            %v5149 = vadd.f32 %v4937, %v5085
            %v5150 = vadd.f32 %v4938, %v5086
            %v5151 = vadd.f32 %v4939, %v5087
            %v5152 = vadd.f32 %v4940, %v5088
            %v5153 = vadd.f32 %v4941, %v5089
            %v5154 = vadd.f32 %v4942, %v5090
            %v5155 = vadd.f32 %v4943, %v5091
            %v5156 = vadd.f32 %v4944, %v5092
            %v5157 = vadd.f32 %v4945, %v5093
            %v5158 = vadd.f32 %v4946, %v5094
            %v5159 = vadd.f32 %v4947, %v5095
            %v5160 = vadd.f32 %v4948, %v5096
            %v5161 = vadd.f32 %v4949, %v5097
            %v5162 = vadd.f32 %v4950, %v5098
            %v5163 = vadd.f32 %v4951, %v5099
            %v5164 = vadd.f32 %v4952, %v5100
            %v5165 = vadd.f32 %v4953, %v5101
            %v5166 = vadd.f32 %v4954, %v5102
            %v5167 = vadd.f32 %v4955, %v5103
            %v5168 = vadd.f32 %v4956, %v5104
            %v5169 = vadd.f32 %v4957, %v5105
            %v5170 = vadd.f32 %v4958, %v5106
            %v5171 = vadd.f32 %v4959, %v5107
            %v5172 = vadd.f32 %v4960, %v5108
            %v5173 = vadd.f32 %v4961, %v5109
            %v5174 = vadd.f32 %v4962, %v5110
            %v5175 = vadd.f32 %v4963, %v5111
            %v5176 = vadd.f32 %v4964, %v5112
            %v5177 = vadd.f32 %v4965, %v5113
            %v5178 = vadd.f32 %v4966, %v5114
            %v5179 = vadd.f32 %v4967, %v5115
            %v5180 = vadd.f32 %v4968, %v5116
            %v5181 = vadd.f32 %v4969, %v5117
            %v5182 = vadd.f32 %v4970, %v5118
            %v5183 = vadd.f32 %v4971, %v5119
            %v5184 = vadd.f32 %v4972, %v5120
            %v5185 = vadd.f32 %v4973, %v5121
            %v5186 = vadd.f32 %v4974, %v5122
            %v5187 = vadd.f32 %v4975, %v5123
            %v5188 = vadd.f32 %v4976, %v5124
            %v5189 = vadd.f32 %v4977, %v5125
            %v5190 = vadd.f32 %v4978, %v5126
            %v5191 = vadd.f32 %v4979, %v5127
            %v5192 = vadd.f32 %v4980, %v5128
            %v5193 = vadd.f32 %v4981, %v5129
            %v5194 = vadd.f32 %v4982, %v5130
            %v5195 = vadd.f32 %v4983, %v5131
            %v5196 = vadd.f32 %v4984, %v5132
            %v5197 = vadd.f32 %v4985, %v5133
            %v5198 = vsub.s32 %v4612, %v4625
            %v5199 = vlaneseq
            %v5200 = vshrl.u32 %v5199, 7
            %v5201 = vsub.s32 0, %v5200
            %v5202 = vrot.slane %v5198, %v5201
            %v5203 = vlaneseq
            %v5204 = vshrl.u32 %v5203, 7
            %v5205 = vsub.s32 1, %v5204
            %v5206 = vrot.slane %v5198, %v5205
            %vm5207 = vcmp.eq.s32.totalorder %v5202, %v232
            %vm5208 = vcmp.eq.s32.totalorder %v5206, %v232
            %vm5209 = vcmp.eq.s32.totalorder %v5202, %v233
            %vm5210 = vcmp.eq.s32.totalorder %v5206, %v233
            %vm5211 = vcmp.eq.s32.totalorder %v5202, %v234
            %vm5212 = vcmp.eq.s32.totalorder %v5206, %v234
            %vm5213 = vcmp.eq.s32.totalorder %v5202, %v235
            %vm5214 = vcmp.eq.s32.totalorder %v5206, %v235
            %vm5215 = vcmp.eq.s32.totalorder %v5202, %v236
            %vm5216 = vcmp.eq.s32.totalorder %v5206, %v236
            %vm5217 = vcmp.eq.s32.totalorder %v5202, %v237
            %vm5218 = vcmp.eq.s32.totalorder %v5206, %v237
            %vm5219 = vcmp.eq.s32.totalorder %v5202, %v238
            %vm5220 = vcmp.eq.s32.totalorder %v5206, %v238
            %vm5221 = vcmp.eq.s32.totalorder %v5202, %v239
            %vm5222 = vcmp.eq.s32.totalorder %v5206, %v239
            %vm5223 = vcmp.eq.s32.totalorder %v5202, %v240
            %vm5224 = vcmp.eq.s32.totalorder %v5206, %v240
            %vm5225 = vcmp.eq.s32.totalorder %v5202, %v241
            %vm5226 = vcmp.eq.s32.totalorder %v5206, %v241
            %vm5227 = vcmp.eq.s32.totalorder %v5202, %v242
            %vm5228 = vcmp.eq.s32.totalorder %v5206, %v242
            %vm5229 = vcmp.eq.s32.totalorder %v5202, %v243
            %vm5230 = vcmp.eq.s32.totalorder %v5206, %v243
            %vm5231 = vcmp.eq.s32.totalorder %v5202, %v244
            %vm5232 = vcmp.eq.s32.totalorder %v5206, %v244
            %vm5233 = vcmp.eq.s32.totalorder %v5202, %v245
            %vm5234 = vcmp.eq.s32.totalorder %v5206, %v245
            %vm5235 = vcmp.eq.s32.totalorder %v5202, %v246
            %vm5236 = vcmp.eq.s32.totalorder %v5206, %v246
            %vm5237 = vcmp.eq.s32.totalorder %v5202, %v247
            %vm5238 = vcmp.eq.s32.totalorder %v5206, %v247
            %vm5239 = vcmp.eq.s32.totalorder %v5202, %v248
            %vm5240 = vcmp.eq.s32.totalorder %v5206, %v248
            %vm5241 = vcmp.eq.s32.totalorder %v5202, %v249
            %vm5242 = vcmp.eq.s32.totalorder %v5206, %v249
            %vm5243 = vcmp.eq.s32.totalorder %v5202, %v250
            %vm5244 = vcmp.eq.s32.totalorder %v5206, %v250
            %vm5245 = vcmp.eq.s32.totalorder %v5202, %v251
            %vm5246 = vcmp.eq.s32.totalorder %v5206, %v251
            %vm5247 = vcmp.eq.s32.totalorder %v5202, %v252
            %vm5248 = vcmp.eq.s32.totalorder %v5206, %v252
            %vm5249 = vcmp.eq.s32.totalorder %v5202, %v253
            %vm5250 = vcmp.eq.s32.totalorder %v5206, %v253
            %vm5251 = vcmp.eq.s32.totalorder %v5202, %v254
            %vm5252 = vcmp.eq.s32.totalorder %v5206, %v254
            %vm5253 = vcmp.eq.s32.totalorder %v5202, %v255
            %vm5254 = vcmp.eq.s32.totalorder %v5206, %v255
            %vm5255 = vcmp.eq.s32.totalorder %v5202, %v256
            %vm5256 = vcmp.eq.s32.totalorder %v5206, %v256
            %vm5257 = vcmp.eq.s32.totalorder %v5202, %v257
            %vm5258 = vcmp.eq.s32.totalorder %v5206, %v257
            %vm5259 = vcmp.eq.s32.totalorder %v5202, %v258
            %vm5260 = vcmp.eq.s32.totalorder %v5206, %v258
            %vm5261 = vcmp.eq.s32.totalorder %v5202, %v259
            %vm5262 = vcmp.eq.s32.totalorder %v5206, %v259
            %vm5263 = vcmp.eq.s32.totalorder %v5202, %v260
            %vm5264 = vcmp.eq.s32.totalorder %v5206, %v260
            %vm5265 = vcmp.eq.s32.totalorder %v5202, %v261
            %vm5266 = vcmp.eq.s32.totalorder %v5206, %v261
            %vm5267 = vcmp.eq.s32.totalorder %v5202, %v262
            %vm5268 = vcmp.eq.s32.totalorder %v5206, %v262
            %vm5269 = vcmp.eq.s32.totalorder %v5202, %v263
            %vm5270 = vcmp.eq.s32.totalorder %v5206, %v263
            %v5272 = vlaneseq
            %v5273 = vshrl.u32 %v5272, 7
            %v5274 = vsub.s32 0, %v5273
            %v5275 = vrot.slane %v4613, %v5274
            %v5276 = vlaneseq
            %v5277 = vshrl.u32 %v5276, 7
            %v5278 = vsub.s32 1, %v5277
            %v5279 = vrot.slane %v4613, %v5278
            %v5282 = vsel %vm5207, %v5275, 0.0
            %v5283 = vsel %vm5208, %v5279, 0.0
            %v5284 = vsel %vm5209, %v5275, 0.0
            %v5285 = vsel %vm5210, %v5279, 0.0
            %v5286 = vsel %vm5211, %v5275, 0.0
            %v5287 = vsel %vm5212, %v5279, 0.0
            %v5288 = vsel %vm5213, %v5275, 0.0
            %v5289 = vsel %vm5214, %v5279, 0.0
            %v5290 = vsel %vm5215, %v5275, 0.0
            %v5291 = vsel %vm5216, %v5279, 0.0
            %v5292 = vsel %vm5217, %v5275, 0.0
            %v5293 = vsel %vm5218, %v5279, 0.0
            %v5294 = vsel %vm5219, %v5275, 0.0
            %v5295 = vsel %vm5220, %v5279, 0.0
            %v5296 = vsel %vm5221, %v5275, 0.0
            %v5297 = vsel %vm5222, %v5279, 0.0
            %v5298 = vsel %vm5223, %v5275, 0.0
            %v5299 = vsel %vm5224, %v5279, 0.0
            %v5300 = vsel %vm5225, %v5275, 0.0
            %v5301 = vsel %vm5226, %v5279, 0.0
            %v5302 = vsel %vm5227, %v5275, 0.0
            %v5303 = vsel %vm5228, %v5279, 0.0
            %v5304 = vsel %vm5229, %v5275, 0.0
            %v5305 = vsel %vm5230, %v5279, 0.0
            %v5306 = vsel %vm5231, %v5275, 0.0
            %v5307 = vsel %vm5232, %v5279, 0.0
            %v5308 = vsel %vm5233, %v5275, 0.0
            %v5309 = vsel %vm5234, %v5279, 0.0
            %v5310 = vsel %vm5235, %v5275, 0.0
            %v5311 = vsel %vm5236, %v5279, 0.0
            %v5312 = vsel %vm5237, %v5275, 0.0
            %v5313 = vsel %vm5238, %v5279, 0.0
            %v5314 = vsel %vm5239, %v5275, 0.0
            %v5315 = vsel %vm5240, %v5279, 0.0
            %v5316 = vsel %vm5241, %v5275, 0.0
            %v5317 = vsel %vm5242, %v5279, 0.0
            %v5318 = vsel %vm5243, %v5275, 0.0
            %v5319 = vsel %vm5244, %v5279, 0.0
            %v5320 = vsel %vm5245, %v5275, 0.0
            %v5321 = vsel %vm5246, %v5279, 0.0
            %v5322 = vsel %vm5247, %v5275, 0.0
            %v5323 = vsel %vm5248, %v5279, 0.0
            %v5324 = vsel %vm5249, %v5275, 0.0
            %v5325 = vsel %vm5250, %v5279, 0.0
            %v5326 = vsel %vm5251, %v5275, 0.0
            %v5327 = vsel %vm5252, %v5279, 0.0
            %v5328 = vsel %vm5253, %v5275, 0.0
            %v5329 = vsel %vm5254, %v5279, 0.0
            %v5330 = vsel %vm5255, %v5275, 0.0
            %v5331 = vsel %vm5256, %v5279, 0.0
            %v5332 = vsel %vm5257, %v5275, 0.0
            %v5333 = vsel %vm5258, %v5279, 0.0
            %v5334 = vsel %vm5259, %v5275, 0.0
            %v5335 = vsel %vm5260, %v5279, 0.0
            %v5336 = vsel %vm5261, %v5275, 0.0
            %v5337 = vsel %vm5262, %v5279, 0.0
            %v5338 = vsel %vm5263, %v5275, 0.0
            %v5339 = vsel %vm5264, %v5279, 0.0
            %v5340 = vsel %vm5265, %v5275, 0.0
            %v5341 = vsel %vm5266, %v5279, 0.0
            %v5342 = vsel %vm5267, %v5275, 0.0
            %v5343 = vsel %vm5268, %v5279, 0.0
            %v5344 = vsel %vm5269, %v5275, 0.0
            %v5345 = vsel %vm5270, %v5279, 0.0
            %v5346 = vadd.f32 %v5134, %v5282
            %v5347 = vadd.f32 %v5135, %v5283
            %v5348 = vadd.f32 %v5136, %v5284
            %v5349 = vadd.f32 %v5137, %v5285
            %v5350 = vadd.f32 %v5138, %v5286
            %v5351 = vadd.f32 %v5139, %v5287
            %v5352 = vadd.f32 %v5140, %v5288
            %v5353 = vadd.f32 %v5141, %v5289
            %v5354 = vadd.f32 %v5142, %v5290
            %v5355 = vadd.f32 %v5143, %v5291
            %v5356 = vadd.f32 %v5144, %v5292
            %v5357 = vadd.f32 %v5145, %v5293
            %v5358 = vadd.f32 %v5146, %v5294
            %v5359 = vadd.f32 %v5147, %v5295
            %v5360 = vadd.f32 %v5148, %v5296
            %v5361 = vadd.f32 %v5149, %v5297
            %v5362 = vadd.f32 %v5150, %v5298
            %v5363 = vadd.f32 %v5151, %v5299
            %v5364 = vadd.f32 %v5152, %v5300
            %v5365 = vadd.f32 %v5153, %v5301
            %v5366 = vadd.f32 %v5154, %v5302
            %v5367 = vadd.f32 %v5155, %v5303
            %v5368 = vadd.f32 %v5156, %v5304
            %v5369 = vadd.f32 %v5157, %v5305
            %v5370 = vadd.f32 %v5158, %v5306
            %v5371 = vadd.f32 %v5159, %v5307
            %v5372 = vadd.f32 %v5160, %v5308
            %v5373 = vadd.f32 %v5161, %v5309
            %v5374 = vadd.f32 %v5162, %v5310
            %v5375 = vadd.f32 %v5163, %v5311
            %v5376 = vadd.f32 %v5164, %v5312
            %v5377 = vadd.f32 %v5165, %v5313
            %v5378 = vadd.f32 %v5166, %v5314
            %v5379 = vadd.f32 %v5167, %v5315
            %v5380 = vadd.f32 %v5168, %v5316
            %v5381 = vadd.f32 %v5169, %v5317
            %v5382 = vadd.f32 %v5170, %v5318
            %v5383 = vadd.f32 %v5171, %v5319
            %v5384 = vadd.f32 %v5172, %v5320
            %v5385 = vadd.f32 %v5173, %v5321
            %v5386 = vadd.f32 %v5174, %v5322
            %v5387 = vadd.f32 %v5175, %v5323
            %v5388 = vadd.f32 %v5176, %v5324
            %v5389 = vadd.f32 %v5177, %v5325
            %v5390 = vadd.f32 %v5178, %v5326
            %v5391 = vadd.f32 %v5179, %v5327
            %v5392 = vadd.f32 %v5180, %v5328
            %v5393 = vadd.f32 %v5181, %v5329
            %v5394 = vadd.f32 %v5182, %v5330
            %v5395 = vadd.f32 %v5183, %v5331
            %v5396 = vadd.f32 %v5184, %v5332
            %v5397 = vadd.f32 %v5185, %v5333
            %v5398 = vadd.f32 %v5186, %v5334
            %v5399 = vadd.f32 %v5187, %v5335
            %v5400 = vadd.f32 %v5188, %v5336
            %v5401 = vadd.f32 %v5189, %v5337
            %v5402 = vadd.f32 %v5190, %v5338
            %v5403 = vadd.f32 %v5191, %v5339
            %v5404 = vadd.f32 %v5192, %v5340
            %v5405 = vadd.f32 %v5193, %v5341
            %v5406 = vadd.f32 %v5194, %v5342
            %v5407 = vadd.f32 %v5195, %v5343
            %v5408 = vadd.f32 %v5196, %v5344
            %v5409 = vadd.f32 %v5197, %v5345
            %s5410 = smul.u32 %s4617, 2
            %s5411 = smul.addr %s5410, 4
            %s5412 = scalar_lea.vmem %s226, %s5411 [#allocation11]
            %v5413 = vld [vmem:[%s5412] sm:$0xff]
            %v5415 = vcombine.high %v5413, %v5413
            %v5417 = vand.u32 %v5347, 4294901760
            %5418 = vmatprep.subr.mxu0 %v5417
            %v5419 = vand.u32 %v5346, 4294901760
            %5420 = vmatpush1.msra.mxu0 %v5419
            %v5421 = vand.u32 %v5349, 4294901760
            %5422 = vmatprep.subr.mxu0 %v5421
            %v5423 = vand.u32 %v5348, 4294901760
            %5424 = vmatpush1.msra.mxu0 %v5423
            %v5425 = vand.u32 %v5351, 4294901760
            %5426 = vmatprep.subr.mxu0 %v5425
            %v5427 = vand.u32 %v5350, 4294901760
            %5428 = vmatpush1.msra.mxu0 %v5427
            %v5429 = vand.u32 %v5353, 4294901760
            %5430 = vmatprep.subr.mxu0 %v5429
            %v5431 = vand.u32 %v5352, 4294901760
            %5432 = vmatpush1.msra.mxu0 %v5431
            %v5433 = vand.u32 %v5355, 4294901760
            %5434 = vmatprep.subr.mxu0 %v5433
            %v5435 = vand.u32 %v5354, 4294901760
            %5436 = vmatpush1.msra.mxu0 %v5435
            %v5437 = vand.u32 %v5357, 4294901760
            %5438 = vmatprep.subr.mxu0 %v5437
            %v5439 = vand.u32 %v5356, 4294901760
            %5440 = vmatpush1.msra.mxu0 %v5439
            %v5441 = vand.u32 %v5359, 4294901760
            %5442 = vmatprep.subr.mxu0 %v5441
            %v5443 = vand.u32 %v5358, 4294901760
            %5444 = vmatpush1.msra.mxu0 %v5443
            %v5445 = vand.u32 %v5361, 4294901760
            %5446 = vmatprep.subr.mxu0 %v5445
            %v5447 = vand.u32 %v5360, 4294901760
            %5448 = vmatpush1.msra.mxu0 %v5447
            %v5449 = vand.u32 %v5363, 4294901760
            %5450 = vmatprep.subr.mxu0 %v5449
            %v5451 = vand.u32 %v5362, 4294901760
            %5452 = vmatpush1.msra.mxu0 %v5451
            %v5453 = vand.u32 %v5365, 4294901760
            %5454 = vmatprep.subr.mxu0 %v5453
            %v5455 = vand.u32 %v5364, 4294901760
            %5456 = vmatpush1.msra.mxu0 %v5455
            %v5457 = vand.u32 %v5367, 4294901760
            %5458 = vmatprep.subr.mxu0 %v5457
            %v5459 = vand.u32 %v5366, 4294901760
            %5460 = vmatpush1.msra.mxu0 %v5459
            %v5461 = vand.u32 %v5369, 4294901760
            %5462 = vmatprep.subr.mxu0 %v5461
            %v5463 = vand.u32 %v5368, 4294901760
            %5464 = vmatpush1.msra.mxu0 %v5463
            %v5465 = vand.u32 %v5371, 4294901760
            %5466 = vmatprep.subr.mxu0 %v5465
            %v5467 = vand.u32 %v5370, 4294901760
            %5468 = vmatpush1.msra.mxu0 %v5467
            %v5469 = vand.u32 %v5373, 4294901760
            %5470 = vmatprep.subr.mxu0 %v5469
            %v5471 = vand.u32 %v5372, 4294901760
            %5472 = vmatpush1.msra.mxu0 %v5471
            %v5473 = vand.u32 %v5375, 4294901760
            %5474 = vmatprep.subr.mxu0 %v5473
            %v5475 = vand.u32 %v5374, 4294901760
            %5476 = vmatpush1.msra.mxu0 %v5475
            %v5477 = vand.u32 %v5377, 4294901760
            %5478 = vmatprep.subr.mxu0 %v5477
            %v5479 = vand.u32 %v5376, 4294901760
            %5480 = vmatpush1.msra.mxu0 %v5479
            %v5481 = vand.u32 %v5379, 4294901760
            %5482 = vmatprep.subr.mxu0 %v5481
            %v5483 = vand.u32 %v5378, 4294901760
            %5484 = vmatpush1.msra.mxu0 %v5483
            %v5485 = vand.u32 %v5381, 4294901760
            %5486 = vmatprep.subr.mxu0 %v5485
            %v5487 = vand.u32 %v5380, 4294901760
            %5488 = vmatpush1.msra.mxu0 %v5487
            %v5489 = vand.u32 %v5383, 4294901760
            %5490 = vmatprep.subr.mxu0 %v5489
            %v5491 = vand.u32 %v5382, 4294901760
            %5492 = vmatpush1.msra.mxu0 %v5491
            %v5493 = vand.u32 %v5385, 4294901760
            %5494 = vmatprep.subr.mxu0 %v5493
            %v5495 = vand.u32 %v5384, 4294901760
            %5496 = vmatpush1.msra.mxu0 %v5495
            %v5497 = vand.u32 %v5387, 4294901760
            %5498 = vmatprep.subr.mxu0 %v5497
            %v5499 = vand.u32 %v5386, 4294901760
            %5500 = vmatpush1.msra.mxu0 %v5499
            %v5501 = vand.u32 %v5389, 4294901760
            %5502 = vmatprep.subr.mxu0 %v5501
            %v5503 = vand.u32 %v5388, 4294901760
            %5504 = vmatpush1.msra.mxu0 %v5503
            %v5505 = vand.u32 %v5391, 4294901760
            %5506 = vmatprep.subr.mxu0 %v5505
            %v5507 = vand.u32 %v5390, 4294901760
            %5508 = vmatpush1.msra.mxu0 %v5507
            %v5509 = vand.u32 %v5393, 4294901760
            %5510 = vmatprep.subr.mxu0 %v5509
            %v5511 = vand.u32 %v5392, 4294901760
            %5512 = vmatpush1.msra.mxu0 %v5511
            %v5513 = vand.u32 %v5395, 4294901760
            %5514 = vmatprep.subr.mxu0 %v5513
            %v5515 = vand.u32 %v5394, 4294901760
            %5516 = vmatpush1.msra.mxu0 %v5515
            %v5517 = vand.u32 %v5397, 4294901760
            %5518 = vmatprep.subr.mxu0 %v5517
            %v5519 = vand.u32 %v5396, 4294901760
            %5520 = vmatpush1.msra.mxu0 %v5519
            %v5521 = vand.u32 %v5399, 4294901760
            %5522 = vmatprep.subr.mxu0 %v5521
            %v5523 = vand.u32 %v5398, 4294901760
            %5524 = vmatpush1.msra.mxu0 %v5523
            %v5525 = vand.u32 %v5401, 4294901760
            %5526 = vmatprep.subr.mxu0 %v5525
            %v5527 = vand.u32 %v5400, 4294901760
            %5528 = vmatpush1.msra.mxu0 %v5527
            %v5529 = vand.u32 %v5403, 4294901760
            %5530 = vmatprep.subr.mxu0 %v5529
            %v5531 = vand.u32 %v5402, 4294901760
            %5532 = vmatpush1.msra.mxu0 %v5531
            %v5533 = vand.u32 %v5405, 4294901760
            %5534 = vmatprep.subr.mxu0 %v5533
            %v5535 = vand.u32 %v5404, 4294901760
            %5536 = vmatpush1.msra.mxu0 %v5535
            %v5537 = vand.u32 %v5407, 4294901760
            %5538 = vmatprep.subr.mxu0 %v5537
            %v5539 = vand.u32 %v5406, 4294901760
            %5540 = vmatpush1.msra.mxu0 %v5539
            %v5541 = vand.u32 %v5409, 4294901760
            %5542 = vmatprep.subr.mxu0 %v5541
            %v5543 = vand.u32 %v5408, 4294901760
            %5544 = vmatpush1.msra.mxu0 %v5543
            %v5545 = vand.u32 %v5415, 4294901760
            %v5546 = vsub.f32 %v5415, %v5545
            %v5547 = vand.u32 %v5546, 4294901760
            %v5548 = vsub.f32 %v5546, %v5547
            %v5549 = vand.u32 %v5548, 4294901760
            %5550 = vmatprep.mubr.f32.mxu0 %v5549
            %v5551 = vand.u32 %v5413, 4294901760
            %v5552 = vsub.f32 %v5413, %v5551
            %v5553 = vand.u32 %v5552, 4294901760
            %v5554 = vsub.f32 %v5552, %v5553
            %v5555 = vand.u32 %v5554, 4294901760
            %5556 = vmatmul.mubr.f32.gmra.mrb[0].mxu0 %v5555
            %v5557 = vpop.f32.mrb[0].mxu0
            %v5558 = vadd.f32 0.0, %v5557
            %v5559 = vpop.f32.mrb[0].mxu0
            %v5560 = vadd.f32 0.0, %v5559
            %5561 = vdwg.mxu0
            %v5562 = vand.u32 %v5347, 4294901760
            %v5563 = vsub.f32 %v5347, %v5562
            %v5564 = vand.u32 %v5563, 4294901760
            %v5565 = vsub.f32 %v5563, %v5564
            %v5566 = vand.u32 %v5565, 4294901760
            %5567 = vmatprep.subr.mxu0 %v5566
            %v5568 = vand.u32 %v5346, 4294901760
            %v5569 = vsub.f32 %v5346, %v5568
            %v5570 = vand.u32 %v5569, 4294901760
            %v5571 = vsub.f32 %v5569, %v5570
            %v5572 = vand.u32 %v5571, 4294901760
            %5573 = vmatpush1.msra.mxu0 %v5572
            %v5574 = vand.u32 %v5349, 4294901760
            %v5575 = vsub.f32 %v5349, %v5574
            %v5576 = vand.u32 %v5575, 4294901760
            %v5577 = vsub.f32 %v5575, %v5576
            %v5578 = vand.u32 %v5577, 4294901760
            %5579 = vmatprep.subr.mxu0 %v5578
            %v5580 = vand.u32 %v5348, 4294901760
            %v5581 = vsub.f32 %v5348, %v5580
            %v5582 = vand.u32 %v5581, 4294901760
            %v5583 = vsub.f32 %v5581, %v5582
            %v5584 = vand.u32 %v5583, 4294901760
            %5585 = vmatpush1.msra.mxu0 %v5584
            %v5586 = vand.u32 %v5351, 4294901760
            %v5587 = vsub.f32 %v5351, %v5586
            %v5588 = vand.u32 %v5587, 4294901760
            %v5589 = vsub.f32 %v5587, %v5588
            %v5590 = vand.u32 %v5589, 4294901760
            %5591 = vmatprep.subr.mxu0 %v5590
            %v5592 = vand.u32 %v5350, 4294901760
            %v5593 = vsub.f32 %v5350, %v5592
            %v5594 = vand.u32 %v5593, 4294901760
            %v5595 = vsub.f32 %v5593, %v5594
            %v5596 = vand.u32 %v5595, 4294901760
            %5597 = vmatpush1.msra.mxu0 %v5596
            %v5598 = vand.u32 %v5353, 4294901760
            %v5599 = vsub.f32 %v5353, %v5598
            %v5600 = vand.u32 %v5599, 4294901760
            %v5601 = vsub.f32 %v5599, %v5600
            %v5602 = vand.u32 %v5601, 4294901760
            %5603 = vmatprep.subr.mxu0 %v5602
            %v5604 = vand.u32 %v5352, 4294901760
            %v5605 = vsub.f32 %v5352, %v5604
            %v5606 = vand.u32 %v5605, 4294901760
            %v5607 = vsub.f32 %v5605, %v5606
            %v5608 = vand.u32 %v5607, 4294901760
            %5609 = vmatpush1.msra.mxu0 %v5608
            %v5610 = vand.u32 %v5355, 4294901760
            %v5611 = vsub.f32 %v5355, %v5610
            %v5612 = vand.u32 %v5611, 4294901760
            %v5613 = vsub.f32 %v5611, %v5612
            %v5614 = vand.u32 %v5613, 4294901760
            %5615 = vmatprep.subr.mxu0 %v5614
            %v5616 = vand.u32 %v5354, 4294901760
            %v5617 = vsub.f32 %v5354, %v5616
            %v5618 = vand.u32 %v5617, 4294901760
            %v5619 = vsub.f32 %v5617, %v5618
            %v5620 = vand.u32 %v5619, 4294901760
            %5621 = vmatpush1.msra.mxu0 %v5620
            %v5622 = vand.u32 %v5357, 4294901760
            %v5623 = vsub.f32 %v5357, %v5622
            %v5624 = vand.u32 %v5623, 4294901760
            %v5625 = vsub.f32 %v5623, %v5624
            %v5626 = vand.u32 %v5625, 4294901760
            %5627 = vmatprep.subr.mxu0 %v5626
            %v5628 = vand.u32 %v5356, 4294901760
            %v5629 = vsub.f32 %v5356, %v5628
            %v5630 = vand.u32 %v5629, 4294901760
            %v5631 = vsub.f32 %v5629, %v5630
            %v5632 = vand.u32 %v5631, 4294901760
            %5633 = vmatpush1.msra.mxu0 %v5632
            %v5634 = vand.u32 %v5359, 4294901760
            %v5635 = vsub.f32 %v5359, %v5634
            %v5636 = vand.u32 %v5635, 4294901760
            %v5637 = vsub.f32 %v5635, %v5636
            %v5638 = vand.u32 %v5637, 4294901760
            %5639 = vmatprep.subr.mxu0 %v5638
            %v5640 = vand.u32 %v5358, 4294901760
            %v5641 = vsub.f32 %v5358, %v5640
            %v5642 = vand.u32 %v5641, 4294901760
            %v5643 = vsub.f32 %v5641, %v5642
            %v5644 = vand.u32 %v5643, 4294901760
            %5645 = vmatpush1.msra.mxu0 %v5644
            %v5646 = vand.u32 %v5361, 4294901760
            %v5647 = vsub.f32 %v5361, %v5646
            %v5648 = vand.u32 %v5647, 4294901760
            %v5649 = vsub.f32 %v5647, %v5648
            %v5650 = vand.u32 %v5649, 4294901760
            %5651 = vmatprep.subr.mxu0 %v5650
            %v5652 = vand.u32 %v5360, 4294901760
            %v5653 = vsub.f32 %v5360, %v5652
            %v5654 = vand.u32 %v5653, 4294901760
            %v5655 = vsub.f32 %v5653, %v5654
            %v5656 = vand.u32 %v5655, 4294901760
            %5657 = vmatpush1.msra.mxu0 %v5656
            %v5658 = vand.u32 %v5363, 4294901760
            %v5659 = vsub.f32 %v5363, %v5658
            %v5660 = vand.u32 %v5659, 4294901760
            %v5661 = vsub.f32 %v5659, %v5660
            %v5662 = vand.u32 %v5661, 4294901760
            %5663 = vmatprep.subr.mxu0 %v5662
            %v5664 = vand.u32 %v5362, 4294901760
            %v5665 = vsub.f32 %v5362, %v5664
            %v5666 = vand.u32 %v5665, 4294901760
            %v5667 = vsub.f32 %v5665, %v5666
            %v5668 = vand.u32 %v5667, 4294901760
            %5669 = vmatpush1.msra.mxu0 %v5668
            %v5670 = vand.u32 %v5365, 4294901760
            %v5671 = vsub.f32 %v5365, %v5670
            %v5672 = vand.u32 %v5671, 4294901760
            %v5673 = vsub.f32 %v5671, %v5672
            %v5674 = vand.u32 %v5673, 4294901760
            %5675 = vmatprep.subr.mxu0 %v5674
            %v5676 = vand.u32 %v5364, 4294901760
            %v5677 = vsub.f32 %v5364, %v5676
            %v5678 = vand.u32 %v5677, 4294901760
            %v5679 = vsub.f32 %v5677, %v5678
            %v5680 = vand.u32 %v5679, 4294901760
            %5681 = vmatpush1.msra.mxu0 %v5680
            %v5682 = vand.u32 %v5367, 4294901760
            %v5683 = vsub.f32 %v5367, %v5682
            %v5684 = vand.u32 %v5683, 4294901760
            %v5685 = vsub.f32 %v5683, %v5684
            %v5686 = vand.u32 %v5685, 4294901760
            %5687 = vmatprep.subr.mxu0 %v5686
            %v5688 = vand.u32 %v5366, 4294901760
            %v5689 = vsub.f32 %v5366, %v5688
            %v5690 = vand.u32 %v5689, 4294901760
            %v5691 = vsub.f32 %v5689, %v5690
            %v5692 = vand.u32 %v5691, 4294901760
            %5693 = vmatpush1.msra.mxu0 %v5692
            %v5694 = vand.u32 %v5369, 4294901760
            %v5695 = vsub.f32 %v5369, %v5694
            %v5696 = vand.u32 %v5695, 4294901760
            %v5697 = vsub.f32 %v5695, %v5696
            %v5698 = vand.u32 %v5697, 4294901760
            %5699 = vmatprep.subr.mxu0 %v5698
            %v5700 = vand.u32 %v5368, 4294901760
            %v5701 = vsub.f32 %v5368, %v5700
            %v5702 = vand.u32 %v5701, 4294901760
            %v5703 = vsub.f32 %v5701, %v5702
            %v5704 = vand.u32 %v5703, 4294901760
            %5705 = vmatpush1.msra.mxu0 %v5704
            %v5706 = vand.u32 %v5371, 4294901760
            %v5707 = vsub.f32 %v5371, %v5706
            %v5708 = vand.u32 %v5707, 4294901760
            %v5709 = vsub.f32 %v5707, %v5708
            %v5710 = vand.u32 %v5709, 4294901760
            %5711 = vmatprep.subr.mxu0 %v5710
            %v5712 = vand.u32 %v5370, 4294901760
            %v5713 = vsub.f32 %v5370, %v5712
            %v5714 = vand.u32 %v5713, 4294901760
            %v5715 = vsub.f32 %v5713, %v5714
            %v5716 = vand.u32 %v5715, 4294901760
            %5717 = vmatpush1.msra.mxu0 %v5716
            %v5718 = vand.u32 %v5373, 4294901760
            %v5719 = vsub.f32 %v5373, %v5718
            %v5720 = vand.u32 %v5719, 4294901760
            %v5721 = vsub.f32 %v5719, %v5720
            %v5722 = vand.u32 %v5721, 4294901760
            %5723 = vmatprep.subr.mxu0 %v5722
            %v5724 = vand.u32 %v5372, 4294901760
            %v5725 = vsub.f32 %v5372, %v5724
            %v5726 = vand.u32 %v5725, 4294901760
            %v5727 = vsub.f32 %v5725, %v5726
            %v5728 = vand.u32 %v5727, 4294901760
            %5729 = vmatpush1.msra.mxu0 %v5728
            %v5730 = vand.u32 %v5375, 4294901760
            %v5731 = vsub.f32 %v5375, %v5730
            %v5732 = vand.u32 %v5731, 4294901760
            %v5733 = vsub.f32 %v5731, %v5732
            %v5734 = vand.u32 %v5733, 4294901760
            %5735 = vmatprep.subr.mxu0 %v5734
            %v5736 = vand.u32 %v5374, 4294901760
            %v5737 = vsub.f32 %v5374, %v5736
            %v5738 = vand.u32 %v5737, 4294901760
            %v5739 = vsub.f32 %v5737, %v5738
            %v5740 = vand.u32 %v5739, 4294901760
            %5741 = vmatpush1.msra.mxu0 %v5740
            %v5742 = vand.u32 %v5377, 4294901760
            %v5743 = vsub.f32 %v5377, %v5742
            %v5744 = vand.u32 %v5743, 4294901760
            %v5745 = vsub.f32 %v5743, %v5744
            %v5746 = vand.u32 %v5745, 4294901760
            %5747 = vmatprep.subr.mxu0 %v5746
            %v5748 = vand.u32 %v5376, 4294901760
            %v5749 = vsub.f32 %v5376, %v5748
            %v5750 = vand.u32 %v5749, 4294901760
            %v5751 = vsub.f32 %v5749, %v5750
            %v5752 = vand.u32 %v5751, 4294901760
            %5753 = vmatpush1.msra.mxu0 %v5752
            %v5754 = vand.u32 %v5379, 4294901760
            %v5755 = vsub.f32 %v5379, %v5754
            %v5756 = vand.u32 %v5755, 4294901760
            %v5757 = vsub.f32 %v5755, %v5756
            %v5758 = vand.u32 %v5757, 4294901760
            %5759 = vmatprep.subr.mxu0 %v5758
            %v5760 = vand.u32 %v5378, 4294901760
            %v5761 = vsub.f32 %v5378, %v5760
            %v5762 = vand.u32 %v5761, 4294901760
            %v5763 = vsub.f32 %v5761, %v5762
            %v5764 = vand.u32 %v5763, 4294901760
            %5765 = vmatpush1.msra.mxu0 %v5764
            %v5766 = vand.u32 %v5381, 4294901760
            %v5767 = vsub.f32 %v5381, %v5766
            %v5768 = vand.u32 %v5767, 4294901760
            %v5769 = vsub.f32 %v5767, %v5768
            %v5770 = vand.u32 %v5769, 4294901760
            %5771 = vmatprep.subr.mxu0 %v5770
            %v5772 = vand.u32 %v5380, 4294901760
            %v5773 = vsub.f32 %v5380, %v5772
            %v5774 = vand.u32 %v5773, 4294901760
            %v5775 = vsub.f32 %v5773, %v5774
            %v5776 = vand.u32 %v5775, 4294901760
            %5777 = vmatpush1.msra.mxu0 %v5776
            %v5778 = vand.u32 %v5383, 4294901760
            %v5779 = vsub.f32 %v5383, %v5778
            %v5780 = vand.u32 %v5779, 4294901760
            %v5781 = vsub.f32 %v5779, %v5780
            %v5782 = vand.u32 %v5781, 4294901760
            %5783 = vmatprep.subr.mxu0 %v5782
            %v5784 = vand.u32 %v5382, 4294901760
            %v5785 = vsub.f32 %v5382, %v5784
            %v5786 = vand.u32 %v5785, 4294901760
            %v5787 = vsub.f32 %v5785, %v5786
            %v5788 = vand.u32 %v5787, 4294901760
            %5789 = vmatpush1.msra.mxu0 %v5788
            %v5790 = vand.u32 %v5385, 4294901760
            %v5791 = vsub.f32 %v5385, %v5790
            %v5792 = vand.u32 %v5791, 4294901760
            %v5793 = vsub.f32 %v5791, %v5792
            %v5794 = vand.u32 %v5793, 4294901760
            %5795 = vmatprep.subr.mxu0 %v5794
            %v5796 = vand.u32 %v5384, 4294901760
            %v5797 = vsub.f32 %v5384, %v5796
            %v5798 = vand.u32 %v5797, 4294901760
            %v5799 = vsub.f32 %v5797, %v5798
            %v5800 = vand.u32 %v5799, 4294901760
            %5801 = vmatpush1.msra.mxu0 %v5800
            %v5802 = vand.u32 %v5387, 4294901760
            %v5803 = vsub.f32 %v5387, %v5802
            %v5804 = vand.u32 %v5803, 4294901760
            %v5805 = vsub.f32 %v5803, %v5804
            %v5806 = vand.u32 %v5805, 4294901760
            %5807 = vmatprep.subr.mxu0 %v5806
            %v5808 = vand.u32 %v5386, 4294901760
            %v5809 = vsub.f32 %v5386, %v5808
            %v5810 = vand.u32 %v5809, 4294901760
            %v5811 = vsub.f32 %v5809, %v5810
            %v5812 = vand.u32 %v5811, 4294901760
            %5813 = vmatpush1.msra.mxu0 %v5812
            %v5814 = vand.u32 %v5389, 4294901760
            %v5815 = vsub.f32 %v5389, %v5814
            %v5816 = vand.u32 %v5815, 4294901760
            %v5817 = vsub.f32 %v5815, %v5816
            %v5818 = vand.u32 %v5817, 4294901760
            %5819 = vmatprep.subr.mxu0 %v5818
            %v5820 = vand.u32 %v5388, 4294901760
            %v5821 = vsub.f32 %v5388, %v5820
            %v5822 = vand.u32 %v5821, 4294901760
            %v5823 = vsub.f32 %v5821, %v5822
            %v5824 = vand.u32 %v5823, 4294901760
            %5825 = vmatpush1.msra.mxu0 %v5824
            %v5826 = vand.u32 %v5391, 4294901760
            %v5827 = vsub.f32 %v5391, %v5826
            %v5828 = vand.u32 %v5827, 4294901760
            %v5829 = vsub.f32 %v5827, %v5828
            %v5830 = vand.u32 %v5829, 4294901760
            %5831 = vmatprep.subr.mxu0 %v5830
            %v5832 = vand.u32 %v5390, 4294901760
            %v5833 = vsub.f32 %v5390, %v5832
            %v5834 = vand.u32 %v5833, 4294901760
            %v5835 = vsub.f32 %v5833, %v5834
            %v5836 = vand.u32 %v5835, 4294901760
            %5837 = vmatpush1.msra.mxu0 %v5836
            %v5838 = vand.u32 %v5393, 4294901760
            %v5839 = vsub.f32 %v5393, %v5838
            %v5840 = vand.u32 %v5839, 4294901760
            %v5841 = vsub.f32 %v5839, %v5840
            %v5842 = vand.u32 %v5841, 4294901760
            %5843 = vmatprep.subr.mxu0 %v5842
            %v5844 = vand.u32 %v5392, 4294901760
            %v5845 = vsub.f32 %v5392, %v5844
            %v5846 = vand.u32 %v5845, 4294901760
            %v5847 = vsub.f32 %v5845, %v5846
            %v5848 = vand.u32 %v5847, 4294901760
            %5849 = vmatpush1.msra.mxu0 %v5848
            %v5850 = vand.u32 %v5395, 4294901760
            %v5851 = vsub.f32 %v5395, %v5850
            %v5852 = vand.u32 %v5851, 4294901760
            %v5853 = vsub.f32 %v5851, %v5852
            %v5854 = vand.u32 %v5853, 4294901760
            %5855 = vmatprep.subr.mxu0 %v5854
            %v5856 = vand.u32 %v5394, 4294901760
            %v5857 = vsub.f32 %v5394, %v5856
            %v5858 = vand.u32 %v5857, 4294901760
            %v5859 = vsub.f32 %v5857, %v5858
            %v5860 = vand.u32 %v5859, 4294901760
            %5861 = vmatpush1.msra.mxu0 %v5860
            %v5862 = vand.u32 %v5397, 4294901760
            %v5863 = vsub.f32 %v5397, %v5862
            %v5864 = vand.u32 %v5863, 4294901760
            %v5865 = vsub.f32 %v5863, %v5864
            %v5866 = vand.u32 %v5865, 4294901760
            %5867 = vmatprep.subr.mxu0 %v5866
            %v5868 = vand.u32 %v5396, 4294901760
            %v5869 = vsub.f32 %v5396, %v5868
            %v5870 = vand.u32 %v5869, 4294901760
            %v5871 = vsub.f32 %v5869, %v5870
            %v5872 = vand.u32 %v5871, 4294901760
            %5873 = vmatpush1.msra.mxu0 %v5872
            %v5874 = vand.u32 %v5399, 4294901760
            %v5875 = vsub.f32 %v5399, %v5874
            %v5876 = vand.u32 %v5875, 4294901760
            %v5877 = vsub.f32 %v5875, %v5876
            %v5878 = vand.u32 %v5877, 4294901760
            %5879 = vmatprep.subr.mxu0 %v5878
            %v5880 = vand.u32 %v5398, 4294901760
            %v5881 = vsub.f32 %v5398, %v5880
            %v5882 = vand.u32 %v5881, 4294901760
            %v5883 = vsub.f32 %v5881, %v5882
            %v5884 = vand.u32 %v5883, 4294901760
            %5885 = vmatpush1.msra.mxu0 %v5884
            %v5886 = vand.u32 %v5401, 4294901760
            %v5887 = vsub.f32 %v5401, %v5886
            %v5888 = vand.u32 %v5887, 4294901760
            %v5889 = vsub.f32 %v5887, %v5888
            %v5890 = vand.u32 %v5889, 4294901760
            %5891 = vmatprep.subr.mxu0 %v5890
            %v5892 = vand.u32 %v5400, 4294901760
            %v5893 = vsub.f32 %v5400, %v5892
            %v5894 = vand.u32 %v5893, 4294901760
            %v5895 = vsub.f32 %v5893, %v5894
            %v5896 = vand.u32 %v5895, 4294901760
            %5897 = vmatpush1.msra.mxu0 %v5896
            %v5898 = vand.u32 %v5403, 4294901760
            %v5899 = vsub.f32 %v5403, %v5898
            %v5900 = vand.u32 %v5899, 4294901760
            %v5901 = vsub.f32 %v5899, %v5900
            %v5902 = vand.u32 %v5901, 4294901760
            %5903 = vmatprep.subr.mxu0 %v5902
            %v5904 = vand.u32 %v5402, 4294901760
            %v5905 = vsub.f32 %v5402, %v5904
            %v5906 = vand.u32 %v5905, 4294901760
            %v5907 = vsub.f32 %v5905, %v5906
            %v5908 = vand.u32 %v5907, 4294901760
            %5909 = vmatpush1.msra.mxu0 %v5908
            %v5910 = vand.u32 %v5405, 4294901760
            %v5911 = vsub.f32 %v5405, %v5910
            %v5912 = vand.u32 %v5911, 4294901760
            %v5913 = vsub.f32 %v5911, %v5912
            %v5914 = vand.u32 %v5913, 4294901760
            %5915 = vmatprep.subr.mxu0 %v5914
            %v5916 = vand.u32 %v5404, 4294901760
            %v5917 = vsub.f32 %v5404, %v5916
            %v5918 = vand.u32 %v5917, 4294901760
            %v5919 = vsub.f32 %v5917, %v5918
            %v5920 = vand.u32 %v5919, 4294901760
            %5921 = vmatpush1.msra.mxu0 %v5920
            %v5922 = vand.u32 %v5407, 4294901760
            %v5923 = vsub.f32 %v5407, %v5922
            %v5924 = vand.u32 %v5923, 4294901760
            %v5925 = vsub.f32 %v5923, %v5924
            %v5926 = vand.u32 %v5925, 4294901760
            %5927 = vmatprep.subr.mxu0 %v5926
            %v5928 = vand.u32 %v5406, 4294901760
            %v5929 = vsub.f32 %v5406, %v5928
            %v5930 = vand.u32 %v5929, 4294901760
            %v5931 = vsub.f32 %v5929, %v5930
            %v5932 = vand.u32 %v5931, 4294901760
            %5933 = vmatpush1.msra.mxu0 %v5932
            %v5934 = vand.u32 %v5409, 4294901760
            %v5935 = vsub.f32 %v5409, %v5934
            %v5936 = vand.u32 %v5935, 4294901760
            %v5937 = vsub.f32 %v5935, %v5936
            %v5938 = vand.u32 %v5937, 4294901760
            %5939 = vmatprep.subr.mxu0 %v5938
            %v5940 = vand.u32 %v5408, 4294901760
            %v5941 = vsub.f32 %v5408, %v5940
            %v5942 = vand.u32 %v5941, 4294901760
            %v5943 = vsub.f32 %v5941, %v5942
            %v5944 = vand.u32 %v5943, 4294901760
            %5945 = vmatpush1.msra.mxu0 %v5944
            %v5946 = vand.u32 %v5415, 4294901760
            %5947 = vmatprep.mubr.f32.mxu0 %v5946
            %v5948 = vand.u32 %v5413, 4294901760
            %5949 = vmatmul.mubr.f32.gmra.mrb[0].mxu0 %v5948
            %v5950 = vpop.f32.mrb[0].mxu0
            %v5951 = vadd.f32 %v5558, %v5950
            %v5952 = vpop.f32.mrb[0].mxu0
            %v5953 = vadd.f32 %v5560, %v5952
            %5954 = vdwg.mxu0
            %v5955 = vand.u32 %v5347, 4294901760
            %v5956 = vsub.f32 %v5347, %v5955
            %5957 = vmatprep.subr.mxu0 %v5956
            %v5958 = vand.u32 %v5346, 4294901760
            %v5959 = vsub.f32 %v5346, %v5958
            %5960 = vmatpush1.msra.mxu0 %v5959
            %v5961 = vand.u32 %v5349, 4294901760
            %v5962 = vsub.f32 %v5349, %v5961
            %5963 = vmatprep.subr.mxu0 %v5962
            %v5964 = vand.u32 %v5348, 4294901760
            %v5965 = vsub.f32 %v5348, %v5964
            %5966 = vmatpush1.msra.mxu0 %v5965
            %v5967 = vand.u32 %v5351, 4294901760
            %v5968 = vsub.f32 %v5351, %v5967
            %5969 = vmatprep.subr.mxu0 %v5968
            %v5970 = vand.u32 %v5350, 4294901760
            %v5971 = vsub.f32 %v5350, %v5970
            %5972 = vmatpush1.msra.mxu0 %v5971
            %v5973 = vand.u32 %v5353, 4294901760
            %v5974 = vsub.f32 %v5353, %v5973
            %5975 = vmatprep.subr.mxu0 %v5974
            %v5976 = vand.u32 %v5352, 4294901760
            %v5977 = vsub.f32 %v5352, %v5976
            %5978 = vmatpush1.msra.mxu0 %v5977
            %v5979 = vand.u32 %v5355, 4294901760
            %v5980 = vsub.f32 %v5355, %v5979
            %5981 = vmatprep.subr.mxu0 %v5980
            %v5982 = vand.u32 %v5354, 4294901760
            %v5983 = vsub.f32 %v5354, %v5982
            %5984 = vmatpush1.msra.mxu0 %v5983
            %v5985 = vand.u32 %v5357, 4294901760
            %v5986 = vsub.f32 %v5357, %v5985
            %5987 = vmatprep.subr.mxu0 %v5986
            %v5988 = vand.u32 %v5356, 4294901760
            %v5989 = vsub.f32 %v5356, %v5988
            %5990 = vmatpush1.msra.mxu0 %v5989
            %v5991 = vand.u32 %v5359, 4294901760
            %v5992 = vsub.f32 %v5359, %v5991
            %5993 = vmatprep.subr.mxu0 %v5992
            %v5994 = vand.u32 %v5358, 4294901760
            %v5995 = vsub.f32 %v5358, %v5994
            %5996 = vmatpush1.msra.mxu0 %v5995
            %v5997 = vand.u32 %v5361, 4294901760
            %v5998 = vsub.f32 %v5361, %v5997
            %5999 = vmatprep.subr.mxu0 %v5998
            %v6000 = vand.u32 %v5360, 4294901760
            %v6001 = vsub.f32 %v5360, %v6000
            %6002 = vmatpush1.msra.mxu0 %v6001
            %v6003 = vand.u32 %v5363, 4294901760
            %v6004 = vsub.f32 %v5363, %v6003
            %6005 = vmatprep.subr.mxu0 %v6004
            %v6006 = vand.u32 %v5362, 4294901760
            %v6007 = vsub.f32 %v5362, %v6006
            %6008 = vmatpush1.msra.mxu0 %v6007
            %v6009 = vand.u32 %v5365, 4294901760
            %v6010 = vsub.f32 %v5365, %v6009
            %6011 = vmatprep.subr.mxu0 %v6010
            %v6012 = vand.u32 %v5364, 4294901760
            %v6013 = vsub.f32 %v5364, %v6012
            %6014 = vmatpush1.msra.mxu0 %v6013
            %v6015 = vand.u32 %v5367, 4294901760
            %v6016 = vsub.f32 %v5367, %v6015
            %6017 = vmatprep.subr.mxu0 %v6016
            %v6018 = vand.u32 %v5366, 4294901760
            %v6019 = vsub.f32 %v5366, %v6018
            %6020 = vmatpush1.msra.mxu0 %v6019
            %v6021 = vand.u32 %v5369, 4294901760
            %v6022 = vsub.f32 %v5369, %v6021
            %6023 = vmatprep.subr.mxu0 %v6022
            %v6024 = vand.u32 %v5368, 4294901760
            %v6025 = vsub.f32 %v5368, %v6024
            %6026 = vmatpush1.msra.mxu0 %v6025
            %v6027 = vand.u32 %v5371, 4294901760
            %v6028 = vsub.f32 %v5371, %v6027
            %6029 = vmatprep.subr.mxu0 %v6028
            %v6030 = vand.u32 %v5370, 4294901760
            %v6031 = vsub.f32 %v5370, %v6030
            %6032 = vmatpush1.msra.mxu0 %v6031
            %v6033 = vand.u32 %v5373, 4294901760
            %v6034 = vsub.f32 %v5373, %v6033
            %6035 = vmatprep.subr.mxu0 %v6034
            %v6036 = vand.u32 %v5372, 4294901760
            %v6037 = vsub.f32 %v5372, %v6036
            %6038 = vmatpush1.msra.mxu0 %v6037
            %v6039 = vand.u32 %v5375, 4294901760
            %v6040 = vsub.f32 %v5375, %v6039
            %6041 = vmatprep.subr.mxu0 %v6040
            %v6042 = vand.u32 %v5374, 4294901760
            %v6043 = vsub.f32 %v5374, %v6042
            %6044 = vmatpush1.msra.mxu0 %v6043
            %v6045 = vand.u32 %v5377, 4294901760
            %v6046 = vsub.f32 %v5377, %v6045
            %6047 = vmatprep.subr.mxu0 %v6046
            %v6048 = vand.u32 %v5376, 4294901760
            %v6049 = vsub.f32 %v5376, %v6048
            %6050 = vmatpush1.msra.mxu0 %v6049
            %v6051 = vand.u32 %v5379, 4294901760
            %v6052 = vsub.f32 %v5379, %v6051
            %6053 = vmatprep.subr.mxu0 %v6052
            %v6054 = vand.u32 %v5378, 4294901760
            %v6055 = vsub.f32 %v5378, %v6054
            %6056 = vmatpush1.msra.mxu0 %v6055
            %v6057 = vand.u32 %v5381, 4294901760
            %v6058 = vsub.f32 %v5381, %v6057
            %6059 = vmatprep.subr.mxu0 %v6058
            %v6060 = vand.u32 %v5380, 4294901760
            %v6061 = vsub.f32 %v5380, %v6060
            %6062 = vmatpush1.msra.mxu0 %v6061
            %v6063 = vand.u32 %v5383, 4294901760
            %v6064 = vsub.f32 %v5383, %v6063
            %6065 = vmatprep.subr.mxu0 %v6064
            %v6066 = vand.u32 %v5382, 4294901760
            %v6067 = vsub.f32 %v5382, %v6066
            %6068 = vmatpush1.msra.mxu0 %v6067
            %v6069 = vand.u32 %v5385, 4294901760
            %v6070 = vsub.f32 %v5385, %v6069
            %6071 = vmatprep.subr.mxu0 %v6070
            %v6072 = vand.u32 %v5384, 4294901760
            %v6073 = vsub.f32 %v5384, %v6072
            %6074 = vmatpush1.msra.mxu0 %v6073
            %v6075 = vand.u32 %v5387, 4294901760
            %v6076 = vsub.f32 %v5387, %v6075
            %6077 = vmatprep.subr.mxu0 %v6076
            %v6078 = vand.u32 %v5386, 4294901760
            %v6079 = vsub.f32 %v5386, %v6078
            %6080 = vmatpush1.msra.mxu0 %v6079
            %v6081 = vand.u32 %v5389, 4294901760
            %v6082 = vsub.f32 %v5389, %v6081
            %6083 = vmatprep.subr.mxu0 %v6082
            %v6084 = vand.u32 %v5388, 4294901760
            %v6085 = vsub.f32 %v5388, %v6084
            %6086 = vmatpush1.msra.mxu0 %v6085
            %v6087 = vand.u32 %v5391, 4294901760
            %v6088 = vsub.f32 %v5391, %v6087
            %6089 = vmatprep.subr.mxu0 %v6088
            %v6090 = vand.u32 %v5390, 4294901760
            %v6091 = vsub.f32 %v5390, %v6090
            %6092 = vmatpush1.msra.mxu0 %v6091
            %v6093 = vand.u32 %v5393, 4294901760
            %v6094 = vsub.f32 %v5393, %v6093
            %6095 = vmatprep.subr.mxu0 %v6094
            %v6096 = vand.u32 %v5392, 4294901760
            %v6097 = vsub.f32 %v5392, %v6096
            %6098 = vmatpush1.msra.mxu0 %v6097
            %v6099 = vand.u32 %v5395, 4294901760
            %v6100 = vsub.f32 %v5395, %v6099
            %6101 = vmatprep.subr.mxu0 %v6100
            %v6102 = vand.u32 %v5394, 4294901760
            %v6103 = vsub.f32 %v5394, %v6102
            %6104 = vmatpush1.msra.mxu0 %v6103
            %v6105 = vand.u32 %v5397, 4294901760
            %v6106 = vsub.f32 %v5397, %v6105
            %6107 = vmatprep.subr.mxu0 %v6106
            %v6108 = vand.u32 %v5396, 4294901760
            %v6109 = vsub.f32 %v5396, %v6108
            %6110 = vmatpush1.msra.mxu0 %v6109
            %v6111 = vand.u32 %v5399, 4294901760
            %v6112 = vsub.f32 %v5399, %v6111
            %6113 = vmatprep.subr.mxu0 %v6112
            %v6114 = vand.u32 %v5398, 4294901760
            %v6115 = vsub.f32 %v5398, %v6114
            %6116 = vmatpush1.msra.mxu0 %v6115
            %v6117 = vand.u32 %v5401, 4294901760
            %v6118 = vsub.f32 %v5401, %v6117
            %6119 = vmatprep.subr.mxu0 %v6118
            %v6120 = vand.u32 %v5400, 4294901760
            %v6121 = vsub.f32 %v5400, %v6120
            %6122 = vmatpush1.msra.mxu0 %v6121
            %v6123 = vand.u32 %v5403, 4294901760
            %v6124 = vsub.f32 %v5403, %v6123
            %6125 = vmatprep.subr.mxu0 %v6124
            %v6126 = vand.u32 %v5402, 4294901760
            %v6127 = vsub.f32 %v5402, %v6126
            %6128 = vmatpush1.msra.mxu0 %v6127
            %v6129 = vand.u32 %v5405, 4294901760
            %v6130 = vsub.f32 %v5405, %v6129
            %6131 = vmatprep.subr.mxu0 %v6130
            %v6132 = vand.u32 %v5404, 4294901760
            %v6133 = vsub.f32 %v5404, %v6132
            %6134 = vmatpush1.msra.mxu0 %v6133
            %v6135 = vand.u32 %v5407, 4294901760
            %v6136 = vsub.f32 %v5407, %v6135
            %6137 = vmatprep.subr.mxu0 %v6136
            %v6138 = vand.u32 %v5406, 4294901760
            %v6139 = vsub.f32 %v5406, %v6138
            %6140 = vmatpush1.msra.mxu0 %v6139
            %v6141 = vand.u32 %v5409, 4294901760
            %v6142 = vsub.f32 %v5409, %v6141
            %6143 = vmatprep.subr.mxu0 %v6142
            %v6144 = vand.u32 %v5408, 4294901760
            %v6145 = vsub.f32 %v5408, %v6144
            %6146 = vmatpush1.msra.mxu0 %v6145
            %v6147 = vand.u32 %v5415, 4294901760
            %v6148 = vsub.f32 %v5415, %v6147
            %6149 = vmatprep.mubr.f32.mxu0 %v6148
            %v6150 = vand.u32 %v5413, 4294901760
            %v6151 = vsub.f32 %v5413, %v6150
            %6152 = vmatmul.mubr.f32.gmra.mrb[0].mxu0 %v6151
            %v6153 = vpop.f32.mrb[0].mxu0
            %v6154 = vadd.f32 %v5951, %v6153
            %v6155 = vpop.f32.mrb[0].mxu0
            %v6156 = vadd.f32 %v5953, %v6155
            %6157 = vdwg.mxu0
            %v6158 = vand.u32 %v5347, 4294901760
            %6159 = vmatprep.subr.mxu0 %v6158
            %v6160 = vand.u32 %v5346, 4294901760
            %6161 = vmatpush1.msra.mxu0 %v6160
            %v6162 = vand.u32 %v5349, 4294901760
            %6163 = vmatprep.subr.mxu0 %v6162
            %v6164 = vand.u32 %v5348, 4294901760
            %6165 = vmatpush1.msra.mxu0 %v6164
            %v6166 = vand.u32 %v5351, 4294901760
            %6167 = vmatprep.subr.mxu0 %v6166
            %v6168 = vand.u32 %v5350, 4294901760
            %6169 = vmatpush1.msra.mxu0 %v6168
            %v6170 = vand.u32 %v5353, 4294901760
            %6171 = vmatprep.subr.mxu0 %v6170
            %v6172 = vand.u32 %v5352, 4294901760
            %6173 = vmatpush1.msra.mxu0 %v6172
            %v6174 = vand.u32 %v5355, 4294901760
            %6175 = vmatprep.subr.mxu0 %v6174
            %v6176 = vand.u32 %v5354, 4294901760
            %6177 = vmatpush1.msra.mxu0 %v6176
            %v6178 = vand.u32 %v5357, 4294901760
            %6179 = vmatprep.subr.mxu0 %v6178
            %v6180 = vand.u32 %v5356, 4294901760
            %6181 = vmatpush1.msra.mxu0 %v6180
            %v6182 = vand.u32 %v5359, 4294901760
            %6183 = vmatprep.subr.mxu0 %v6182
            %v6184 = vand.u32 %v5358, 4294901760
            %6185 = vmatpush1.msra.mxu0 %v6184
            %v6186 = vand.u32 %v5361, 4294901760
            %6187 = vmatprep.subr.mxu0 %v6186
            %v6188 = vand.u32 %v5360, 4294901760
            %6189 = vmatpush1.msra.mxu0 %v6188
            %v6190 = vand.u32 %v5363, 4294901760
            %6191 = vmatprep.subr.mxu0 %v6190
            %v6192 = vand.u32 %v5362, 4294901760
            %6193 = vmatpush1.msra.mxu0 %v6192
            %v6194 = vand.u32 %v5365, 4294901760
            %6195 = vmatprep.subr.mxu0 %v6194
            %v6196 = vand.u32 %v5364, 4294901760
            %6197 = vmatpush1.msra.mxu0 %v6196
            %v6198 = vand.u32 %v5367, 4294901760
            %6199 = vmatprep.subr.mxu0 %v6198
            %v6200 = vand.u32 %v5366, 4294901760
            %6201 = vmatpush1.msra.mxu0 %v6200
            %v6202 = vand.u32 %v5369, 4294901760
            %6203 = vmatprep.subr.mxu0 %v6202
            %v6204 = vand.u32 %v5368, 4294901760
            %6205 = vmatpush1.msra.mxu0 %v6204
            %v6206 = vand.u32 %v5371, 4294901760
            %6207 = vmatprep.subr.mxu0 %v6206
            %v6208 = vand.u32 %v5370, 4294901760
            %6209 = vmatpush1.msra.mxu0 %v6208
            %v6210 = vand.u32 %v5373, 4294901760
            %6211 = vmatprep.subr.mxu0 %v6210
            %v6212 = vand.u32 %v5372, 4294901760
            %6213 = vmatpush1.msra.mxu0 %v6212
            %v6214 = vand.u32 %v5375, 4294901760
            %6215 = vmatprep.subr.mxu0 %v6214
            %v6216 = vand.u32 %v5374, 4294901760
            %6217 = vmatpush1.msra.mxu0 %v6216
            %v6218 = vand.u32 %v5377, 4294901760
            %6219 = vmatprep.subr.mxu0 %v6218
            %v6220 = vand.u32 %v5376, 4294901760
            %6221 = vmatpush1.msra.mxu0 %v6220
            %v6222 = vand.u32 %v5379, 4294901760
            %6223 = vmatprep.subr.mxu0 %v6222
            %v6224 = vand.u32 %v5378, 4294901760
            %6225 = vmatpush1.msra.mxu0 %v6224
            %v6226 = vand.u32 %v5381, 4294901760
            %6227 = vmatprep.subr.mxu0 %v6226
            %v6228 = vand.u32 %v5380, 4294901760
            %6229 = vmatpush1.msra.mxu0 %v6228
            %v6230 = vand.u32 %v5383, 4294901760
            %6231 = vmatprep.subr.mxu0 %v6230
            %v6232 = vand.u32 %v5382, 4294901760
            %6233 = vmatpush1.msra.mxu0 %v6232
            %v6234 = vand.u32 %v5385, 4294901760
            %6235 = vmatprep.subr.mxu0 %v6234
            %v6236 = vand.u32 %v5384, 4294901760
            %6237 = vmatpush1.msra.mxu0 %v6236
            %v6238 = vand.u32 %v5387, 4294901760
            %6239 = vmatprep.subr.mxu0 %v6238
            %v6240 = vand.u32 %v5386, 4294901760
            %6241 = vmatpush1.msra.mxu0 %v6240
            %v6242 = vand.u32 %v5389, 4294901760
            %6243 = vmatprep.subr.mxu0 %v6242
            %v6244 = vand.u32 %v5388, 4294901760
            %6245 = vmatpush1.msra.mxu0 %v6244
            %v6246 = vand.u32 %v5391, 4294901760
            %6247 = vmatprep.subr.mxu0 %v6246
            %v6248 = vand.u32 %v5390, 4294901760
            %6249 = vmatpush1.msra.mxu0 %v6248
            %v6250 = vand.u32 %v5393, 4294901760
            %6251 = vmatprep.subr.mxu0 %v6250
            %v6252 = vand.u32 %v5392, 4294901760
            %6253 = vmatpush1.msra.mxu0 %v6252
            %v6254 = vand.u32 %v5395, 4294901760
            %6255 = vmatprep.subr.mxu0 %v6254
            %v6256 = vand.u32 %v5394, 4294901760
            %6257 = vmatpush1.msra.mxu0 %v6256
            %v6258 = vand.u32 %v5397, 4294901760
            %6259 = vmatprep.subr.mxu0 %v6258
            %v6260 = vand.u32 %v5396, 4294901760
            %6261 = vmatpush1.msra.mxu0 %v6260
            %v6262 = vand.u32 %v5399, 4294901760
            %6263 = vmatprep.subr.mxu0 %v6262
            %v6264 = vand.u32 %v5398, 4294901760
            %6265 = vmatpush1.msra.mxu0 %v6264
            %v6266 = vand.u32 %v5401, 4294901760
            %6267 = vmatprep.subr.mxu0 %v6266
            %v6268 = vand.u32 %v5400, 4294901760
            %6269 = vmatpush1.msra.mxu0 %v6268
            %v6270 = vand.u32 %v5403, 4294901760
            %6271 = vmatprep.subr.mxu0 %v6270
            %v6272 = vand.u32 %v5402, 4294901760
            %6273 = vmatpush1.msra.mxu0 %v6272
            %v6274 = vand.u32 %v5405, 4294901760
            %6275 = vmatprep.subr.mxu0 %v6274
            %v6276 = vand.u32 %v5404, 4294901760
            %6277 = vmatpush1.msra.mxu0 %v6276
            %v6278 = vand.u32 %v5407, 4294901760
            %6279 = vmatprep.subr.mxu0 %v6278
            %v6280 = vand.u32 %v5406, 4294901760
            %6281 = vmatpush1.msra.mxu0 %v6280
            %v6282 = vand.u32 %v5409, 4294901760
            %6283 = vmatprep.subr.mxu0 %v6282
            %v6284 = vand.u32 %v5408, 4294901760
            %6285 = vmatpush1.msra.mxu0 %v6284
            %v6286 = vand.u32 %v5415, 4294901760
            %v6287 = vsub.f32 %v5415, %v6286
            %v6288 = vand.u32 %v6287, 4294901760
            %6289 = vmatprep.mubr.f32.mxu0 %v6288
            %v6290 = vand.u32 %v5413, 4294901760
            %v6291 = vsub.f32 %v5413, %v6290
            %v6292 = vand.u32 %v6291, 4294901760
            %6293 = vmatmul.mubr.f32.gmra.mrb[0].mxu0 %v6292
            %v6294 = vpop.f32.mrb[0].mxu0
            %v6295 = vadd.f32 %v6154, %v6294
            %v6296 = vpop.f32.mrb[0].mxu0
            %v6297 = vadd.f32 %v6156, %v6296
            %6298 = vdwg.mxu0
            %v6299 = vand.u32 %v5347, 4294901760
            %v6300 = vsub.f32 %v5347, %v6299
            %v6301 = vand.u32 %v6300, 4294901760
            %6302 = vmatprep.subr.mxu0 %v6301
            %v6303 = vand.u32 %v5346, 4294901760
            %v6304 = vsub.f32 %v5346, %v6303
            %v6305 = vand.u32 %v6304, 4294901760
            %6306 = vmatpush1.msra.mxu0 %v6305
            %v6307 = vand.u32 %v5349, 4294901760
            %v6308 = vsub.f32 %v5349, %v6307
            %v6309 = vand.u32 %v6308, 4294901760
            %6310 = vmatprep.subr.mxu0 %v6309
            %v6311 = vand.u32 %v5348, 4294901760
            %v6312 = vsub.f32 %v5348, %v6311
            %v6313 = vand.u32 %v6312, 4294901760
            %6314 = vmatpush1.msra.mxu0 %v6313
            %v6315 = vand.u32 %v5351, 4294901760
            %v6316 = vsub.f32 %v5351, %v6315
            %v6317 = vand.u32 %v6316, 4294901760
            %6318 = vmatprep.subr.mxu0 %v6317
            %v6319 = vand.u32 %v5350, 4294901760
            %v6320 = vsub.f32 %v5350, %v6319
            %v6321 = vand.u32 %v6320, 4294901760
            %6322 = vmatpush1.msra.mxu0 %v6321
            %v6323 = vand.u32 %v5353, 4294901760
            %v6324 = vsub.f32 %v5353, %v6323
            %v6325 = vand.u32 %v6324, 4294901760
            %6326 = vmatprep.subr.mxu0 %v6325
            %v6327 = vand.u32 %v5352, 4294901760
            %v6328 = vsub.f32 %v5352, %v6327
            %v6329 = vand.u32 %v6328, 4294901760
            %6330 = vmatpush1.msra.mxu0 %v6329
            %v6331 = vand.u32 %v5355, 4294901760
            %v6332 = vsub.f32 %v5355, %v6331
            %v6333 = vand.u32 %v6332, 4294901760
            %6334 = vmatprep.subr.mxu0 %v6333
            %v6335 = vand.u32 %v5354, 4294901760
            %v6336 = vsub.f32 %v5354, %v6335
            %v6337 = vand.u32 %v6336, 4294901760
            %6338 = vmatpush1.msra.mxu0 %v6337
            %v6339 = vand.u32 %v5357, 4294901760
            %v6340 = vsub.f32 %v5357, %v6339
            %v6341 = vand.u32 %v6340, 4294901760
            %6342 = vmatprep.subr.mxu0 %v6341
            %v6343 = vand.u32 %v5356, 4294901760
            %v6344 = vsub.f32 %v5356, %v6343
            %v6345 = vand.u32 %v6344, 4294901760
            %6346 = vmatpush1.msra.mxu0 %v6345
            %v6347 = vand.u32 %v5359, 4294901760
            %v6348 = vsub.f32 %v5359, %v6347
            %v6349 = vand.u32 %v6348, 4294901760
            %6350 = vmatprep.subr.mxu0 %v6349
            %v6351 = vand.u32 %v5358, 4294901760
            %v6352 = vsub.f32 %v5358, %v6351
            %v6353 = vand.u32 %v6352, 4294901760
            %6354 = vmatpush1.msra.mxu0 %v6353
            %v6355 = vand.u32 %v5361, 4294901760
            %v6356 = vsub.f32 %v5361, %v6355
            %v6357 = vand.u32 %v6356, 4294901760
            %6358 = vmatprep.subr.mxu0 %v6357
            %v6359 = vand.u32 %v5360, 4294901760
            %v6360 = vsub.f32 %v5360, %v6359
            %v6361 = vand.u32 %v6360, 4294901760
            %6362 = vmatpush1.msra.mxu0 %v6361
            %v6363 = vand.u32 %v5363, 4294901760
            %v6364 = vsub.f32 %v5363, %v6363
            %v6365 = vand.u32 %v6364, 4294901760
            %6366 = vmatprep.subr.mxu0 %v6365
            %v6367 = vand.u32 %v5362, 4294901760
            %v6368 = vsub.f32 %v5362, %v6367
            %v6369 = vand.u32 %v6368, 4294901760
            %6370 = vmatpush1.msra.mxu0 %v6369
            %v6371 = vand.u32 %v5365, 4294901760
            %v6372 = vsub.f32 %v5365, %v6371
            %v6373 = vand.u32 %v6372, 4294901760
            %6374 = vmatprep.subr.mxu0 %v6373
            %v6375 = vand.u32 %v5364, 4294901760
            %v6376 = vsub.f32 %v5364, %v6375
            %v6377 = vand.u32 %v6376, 4294901760
            %6378 = vmatpush1.msra.mxu0 %v6377
            %v6379 = vand.u32 %v5367, 4294901760
            %v6380 = vsub.f32 %v5367, %v6379
            %v6381 = vand.u32 %v6380, 4294901760
            %6382 = vmatprep.subr.mxu0 %v6381
            %v6383 = vand.u32 %v5366, 4294901760
            %v6384 = vsub.f32 %v5366, %v6383
            %v6385 = vand.u32 %v6384, 4294901760
            %6386 = vmatpush1.msra.mxu0 %v6385
            %v6387 = vand.u32 %v5369, 4294901760
            %v6388 = vsub.f32 %v5369, %v6387
            %v6389 = vand.u32 %v6388, 4294901760
            %6390 = vmatprep.subr.mxu0 %v6389
            %v6391 = vand.u32 %v5368, 4294901760
            %v6392 = vsub.f32 %v5368, %v6391
            %v6393 = vand.u32 %v6392, 4294901760
            %6394 = vmatpush1.msra.mxu0 %v6393
            %v6395 = vand.u32 %v5371, 4294901760
            %v6396 = vsub.f32 %v5371, %v6395
            %v6397 = vand.u32 %v6396, 4294901760
            %6398 = vmatprep.subr.mxu0 %v6397
            %v6399 = vand.u32 %v5370, 4294901760
            %v6400 = vsub.f32 %v5370, %v6399
            %v6401 = vand.u32 %v6400, 4294901760
            %6402 = vmatpush1.msra.mxu0 %v6401
            %v6403 = vand.u32 %v5373, 4294901760
            %v6404 = vsub.f32 %v5373, %v6403
            %v6405 = vand.u32 %v6404, 4294901760
            %6406 = vmatprep.subr.mxu0 %v6405
            %v6407 = vand.u32 %v5372, 4294901760
            %v6408 = vsub.f32 %v5372, %v6407
            %v6409 = vand.u32 %v6408, 4294901760
            %6410 = vmatpush1.msra.mxu0 %v6409
            %v6411 = vand.u32 %v5375, 4294901760
            %v6412 = vsub.f32 %v5375, %v6411
            %v6413 = vand.u32 %v6412, 4294901760
            %6414 = vmatprep.subr.mxu0 %v6413
            %v6415 = vand.u32 %v5374, 4294901760
            %v6416 = vsub.f32 %v5374, %v6415
            %v6417 = vand.u32 %v6416, 4294901760
            %6418 = vmatpush1.msra.mxu0 %v6417
            %v6419 = vand.u32 %v5377, 4294901760
            %v6420 = vsub.f32 %v5377, %v6419
            %v6421 = vand.u32 %v6420, 4294901760
            %6422 = vmatprep.subr.mxu0 %v6421
            %v6423 = vand.u32 %v5376, 4294901760
            %v6424 = vsub.f32 %v5376, %v6423
            %v6425 = vand.u32 %v6424, 4294901760
            %6426 = vmatpush1.msra.mxu0 %v6425
            %v6427 = vand.u32 %v5379, 4294901760
            %v6428 = vsub.f32 %v5379, %v6427
            %v6429 = vand.u32 %v6428, 4294901760
            %6430 = vmatprep.subr.mxu0 %v6429
            %v6431 = vand.u32 %v5378, 4294901760
            %v6432 = vsub.f32 %v5378, %v6431
            %v6433 = vand.u32 %v6432, 4294901760
            %6434 = vmatpush1.msra.mxu0 %v6433
            %v6435 = vand.u32 %v5381, 4294901760
            %v6436 = vsub.f32 %v5381, %v6435
            %v6437 = vand.u32 %v6436, 4294901760
            %6438 = vmatprep.subr.mxu0 %v6437
            %v6439 = vand.u32 %v5380, 4294901760
            %v6440 = vsub.f32 %v5380, %v6439
            %v6441 = vand.u32 %v6440, 4294901760
            %6442 = vmatpush1.msra.mxu0 %v6441
            %v6443 = vand.u32 %v5383, 4294901760
            %v6444 = vsub.f32 %v5383, %v6443
            %v6445 = vand.u32 %v6444, 4294901760
            %6446 = vmatprep.subr.mxu0 %v6445
            %v6447 = vand.u32 %v5382, 4294901760
            %v6448 = vsub.f32 %v5382, %v6447
            %v6449 = vand.u32 %v6448, 4294901760
            %6450 = vmatpush1.msra.mxu0 %v6449
            %v6451 = vand.u32 %v5385, 4294901760
            %v6452 = vsub.f32 %v5385, %v6451
            %v6453 = vand.u32 %v6452, 4294901760
            %6454 = vmatprep.subr.mxu0 %v6453
            %v6455 = vand.u32 %v5384, 4294901760
            %v6456 = vsub.f32 %v5384, %v6455
            %v6457 = vand.u32 %v6456, 4294901760
            %6458 = vmatpush1.msra.mxu0 %v6457
            %v6459 = vand.u32 %v5387, 4294901760
            %v6460 = vsub.f32 %v5387, %v6459
            %v6461 = vand.u32 %v6460, 4294901760
            %6462 = vmatprep.subr.mxu0 %v6461
            %v6463 = vand.u32 %v5386, 4294901760
            %v6464 = vsub.f32 %v5386, %v6463
            %v6465 = vand.u32 %v6464, 4294901760
            %6466 = vmatpush1.msra.mxu0 %v6465
            %v6467 = vand.u32 %v5389, 4294901760
            %v6468 = vsub.f32 %v5389, %v6467
            %v6469 = vand.u32 %v6468, 4294901760
            %6470 = vmatprep.subr.mxu0 %v6469
            %v6471 = vand.u32 %v5388, 4294901760
            %v6472 = vsub.f32 %v5388, %v6471
            %v6473 = vand.u32 %v6472, 4294901760
            %6474 = vmatpush1.msra.mxu0 %v6473
            %v6475 = vand.u32 %v5391, 4294901760
            %v6476 = vsub.f32 %v5391, %v6475
            %v6477 = vand.u32 %v6476, 4294901760
            %6478 = vmatprep.subr.mxu0 %v6477
            %v6479 = vand.u32 %v5390, 4294901760
            %v6480 = vsub.f32 %v5390, %v6479
            %v6481 = vand.u32 %v6480, 4294901760
            %6482 = vmatpush1.msra.mxu0 %v6481
            %v6483 = vand.u32 %v5393, 4294901760
            %v6484 = vsub.f32 %v5393, %v6483
            %v6485 = vand.u32 %v6484, 4294901760
            %6486 = vmatprep.subr.mxu0 %v6485
            %v6487 = vand.u32 %v5392, 4294901760
            %v6488 = vsub.f32 %v5392, %v6487
            %v6489 = vand.u32 %v6488, 4294901760
            %6490 = vmatpush1.msra.mxu0 %v6489
            %v6491 = vand.u32 %v5395, 4294901760
            %v6492 = vsub.f32 %v5395, %v6491
            %v6493 = vand.u32 %v6492, 4294901760
            %6494 = vmatprep.subr.mxu0 %v6493
            %v6495 = vand.u32 %v5394, 4294901760
            %v6496 = vsub.f32 %v5394, %v6495
            %v6497 = vand.u32 %v6496, 4294901760
            %6498 = vmatpush1.msra.mxu0 %v6497
            %v6499 = vand.u32 %v5397, 4294901760
            %v6500 = vsub.f32 %v5397, %v6499
            %v6501 = vand.u32 %v6500, 4294901760
            %6502 = vmatprep.subr.mxu0 %v6501
            %v6503 = vand.u32 %v5396, 4294901760
            %v6504 = vsub.f32 %v5396, %v6503
            %v6505 = vand.u32 %v6504, 4294901760
            %6506 = vmatpush1.msra.mxu0 %v6505
            %v6507 = vand.u32 %v5399, 4294901760
            %v6508 = vsub.f32 %v5399, %v6507
            %v6509 = vand.u32 %v6508, 4294901760
            %6510 = vmatprep.subr.mxu0 %v6509
            %v6511 = vand.u32 %v5398, 4294901760
            %v6512 = vsub.f32 %v5398, %v6511
            %v6513 = vand.u32 %v6512, 4294901760
            %6514 = vmatpush1.msra.mxu0 %v6513
            %v6515 = vand.u32 %v5401, 4294901760
            %v6516 = vsub.f32 %v5401, %v6515
            %v6517 = vand.u32 %v6516, 4294901760
            %6518 = vmatprep.subr.mxu0 %v6517
            %v6519 = vand.u32 %v5400, 4294901760
            %v6520 = vsub.f32 %v5400, %v6519
            %v6521 = vand.u32 %v6520, 4294901760
            %6522 = vmatpush1.msra.mxu0 %v6521
            %v6523 = vand.u32 %v5403, 4294901760
            %v6524 = vsub.f32 %v5403, %v6523
            %v6525 = vand.u32 %v6524, 4294901760
            %6526 = vmatprep.subr.mxu0 %v6525
            %v6527 = vand.u32 %v5402, 4294901760
            %v6528 = vsub.f32 %v5402, %v6527
            %v6529 = vand.u32 %v6528, 4294901760
            %6530 = vmatpush1.msra.mxu0 %v6529
            %v6531 = vand.u32 %v5405, 4294901760
            %v6532 = vsub.f32 %v5405, %v6531
            %v6533 = vand.u32 %v6532, 4294901760
            %6534 = vmatprep.subr.mxu0 %v6533
            %v6535 = vand.u32 %v5404, 4294901760
            %v6536 = vsub.f32 %v5404, %v6535
            %v6537 = vand.u32 %v6536, 4294901760
            %6538 = vmatpush1.msra.mxu0 %v6537
            %v6539 = vand.u32 %v5407, 4294901760
            %v6540 = vsub.f32 %v5407, %v6539
            %v6541 = vand.u32 %v6540, 4294901760
            %6542 = vmatprep.subr.mxu0 %v6541
            %v6543 = vand.u32 %v5406, 4294901760
            %v6544 = vsub.f32 %v5406, %v6543
            %v6545 = vand.u32 %v6544, 4294901760
            %6546 = vmatpush1.msra.mxu0 %v6545
            %v6547 = vand.u32 %v5409, 4294901760
            %v6548 = vsub.f32 %v5409, %v6547
            %v6549 = vand.u32 %v6548, 4294901760
            %6550 = vmatprep.subr.mxu0 %v6549
            %v6551 = vand.u32 %v5408, 4294901760
            %v6552 = vsub.f32 %v5408, %v6551
            %v6553 = vand.u32 %v6552, 4294901760
            %6554 = vmatpush1.msra.mxu0 %v6553
            %v6555 = vand.u32 %v5415, 4294901760
            %6556 = vmatprep.mubr.f32.mxu0 %v6555
            %v6557 = vand.u32 %v5413, 4294901760
            %6558 = vmatmul.mubr.f32.gmra.mrb[0].mxu0 %v6557
            %v6559 = vpop.f32.mrb[0].mxu0
            %v6560 = vadd.f32 %v6295, %v6559
            %v6561 = vpop.f32.mrb[0].mxu0
            %v6562 = vadd.f32 %v6297, %v6561
            %6563 = vdwg.mxu0
            %v6564 = vand.u32 %v5347, 4294901760
            %6565 = vmatprep.subr.mxu0 %v6564
            %v6566 = vand.u32 %v5346, 4294901760
            %6567 = vmatpush1.msra.mxu0 %v6566
            %v6568 = vand.u32 %v5349, 4294901760
            %6569 = vmatprep.subr.mxu0 %v6568
            %v6570 = vand.u32 %v5348, 4294901760
            %6571 = vmatpush1.msra.mxu0 %v6570
            %v6572 = vand.u32 %v5351, 4294901760
            %6573 = vmatprep.subr.mxu0 %v6572
            %v6574 = vand.u32 %v5350, 4294901760
            %6575 = vmatpush1.msra.mxu0 %v6574
            %v6576 = vand.u32 %v5353, 4294901760
            %6577 = vmatprep.subr.mxu0 %v6576
            %v6578 = vand.u32 %v5352, 4294901760
            %6579 = vmatpush1.msra.mxu0 %v6578
            %v6580 = vand.u32 %v5355, 4294901760
            %6581 = vmatprep.subr.mxu0 %v6580
            %v6582 = vand.u32 %v5354, 4294901760
            %6583 = vmatpush1.msra.mxu0 %v6582
            %v6584 = vand.u32 %v5357, 4294901760
            %6585 = vmatprep.subr.mxu0 %v6584
            %v6586 = vand.u32 %v5356, 4294901760
            %6587 = vmatpush1.msra.mxu0 %v6586
            %v6588 = vand.u32 %v5359, 4294901760
            %6589 = vmatprep.subr.mxu0 %v6588
            %v6590 = vand.u32 %v5358, 4294901760
            %6591 = vmatpush1.msra.mxu0 %v6590
            %v6592 = vand.u32 %v5361, 4294901760
            %6593 = vmatprep.subr.mxu0 %v6592
            %v6594 = vand.u32 %v5360, 4294901760
            %6595 = vmatpush1.msra.mxu0 %v6594
            %v6596 = vand.u32 %v5363, 4294901760
            %6597 = vmatprep.subr.mxu0 %v6596
            %v6598 = vand.u32 %v5362, 4294901760
            %6599 = vmatpush1.msra.mxu0 %v6598
            %v6600 = vand.u32 %v5365, 4294901760
            %6601 = vmatprep.subr.mxu0 %v6600
            %v6602 = vand.u32 %v5364, 4294901760
            %6603 = vmatpush1.msra.mxu0 %v6602
            %v6604 = vand.u32 %v5367, 4294901760
            %6605 = vmatprep.subr.mxu0 %v6604
            %v6606 = vand.u32 %v5366, 4294901760
            %6607 = vmatpush1.msra.mxu0 %v6606
            %v6608 = vand.u32 %v5369, 4294901760
            %6609 = vmatprep.subr.mxu0 %v6608
            %v6610 = vand.u32 %v5368, 4294901760
            %6611 = vmatpush1.msra.mxu0 %v6610
            %v6612 = vand.u32 %v5371, 4294901760
            %6613 = vmatprep.subr.mxu0 %v6612
            %v6614 = vand.u32 %v5370, 4294901760
            %6615 = vmatpush1.msra.mxu0 %v6614
            %v6616 = vand.u32 %v5373, 4294901760
            %6617 = vmatprep.subr.mxu0 %v6616
            %v6618 = vand.u32 %v5372, 4294901760
            %6619 = vmatpush1.msra.mxu0 %v6618
            %v6620 = vand.u32 %v5375, 4294901760
            %6621 = vmatprep.subr.mxu0 %v6620
            %v6622 = vand.u32 %v5374, 4294901760
            %6623 = vmatpush1.msra.mxu0 %v6622
            %v6624 = vand.u32 %v5377, 4294901760
            %6625 = vmatprep.subr.mxu0 %v6624
            %v6626 = vand.u32 %v5376, 4294901760
            %6627 = vmatpush1.msra.mxu0 %v6626
            %v6628 = vand.u32 %v5379, 4294901760
            %6629 = vmatprep.subr.mxu0 %v6628
            %v6630 = vand.u32 %v5378, 4294901760
            %6631 = vmatpush1.msra.mxu0 %v6630
            %v6632 = vand.u32 %v5381, 4294901760
            %6633 = vmatprep.subr.mxu0 %v6632
            %v6634 = vand.u32 %v5380, 4294901760
            %6635 = vmatpush1.msra.mxu0 %v6634
            %v6636 = vand.u32 %v5383, 4294901760
            %6637 = vmatprep.subr.mxu0 %v6636
            %v6638 = vand.u32 %v5382, 4294901760
            %6639 = vmatpush1.msra.mxu0 %v6638
            %v6640 = vand.u32 %v5385, 4294901760
            %6641 = vmatprep.subr.mxu0 %v6640
            %v6642 = vand.u32 %v5384, 4294901760
            %6643 = vmatpush1.msra.mxu0 %v6642
            %v6644 = vand.u32 %v5387, 4294901760
            %6645 = vmatprep.subr.mxu0 %v6644
            %v6646 = vand.u32 %v5386, 4294901760
            %6647 = vmatpush1.msra.mxu0 %v6646
            %v6648 = vand.u32 %v5389, 4294901760
            %6649 = vmatprep.subr.mxu0 %v6648
            %v6650 = vand.u32 %v5388, 4294901760
            %6651 = vmatpush1.msra.mxu0 %v6650
            %v6652 = vand.u32 %v5391, 4294901760
            %6653 = vmatprep.subr.mxu0 %v6652
            %v6654 = vand.u32 %v5390, 4294901760
            %6655 = vmatpush1.msra.mxu0 %v6654
            %v6656 = vand.u32 %v5393, 4294901760
            %6657 = vmatprep.subr.mxu0 %v6656
            %v6658 = vand.u32 %v5392, 4294901760
            %6659 = vmatpush1.msra.mxu0 %v6658
            %v6660 = vand.u32 %v5395, 4294901760
            %6661 = vmatprep.subr.mxu0 %v6660
            %v6662 = vand.u32 %v5394, 4294901760
            %6663 = vmatpush1.msra.mxu0 %v6662
            %v6664 = vand.u32 %v5397, 4294901760
            %6665 = vmatprep.subr.mxu0 %v6664
            %v6666 = vand.u32 %v5396, 4294901760
            %6667 = vmatpush1.msra.mxu0 %v6666
            %v6668 = vand.u32 %v5399, 4294901760
            %6669 = vmatprep.subr.mxu0 %v6668
            %v6670 = vand.u32 %v5398, 4294901760
            %6671 = vmatpush1.msra.mxu0 %v6670
            %v6672 = vand.u32 %v5401, 4294901760
            %6673 = vmatprep.subr.mxu0 %v6672
            %v6674 = vand.u32 %v5400, 4294901760
            %6675 = vmatpush1.msra.mxu0 %v6674
            %v6676 = vand.u32 %v5403, 4294901760
            %6677 = vmatprep.subr.mxu0 %v6676
            %v6678 = vand.u32 %v5402, 4294901760
            %6679 = vmatpush1.msra.mxu0 %v6678
            %v6680 = vand.u32 %v5405, 4294901760
            %6681 = vmatprep.subr.mxu0 %v6680
            %v6682 = vand.u32 %v5404, 4294901760
            %6683 = vmatpush1.msra.mxu0 %v6682
            %v6684 = vand.u32 %v5407, 4294901760
            %6685 = vmatprep.subr.mxu0 %v6684
            %v6686 = vand.u32 %v5406, 4294901760
            %6687 = vmatpush1.msra.mxu0 %v6686
            %v6688 = vand.u32 %v5409, 4294901760
            %6689 = vmatprep.subr.mxu0 %v6688
            %v6690 = vand.u32 %v5408, 4294901760
            %6691 = vmatpush1.msra.mxu0 %v6690
            %v6692 = vand.u32 %v5415, 4294901760
            %6693 = vmatprep.mubr.f32.mxu0 %v6692
            %v6694 = vand.u32 %v5413, 4294901760
            %6695 = vmatmul.mubr.f32.gmra.mrb[0].mxu0 %v6694
            %v6696 = vpop.f32.mrb[0].mxu0
            %v6697 = vadd.f32 %v6560, %v6696
            %v6698 = vpop.f32.mrb[0].mxu0
            %v6699 = vadd.f32 %v6562, %v6698
            %6700 = vdwg.mxu0
            %v6701 = vadd.f32 %v4622, %v6697
            %v6702 = vadd.f32 %v4623, %v6699
          $region67: #{tpu_custom_call.1} parent=61 // loop_footer
            %s4619 = sadd.s32 %s4617, 1
          $region68: #{tpu_custom_call.1} parent=61 // loop_footer_branch
            %4616 = sbr.rel target = $region64
          $region69: #{tpu_custom_call.1} parent=61 // loop_exit
            _
          %v6705 = vcombine.low %v4622, %v4623
          %6707 = vst [vmem:[#allocation2] sm:$0xff] %v6705
        $region62: #{tpu_custom_call.1} parent=27 // pred_fallthru
          _
        %s6708 = sand.u32 %s108, 1
        %s6709 = scalar_lea.sflag [#allocation8], %s6708
        %s6710 = sand.u32 %s108, 1
        %s6711 = smul.addr %s6710, 8
        %s6712 = scalar_lea.vmem [#allocation11], %s6711
        // Predicated region
        $region70: #{tpu_custom_call.1} parent=27 // pred_check
          %p6713 = pneg %p118
        $region71: #{tpu_custom_call.1} parent=27 // pred_check_branch
          %6715 = sbr.rel (%p6713) target = $region73
        $region72: #{tpu_custom_call.1} parent=27 // pred_region
          %s6717 = ssub.s32 128, 128
          %6718 = vsyncadd %s6709, %s6717
          %s6719 = smul.addr %s36, 2
          %s6720 = smul.addr %s6719, 64
          %s6721 = scalar_lea.hbm %s4, %s6720
          %s6723 = sshll.u32 %s6712, 4
          %s6724 = int_to_ptr.vmem [resolvable:$true] %s6723
          %6726 = dma.vmem_to_hbm [thread:$0]  %s6724, 128, %s6721, %s6709
        $region73: #{tpu_custom_call.1} parent=27 // pred_fallthru
          _
      $region28: #{tpu_custom_call.1} parent=5 // pred_fallthru
        _
      %p6727 = scmp.le.s32.totalorder 2, %s27
      // Predicated region
      $region74: #{tpu_custom_call.1} parent=5 // pred_check
        %p6728 = pneg %p6727
      $region75: #{tpu_custom_call.1} parent=5 // pred_check_branch
        %6730 = sbr.rel (%p6728) target = $region77
      $region76: #{tpu_custom_call.1} parent=5 // pred_region
        %s6731 = ssub.s32 %s27, 2
        // Predicated region
        $region78: #{tpu_custom_call.1} parent=76 // pred_check
          %p6732 = pneg %p124
        $region79: #{tpu_custom_call.1} parent=76 // pred_check_branch
          %6734 = sbr.rel (%p6732) target = $region81
        $region80: #{tpu_custom_call.1} parent=76 // pred_region
          %s6735 = sand.u32 %s109, 1
          %s6736 = scalar_lea.sflag [#allocation8], %s6735
          %s6737 = sand.u32 %s109, 1
          %s6738 = smul.addr %s6737, 8
          %s6739 = scalar_lea.vmem [#allocation11], %s6738
          %6740 = dma.done %s6736, 128
        $region81: #{tpu_custom_call.1} parent=76 // pred_fallthru
          _
      $region77: #{tpu_custom_call.1} parent=5 // pred_fallthru
        _
    $region6: #{tpu_custom_call.1} parent=1 // loop_footer
      %s31 = sadd.s32 1, %s27
    $region7: #{tpu_custom_call.1} parent=1 // loop_footer_branch
      %26 = sbr.rel target = $region3
    $region8: #{tpu_custom_call.1} parent=1 // loop_exit
      _
    %6741 = vsyncpa [#allocation7], 1
    %s6742 = scalar_lea.sflag [#allocation7], 1
    %6743 = vsyncpa %s6742, 1
    %6744 = vsyncpa [#allocation10], 1
    %s6745 = scalar_lea.sflag [#allocation10], 1
    %6746 = vsyncpa %s6745, 1
    %6747 = vsyncpa [#allocation8], 1
    %s6748 = scalar_lea.sflag [#allocation8], 1
    %6749 = vsyncpa %s6748, 1

</llo_original>
